<compile_context>
chip_gen: v5e
topology: v5e:2x2
jax: 0.10.0
libtpu: 0.0.40
codegen_flags: <defaults>
</compile_context>

<pallas_src>
import functools

import jax
import jax.numpy as jnp
from jax.experimental import pallas as pl
from jax.experimental.pallas import tpu as pltpu


# ============================================================================
# Pallas kernels
# ============================================================================
def _conv_acc_kernel(x_ref, w_ref, b_ref, o_ref, acc_ref, *, n_phase):
    """One kd tap of a 3x3x3 conv: acc += x_kd @ w_kd (K = 9*Cin).

    Epilogue (last kd): optional max over `n_phase` pooling row-blocks
    (fused MaxPool3d((1,2,2))), + per-channel bias (BN folded into weights),
    ReLU, cast to the output dtype.
    """
    kd = pl.program_id(1)

    @pl.when(kd == 0)
    def _init():
        acc_ref[...] = jnp.zeros_like(acc_ref)

    acc_ref[...] += jnp.dot(x_ref[0], w_ref[0],
                            preferred_element_type=jnp.float32)

    @pl.when(kd == pl.num_programs(1) - 1)
    def _finish():
        acc = acc_ref[...]
        rout = acc.shape[0] // n_phase
        y = acc[0:rout]
        for p in range(1, n_phase):                  # fused 2x2 max pooling
            y = jnp.maximum(y, acc[p * rout:(p + 1) * rout])
        y = y + b_ref[...]
        o_ref[0] = jnp.maximum(y, 0.0).astype(o_ref.dtype)


def _conv_acc_res_kernel(x_ref, w_ref, b_ref, xsc_ref, wsc_ref, bsc_ref,
                         o_ref, acc_ref):
    """conv2 of a ResidualBlock3D: kd accumulation + (in the epilogue) the
    projection shortcut (1x1x1 strided conv + BN, one extra matmul), the
    residual add and the final ReLU."""
    kd = pl.program_id(1)

    @pl.when(kd == 0)
    def _init():
        acc_ref[...] = jnp.zeros_like(acc_ref)

    acc_ref[...] += jnp.dot(x_ref[0], w_ref[0],
                            preferred_element_type=jnp.float32)

    @pl.when(kd == pl.num_programs(1) - 1)
    def _finish():
        sc = jnp.dot(xsc_ref[0], wsc_ref[...],
                     preferred_element_type=jnp.float32)
        y = acc_ref[...] + b_ref[...] + sc + bsc_ref[...]
        o_ref[0] = jnp.maximum(y, 0.0).astype(o_ref.dtype)


def _head_kernel(x_ref, p_ref, w1_ref, b1_ref, w2_ref, b2_ref, o_ref):
    """Global average pool (as an averaging matmul) + fc1 + ReLU + fc2."""
    pooled = jnp.dot(p_ref[...], x_ref[...],
                     preferred_element_type=jnp.float32)            # (N, C)
    h = jnp.dot(pooled.astype(w1_ref.dtype), w1_ref[...],
                preferred_element_type=jnp.float32) + b1_ref[...]
    h = jnp.maximum(h, 0.0)
    o_ref[...] = (jnp.dot(h.astype(w2_ref.dtype), w2_ref[...],
                          preferred_element_type=jnp.float32) + b2_ref[...])


# ============================================================================
# Wrapper glue (pure JAX): padding, (kh,kw) tap gathering, BN folding.
# ============================================================================
def _pad_dhw(x):
    # x: (D, N, H, W, C) -> pad D, H, W by 1.
    return jnp.pad(x, ((1, 1), (0, 0), (1, 1), (1, 1), (0, 0)))


def _gather_hw_taps(xp, ho, wo, sh, sw):
    """xp: padded (Dp, N, Hp, Wp, C) -> (Dp, N, ho, wo, 9*C); taps (kh, kw, c)."""
    cols = []
    for kh in range(3):
        for kw in range(3):
            cols.append(xp[:, :, kh:kh + (ho - 1) * sh + 1:sh,
                           kw:kw + (wo - 1) * sw + 1:sw, :])
    return jnp.concatenate(cols, axis=-1)


def _conv_call(slab, w3, bias, *, n_phase=1, shortcut=None,
               out_dtype=jnp.bfloat16):
    """slab: (Dp, R, 9*Cin) bf16; w3: (3, 9*Cin, Cout) bf16 (BN scale folded);
    bias: (Cout,) f32.  Returns (Dp-2, R//n_phase, Cout)."""
    Dp, R, Kg = slab.shape
    Do = Dp - 2
    Cout = w3.shape[-1]
    Rout = R // n_phase
    b2 = bias.reshape(1, Cout).astype(jnp.float32)

    in_specs = [
        pl.BlockSpec((1, R, Kg), lambda d, kd: (d + kd, 0, 0)),
        pl.BlockSpec((1, Kg, Cout), lambda d, kd: (kd, 0, 0)),
        pl.BlockSpec((1, Cout), lambda d, kd: (0, 0)),
    ]
    args = [slab, w3, b2]

    if shortcut is None:
        kernel = functools.partial(_conv_acc_kernel, n_phase=n_phase)
    else:
        xsc, wsc, bsc = shortcut
        Csc = xsc.shape[-1]
        in_specs += [
            pl.BlockSpec((1, Rout, Csc), lambda d, kd: (d, 0, 0)),
            pl.BlockSpec((Csc, Cout), lambda d, kd: (0, 0)),
            pl.BlockSpec((1, Cout), lambda d, kd: (0, 0)),
        ]
        args += [xsc, wsc, bsc.reshape(1, Cout).astype(jnp.float32)]
        kernel = _conv_acc_res_kernel

    return pl.pallas_call(
        kernel,
        grid=(Do, 3),                                   # (depth, kd-reduction)
        in_specs=in_specs,
        out_specs=pl.BlockSpec((1, Rout, Cout), lambda d, kd: (d, 0, 0)),
        out_shape=jax.ShapeDtypeStruct((Do, Rout, Cout), out_dtype),
        scratch_shapes=[pltpu.VMEM((R, Cout), jnp.float32)],
        compiler_params=pltpu.CompilerParams(
            dimension_semantics=("parallel", "arbitrary")),
    )(*args)


def conv3x3_bn_relu(x, w3, bias, *, stride_hw=1):
    """3x3x3 conv (pad 1, stride (1,s,s)) + folded-BN bias + ReLU."""
    D, N, H, W, Cin = x.shape
    ho = (H - 1) // stride_hw + 1
    wo = (W - 1) // stride_hw + 1
    pat = _gather_hw_taps(_pad_dhw(x), ho, wo, stride_hw, stride_hw)
    slab = pat.reshape(D + 2, N * ho * wo, 9 * Cin)
    out = _conv_call(slab, w3, bias)
    return out.reshape(D, N, ho, wo, w3.shape[-1])


def conv1_bn_relu_pool(x, w3, bias):
    """Stem conv1 + BN + ReLU + MaxPool3d((1,2,2)), fused in one pallas_call:
    the 4 pooling phases are stacked as row-blocks and max-reduced in-kernel."""
    D, N, H, W, Cin = x.shape
    ho, wo = H // 2, W // 2
    pat = _gather_hw_taps(_pad_dhw(x), H, W, 1, 1)       # (Dp, N, H, W, 9*Cin)
    phases = [pat[:, :, a::2, b::2, :] for a in (0, 1) for b in (0, 1)]
    slab = jnp.stack(phases, axis=1).reshape(D + 2, 4 * N * ho * wo, 9 * Cin)
    out = _conv_call(slab, w3, bias, n_phase=4)          # (D, N*ho*wo, Cout)
    return out.reshape(D, N, ho, wo, w3.shape[-1])


def residual_block_fwd(x, w1f, b1, w2f, b2, wscf, bsc, *, stride_hw=2):
    """ResidualBlock3D (projection shortcut) in 2 fused pallas_calls."""
    D, N, H, W, Cin = x.shape
    h = conv3x3_bn_relu(x, w1f, b1, stride_hw=stride_hw)     # conv1+BN+ReLU
    _, _, Ho, Wo, Cmid = h.shape
    pat = _gather_hw_taps(_pad_dhw(h), Ho, Wo, 1, 1)
    slab = pat.reshape(D + 2, N * Ho * Wo, 9 * Cmid)
    # 1x1x1 strided shortcut operand: plain subsample of the block input.
    xsc = x[:, :, ::stride_hw, ::stride_hw, :].reshape(D, N * Ho * Wo, Cin)
    out = _conv_call(slab, w2f, b2, shortcut=(xsc, wscf, bsc))
    return out.reshape(D, N, Ho, Wo, w2f.shape[-1])


def head_fwd(x, fc1_w, fc1_b, fc2_w, fc2_b):
    """AdaptiveAvgPool3d((1,1,1)) + flatten + fc1 + ReLU + fc2 (one call).
    Dropout3d / Dropout are identity at inference."""
    D, N, Hh, Ww, C = x.shape
    S = Hh * Ww
    M = D * N * S
    x2 = x.reshape(M, C)
    row_owner = (jnp.arange(M) // S) % N                 # rows ordered (d,n,s)
    pmat = ((row_owner[None, :] == jnp.arange(N)[:, None])
            .astype(jnp.float32) / (D * S)).astype(jnp.bfloat16)
    H1, H2 = fc1_w.shape[1], fc2_w.shape[1]
    return pl.pallas_call(
        _head_kernel,
        grid=(1,),
        in_specs=[
            pl.BlockSpec((M, C), lambda i: (0, 0)),
            pl.BlockSpec((N, M), lambda i: (0, 0)),
            pl.BlockSpec((C, H1), lambda i: (0, 0)),
            pl.BlockSpec((1, H1), lambda i: (0, 0)),
            pl.BlockSpec((H1, H2), lambda i: (0, 0)),
            pl.BlockSpec((1, H2), lambda i: (0, 0)),
        ],
        out_specs=pl.BlockSpec((N, H2), lambda i: (0, 0)),
        out_shape=jax.ShapeDtypeStruct((N, H2), jnp.float32),
    )(x2, pmat,
      fc1_w.astype(jnp.bfloat16), fc1_b.reshape(1, H1).astype(jnp.float32),
      fc2_w.astype(jnp.bfloat16), fc2_b.reshape(1, H2).astype(jnp.float32))


# ============================================================================
# BN folding (inference mode) and parameters
# ============================================================================
def _bn_fold(gamma, beta, mean, var, conv_bias=None, eps=1e-5):
    scale = gamma / jnp.sqrt(var + eps)
    bias = beta - mean * scale
    if conv_bias is not None:
        bias = bias + scale * conv_bias
    return scale, bias


def _fold_conv(w, bn, conv_bias=None):
    # w: (3,3,3,Cin,Cout).  NOTE: real PyTorch weights (Cout,Cin,kD,kH,kW) must
    # be permuted to (kD,kH,kW,Cin,Cout) before use.
    scale, bias = _bn_fold(*bn, conv_bias=conv_bias)
    wf = (w * scale).reshape(3, 9 * w.shape[3], w.shape[4]).astype(jnp.bfloat16)
    return wf, bias.astype(jnp.float32)


def _fold_shortcut(w, bn):
    scale, bias = _bn_fold(*bn)
    return (w * scale).astype(jnp.bfloat16), bias.astype(jnp.float32)


def init_params(key):
    keys = iter(jax.random.split(key, 64))

    def conv_w(cin, cout):
        return (0.05 * jax.random.normal(next(keys), (3, 3, 3, cin, cout))).astype(jnp.float32)

    def lin_w(cin, cout):
        return (0.05 * jax.random.normal(next(keys), (cin, cout))).astype(jnp.float32)

    def bn(c):
        gamma = (1.0 + 0.1 * jax.random.normal(next(keys), (c,))).astype(jnp.float32)
        beta = (0.1 * jax.random.normal(next(keys), (c,))).astype(jnp.float32)
        mean = (0.1 * jax.random.normal(next(keys), (c,))).astype(jnp.float32)
        var = jnp.abs(1.0 + 0.1 * jax.random.normal(next(keys), (c,))).astype(jnp.float32)
        return (gamma, beta, mean, var)

    def res_block(cin, cout):
        return {
            "w1": conv_w(cin, cout), "bn1": bn(cout),
            "w2": conv_w(cout, cout), "bn2": bn(cout),
            "w_sc": lin_w(cin, cout), "bn_sc": bn(cout),
        }

    return {
        "conv1_w": conv_w(20, 32),
        "conv1_b": (0.05 * jax.random.normal(next(keys), (32,))).astype(jnp.float32),
        "bn1": bn(32),
        "res1": res_block(32, 64),
        "res2": res_block(64, 128),
        "res3": res_block(128, 256),
        "fc1_w": lin_w(256, 128),
        "fc1_b": (0.05 * jax.random.normal(next(keys), (128,))).astype(jnp.float32),
        "fc2_w": lin_w(128, 7),
        "fc2_b": (0.05 * jax.random.normal(next(keys), (7,))).astype(jnp.float32),
    }


def gesture3dnet_forward(x_ncdhw, params):
    # PyTorch NCDHW -> internal (D, N, H, W, C), bf16 activations.
    x = jnp.transpose(x_ncdhw, (2, 0, 3, 4, 1)).astype(jnp.bfloat16)

    w1, b1 = _fold_conv(params["conv1_w"], params["bn1"],
                        conv_bias=params["conv1_b"])
    x = conv1_bn_relu_pool(x, w1, b1)

    for name in ("res1", "res2", "res3"):
        p = params[name]
        wa, ba = _fold_conv(p["w1"], p["bn1"])
        wb, bb = _fold_conv(p["w2"], p["bn2"])
        wsc, bsc = _fold_shortcut(p["w_sc"], p["bn_sc"])
        x = residual_block_fwd(x, wa, ba, wb, bb, wsc, bsc, stride_hw=2)

    # Dropout3d / Dropout: identity at inference.
    return head_fwd(x, params["fc1_w"], params["fc1_b"],
                    params["fc2_w"], params["fc2_b"])          # (N, 7) f32


if __name__ == "__main__":
    key = jax.random.PRNGKey(0)
    pkey, xkey = jax.random.split(key)
    params = init_params(pkey)

    # Input: batch=2, in_channels=20 (fixed by the model), D=4, H=W=16 (NCDHW).
    x = jax.random.normal(xkey, (2, 20, 4, 16, 16), dtype=jnp.float32)

    fwd = jax.jit(gesture3dnet_forward)
    logits = fwd(x, params)
    jax.block_until_ready(logits)

    assert logits.shape == (2, 7), logits.shape
    assert bool(jnp.all(jnp.isfinite(logits)))
    print("KERNEL_OK")
</pallas_src>

<mosaic_0001>
module attributes {stable_mosaic.version = 11 : i64} {
  func.func @_conv_acc_kernel(%arg0: i32, %arg1: i32, %arg2: memref<1x512x180xbf16, #tpu.memory_space<vmem>>, %arg3: memref<1x180x32xbf16, #tpu.memory_space<vmem>>, %arg4: memref<1x32xf32, #tpu.memory_space<vmem>>, %arg5: memref<1x128x32xbf16, #tpu.memory_space<vmem>>, %arg6: memref<512x32xf32, #tpu.memory_space<vmem>>) attributes {dimension_semantics = [#tpu.dimension_semantics<parallel>, #tpu.dimension_semantics<arbitrary>], iteration_bounds = array<i64: 4, 3>, scalar_prefetch = 0 : i64, scratch_operands = 1 : i64, tpu.core_type = #tpu.core_type<tc>, window_params = [{transform_indices = @transform_0, window_bounds = array<i64: 1, 512, 180>}, {transform_indices = @transform_1, window_bounds = array<i64: 1, 180, 32>}, {pipeline_mode = #tpu.pipeline_mode<synchronous>, transform_indices = @transform_2, window_bounds = array<i64: 1, 32>}, {transform_indices = @transform_3, window_bounds = array<i64: 1, 128, 32>}]} {
    %c0_i32 = arith.constant 0 : i32
    %0 = arith.cmpi eq, %arg1, %c0_i32 : i32
    %1 = arith.extui %0 : i1 to i32
    %c0_i32_0 = arith.constant 0 : i32
    %2 = arith.cmpi ne, %1, %c0_i32_0 : i32
    scf.if %2 {
      %cst_11 = arith.constant 0.000000e+00 : f32
      %14 = vector.broadcast %cst_11 : f32 to vector<512x32xf32>
      %c0_12 = arith.constant 0 : index
      %c0_13 = arith.constant 0 : index
      %15 = vector.load %arg6[%c0_12, %c0_13] : memref<512x32xf32, #tpu.memory_space<vmem>>, vector<512x32xf32>
      tpu.vector_store %arg6[%c0_12, %c0_13], %14 {strides = array<i32>} : memref<512x32xf32, #tpu.memory_space<vmem>>, vector<512x32xf32>,
    } else {
    }
    %c0 = arith.constant 0 : index
    %c0_1 = arith.constant 0 : index
    %3 = vector.load %arg6[%c0, %c0_1] : memref<512x32xf32, #tpu.memory_space<vmem>>, vector<512x32xf32>
    %c0_2 = arith.constant 0 : index
    %c0_3 = arith.constant 0 : index
    %c0_4 = arith.constant 0 : index
    %4 = vector.load %arg2[%c0_2, %c0_3, %c0_4] : memref<1x512x180xbf16, #tpu.memory_space<vmem>>, vector<1x512x180xbf16>
    %5 = vector.shape_cast %4 : vector<1x512x180xbf16> to vector<512x180xbf16>
    %c0_5 = arith.constant 0 : index
    %c0_6 = arith.constant 0 : index
    %c0_7 = arith.constant 0 : index
    %6 = vector.load %arg3[%c0_5, %c0_6, %c0_7] : memref<1x180x32xbf16, #tpu.memory_space<vmem>>, vector<1x180x32xbf16>
    %7 = vector.shape_cast %6 : vector<1x180x32xbf16> to vector<180x32xbf16>
    %cst = arith.constant dense<0.000000e+00> : vector<512x32xf32>
    %8 = tpu.matmul %5, %7, %cst {dimension_numbers = #tpu.dot_dimension_numbers<[1], [0], [0], [1], [0, 0, 1, 1], [], []>} : vector<512x180xbf16>, vector<180x32xbf16>, vector<512x32xf32> -> vector<512x32xf32>
    %9 = arith.addf %3, %8 : vector<512x32xf32>
    %c0_8 = arith.constant 0 : index
    %c0_9 = arith.constant 0 : index
    %10 = vector.load %arg6[%c0_8, %c0_9] : memref<512x32xf32, #tpu.memory_space<vmem>>, vector<512x32xf32>
    tpu.vector_store %arg6[%c0_8, %c0_9], %9 {strides = array<i32>} : memref<512x32xf32, #tpu.memory_space<vmem>>, vector<512x32xf32>,
    %c2_i32 = arith.constant 2 : i32
    %11 = arith.cmpi eq, %arg1, %c2_i32 : i32
    %12 = arith.extui %11 : i1 to i32
    %c0_i32_10 = arith.constant 0 : i32
    %13 = arith.cmpi ne, %12, %c0_i32_10 : i32
    scf.if %13 {
      %c0_11 = arith.constant 0 : index
      %c0_12 = arith.constant 0 : index
      %14 = vector.load %arg6[%c0_11, %c0_12] : memref<512x32xf32, #tpu.memory_space<vmem>>, vector<512x32xf32>
      %15 = vector.extract_strided_slice %14 {offsets = [0, 0], sizes = [128, 32], strides = [1, 1]} : vector<512x32xf32> to vector<128x32xf32>
      %16 = vector.extract_strided_slice %14 {offsets = [128, 0], sizes = [128, 32], strides = [1, 1]} : vector<512x32xf32> to vector<128x32xf32>
      %17 = arith.maximumf %15, %16 : vector<128x32xf32>
      %18 = vector.extract_strided_slice %14 {offsets = [256, 0], sizes = [128, 32], strides = [1, 1]} : vector<512x32xf32> to vector<128x32xf32>
      %19 = arith.maximumf %17, %18 : vector<128x32xf32>
      %20 = vector.extract_strided_slice %14 {offsets = [384, 0], sizes = [128, 32], strides = [1, 1]} : vector<512x32xf32> to vector<128x32xf32>
      %21 = arith.maximumf %19, %20 : vector<128x32xf32>
      %c0_13 = arith.constant 0 : index
      %c0_14 = arith.constant 0 : index
      %22 = vector.load %arg4[%c0_13, %c0_14] : memref<1x32xf32, #tpu.memory_space<vmem>>, vector<1x32xf32>
      %23 = vector.broadcast %22 : vector<1x32xf32> to vector<128x32xf32>
      %24 = arith.addf %21, %23 : vector<128x32xf32>
      %cst_15 = arith.constant 0.000000e+00 : f32
      %25 = vector.broadcast %cst_15 : f32 to vector<128x32xf32>
      %26 = arith.maximumf %24, %25 : vector<128x32xf32>
      %27 = arith.truncf %26 : vector<128x32xf32> to vector<128x32xbf16>
      %c0_16 = arith.constant 0 : index
      %c0_17 = arith.constant 0 : index
      %c0_18 = arith.constant 0 : index
      %28 = vector.load %arg5[%c0_16, %c0_17, %c0_18] : memref<1x128x32xbf16, #tpu.memory_space<vmem>>, vector<1x128x32xbf16>
      %29 = vector.shape_cast %28 : vector<1x128x32xbf16> to vector<128x32xbf16>
      %30 = vector.shape_cast %27 : vector<128x32xbf16> to vector<1x128x32xbf16>
      tpu.vector_store %arg5[%c0_16, %c0_17, %c0_18], %30 {strides = array<i32>} : memref<1x128x32xbf16, #tpu.memory_space<vmem>>, vector<1x128x32xbf16>,
    } else {
    }
    return
  }
  func.func @transform_0(%arg0: i32, %arg1: i32) -> (i32, i32, i32) {
    %0 = arith.addi %arg0, %arg1 : i32
    %c0_i32 = arith.constant 0 : i32
    %c0_i32_0 = arith.constant 0 : i32
    %c0_i32_1 = arith.constant 0 : i32
    return %0, %c0_i32, %c0_i32_0 : i32, i32, i32
  }
  func.func @transform_1(%arg0: i32, %arg1: i32) -> (i32, i32, i32) {
    %c0_i32 = arith.constant 0 : i32
    %c0_i32_0 = arith.constant 0 : i32
    %c0_i32_1 = arith.constant 0 : i32
    return %arg1, %c0_i32, %c0_i32_0 : i32, i32, i32
  }
  func.func @transform_2(%arg0: i32, %arg1: i32) -> (i32, i32) {
    %c0_i32 = arith.constant 0 : i32
    %c0_i32_0 = arith.constant 0 : i32
    %c0_i32_1 = arith.constant 0 : i32
    return %c0_i32, %c0_i32_0 : i32, i32
  }
  func.func @transform_3(%arg0: i32, %arg1: i32) -> (i32, i32, i32) {
    %c0_i32 = arith.constant 0 : i32
    %c0_i32_0 = arith.constant 0 : i32
    %c0_i32_1 = arith.constant 0 : i32
    return %arg0, %c0_i32, %c0_i32_0 : i32, i32, i32
  }
}

module attributes {stable_mosaic.version = 11 : i64} {
  func.func @_conv_acc_kernel(%arg0: i32, %arg1: i32, %arg2: memref<1x32x288xbf16, #tpu.memory_space<vmem>>, %arg3: memref<1x288x64xbf16, #tpu.memory_space<vmem>>, %arg4: memref<1x64xf32, #tpu.memory_space<vmem>>, %arg5: memref<1x32x64xbf16, #tpu.memory_space<vmem>>, %arg6: memref<32x64xf32, #tpu.memory_space<vmem>>) attributes {dimension_semantics = [#tpu.dimension_semantics<parallel>, #tpu.dimension_semantics<arbitrary>], iteration_bounds = array<i64: 4, 3>, scalar_prefetch = 0 : i64, scratch_operands = 1 : i64, tpu.core_type = #tpu.core_type<tc>, window_params = [{transform_indices = @transform_0, window_bounds = array<i64: 1, 32, 288>}, {transform_indices = @transform_1, window_bounds = array<i64: 1, 288, 64>}, {pipeline_mode = #tpu.pipeline_mode<synchronous>, transform_indices = @transform_2, window_bounds = array<i64: 1, 64>}, {transform_indices = @transform_3, window_bounds = array<i64: 1, 32, 64>}]} {
    %c0_i32 = arith.constant 0 : i32
    %0 = arith.cmpi eq, %arg1, %c0_i32 : i32
    %1 = arith.extui %0 : i1 to i32
    %c0_i32_0 = arith.constant 0 : i32
    %2 = arith.cmpi ne, %1, %c0_i32_0 : i32
    scf.if %2 {
      %cst_11 = arith.constant 0.000000e+00 : f32
      %14 = vector.broadcast %cst_11 : f32 to vector<32x64xf32>
      %c0_12 = arith.constant 0 : index
      %c0_13 = arith.constant 0 : index
      %15 = vector.load %arg6[%c0_12, %c0_13] : memref<32x64xf32, #tpu.memory_space<vmem>>, vector<32x64xf32>
      tpu.vector_store %arg6[%c0_12, %c0_13], %14 {strides = array<i32>} : memref<32x64xf32, #tpu.memory_space<vmem>>, vector<32x64xf32>,
    } else {
    }
    %c0 = arith.constant 0 : index
    %c0_1 = arith.constant 0 : index
    %3 = vector.load %arg6[%c0, %c0_1] : memref<32x64xf32, #tpu.memory_space<vmem>>, vector<32x64xf32>
    %c0_2 = arith.constant 0 : index
    %c0_3 = arith.constant 0 : index
    %c0_4 = arith.constant 0 : index
    %4 = vector.load %arg2[%c0_2, %c0_3, %c0_4] : memref<1x32x288xbf16, #tpu.memory_space<vmem>>, vector<1x32x288xbf16>
    %5 = vector.shape_cast %4 : vector<1x32x288xbf16> to vector<32x288xbf16>
    %c0_5 = arith.constant 0 : index
    %c0_6 = arith.constant 0 : index
    %c0_7 = arith.constant 0 : index
    %6 = vector.load %arg3[%c0_5, %c0_6, %c0_7] : memref<1x288x64xbf16, #tpu.memory_space<vmem>>, vector<1x288x64xbf16>
    %7 = vector.shape_cast %6 : vector<1x288x64xbf16> to vector<288x64xbf16>
    %cst = arith.constant dense<0.000000e+00> : vector<32x64xf32>
    %8 = tpu.matmul %5, %7, %cst {dimension_numbers = #tpu.dot_dimension_numbers<[1], [0], [0], [1], [0, 0, 1, 1], [], []>} : vector<32x288xbf16>, vector<288x64xbf16>, vector<32x64xf32> -> vector<32x64xf32>
    %9 = arith.addf %3, %8 : vector<32x64xf32>
    %c0_8 = arith.constant 0 : index
    %c0_9 = arith.constant 0 : index
    %10 = vector.load %arg6[%c0_8, %c0_9] : memref<32x64xf32, #tpu.memory_space<vmem>>, vector<32x64xf32>
    tpu.vector_store %arg6[%c0_8, %c0_9], %9 {strides = array<i32>} : memref<32x64xf32, #tpu.memory_space<vmem>>, vector<32x64xf32>,
    %c2_i32 = arith.constant 2 : i32
    %11 = arith.cmpi eq, %arg1, %c2_i32 : i32
    %12 = arith.extui %11 : i1 to i32
    %c0_i32_10 = arith.constant 0 : i32
    %13 = arith.cmpi ne, %12, %c0_i32_10 : i32
    scf.if %13 {
      %c0_11 = arith.constant 0 : index
      %c0_12 = arith.constant 0 : index
      %14 = vector.load %arg6[%c0_11, %c0_12] : memref<32x64xf32, #tpu.memory_space<vmem>>, vector<32x64xf32>
      %c0_13 = arith.constant 0 : index
      %c0_14 = arith.constant 0 : index
      %15 = vector.load %arg4[%c0_13, %c0_14] : memref<1x64xf32, #tpu.memory_space<vmem>>, vector<1x64xf32>
      %16 = vector.broadcast %15 : vector<1x64xf32> to vector<32x64xf32>
      %17 = arith.addf %14, %16 : vector<32x64xf32>
      %cst_15 = arith.constant 0.000000e+00 : f32
      %18 = vector.broadcast %cst_15 : f32 to vector<32x64xf32>
      %19 = arith.maximumf %17, %18 : vector<32x64xf32>
      %20 = arith.truncf %19 : vector<32x64xf32> to vector<32x64xbf16>
      %c0_16 = arith.constant 0 : index
      %c0_17 = arith.constant 0 : index
      %c0_18 = arith.constant 0 : index
      %21 = vector.load %arg5[%c0_16, %c0_17, %c0_18] : memref<1x32x64xbf16, #tpu.memory_space<vmem>>, vector<1x32x64xbf16>
      %22 = vector.shape_cast %21 : vector<1x32x64xbf16> to vector<32x64xbf16>
      %23 = vector.shape_cast %20 : vector<32x64xbf16> to vector<1x32x64xbf16>
      tpu.vector_store %arg5[%c0_16, %c0_17, %c0_18], %23 {strides = array<i32>} : memref<1x32x64xbf16, #tpu.memory_space<vmem>>, vector<1x32x64xbf16>,
    } else {
    }
    return
  }
  func.func @transform_0(%arg0: i32, %arg1: i32) -> (i32, i32, i32) {
    %0 = arith.addi %arg0, %arg1 : i32
    %c0_i32 = arith.constant 0 : i32
    %c0_i32_0 = arith.constant 0 : i32
    %c0_i32_1 = arith.constant 0 : i32
    return %0, %c0_i32, %c0_i32_0 : i32, i32, i32
  }
  func.func @transform_1(%arg0: i32, %arg1: i32) -> (i32, i32, i32) {
    %c0_i32 = arith.constant 0 : i32
    %c0_i32_0 = arith.constant 0 : i32
    %c0_i32_1 = arith.constant 0 : i32
    return %arg1, %c0_i32, %c0_i32_0 : i32, i32, i32
  }
  func.func @transform_2(%arg0: i32, %arg1: i32) -> (i32, i32) {
    %c0_i32 = arith.constant 0 : i32
    %c0_i32_0 = arith.constant 0 : i32
    %c0_i32_1 = arith.constant 0 : i32
    return %c0_i32, %c0_i32_0 : i32, i32
  }
  func.func @transform_3(%arg0: i32, %arg1: i32) -> (i32, i32, i32) {
    %c0_i32 = arith.constant 0 : i32
    %c0_i32_0 = arith.constant 0 : i32
    %c0_i32_1 = arith.constant 0 : i32
    return %arg0, %c0_i32, %c0_i32_0 : i32, i32, i32
  }
}

module attributes {stable_mosaic.version = 11 : i64} {
  func.func @_conv_acc_res_kernel(%arg0: i32, %arg1: i32, %arg2: memref<1x32x576xbf16, #tpu.memory_space<vmem>>, %arg3: memref<1x576x64xbf16, #tpu.memory_space<vmem>>, %arg4: memref<1x64xf32, #tpu.memory_space<vmem>>, %arg5: memref<1x32x32xbf16, #tpu.memory_space<vmem>>, %arg6: memref<32x64xbf16, #tpu.memory_space<vmem>>, %arg7: memref<1x64xf32, #tpu.memory_space<vmem>>, %arg8: memref<1x32x64xbf16, #tpu.memory_space<vmem>>, %arg9: memref<32x64xf32, #tpu.memory_space<vmem>>) attributes {dimension_semantics = [#tpu.dimension_semantics<parallel>, #tpu.dimension_semantics<arbitrary>], iteration_bounds = array<i64: 4, 3>, scalar_prefetch = 0 : i64, scratch_operands = 1 : i64, tpu.core_type = #tpu.core_type<tc>, window_params = [{transform_indices = @transform_0, window_bounds = array<i64: 1, 32, 576>}, {transform_indices = @transform_1, window_bounds = array<i64: 1, 576, 64>}, {pipeline_mode = #tpu.pipeline_mode<synchronous>, transform_indices = @transform_2, window_bounds = array<i64: 1, 64>}, {transform_indices = @transform_3, window_bounds = array<i64: 1, 32, 32>}, {pipeline_mode = #tpu.pipeline_mode<synchronous>, transform_indices = @transform_4, window_bounds = array<i64: 32, 64>}, {pipeline_mode = #tpu.pipeline_mode<synchronous>, transform_indices = @transform_5, window_bounds = array<i64: 1, 64>}, {transform_indices = @transform_6, window_bounds = array<i64: 1, 32, 64>}]} {
    %c0_i32 = arith.constant 0 : i32
    %0 = arith.cmpi eq, %arg1, %c0_i32 : i32
    %1 = arith.extui %0 : i1 to i32
    %c0_i32_0 = arith.constant 0 : i32
    %2 = arith.cmpi ne, %1, %c0_i32_0 : i32
    scf.if %2 {
      %cst_11 = arith.constant 0.000000e+00 : f32
      %14 = vector.broadcast %cst_11 : f32 to vector<32x64xf32>
      %c0_12 = arith.constant 0 : index
      %c0_13 = arith.constant 0 : index
      %15 = vector.load %arg9[%c0_12, %c0_13] : memref<32x64xf32, #tpu.memory_space<vmem>>, vector<32x64xf32>
      tpu.vector_store %arg9[%c0_12, %c0_13], %14 {strides = array<i32>} : memref<32x64xf32, #tpu.memory_space<vmem>>, vector<32x64xf32>,
    } else {
    }
    %c0 = arith.constant 0 : index
    %c0_1 = arith.constant 0 : index
    %3 = vector.load %arg9[%c0, %c0_1] : memref<32x64xf32, #tpu.memory_space<vmem>>, vector<32x64xf32>
    %c0_2 = arith.constant 0 : index
    %c0_3 = arith.constant 0 : index
    %c0_4 = arith.constant 0 : index
    %4 = vector.load %arg2[%c0_2, %c0_3, %c0_4] : memref<1x32x576xbf16, #tpu.memory_space<vmem>>, vector<1x32x576xbf16>
    %5 = vector.shape_cast %4 : vector<1x32x576xbf16> to vector<32x576xbf16>
    %c0_5 = arith.constant 0 : index
    %c0_6 = arith.constant 0 : index
    %c0_7 = arith.constant 0 : index
    %6 = vector.load %arg3[%c0_5, %c0_6, %c0_7] : memref<1x576x64xbf16, #tpu.memory_space<vmem>>, vector<1x576x64xbf16>
    %7 = vector.shape_cast %6 : vector<1x576x64xbf16> to vector<576x64xbf16>
    %cst = arith.constant dense<0.000000e+00> : vector<32x64xf32>
    %8 = tpu.matmul %5, %7, %cst {dimension_numbers = #tpu.dot_dimension_numbers<[1], [0], [0], [1], [0, 0, 1, 1], [], []>} : vector<32x576xbf16>, vector<576x64xbf16>, vector<32x64xf32> -> vector<32x64xf32>
    %9 = arith.addf %3, %8 : vector<32x64xf32>
    %c0_8 = arith.constant 0 : index
    %c0_9 = arith.constant 0 : index
    %10 = vector.load %arg9[%c0_8, %c0_9] : memref<32x64xf32, #tpu.memory_space<vmem>>, vector<32x64xf32>
    tpu.vector_store %arg9[%c0_8, %c0_9], %9 {strides = array<i32>} : memref<32x64xf32, #tpu.memory_space<vmem>>, vector<32x64xf32>,
    %c2_i32 = arith.constant 2 : i32
    %11 = arith.cmpi eq, %arg1, %c2_i32 : i32
    %12 = arith.extui %11 : i1 to i32
    %c0_i32_10 = arith.constant 0 : i32
    %13 = arith.cmpi ne, %12, %c0_i32_10 : i32
    scf.if %13 {
      %c0_11 = arith.constant 0 : index
      %c0_12 = arith.constant 0 : index
      %c0_13 = arith.constant 0 : index
      %14 = vector.load %arg5[%c0_11, %c0_12, %c0_13] : memref<1x32x32xbf16, #tpu.memory_space<vmem>>, vector<1x32x32xbf16>
      %15 = vector.shape_cast %14 : vector<1x32x32xbf16> to vector<32x32xbf16>
      %c0_14 = arith.constant 0 : index
      %c0_15 = arith.constant 0 : index
      %16 = vector.load %arg6[%c0_14, %c0_15] : memref<32x64xbf16, #tpu.memory_space<vmem>>, vector<32x64xbf16>
      %cst_16 = arith.constant dense<0.000000e+00> : vector<32x64xf32>
      %17 = tpu.matmul %15, %16, %cst_16 {dimension_numbers = #tpu.dot_dimension_numbers<[1], [0], [0], [1], [0, 0, 1, 1], [], []>} : vector<32x32xbf16>, vector<32x64xbf16>, vector<32x64xf32> -> vector<32x64xf32>
      %c0_17 = arith.constant 0 : index
      %c0_18 = arith.constant 0 : index
      %18 = vector.load %arg9[%c0_17, %c0_18] : memref<32x64xf32, #tpu.memory_space<vmem>>, vector<32x64xf32>
      %c0_19 = arith.constant 0 : index
      %c0_20 = arith.constant 0 : index
      %19 = vector.load %arg4[%c0_19, %c0_20] : memref<1x64xf32, #tpu.memory_space<vmem>>, vector<1x64xf32>
      %20 = vector.broadcast %19 : vector<1x64xf32> to vector<32x64xf32>
      %21 = arith.addf %18, %20 : vector<32x64xf32>
      %22 = arith.addf %21, %17 : vector<32x64xf32>
      %c0_21 = arith.constant 0 : index
      %c0_22 = arith.constant 0 : index
      %23 = vector.load %arg7[%c0_21, %c0_22] : memref<1x64xf32, #tpu.memory_space<vmem>>, vector<1x64xf32>
      %24 = vector.broadcast %23 : vector<1x64xf32> to vector<32x64xf32>
      %25 = arith.addf %22, %24 : vector<32x64xf32>
      %cst_23 = arith.constant 0.000000e+00 : f32
      %26 = vector.broadcast %cst_23 : f32 to vector<32x64xf32>
      %27 = arith.maximumf %25, %26 : vector<32x64xf32>
      %28 = arith.truncf %27 : vector<32x64xf32> to vector<32x64xbf16>
      %c0_24 = arith.constant 0 : index
      %c0_25 = arith.constant 0 : index
      %c0_26 = arith.constant 0 : index
      %29 = vector.load %arg8[%c0_24, %c0_25, %c0_26] : memref<1x32x64xbf16, #tpu.memory_space<vmem>>, vector<1x32x64xbf16>
      %30 = vector.shape_cast %29 : vector<1x32x64xbf16> to vector<32x64xbf16>
      %31 = vector.shape_cast %28 : vector<32x64xbf16> to vector<1x32x64xbf16>
      tpu.vector_store %arg8[%c0_24, %c0_25, %c0_26], %31 {strides = array<i32>} : memref<1x32x64xbf16, #tpu.memory_space<vmem>>, vector<1x32x64xbf16>,
    } else {
    }
    return
  }
  func.func @transform_0(%arg0: i32, %arg1: i32) -> (i32, i32, i32) {
    %0 = arith.addi %arg0, %arg1 : i32
    %c0_i32 = arith.constant 0 : i32
    %c0_i32_0 = arith.constant 0 : i32
    %c0_i32_1 = arith.constant 0 : i32
    return %0, %c0_i32, %c0_i32_0 : i32, i32, i32
  }
  func.func @transform_1(%arg0: i32, %arg1: i32) -> (i32, i32, i32) {
    %c0_i32 = arith.constant 0 : i32
    %c0_i32_0 = arith.constant 0 : i32
    %c0_i32_1 = arith.constant 0 : i32
    return %arg1, %c0_i32, %c0_i32_0 : i32, i32, i32
  }
  func.func @transform_2(%arg0: i32, %arg1: i32) -> (i32, i32) {
    %c0_i32 = arith.constant 0 : i32
    %c0_i32_0 = arith.constant 0 : i32
    %c0_i32_1 = arith.constant 0 : i32
    return %c0_i32, %c0_i32_0 : i32, i32
  }
  func.func @transform_3(%arg0: i32, %arg1: i32) -> (i32, i32, i32) {
    %c0_i32 = arith.constant 0 : i32
    %c0_i32_0 = arith.constant 0 : i32
    %c0_i32_1 = arith.constant 0 : i32
    return %arg0, %c0_i32, %c0_i32_0 : i32, i32, i32
  }
  func.func @transform_4(%arg0: i32, %arg1: i32) -> (i32, i32) {
    %c0_i32 = arith.constant 0 : i32
    %c0_i32_0 = arith.constant 0 : i32
    %c0_i32_1 = arith.constant 0 : i32
    return %c0_i32, %c0_i32_0 : i32, i32
  }
  func.func @transform_5(%arg0: i32, %arg1: i32) -> (i32, i32) {
    %c0_i32 = arith.constant 0 : i32
    %c0_i32_0 = arith.constant 0 : i32
    %c0_i32_1 = arith.constant 0 : i32
    return %c0_i32, %c0_i32_0 : i32, i32
  }
  func.func @transform_6(%arg0: i32, %arg1: i32) -> (i32, i32, i32) {
    %c0_i32 = arith.constant 0 : i32
    %c0_i32_0 = arith.constant 0 : i32
    %c0_i32_1 = arith.constant 0 : i32
    return %arg0, %c0_i32, %c0_i32_0 : i32, i32, i32
  }
}

module attributes {stable_mosaic.version = 11 : i64} {
  func.func @_conv_acc_kernel(%arg0: i32, %arg1: i32, %arg2: memref<1x8x576xbf16, #tpu.memory_space<vmem>>, %arg3: memref<1x576x128xbf16, #tpu.memory_space<vmem>>, %arg4: memref<1x128xf32, #tpu.memory_space<vmem>>, %arg5: memref<1x8x128xbf16, #tpu.memory_space<vmem>>, %arg6: memref<8x128xf32, #tpu.memory_space<vmem>>) attributes {dimension_semantics = [#tpu.dimension_semantics<parallel>, #tpu.dimension_semantics<arbitrary>], iteration_bounds = array<i64: 4, 3>, scalar_prefetch = 0 : i64, scratch_operands = 1 : i64, tpu.core_type = #tpu.core_type<tc>, window_params = [{transform_indices = @transform_0, window_bounds = array<i64: 1, 8, 576>}, {transform_indices = @transform_1, window_bounds = array<i64: 1, 576, 128>}, {pipeline_mode = #tpu.pipeline_mode<synchronous>, transform_indices = @transform_2, window_bounds = array<i64: 1, 128>}, {transform_indices = @transform_3, window_bounds = array<i64: 1, 8, 128>}]} {
    %c0_i32 = arith.constant 0 : i32
    %0 = arith.cmpi eq, %arg1, %c0_i32 : i32
    %1 = arith.extui %0 : i1 to i32
    %c0_i32_0 = arith.constant 0 : i32
    %2 = arith.cmpi ne, %1, %c0_i32_0 : i32
    scf.if %2 {
      %cst_11 = arith.constant 0.000000e+00 : f32
      %14 = vector.broadcast %cst_11 : f32 to vector<8x128xf32>
      %c0_12 = arith.constant 0 : index
      %c0_13 = arith.constant 0 : index
      %15 = vector.load %arg6[%c0_12, %c0_13] : memref<8x128xf32, #tpu.memory_space<vmem>>, vector<8x128xf32>
      tpu.vector_store %arg6[%c0_12, %c0_13], %14 {strides = array<i32>} : memref<8x128xf32, #tpu.memory_space<vmem>>, vector<8x128xf32>,
    } else {
    }
    %c0 = arith.constant 0 : index
    %c0_1 = arith.constant 0 : index
    %3 = vector.load %arg6[%c0, %c0_1] : memref<8x128xf32, #tpu.memory_space<vmem>>, vector<8x128xf32>
    %c0_2 = arith.constant 0 : index
    %c0_3 = arith.constant 0 : index
    %c0_4 = arith.constant 0 : index
    %4 = vector.load %arg2[%c0_2, %c0_3, %c0_4] : memref<1x8x576xbf16, #tpu.memory_space<vmem>>, vector<1x8x576xbf16>
    %5 = vector.shape_cast %4 : vector<1x8x576xbf16> to vector<8x576xbf16>
    %c0_5 = arith.constant 0 : index
    %c0_6 = arith.constant 0 : index
    %c0_7 = arith.constant 0 : index
    %6 = vector.load %arg3[%c0_5, %c0_6, %c0_7] : memref<1x576x128xbf16, #tpu.memory_space<vmem>>, vector<1x576x128xbf16>
    %7 = vector.shape_cast %6 : vector<1x576x128xbf16> to vector<576x128xbf16>
    %cst = arith.constant dense<0.000000e+00> : vector<8x128xf32>
    %8 = tpu.matmul %5, %7, %cst {dimension_numbers = #tpu.dot_dimension_numbers<[1], [0], [0], [1], [0, 0, 1, 1], [], []>} : vector<8x576xbf16>, vector<576x128xbf16>, vector<8x128xf32> -> vector<8x128xf32>
    %9 = arith.addf %3, %8 : vector<8x128xf32>
    %c0_8 = arith.constant 0 : index
    %c0_9 = arith.constant 0 : index
    %10 = vector.load %arg6[%c0_8, %c0_9] : memref<8x128xf32, #tpu.memory_space<vmem>>, vector<8x128xf32>
    tpu.vector_store %arg6[%c0_8, %c0_9], %9 {strides = array<i32>} : memref<8x128xf32, #tpu.memory_space<vmem>>, vector<8x128xf32>,
    %c2_i32 = arith.constant 2 : i32
    %11 = arith.cmpi eq, %arg1, %c2_i32 : i32
    %12 = arith.extui %11 : i1 to i32
    %c0_i32_10 = arith.constant 0 : i32
    %13 = arith.cmpi ne, %12, %c0_i32_10 : i32
    scf.if %13 {
      %c0_11 = arith.constant 0 : index
      %c0_12 = arith.constant 0 : index
      %14 = vector.load %arg6[%c0_11, %c0_12] : memref<8x128xf32, #tpu.memory_space<vmem>>, vector<8x128xf32>
      %c0_13 = arith.constant 0 : index
      %c0_14 = arith.constant 0 : index
      %15 = vector.load %arg4[%c0_13, %c0_14] : memref<1x128xf32, #tpu.memory_space<vmem>>, vector<1x128xf32>
      %16 = vector.broadcast %15 : vector<1x128xf32> to vector<8x128xf32>
      %17 = arith.addf %14, %16 : vector<8x128xf32>
      %cst_15 = arith.constant 0.000000e+00 : f32
      %18 = vector.broadcast %cst_15 : f32 to vector<8x128xf32>
      %19 = arith.maximumf %17, %18 : vector<8x128xf32>
      %20 = arith.truncf %19 : vector<8x128xf32> to vector<8x128xbf16>
      %c0_16 = arith.constant 0 : index
      %c0_17 = arith.constant 0 : index
      %c0_18 = arith.constant 0 : index
      %21 = vector.load %arg5[%c0_16, %c0_17, %c0_18] : memref<1x8x128xbf16, #tpu.memory_space<vmem>>, vector<1x8x128xbf16>
      %22 = vector.shape_cast %21 : vector<1x8x128xbf16> to vector<8x128xbf16>
      %23 = vector.shape_cast %20 : vector<8x128xbf16> to vector<1x8x128xbf16>
      tpu.vector_store %arg5[%c0_16, %c0_17, %c0_18], %23 {strides = array<i32>} : memref<1x8x128xbf16, #tpu.memory_space<vmem>>, vector<1x8x128xbf16>,
    } else {
    }
    return
  }
  func.func @transform_0(%arg0: i32, %arg1: i32) -> (i32, i32, i32) {
    %0 = arith.addi %arg0, %arg1 : i32
    %c0_i32 = arith.constant 0 : i32
    %c0_i32_0 = arith.constant 0 : i32
    %c0_i32_1 = arith.constant 0 : i32
    return %0, %c0_i32, %c0_i32_0 : i32, i32, i32
  }
  func.func @transform_1(%arg0: i32, %arg1: i32) -> (i32, i32, i32) {
    %c0_i32 = arith.constant 0 : i32
    %c0_i32_0 = arith.constant 0 : i32
    %c0_i32_1 = arith.constant 0 : i32
    return %arg1, %c0_i32, %c0_i32_0 : i32, i32, i32
  }
  func.func @transform_2(%arg0: i32, %arg1: i32) -> (i32, i32) {
    %c0_i32 = arith.constant 0 : i32
    %c0_i32_0 = arith.constant 0 : i32
    %c0_i32_1 = arith.constant 0 : i32
    return %c0_i32, %c0_i32_0 : i32, i32
  }
  func.func @transform_3(%arg0: i32, %arg1: i32) -> (i32, i32, i32) {
    %c0_i32 = arith.constant 0 : i32
    %c0_i32_0 = arith.constant 0 : i32
    %c0_i32_1 = arith.constant 0 : i32
    return %arg0, %c0_i32, %c0_i32_0 : i32, i32, i32
  }
}

module attributes {stable_mosaic.version = 11 : i64} {
  func.func @_conv_acc_res_kernel(%arg0: i32, %arg1: i32, %arg2: memref<1x8x1152xbf16, #tpu.memory_space<vmem>>, %arg3: memref<1x1152x128xbf16, #tpu.memory_space<vmem>>, %arg4: memref<1x128xf32, #tpu.memory_space<vmem>>, %arg5: memref<1x8x64xbf16, #tpu.memory_space<vmem>>, %arg6: memref<64x128xbf16, #tpu.memory_space<vmem>>, %arg7: memref<1x128xf32, #tpu.memory_space<vmem>>, %arg8: memref<1x8x128xbf16, #tpu.memory_space<vmem>>, %arg9: memref<8x128xf32, #tpu.memory_space<vmem>>) attributes {dimension_semantics = [#tpu.dimension_semantics<parallel>, #tpu.dimension_semantics<arbitrary>], iteration_bounds = array<i64: 4, 3>, scalar_prefetch = 0 : i64, scratch_operands = 1 : i64, tpu.core_type = #tpu.core_type<tc>, window_params = [{transform_indices = @transform_0, window_bounds = array<i64: 1, 8, 1152>}, {transform_indices = @transform_1, window_bounds = array<i64: 1, 1152, 128>}, {pipeline_mode = #tpu.pipeline_mode<synchronous>, transform_indices = @transform_2, window_bounds = array<i64: 1, 128>}, {transform_indices = @transform_3, window_bounds = array<i64: 1, 8, 64>}, {pipeline_mode = #tpu.pipeline_mode<synchronous>, transform_indices = @transform_4, window_bounds = array<i64: 64, 128>}, {pipeline_mode = #tpu.pipeline_mode<synchronous>, transform_indices = @transform_5, window_bounds = array<i64: 1, 128>}, {transform_indices = @transform_6, window_bounds = array<i64: 1, 8, 128>}]} {
    %c0_i32 = arith.constant 0 : i32
    %0 = arith.cmpi eq, %arg1, %c0_i32 : i32
    %1 = arith.extui %0 : i1 to i32
    %c0_i32_0 = arith.constant 0 : i32
    %2 = arith.cmpi ne, %1, %c0_i32_0 : i32
    scf.if %2 {
      %cst_11 = arith.constant 0.000000e+00 : f32
      %14 = vector.broadcast %cst_11 : f32 to vector<8x128xf32>
      %c0_12 = arith.constant 0 : index
      %c0_13 = arith.constant 0 : index
      %15 = vector.load %arg9[%c0_12, %c0_13] : memref<8x128xf32, #tpu.memory_space<vmem>>, vector<8x128xf32>
      tpu.vector_store %arg9[%c0_12, %c0_13], %14 {strides = array<i32>} : memref<8x128xf32, #tpu.memory_space<vmem>>, vector<8x128xf32>,
    } else {
    }
    %c0 = arith.constant 0 : index
    %c0_1 = arith.constant 0 : index
    %3 = vector.load %arg9[%c0, %c0_1] : memref<8x128xf32, #tpu.memory_space<vmem>>, vector<8x128xf32>
    %c0_2 = arith.constant 0 : index
    %c0_3 = arith.constant 0 : index
    %c0_4 = arith.constant 0 : index
    %4 = vector.load %arg2[%c0_2, %c0_3, %c0_4] : memref<1x8x1152xbf16, #tpu.memory_space<vmem>>, vector<1x8x1152xbf16>
    %5 = vector.shape_cast %4 : vector<1x8x1152xbf16> to vector<8x1152xbf16>
    %c0_5 = arith.constant 0 : index
    %c0_6 = arith.constant 0 : index
    %c0_7 = arith.constant 0 : index
    %6 = vector.load %arg3[%c0_5, %c0_6, %c0_7] : memref<1x1152x128xbf16, #tpu.memory_space<vmem>>, vector<1x1152x128xbf16>
    %7 = vector.shape_cast %6 : vector<1x1152x128xbf16> to vector<1152x128xbf16>
    %cst = arith.constant dense<0.000000e+00> : vector<8x128xf32>
    %8 = tpu.matmul %5, %7, %cst {dimension_numbers = #tpu.dot_dimension_numbers<[1], [0], [0], [1], [0, 0, 1, 1], [], []>} : vector<8x1152xbf16>, vector<1152x128xbf16>, vector<8x128xf32> -> vector<8x128xf32>
    %9 = arith.addf %3, %8 : vector<8x128xf32>
    %c0_8 = arith.constant 0 : index
    %c0_9 = arith.constant 0 : index
    %10 = vector.load %arg9[%c0_8, %c0_9] : memref<8x128xf32, #tpu.memory_space<vmem>>, vector<8x128xf32>
    tpu.vector_store %arg9[%c0_8, %c0_9], %9 {strides = array<i32>} : memref<8x128xf32, #tpu.memory_space<vmem>>, vector<8x128xf32>,
    %c2_i32 = arith.constant 2 : i32
    %11 = arith.cmpi eq, %arg1, %c2_i32 : i32
    %12 = arith.extui %11 : i1 to i32
    %c0_i32_10 = arith.constant 0 : i32
    %13 = arith.cmpi ne, %12, %c0_i32_10 : i32
    scf.if %13 {
      %c0_11 = arith.constant 0 : index
      %c0_12 = arith.constant 0 : index
      %c0_13 = arith.constant 0 : index
      %14 = vector.load %arg5[%c0_11, %c0_12, %c0_13] : memref<1x8x64xbf16, #tpu.memory_space<vmem>>, vector<1x8x64xbf16>
      %15 = vector.shape_cast %14 : vector<1x8x64xbf16> to vector<8x64xbf16>
      %c0_14 = arith.constant 0 : index
      %c0_15 = arith.constant 0 : index
      %16 = vector.load %arg6[%c0_14, %c0_15] : memref<64x128xbf16, #tpu.memory_space<vmem>>, vector<64x128xbf16>
      %cst_16 = arith.constant dense<0.000000e+00> : vector<8x128xf32>
      %17 = tpu.matmul %15, %16, %cst_16 {dimension_numbers = #tpu.dot_dimension_numbers<[1], [0], [0], [1], [0, 0, 1, 1], [], []>} : vector<8x64xbf16>, vector<64x128xbf16>, vector<8x128xf32> -> vector<8x128xf32>
      %c0_17 = arith.constant 0 : index
      %c0_18 = arith.constant 0 : index
      %18 = vector.load %arg9[%c0_17, %c0_18] : memref<8x128xf32, #tpu.memory_space<vmem>>, vector<8x128xf32>
      %c0_19 = arith.constant 0 : index
      %c0_20 = arith.constant 0 : index
      %19 = vector.load %arg4[%c0_19, %c0_20] : memref<1x128xf32, #tpu.memory_space<vmem>>, vector<1x128xf32>
      %20 = vector.broadcast %19 : vector<1x128xf32> to vector<8x128xf32>
      %21 = arith.addf %18, %20 : vector<8x128xf32>
      %22 = arith.addf %21, %17 : vector<8x128xf32>
      %c0_21 = arith.constant 0 : index
      %c0_22 = arith.constant 0 : index
      %23 = vector.load %arg7[%c0_21, %c0_22] : memref<1x128xf32, #tpu.memory_space<vmem>>, vector<1x128xf32>
      %24 = vector.broadcast %23 : vector<1x128xf32> to vector<8x128xf32>
      %25 = arith.addf %22, %24 : vector<8x128xf32>
      %cst_23 = arith.constant 0.000000e+00 : f32
      %26 = vector.broadcast %cst_23 : f32 to vector<8x128xf32>
      %27 = arith.maximumf %25, %26 : vector<8x128xf32>
      %28 = arith.truncf %27 : vector<8x128xf32> to vector<8x128xbf16>
      %c0_24 = arith.constant 0 : index
      %c0_25 = arith.constant 0 : index
      %c0_26 = arith.constant 0 : index
      %29 = vector.load %arg8[%c0_24, %c0_25, %c0_26] : memref<1x8x128xbf16, #tpu.memory_space<vmem>>, vector<1x8x128xbf16>
      %30 = vector.shape_cast %29 : vector<1x8x128xbf16> to vector<8x128xbf16>
      %31 = vector.shape_cast %28 : vector<8x128xbf16> to vector<1x8x128xbf16>
      tpu.vector_store %arg8[%c0_24, %c0_25, %c0_26], %31 {strides = array<i32>} : memref<1x8x128xbf16, #tpu.memory_space<vmem>>, vector<1x8x128xbf16>,
    } else {
    }
    return
  }
  func.func @transform_0(%arg0: i32, %arg1: i32) -> (i32, i32, i32) {
    %0 = arith.addi %arg0, %arg1 : i32
    %c0_i32 = arith.constant 0 : i32
    %c0_i32_0 = arith.constant 0 : i32
    %c0_i32_1 = arith.constant 0 : i32
    return %0, %c0_i32, %c0_i32_0 : i32, i32, i32
  }
  func.func @transform_1(%arg0: i32, %arg1: i32) -> (i32, i32, i32) {
    %c0_i32 = arith.constant 0 : i32
    %c0_i32_0 = arith.constant 0 : i32
    %c0_i32_1 = arith.constant 0 : i32
    return %arg1, %c0_i32, %c0_i32_0 : i32, i32, i32
  }
  func.func @transform_2(%arg0: i32, %arg1: i32) -> (i32, i32) {
    %c0_i32 = arith.constant 0 : i32
    %c0_i32_0 = arith.constant 0 : i32
    %c0_i32_1 = arith.constant 0 : i32
    return %c0_i32, %c0_i32_0 : i32, i32
  }
  func.func @transform_3(%arg0: i32, %arg1: i32) -> (i32, i32, i32) {
    %c0_i32 = arith.constant 0 : i32
    %c0_i32_0 = arith.constant 0 : i32
    %c0_i32_1 = arith.constant 0 : i32
    return %arg0, %c0_i32, %c0_i32_0 : i32, i32, i32
  }
  func.func @transform_4(%arg0: i32, %arg1: i32) -> (i32, i32) {
    %c0_i32 = arith.constant 0 : i32
    %c0_i32_0 = arith.constant 0 : i32
    %c0_i32_1 = arith.constant 0 : i32
    return %c0_i32, %c0_i32_0 : i32, i32
  }
  func.func @transform_5(%arg0: i32, %arg1: i32) -> (i32, i32) {
    %c0_i32 = arith.constant 0 : i32
    %c0_i32_0 = arith.constant 0 : i32
    %c0_i32_1 = arith.constant 0 : i32
    return %c0_i32, %c0_i32_0 : i32, i32
  }
  func.func @transform_6(%arg0: i32, %arg1: i32) -> (i32, i32, i32) {
    %c0_i32 = arith.constant 0 : i32
    %c0_i32_0 = arith.constant 0 : i32
    %c0_i32_1 = arith.constant 0 : i32
    return %arg0, %c0_i32, %c0_i32_0 : i32, i32, i32
  }
}

module attributes {stable_mosaic.version = 11 : i64} {
  func.func @_conv_acc_kernel(%arg0: i32, %arg1: i32, %arg2: memref<1x2x1152xbf16, #tpu.memory_space<vmem>>, %arg3: memref<1x1152x256xbf16, #tpu.memory_space<vmem>>, %arg4: memref<1x256xf32, #tpu.memory_space<vmem>>, %arg5: memref<1x2x256xbf16, #tpu.memory_space<vmem>>, %arg6: memref<2x256xf32, #tpu.memory_space<vmem>>) attributes {dimension_semantics = [#tpu.dimension_semantics<parallel>, #tpu.dimension_semantics<arbitrary>], iteration_bounds = array<i64: 4, 3>, scalar_prefetch = 0 : i64, scratch_operands = 1 : i64, tpu.core_type = #tpu.core_type<tc>, window_params = [{transform_indices = @transform_0, window_bounds = array<i64: 1, 2, 1152>}, {transform_indices = @transform_1, window_bounds = array<i64: 1, 1152, 256>}, {pipeline_mode = #tpu.pipeline_mode<synchronous>, transform_indices = @transform_2, window_bounds = array<i64: 1, 256>}, {transform_indices = @transform_3, window_bounds = array<i64: 1, 2, 256>}]} {
    %c0_i32 = arith.constant 0 : i32
    %0 = arith.cmpi eq, %arg1, %c0_i32 : i32
    %1 = arith.extui %0 : i1 to i32
    %c0_i32_0 = arith.constant 0 : i32
    %2 = arith.cmpi ne, %1, %c0_i32_0 : i32
    scf.if %2 {
      %cst_11 = arith.constant 0.000000e+00 : f32
      %14 = vector.broadcast %cst_11 : f32 to vector<2x256xf32>
      %c0_12 = arith.constant 0 : index
      %c0_13 = arith.constant 0 : index
      %15 = vector.load %arg6[%c0_12, %c0_13] : memref<2x256xf32, #tpu.memory_space<vmem>>, vector<2x256xf32>
      tpu.vector_store %arg6[%c0_12, %c0_13], %14 {strides = array<i32>} : memref<2x256xf32, #tpu.memory_space<vmem>>, vector<2x256xf32>,
    } else {
    }
    %c0 = arith.constant 0 : index
    %c0_1 = arith.constant 0 : index
    %3 = vector.load %arg6[%c0, %c0_1] : memref<2x256xf32, #tpu.memory_space<vmem>>, vector<2x256xf32>
    %c0_2 = arith.constant 0 : index
    %c0_3 = arith.constant 0 : index
    %c0_4 = arith.constant 0 : index
    %4 = vector.load %arg2[%c0_2, %c0_3, %c0_4] : memref<1x2x1152xbf16, #tpu.memory_space<vmem>>, vector<1x2x1152xbf16>
    %5 = vector.shape_cast %4 : vector<1x2x1152xbf16> to vector<2x1152xbf16>
    %c0_5 = arith.constant 0 : index
    %c0_6 = arith.constant 0 : index
    %c0_7 = arith.constant 0 : index
    %6 = vector.load %arg3[%c0_5, %c0_6, %c0_7] : memref<1x1152x256xbf16, #tpu.memory_space<vmem>>, vector<1x1152x256xbf16>
    %7 = vector.shape_cast %6 : vector<1x1152x256xbf16> to vector<1152x256xbf16>
    %cst = arith.constant dense<0.000000e+00> : vector<2x256xf32>
    %8 = tpu.matmul %5, %7, %cst {dimension_numbers = #tpu.dot_dimension_numbers<[1], [0], [0], [1], [0, 0, 1, 1], [], []>} : vector<2x1152xbf16>, vector<1152x256xbf16>, vector<2x256xf32> -> vector<2x256xf32>
    %9 = arith.addf %3, %8 : vector<2x256xf32>
    %c0_8 = arith.constant 0 : index
    %c0_9 = arith.constant 0 : index
    %10 = vector.load %arg6[%c0_8, %c0_9] : memref<2x256xf32, #tpu.memory_space<vmem>>, vector<2x256xf32>
    tpu.vector_store %arg6[%c0_8, %c0_9], %9 {strides = array<i32>} : memref<2x256xf32, #tpu.memory_space<vmem>>, vector<2x256xf32>,
    %c2_i32 = arith.constant 2 : i32
    %11 = arith.cmpi eq, %arg1, %c2_i32 : i32
    %12 = arith.extui %11 : i1 to i32
    %c0_i32_10 = arith.constant 0 : i32
    %13 = arith.cmpi ne, %12, %c0_i32_10 : i32
    scf.if %13 {
      %c0_11 = arith.constant 0 : index
      %c0_12 = arith.constant 0 : index
      %14 = vector.load %arg6[%c0_11, %c0_12] : memref<2x256xf32, #tpu.memory_space<vmem>>, vector<2x256xf32>
      %c0_13 = arith.constant 0 : index
      %c0_14 = arith.constant 0 : index
      %15 = vector.load %arg4[%c0_13, %c0_14] : memref<1x256xf32, #tpu.memory_space<vmem>>, vector<1x256xf32>
      %16 = vector.broadcast %15 : vector<1x256xf32> to vector<2x256xf32>
      %17 = arith.addf %14, %16 : vector<2x256xf32>
      %cst_15 = arith.constant 0.000000e+00 : f32
      %18 = vector.broadcast %cst_15 : f32 to vector<2x256xf32>
      %19 = arith.maximumf %17, %18 : vector<2x256xf32>
      %20 = arith.truncf %19 : vector<2x256xf32> to vector<2x256xbf16>
      %c0_16 = arith.constant 0 : index
      %c0_17 = arith.constant 0 : index
      %c0_18 = arith.constant 0 : index
      %21 = vector.load %arg5[%c0_16, %c0_17, %c0_18] : memref<1x2x256xbf16, #tpu.memory_space<vmem>>, vector<1x2x256xbf16>
      %22 = vector.shape_cast %21 : vector<1x2x256xbf16> to vector<2x256xbf16>
      %23 = vector.shape_cast %20 : vector<2x256xbf16> to vector<1x2x256xbf16>
      tpu.vector_store %arg5[%c0_16, %c0_17, %c0_18], %23 {strides = array<i32>} : memref<1x2x256xbf16, #tpu.memory_space<vmem>>, vector<1x2x256xbf16>,
    } else {
    }
    return
  }
  func.func @transform_0(%arg0: i32, %arg1: i32) -> (i32, i32, i32) {
    %0 = arith.addi %arg0, %arg1 : i32
    %c0_i32 = arith.constant 0 : i32
    %c0_i32_0 = arith.constant 0 : i32
    %c0_i32_1 = arith.constant 0 : i32
    return %0, %c0_i32, %c0_i32_0 : i32, i32, i32
  }
  func.func @transform_1(%arg0: i32, %arg1: i32) -> (i32, i32, i32) {
    %c0_i32 = arith.constant 0 : i32
    %c0_i32_0 = arith.constant 0 : i32
    %c0_i32_1 = arith.constant 0 : i32
    return %arg1, %c0_i32, %c0_i32_0 : i32, i32, i32
  }
  func.func @transform_2(%arg0: i32, %arg1: i32) -> (i32, i32) {
    %c0_i32 = arith.constant 0 : i32
    %c0_i32_0 = arith.constant 0 : i32
    %c0_i32_1 = arith.constant 0 : i32
    return %c0_i32, %c0_i32_0 : i32, i32
  }
  func.func @transform_3(%arg0: i32, %arg1: i32) -> (i32, i32, i32) {
    %c0_i32 = arith.constant 0 : i32
    %c0_i32_0 = arith.constant 0 : i32
    %c0_i32_1 = arith.constant 0 : i32
    return %arg0, %c0_i32, %c0_i32_0 : i32, i32, i32
  }
}

module attributes {stable_mosaic.version = 11 : i64} {
  func.func @_conv_acc_res_kernel(%arg0: i32, %arg1: i32, %arg2: memref<1x2x2304xbf16, #tpu.memory_space<vmem>>, %arg3: memref<1x2304x256xbf16, #tpu.memory_space<vmem>>, %arg4: memref<1x256xf32, #tpu.memory_space<vmem>>, %arg5: memref<1x2x128xbf16, #tpu.memory_space<vmem>>, %arg6: memref<128x256xbf16, #tpu.memory_space<vmem>>, %arg7: memref<1x256xf32, #tpu.memory_space<vmem>>, %arg8: memref<1x2x256xbf16, #tpu.memory_space<vmem>>, %arg9: memref<2x256xf32, #tpu.memory_space<vmem>>) attributes {dimension_semantics = [#tpu.dimension_semantics<parallel>, #tpu.dimension_semantics<arbitrary>], iteration_bounds = array<i64: 4, 3>, scalar_prefetch = 0 : i64, scratch_operands = 1 : i64, tpu.core_type = #tpu.core_type<tc>, window_params = [{transform_indices = @transform_0, window_bounds = array<i64: 1, 2, 2304>}, {transform_indices = @transform_1, window_bounds = array<i64: 1, 2304, 256>}, {pipeline_mode = #tpu.pipeline_mode<synchronous>, transform_indices = @transform_2, window_bounds = array<i64: 1, 256>}, {transform_indices = @transform_3, window_bounds = array<i64: 1, 2, 128>}, {pipeline_mode = #tpu.pipeline_mode<synchronous>, transform_indices = @transform_4, window_bounds = array<i64: 128, 256>}, {pipeline_mode = #tpu.pipeline_mode<synchronous>, transform_indices = @transform_5, window_bounds = array<i64: 1, 256>}, {transform_indices = @transform_6, window_bounds = array<i64: 1, 2, 256>}]} {
    %c0_i32 = arith.constant 0 : i32
    %0 = arith.cmpi eq, %arg1, %c0_i32 : i32
    %1 = arith.extui %0 : i1 to i32
    %c0_i32_0 = arith.constant 0 : i32
    %2 = arith.cmpi ne, %1, %c0_i32_0 : i32
    scf.if %2 {
      %cst_11 = arith.constant 0.000000e+00 : f32
      %14 = vector.broadcast %cst_11 : f32 to vector<2x256xf32>
      %c0_12 = arith.constant 0 : index
      %c0_13 = arith.constant 0 : index
      %15 = vector.load %arg9[%c0_12, %c0_13] : memref<2x256xf32, #tpu.memory_space<vmem>>, vector<2x256xf32>
      tpu.vector_store %arg9[%c0_12, %c0_13], %14 {strides = array<i32>} : memref<2x256xf32, #tpu.memory_space<vmem>>, vector<2x256xf32>,
    } else {
    }
    %c0 = arith.constant 0 : index
    %c0_1 = arith.constant 0 : index
    %3 = vector.load %arg9[%c0, %c0_1] : memref<2x256xf32, #tpu.memory_space<vmem>>, vector<2x256xf32>
    %c0_2 = arith.constant 0 : index
    %c0_3 = arith.constant 0 : index
    %c0_4 = arith.constant 0 : index
    %4 = vector.load %arg2[%c0_2, %c0_3, %c0_4] : memref<1x2x2304xbf16, #tpu.memory_space<vmem>>, vector<1x2x2304xbf16>
    %5 = vector.shape_cast %4 : vector<1x2x2304xbf16> to vector<2x2304xbf16>
    %c0_5 = arith.constant 0 : index
    %c0_6 = arith.constant 0 : index
    %c0_7 = arith.constant 0 : index
    %6 = vector.load %arg3[%c0_5, %c0_6, %c0_7] : memref<1x2304x256xbf16, #tpu.memory_space<vmem>>, vector<1x2304x256xbf16>
    %7 = vector.shape_cast %6 : vector<1x2304x256xbf16> to vector<2304x256xbf16>
    %cst = arith.constant dense<0.000000e+00> : vector<2x256xf32>
    %8 = tpu.matmul %5, %7, %cst {dimension_numbers = #tpu.dot_dimension_numbers<[1], [0], [0], [1], [0, 0, 1, 1], [], []>} : vector<2x2304xbf16>, vector<2304x256xbf16>, vector<2x256xf32> -> vector<2x256xf32>
    %9 = arith.addf %3, %8 : vector<2x256xf32>
    %c0_8 = arith.constant 0 : index
    %c0_9 = arith.constant 0 : index
    %10 = vector.load %arg9[%c0_8, %c0_9] : memref<2x256xf32, #tpu.memory_space<vmem>>, vector<2x256xf32>
    tpu.vector_store %arg9[%c0_8, %c0_9], %9 {strides = array<i32>} : memref<2x256xf32, #tpu.memory_space<vmem>>, vector<2x256xf32>,
    %c2_i32 = arith.constant 2 : i32
    %11 = arith.cmpi eq, %arg1, %c2_i32 : i32
    %12 = arith.extui %11 : i1 to i32
    %c0_i32_10 = arith.constant 0 : i32
    %13 = arith.cmpi ne, %12, %c0_i32_10 : i32
    scf.if %13 {
      %c0_11 = arith.constant 0 : index
      %c0_12 = arith.constant 0 : index
      %c0_13 = arith.constant 0 : index
      %14 = vector.load %arg5[%c0_11, %c0_12, %c0_13] : memref<1x2x128xbf16, #tpu.memory_space<vmem>>, vector<1x2x128xbf16>
      %15 = vector.shape_cast %14 : vector<1x2x128xbf16> to vector<2x128xbf16>
      %c0_14 = arith.constant 0 : index
      %c0_15 = arith.constant 0 : index
      %16 = vector.load %arg6[%c0_14, %c0_15] : memref<128x256xbf16, #tpu.memory_space<vmem>>, vector<128x256xbf16>
      %cst_16 = arith.constant dense<0.000000e+00> : vector<2x256xf32>
      %17 = tpu.matmul %15, %16, %cst_16 {dimension_numbers = #tpu.dot_dimension_numbers<[1], [0], [0], [1], [0, 0, 1, 1], [], []>} : vector<2x128xbf16>, vector<128x256xbf16>, vector<2x256xf32> -> vector<2x256xf32>
      %c0_17 = arith.constant 0 : index
      %c0_18 = arith.constant 0 : index
      %18 = vector.load %arg9[%c0_17, %c0_18] : memref<2x256xf32, #tpu.memory_space<vmem>>, vector<2x256xf32>
      %c0_19 = arith.constant 0 : index
      %c0_20 = arith.constant 0 : index
      %19 = vector.load %arg4[%c0_19, %c0_20] : memref<1x256xf32, #tpu.memory_space<vmem>>, vector<1x256xf32>
      %20 = vector.broadcast %19 : vector<1x256xf32> to vector<2x256xf32>
      %21 = arith.addf %18, %20 : vector<2x256xf32>
      %22 = arith.addf %21, %17 : vector<2x256xf32>
      %c0_21 = arith.constant 0 : index
      %c0_22 = arith.constant 0 : index
      %23 = vector.load %arg7[%c0_21, %c0_22] : memref<1x256xf32, #tpu.memory_space<vmem>>, vector<1x256xf32>
      %24 = vector.broadcast %23 : vector<1x256xf32> to vector<2x256xf32>
      %25 = arith.addf %22, %24 : vector<2x256xf32>
      %cst_23 = arith.constant 0.000000e+00 : f32
      %26 = vector.broadcast %cst_23 : f32 to vector<2x256xf32>
      %27 = arith.maximumf %25, %26 : vector<2x256xf32>
      %28 = arith.truncf %27 : vector<2x256xf32> to vector<2x256xbf16>
      %c0_24 = arith.constant 0 : index
      %c0_25 = arith.constant 0 : index
      %c0_26 = arith.constant 0 : index
      %29 = vector.load %arg8[%c0_24, %c0_25, %c0_26] : memref<1x2x256xbf16, #tpu.memory_space<vmem>>, vector<1x2x256xbf16>
      %30 = vector.shape_cast %29 : vector<1x2x256xbf16> to vector<2x256xbf16>
      %31 = vector.shape_cast %28 : vector<2x256xbf16> to vector<1x2x256xbf16>
      tpu.vector_store %arg8[%c0_24, %c0_25, %c0_26], %31 {strides = array<i32>} : memref<1x2x256xbf16, #tpu.memory_space<vmem>>, vector<1x2x256xbf16>,
    } else {
    }
    return
  }
  func.func @transform_0(%arg0: i32, %arg1: i32) -> (i32, i32, i32) {
    %0 = arith.addi %arg0, %arg1 : i32
    %c0_i32 = arith.constant 0 : i32
    %c0_i32_0 = arith.constant 0 : i32
    %c0_i32_1 = arith.constant 0 : i32
    return %0, %c0_i32, %c0_i32_0 : i32, i32, i32
  }
  func.func @transform_1(%arg0: i32, %arg1: i32) -> (i32, i32, i32) {
    %c0_i32 = arith.constant 0 : i32
    %c0_i32_0 = arith.constant 0 : i32
    %c0_i32_1 = arith.constant 0 : i32
    return %arg1, %c0_i32, %c0_i32_0 : i32, i32, i32
  }
  func.func @transform_2(%arg0: i32, %arg1: i32) -> (i32, i32) {
    %c0_i32 = arith.constant 0 : i32
    %c0_i32_0 = arith.constant 0 : i32
    %c0_i32_1 = arith.constant 0 : i32
    return %c0_i32, %c0_i32_0 : i32, i32
  }
  func.func @transform_3(%arg0: i32, %arg1: i32) -> (i32, i32, i32) {
    %c0_i32 = arith.constant 0 : i32
    %c0_i32_0 = arith.constant 0 : i32
    %c0_i32_1 = arith.constant 0 : i32
    return %arg0, %c0_i32, %c0_i32_0 : i32, i32, i32
  }
  func.func @transform_4(%arg0: i32, %arg1: i32) -> (i32, i32) {
    %c0_i32 = arith.constant 0 : i32
    %c0_i32_0 = arith.constant 0 : i32
    %c0_i32_1 = arith.constant 0 : i32
    return %c0_i32, %c0_i32_0 : i32, i32
  }
  func.func @transform_5(%arg0: i32, %arg1: i32) -> (i32, i32) {
    %c0_i32 = arith.constant 0 : i32
    %c0_i32_0 = arith.constant 0 : i32
    %c0_i32_1 = arith.constant 0 : i32
    return %c0_i32, %c0_i32_0 : i32, i32
  }
  func.func @transform_6(%arg0: i32, %arg1: i32) -> (i32, i32, i32) {
    %c0_i32 = arith.constant 0 : i32
    %c0_i32_0 = arith.constant 0 : i32
    %c0_i32_1 = arith.constant 0 : i32
    return %arg0, %c0_i32, %c0_i32_0 : i32, i32, i32
  }
}

module attributes {stable_mosaic.version = 11 : i64} {
  func.func @_head_kernel(%arg0: i32, %arg1: memref<8x256xbf16, #tpu.memory_space<vmem>>, %arg2: memref<2x8xbf16, #tpu.memory_space<vmem>>, %arg3: memref<256x128xbf16, #tpu.memory_space<vmem>>, %arg4: memref<1x128xf32, #tpu.memory_space<vmem>>, %arg5: memref<128x7xbf16, #tpu.memory_space<vmem>>, %arg6: memref<1x7xf32, #tpu.memory_space<vmem>>, %arg7: memref<2x7xf32, #tpu.memory_space<vmem>>) attributes {dimension_semantics = [#tpu.dimension_semantics<arbitrary>], iteration_bounds = array<i64: 1>, scalar_prefetch = 0 : i64, scratch_operands = 0 : i64, tpu.core_type = #tpu.core_type<tc>, window_params = [{pipeline_mode = #tpu.pipeline_mode<synchronous>, transform_indices = @transform_0, window_bounds = array<i64: 8, 256>}, {pipeline_mode = #tpu.pipeline_mode<synchronous>, transform_indices = @transform_1, window_bounds = array<i64: 2, 8>}, {pipeline_mode = #tpu.pipeline_mode<synchronous>, transform_indices = @transform_2, window_bounds = array<i64: 256, 128>}, {pipeline_mode = #tpu.pipeline_mode<synchronous>, transform_indices = @transform_3, window_bounds = array<i64: 1, 128>}, {pipeline_mode = #tpu.pipeline_mode<synchronous>, transform_indices = @transform_4, window_bounds = array<i64: 128, 7>}, {pipeline_mode = #tpu.pipeline_mode<synchronous>, transform_indices = @transform_5, window_bounds = array<i64: 1, 7>}, {pipeline_mode = #tpu.pipeline_mode<synchronous>, transform_indices = @transform_6, window_bounds = array<i64: 2, 7>}]} {
    %c0 = arith.constant 0 : index
    %c0_0 = arith.constant 0 : index
    %0 = vector.load %arg2[%c0, %c0_0] : memref<2x8xbf16, #tpu.memory_space<vmem>>, vector<2x8xbf16>
    %c0_1 = arith.constant 0 : index
    %c0_2 = arith.constant 0 : index
    %1 = vector.load %arg1[%c0_1, %c0_2] : memref<8x256xbf16, #tpu.memory_space<vmem>>, vector<8x256xbf16>
    %cst = arith.constant dense<0.000000e+00> : vector<2x256xf32>
    %2 = tpu.matmul %0, %1, %cst {dimension_numbers = #tpu.dot_dimension_numbers<[1], [0], [0], [1], [0, 0, 1, 1], [], []>} : vector<2x8xbf16>, vector<8x256xbf16>, vector<2x256xf32> -> vector<2x256xf32>
    %3 = arith.truncf %2 : vector<2x256xf32> to vector<2x256xbf16>
    %c0_3 = arith.constant 0 : index
    %c0_4 = arith.constant 0 : index
    %4 = vector.load %arg3[%c0_3, %c0_4] : memref<256x128xbf16, #tpu.memory_space<vmem>>, vector<256x128xbf16>
    %cst_5 = arith.constant dense<0.000000e+00> : vector<2x128xf32>
    %5 = tpu.matmul %3, %4, %cst_5 {dimension_numbers = #tpu.dot_dimension_numbers<[1], [0], [0], [1], [0, 0, 1, 1], [], []>} : vector<2x256xbf16>, vector<256x128xbf16>, vector<2x128xf32> -> vector<2x128xf32>
    %c0_6 = arith.constant 0 : index
    %c0_7 = arith.constant 0 : index
    %6 = vector.load %arg4[%c0_6, %c0_7] : memref<1x128xf32, #tpu.memory_space<vmem>>, vector<1x128xf32>
    %7 = vector.broadcast %6 : vector<1x128xf32> to vector<2x128xf32>
    %8 = arith.addf %5, %7 : vector<2x128xf32>
    %cst_8 = arith.constant 0.000000e+00 : f32
    %9 = vector.broadcast %cst_8 : f32 to vector<2x128xf32>
    %10 = arith.maximumf %8, %9 : vector<2x128xf32>
    %11 = arith.truncf %10 : vector<2x128xf32> to vector<2x128xbf16>
    %c0_9 = arith.constant 0 : index
    %c0_10 = arith.constant 0 : index
    %12 = vector.load %arg5[%c0_9, %c0_10] : memref<128x7xbf16, #tpu.memory_space<vmem>>, vector<128x7xbf16>
    %cst_11 = arith.constant dense<0.000000e+00> : vector<2x7xf32>
    %13 = tpu.matmul %11, %12, %cst_11 {dimension_numbers = #tpu.dot_dimension_numbers<[1], [0], [0], [1], [0, 0, 1, 1], [], []>} : vector<2x128xbf16>, vector<128x7xbf16>, vector<2x7xf32> -> vector<2x7xf32>
    %c0_12 = arith.constant 0 : index
    %c0_13 = arith.constant 0 : index
    %14 = vector.load %arg6[%c0_12, %c0_13] : memref<1x7xf32, #tpu.memory_space<vmem>>, vector<1x7xf32>
    %15 = vector.broadcast %14 : vector<1x7xf32> to vector<2x7xf32>
    %16 = arith.addf %13, %15 : vector<2x7xf32>
    %c0_14 = arith.constant 0 : index
    %c0_15 = arith.constant 0 : index
    %17 = vector.load %arg7[%c0_14, %c0_15] : memref<2x7xf32, #tpu.memory_space<vmem>>, vector<2x7xf32>
    tpu.vector_store %arg7[%c0_14, %c0_15], %16 {strides = array<i32>} : memref<2x7xf32, #tpu.memory_space<vmem>>, vector<2x7xf32>,
    return
  }
  func.func @transform_0(%arg0: i32) -> (i32, i32) {
    %c0_i32 = arith.constant 0 : i32
    %c0_i32_0 = arith.constant 0 : i32
    %c0_i32_1 = arith.constant 0 : i32
    return %c0_i32, %c0_i32_0 : i32, i32
  }
  func.func @transform_1(%arg0: i32) -> (i32, i32) {
    %c0_i32 = arith.constant 0 : i32
    %c0_i32_0 = arith.constant 0 : i32
    %c0_i32_1 = arith.constant 0 : i32
    return %c0_i32, %c0_i32_0 : i32, i32
  }
  func.func @transform_2(%arg0: i32) -> (i32, i32) {
    %c0_i32 = arith.constant 0 : i32
    %c0_i32_0 = arith.constant 0 : i32
    %c0_i32_1 = arith.constant 0 : i32
    return %c0_i32, %c0_i32_0 : i32, i32
  }
  func.func @transform_3(%arg0: i32) -> (i32, i32) {
    %c0_i32 = arith.constant 0 : i32
    %c0_i32_0 = arith.constant 0 : i32
    %c0_i32_1 = arith.constant 0 : i32
    return %c0_i32, %c0_i32_0 : i32, i32
  }
  func.func @transform_4(%arg0: i32) -> (i32, i32) {
    %c0_i32 = arith.constant 0 : i32
    %c0_i32_0 = arith.constant 0 : i32
    %c0_i32_1 = arith.constant 0 : i32
    return %c0_i32, %c0_i32_0 : i32, i32
  }
  func.func @transform_5(%arg0: i32) -> (i32, i32) {
    %c0_i32 = arith.constant 0 : i32
    %c0_i32_0 = arith.constant 0 : i32
    %c0_i32_1 = arith.constant 0 : i32
    return %c0_i32, %c0_i32_0 : i32, i32
  }
  func.func @transform_6(%arg0: i32) -> (i32, i32) {
    %c0_i32 = arith.constant 0 : i32
    %c0_i32_0 = arith.constant 0 : i32
    %c0_i32_1 = arith.constant 0 : i32
    return %c0_i32, %c0_i32_0 : i32, i32
  }
}

</mosaic_0001>

<llo_original>
// kernel: gesture3dnet_forward.8
$region0: #{gesture3dnet_forward.8}
  #allocation0 [shape = 'u32[]', space=smem, size = 0x4, offset = 0x4, fixed_abs, tag = 'smem constant byte address 0x4 - core index']
  #allocation1 [shape = 'u32[72,128]{1,0:T(1,128)}', space=vmem, size = 0x9000, scoped, tag = 'internal scratch']
  #allocation2 [shape = 'f32[512,32]{1,0:T(8,128)}', space=vmem, size = 0x40000, scoped, tag = 'scratch operand']
  %s0 = inlined_call_operand.vmem [shape: bf16[6,512,180], index: 0, kind: input, shape index: {}]
  %s1 = inlined_call_operand.vmem [shape: bf16[3,180,32], index: 1, kind: input, shape index: {}]
  %s2 = inlined_call_operand.vmem [shape: f32[1,32], index: 2, kind: input, shape index: {}]
  %s3 = inlined_call_operand.vmem [shape: bf16[4,128,32], index: 3, kind: output, shape index: {}]
  %s4 = sld [smem:[#allocation0]]
  $region53: #{gesture3dnet_forward.8} parent=0
    _
  %s6 = ssub.s32 1, %s4
  %s7 = scalar_select 0, %s6, %s4
  loop: start=0, step=1, limit=14
  $region2: #{gesture3dnet_forward.8} parent=0 // loop_pre_header
    _
  $region3: #{gesture3dnet_forward.8} parent=0 // loop_header
    %s9 = sphi 0, %s13
    %p10 = scmp.ge.s32.totalorder %s9, 14
    %s16 = sphi 0, %s28
    %s17 = sphi 0, %s24
    %s18 = sphi 0, %s16
    %s19 = sphi 0, %s17
    %s20 = sphi 0, %s18
    %s21 = sphi 0, %s19
    %s33 = sphi 0, %s35
    %s36 = sphi 0, %s33
    %s37 = sphi 0, %s36
    %s53 = sphi 0, %s37
    %s59 = sphi 0, %s61
    %s62 = sphi 0, %s59
    %s63 = sphi 0, %s62
    %s79 = sphi 0, %s63
    %s83 = sphi 0, %s83
    %s85 = sphi 0, %s83
    %s86 = sphi 0, %s85
    %s100 = sphi 0, %s86
    %s106 = sphi 0, %s108
    %s109 = sphi 0, %s106
    %s110 = sphi 0, %s109
    %s126 = sphi 0, %s110
  $region4: #{gesture3dnet_forward.8} parent=0 // loop_header_branch
    %12 = sbr.rel (%p10) target = $region8
  $region5: #{gesture3dnet_forward.8} parent=0 // loop_body
    %s14 = ssub.s32 %s9, 1
    %s15 = ssub.s32 %s9, 2
    %s22 = sadd.s32 1, %s17
    %p23 = scmp.ge.s32.totalorder %s22, 3
    %s24 = scalar_select %p23, 0, %s22
    %s25 = sadd.s32 1, %s16
    %s26 = scalar_select %p23, %s25, %s16
    %p27 = scmp.ge.s32.totalorder %s26, 4
    %s28 = scalar_select %p27, 0, %s26
    %s29 = sadd.s32 %s16, %s17
    %s30 = sadd.s32 %s28, %s24
    %s31 = ssub.s32 %s29, %s30
    %p32 = scmp.eq.s32.totalorder %s31, 0
    %s34 = sadd.s32 %s33, 1
    %s35 = scalar_select %p32, %s33, %s34
    %p38 = pneg %p32
    %p39 = scmp.eq.s32.totalorder %s9, 11
    %p40 = por %p38, %p39
    %p41 = scmp.ne.s32.totalorder %s33, %s36
    %p42 = scmp.eq.s32.totalorder %s9, 0
    %p43 = por %p41, %p42
    %p44 = scmp.ne.s32.totalorder %s33, %s36
    %p45 = scmp.eq.s32.totalorder %s14, 11
    %p46 = por %p44, %p45
    %p47 = scmp.ne.s32.totalorder %s36, %s37
    %p48 = scmp.eq.s32.totalorder %s14, 0
    %p49 = por %p47, %p48
    %p50 = scmp.ne.s32.totalorder %s36, %s37
    %p51 = scmp.eq.s32.totalorder %s15, 11
    %p52 = por %p50, %p51
    %p54 = scmp.ne.s32.totalorder %s37, %s53
    %p55 = scmp.eq.s32.totalorder %s15, 0
    %p56 = por %p54, %p55
    %s57 = ssub.s32 %s17, %s24
    %p58 = scmp.eq.s32.totalorder %s57, 0
    %s60 = sadd.s32 %s59, 1
    %s61 = scalar_select %p58, %s59, %s60
    %p64 = pneg %p58
    %p65 = scmp.eq.s32.totalorder %s9, 11
    %p66 = por %p64, %p65
    %p67 = scmp.ne.s32.totalorder %s59, %s62
    %p68 = scmp.eq.s32.totalorder %s9, 0
    %p69 = por %p67, %p68
    %p70 = scmp.ne.s32.totalorder %s59, %s62
    %p71 = scmp.eq.s32.totalorder %s14, 11
    %p72 = por %p70, %p71
    %p73 = scmp.ne.s32.totalorder %s62, %s63
    %p74 = scmp.eq.s32.totalorder %s14, 0
    %p75 = por %p73, %p74
    %p76 = scmp.ne.s32.totalorder %s62, %s63
    %p77 = scmp.eq.s32.totalorder %s15, 11
    %p78 = por %p76, %p77
    %p80 = scmp.ne.s32.totalorder %s63, %s79
    %p81 = scmp.eq.s32.totalorder %s15, 0
    %p82 = por %p80, %p81
    %s84 = sadd.s32 %s83, 1
    %p87 = scmp.eq.s32.totalorder %s9, 11
    %p88 = scmp.ne.s32.totalorder %s83, %s85
    %p89 = scmp.eq.s32.totalorder %s9, 0
    %p90 = por %p88, %p89
    %p91 = scmp.ne.s32.totalorder %s83, %s85
    %p92 = scmp.eq.s32.totalorder %s14, 11
    %p93 = por %p91, %p92
    %p94 = scmp.ne.s32.totalorder %s85, %s86
    %p95 = scmp.eq.s32.totalorder %s14, 0
    %p96 = por %p94, %p95
    %p97 = scmp.ne.s32.totalorder %s85, %s86
    %p98 = scmp.eq.s32.totalorder %s15, 11
    %p99 = por %p97, %p98
    %p101 = scmp.ne.s32.totalorder %s86, %s100
    %p102 = scmp.eq.s32.totalorder %s15, 0
    %p103 = por %p101, %p102
    %s104 = ssub.s32 %s16, %s28
    %p105 = scmp.eq.s32.totalorder %s104, 0
    %s107 = sadd.s32 %s106, 1
    %s108 = scalar_select %p105, %s106, %s107
    %p111 = pneg %p105
    %p112 = scmp.eq.s32.totalorder %s9, 11
    %p113 = por %p111, %p112
    %p114 = scmp.ne.s32.totalorder %s106, %s109
    %p115 = scmp.eq.s32.totalorder %s9, 0
    %p116 = por %p114, %p115
    %p117 = scmp.ne.s32.totalorder %s106, %s109
    %p118 = scmp.eq.s32.totalorder %s14, 11
    %p119 = por %p117, %p118
    %p120 = scmp.ne.s32.totalorder %s109, %s110
    %p121 = scmp.eq.s32.totalorder %s14, 0
    %p122 = por %p120, %p121
    %p123 = scmp.ne.s32.totalorder %s109, %s110
    %p124 = scmp.eq.s32.totalorder %s15, 11
    %p125 = por %p123, %p124
    %p127 = scmp.ne.s32.totalorder %s110, %s126
    %p128 = scmp.eq.s32.totalorder %s15, 0
    %p129 = por %p127, %p128
    %p130 = scmp.le.s32.totalorder 1, %s9
    %p131 = scmp.lt.s32.totalorder %s9, 13
    %p132 = pnand %p130, %p131
    %p133 = pneg %p132
    // Predicated region
    $region9: #{gesture3dnet_forward.8} parent=5 // pred_check
      _
    $region10: #{gesture3dnet_forward.8} parent=5 // pred_check_branch
      %135 = sbr.rel (%p132) target = $region12
    $region11: #{gesture3dnet_forward.8} parent=5 // pred_region
      %s136 = ssub.s32 %s9, 1
      // Predicated region
      $region13: #{gesture3dnet_forward.8} parent=11 // pred_check
        %p137 = pneg %p96
      $region14: #{gesture3dnet_forward.8} parent=11 // pred_check_branch
        %139 = sbr.rel (%p137) target = $region16
      $region15: #{gesture3dnet_forward.8} parent=11 // pred_region
        _
      $region16: #{gesture3dnet_forward.8} parent=11 // pred_fallthru
        _
    $region12: #{gesture3dnet_forward.8} parent=5 // pred_fallthru
      _
    %p140 = scmp.lt.s32.totalorder %s9, 12
    // Predicated region
    $region17: #{gesture3dnet_forward.8} parent=5 // pred_check
      %p141 = pneg %p140
    $region18: #{gesture3dnet_forward.8} parent=5 // pred_check_branch
      %143 = sbr.rel (%p141) target = $region20
    $region19: #{gesture3dnet_forward.8} parent=5 // pred_region
      // Predicated region
      $region21: #{gesture3dnet_forward.8} parent=19 // pred_check
        %p144 = pneg %p43
      $region22: #{gesture3dnet_forward.8} parent=19 // pred_check_branch
        %146 = sbr.rel (%p144) target = $region24
      $region23: #{gesture3dnet_forward.8} parent=19 // pred_region
        %s147 = sadd.s32 %s16, %s17
        %p148 = scmp.lt.s32.totalorder %s147, 5
        %s149 = scalar_select %p148, %s147, 5
        %s150 = smul.addr %s149, 128
        %s151 = smul.addr %s150, 4
        %s152 = scalar_lea.vmem %s0, %s151
        %s153 = sadd.s32 %s16, %s17
      $region24: #{gesture3dnet_forward.8} parent=19 // pred_fallthru
        _
      // Predicated region
      $region25: #{gesture3dnet_forward.8} parent=19 // pred_check
        %p154 = pneg %p69
      $region26: #{gesture3dnet_forward.8} parent=19 // pred_check_branch
        %156 = sbr.rel (%p154) target = $region28
      $region27: #{gesture3dnet_forward.8} parent=19 // pred_region
        %p157 = scmp.lt.s32.totalorder %s17, 2
        %s158 = scalar_select %p157, %s17, 2
        %s159 = smul.addr %s158, 23
        %s160 = smul.addr %s159, 4
        %s161 = scalar_lea.vmem %s1, %s160
      $region28: #{gesture3dnet_forward.8} parent=19 // pred_fallthru
        _
    $region20: #{gesture3dnet_forward.8} parent=5 // pred_fallthru
      _
    %p162 = scmp.le.s32.totalorder 1, %s9
    %p163 = scmp.lt.s32.totalorder %s9, 13
    %p164 = pnand %p162, %p163
    %p165 = pneg %p164
    // Predicated region
    $region29: #{gesture3dnet_forward.8} parent=5 // pred_check
      _
    $region30: #{gesture3dnet_forward.8} parent=5 // pred_check_branch
      %167 = sbr.rel (%p164) target = $region32
    $region31: #{gesture3dnet_forward.8} parent=5 // pred_region
      %s168 = ssub.s32 %s9, 1
      %s169 = sadd.s32 %s18, %s19
      %p170 = scmp.lt.s32.totalorder %s169, 5
      %s171 = scalar_select %p170, %s169, 5
      %s172 = smul.addr %s171, 128
      %s173 = smul.addr %s172, 4
      %s174 = scalar_lea.vmem %s0, %s173
      %p175 = pneg %p49
      %p176 = pneg %p46
      %p177 = scmp.lt.s32.totalorder %s19, 2
      %s178 = scalar_select %p177, %s19, 2
      %s179 = smul.addr %s178, 23
      %s180 = smul.addr %s179, 4
      %s181 = scalar_lea.vmem %s1, %s180
      %p182 = pneg %p75
      %p183 = pneg %p72
      %p184 = pneg %p96
      %p185 = pneg %p93
      %p186 = pneg %p122
      %p187 = pneg %p119
      %p188 = scmp.lt.s32.totalorder %s18, 3
      %s189 = scalar_select %p188, %s18, 3
      %s190 = smul.addr %s189, 16
      %s191 = smul.addr %s190, 4
      %s192 = scalar_lea.vmem %s3, %s191
      %s193 = sadd.s32 %s18, %s19
      %p194 = scmp.lt.s32.totalorder %s193, 5
      %s195 = scalar_select %p194, %s193, 5
      %s196 = smul.addr %s195, 128
      %s197 = smul.addr %s196, 4
      %s198 = scalar_lea.vmem %s0, %s197
      %s199 = sadd.s32 %s18, %s19
      %p200 = scmp.lt.s32.totalorder %s19, 2
      %s201 = scalar_select %p200, %s19, 2
      %s202 = smul.addr %s201, 23
      %s203 = smul.addr %s202, 4
      %s204 = scalar_lea.vmem %s1, %s203
      %p205 = scmp.lt.s32.totalorder %s18, 3
      %s206 = scalar_select %p205, %s18, 3
      %s207 = smul.addr %s206, 16
      %s208 = smul.addr %s207, 4
      %s209 = scalar_lea.vmem %s3, %s208
      %p211 = scmp.eq.s32.totalorder %s19, 0
      // Predicated region
      $region33: #{gesture3dnet_forward.8} parent=31 // pred_check
        %p212 = pneg %p211
      $region34: #{gesture3dnet_forward.8} parent=31 // pred_check_branch
        %214 = sbr.rel (%p212) target = $region36
      $region35: #{gesture3dnet_forward.8} parent=31 // pred_region
        %vm215 = vcmask 261120
        %216 = vst.msk [vmem:[#allocation2] sm:$0xff] %vm215, 0.0
        %217 = vst.msk [vmem:[#allocation2 + $0x8] sm:$0xff] %vm215, 0.0
        %218 = vst.msk [vmem:[#allocation2 + $0x10] sm:$0xff] %vm215, 0.0
        %219 = vst.msk [vmem:[#allocation2 + $0x18] sm:$0xff] %vm215, 0.0
        %220 = vst.msk [vmem:[#allocation2 + $0x20] sm:$0xff] %vm215, 0.0
        %221 = vst.msk [vmem:[#allocation2 + $0x28] sm:$0xff] %vm215, 0.0
        %222 = vst.msk [vmem:[#allocation2 + $0x30] sm:$0xff] %vm215, 0.0
        %223 = vst.msk [vmem:[#allocation2 + $0x38] sm:$0xff] %vm215, 0.0
        %224 = vst.msk [vmem:[#allocation2 + $0x40] sm:$0xff] %vm215, 0.0
        %225 = vst.msk [vmem:[#allocation2 + $0x48] sm:$0xff] %vm215, 0.0
        %226 = vst.msk [vmem:[#allocation2 + $0x50] sm:$0xff] %vm215, 0.0
        %227 = vst.msk [vmem:[#allocation2 + $0x58] sm:$0xff] %vm215, 0.0
        %228 = vst.msk [vmem:[#allocation2 + $0x60] sm:$0xff] %vm215, 0.0
        %229 = vst.msk [vmem:[#allocation2 + $0x68] sm:$0xff] %vm215, 0.0
        %230 = vst.msk [vmem:[#allocation2 + $0x70] sm:$0xff] %vm215, 0.0
        %231 = vst.msk [vmem:[#allocation2 + $0x78] sm:$0xff] %vm215, 0.0
        %232 = vst.msk [vmem:[#allocation2 + $0x80] sm:$0xff] %vm215, 0.0
        %233 = vst.msk [vmem:[#allocation2 + $0x88] sm:$0xff] %vm215, 0.0
        %234 = vst.msk [vmem:[#allocation2 + $0x90] sm:$0xff] %vm215, 0.0
        %235 = vst.msk [vmem:[#allocation2 + $0x98] sm:$0xff] %vm215, 0.0
        %236 = vst.msk [vmem:[#allocation2 + $0xa0] sm:$0xff] %vm215, 0.0
        %237 = vst.msk [vmem:[#allocation2 + $0xa8] sm:$0xff] %vm215, 0.0
        %238 = vst.msk [vmem:[#allocation2 + $0xb0] sm:$0xff] %vm215, 0.0
        %239 = vst.msk [vmem:[#allocation2 + $0xb8] sm:$0xff] %vm215, 0.0
        %240 = vst.msk [vmem:[#allocation2 + $0xc0] sm:$0xff] %vm215, 0.0
        %241 = vst.msk [vmem:[#allocation2 + $0xc8] sm:$0xff] %vm215, 0.0
        %242 = vst.msk [vmem:[#allocation2 + $0xd0] sm:$0xff] %vm215, 0.0
        %243 = vst.msk [vmem:[#allocation2 + $0xd8] sm:$0xff] %vm215, 0.0
        %244 = vst.msk [vmem:[#allocation2 + $0xe0] sm:$0xff] %vm215, 0.0
        %245 = vst.msk [vmem:[#allocation2 + $0xe8] sm:$0xff] %vm215, 0.0
        %246 = vst.msk [vmem:[#allocation2 + $0xf0] sm:$0xff] %vm215, 0.0
        %247 = vst.msk [vmem:[#allocation2 + $0xf8] sm:$0xff] %vm215, 0.0
        %248 = vst.msk [vmem:[#allocation2 + $0x100] sm:$0xff] %vm215, 0.0
        %249 = vst.msk [vmem:[#allocation2 + $0x108] sm:$0xff] %vm215, 0.0
        %250 = vst.msk [vmem:[#allocation2 + $0x110] sm:$0xff] %vm215, 0.0
        %251 = vst.msk [vmem:[#allocation2 + $0x118] sm:$0xff] %vm215, 0.0
        %252 = vst.msk [vmem:[#allocation2 + $0x120] sm:$0xff] %vm215, 0.0
        %253 = vst.msk [vmem:[#allocation2 + $0x128] sm:$0xff] %vm215, 0.0
        %254 = vst.msk [vmem:[#allocation2 + $0x130] sm:$0xff] %vm215, 0.0
        %255 = vst.msk [vmem:[#allocation2 + $0x138] sm:$0xff] %vm215, 0.0
        %256 = vst.msk [vmem:[#allocation2 + $0x140] sm:$0xff] %vm215, 0.0
        %257 = vst.msk [vmem:[#allocation2 + $0x148] sm:$0xff] %vm215, 0.0
        %258 = vst.msk [vmem:[#allocation2 + $0x150] sm:$0xff] %vm215, 0.0
        %259 = vst.msk [vmem:[#allocation2 + $0x158] sm:$0xff] %vm215, 0.0
        %260 = vst.msk [vmem:[#allocation2 + $0x160] sm:$0xff] %vm215, 0.0
        %261 = vst.msk [vmem:[#allocation2 + $0x168] sm:$0xff] %vm215, 0.0
        %262 = vst.msk [vmem:[#allocation2 + $0x170] sm:$0xff] %vm215, 0.0
        %263 = vst.msk [vmem:[#allocation2 + $0x178] sm:$0xff] %vm215, 0.0
        %264 = vst.msk [vmem:[#allocation2 + $0x180] sm:$0xff] %vm215, 0.0
        %265 = vst.msk [vmem:[#allocation2 + $0x188] sm:$0xff] %vm215, 0.0
        %266 = vst.msk [vmem:[#allocation2 + $0x190] sm:$0xff] %vm215, 0.0
        %267 = vst.msk [vmem:[#allocation2 + $0x198] sm:$0xff] %vm215, 0.0
        %268 = vst.msk [vmem:[#allocation2 + $0x1a0] sm:$0xff] %vm215, 0.0
        %269 = vst.msk [vmem:[#allocation2 + $0x1a8] sm:$0xff] %vm215, 0.0
        %270 = vst.msk [vmem:[#allocation2 + $0x1b0] sm:$0xff] %vm215, 0.0
        %271 = vst.msk [vmem:[#allocation2 + $0x1b8] sm:$0xff] %vm215, 0.0
        %272 = vst.msk [vmem:[#allocation2 + $0x1c0] sm:$0xff] %vm215, 0.0
        %273 = vst.msk [vmem:[#allocation2 + $0x1c8] sm:$0xff] %vm215, 0.0
        %274 = vst.msk [vmem:[#allocation2 + $0x1d0] sm:$0xff] %vm215, 0.0
        %275 = vst.msk [vmem:[#allocation2 + $0x1d8] sm:$0xff] %vm215, 0.0
        %276 = vst.msk [vmem:[#allocation2 + $0x1e0] sm:$0xff] %vm215, 0.0
        %277 = vst.msk [vmem:[#allocation2 + $0x1e8] sm:$0xff] %vm215, 0.0
        %278 = vst.msk [vmem:[#allocation2 + $0x1f0] sm:$0xff] %vm215, 0.0
        %279 = vst.msk [vmem:[#allocation2 + $0x1f8] sm:$0xff] %vm215, 0.0
      $region36: #{gesture3dnet_forward.8} parent=31 // pred_fallthru
        _
      %v280 = vld [vmem:[#allocation2] sm:$0xff]
      %v281 = vld [vmem:[#allocation2 + $0x8] sm:$0xff]
      %v282 = vld [vmem:[#allocation2 + $0x10] sm:$0xff]
      %v283 = vld [vmem:[#allocation2 + $0x18] sm:$0xff]
      %v284 = vld [vmem:[#allocation2 + $0x20] sm:$0xff]
      %v285 = vld [vmem:[#allocation2 + $0x28] sm:$0xff]
      %v286 = vld [vmem:[#allocation2 + $0x30] sm:$0xff]
      %v287 = vld [vmem:[#allocation2 + $0x38] sm:$0xff]
      %v288 = vld [vmem:[#allocation2 + $0x40] sm:$0xff]
      %v289 = vld [vmem:[#allocation2 + $0x48] sm:$0xff]
      %v290 = vld [vmem:[#allocation2 + $0x50] sm:$0xff]
      %v291 = vld [vmem:[#allocation2 + $0x58] sm:$0xff]
      %v292 = vld [vmem:[#allocation2 + $0x60] sm:$0xff]
      %v293 = vld [vmem:[#allocation2 + $0x68] sm:$0xff]
      %v294 = vld [vmem:[#allocation2 + $0x70] sm:$0xff]
      %v295 = vld [vmem:[#allocation2 + $0x78] sm:$0xff]
      %v296 = vld [vmem:[#allocation2 + $0x80] sm:$0xff]
      %v297 = vld [vmem:[#allocation2 + $0x88] sm:$0xff]
      %v298 = vld [vmem:[#allocation2 + $0x90] sm:$0xff]
      %v299 = vld [vmem:[#allocation2 + $0x98] sm:$0xff]
      %v300 = vld [vmem:[#allocation2 + $0xa0] sm:$0xff]
      %v301 = vld [vmem:[#allocation2 + $0xa8] sm:$0xff]
      %v302 = vld [vmem:[#allocation2 + $0xb0] sm:$0xff]
      %v303 = vld [vmem:[#allocation2 + $0xb8] sm:$0xff]
      %v304 = vld [vmem:[#allocation2 + $0xc0] sm:$0xff]
      %v305 = vld [vmem:[#allocation2 + $0xc8] sm:$0xff]
      %v306 = vld [vmem:[#allocation2 + $0xd0] sm:$0xff]
      %v307 = vld [vmem:[#allocation2 + $0xd8] sm:$0xff]
      %v308 = vld [vmem:[#allocation2 + $0xe0] sm:$0xff]
      %v309 = vld [vmem:[#allocation2 + $0xe8] sm:$0xff]
      %v310 = vld [vmem:[#allocation2 + $0xf0] sm:$0xff]
      %v311 = vld [vmem:[#allocation2 + $0xf8] sm:$0xff]
      %v312 = vld [vmem:[#allocation2 + $0x100] sm:$0xff]
      %v313 = vld [vmem:[#allocation2 + $0x108] sm:$0xff]
      %v314 = vld [vmem:[#allocation2 + $0x110] sm:$0xff]
      %v315 = vld [vmem:[#allocation2 + $0x118] sm:$0xff]
      %v316 = vld [vmem:[#allocation2 + $0x120] sm:$0xff]
      %v317 = vld [vmem:[#allocation2 + $0x128] sm:$0xff]
      %v318 = vld [vmem:[#allocation2 + $0x130] sm:$0xff]
      %v319 = vld [vmem:[#allocation2 + $0x138] sm:$0xff]
      %v320 = vld [vmem:[#allocation2 + $0x140] sm:$0xff]
      %v321 = vld [vmem:[#allocation2 + $0x148] sm:$0xff]
      %v322 = vld [vmem:[#allocation2 + $0x150] sm:$0xff]
      %v323 = vld [vmem:[#allocation2 + $0x158] sm:$0xff]
      %v324 = vld [vmem:[#allocation2 + $0x160] sm:$0xff]
      %v325 = vld [vmem:[#allocation2 + $0x168] sm:$0xff]
      %v326 = vld [vmem:[#allocation2 + $0x170] sm:$0xff]
      %v327 = vld [vmem:[#allocation2 + $0x178] sm:$0xff]
      %v328 = vld [vmem:[#allocation2 + $0x180] sm:$0xff]
      %v329 = vld [vmem:[#allocation2 + $0x188] sm:$0xff]
      %v330 = vld [vmem:[#allocation2 + $0x190] sm:$0xff]
      %v331 = vld [vmem:[#allocation2 + $0x198] sm:$0xff]
      %v332 = vld [vmem:[#allocation2 + $0x1a0] sm:$0xff]
      %v333 = vld [vmem:[#allocation2 + $0x1a8] sm:$0xff]
      %v334 = vld [vmem:[#allocation2 + $0x1b0] sm:$0xff]
      %v335 = vld [vmem:[#allocation2 + $0x1b8] sm:$0xff]
      %v336 = vld [vmem:[#allocation2 + $0x1c0] sm:$0xff]
      %v337 = vld [vmem:[#allocation2 + $0x1c8] sm:$0xff]
      %v338 = vld [vmem:[#allocation2 + $0x1d0] sm:$0xff]
      %v339 = vld [vmem:[#allocation2 + $0x1d8] sm:$0xff]
      %v340 = vld [vmem:[#allocation2 + $0x1e0] sm:$0xff]
      %v341 = vld [vmem:[#allocation2 + $0x1e8] sm:$0xff]
      %v342 = vld [vmem:[#allocation2 + $0x1f0] sm:$0xff]
      %v343 = vld [vmem:[#allocation2 + $0x1f8] sm:$0xff]
      %v344 = vld [vmem:[%s198] sm:$0xff]
      %v345 = vld [vmem:[%s198 + $0x8] sm:$0xff]
      %v346 = vld [vmem:[%s198 + $0x10] sm:$0xff]
      %v347 = vld [vmem:[%s198 + $0x18] sm:$0xff]
      %v348 = vld [vmem:[%s198 + $0x20] sm:$0xff]
      %v349 = vld [vmem:[%s198 + $0x28] sm:$0xff]
      %v350 = vld [vmem:[%s198 + $0x30] sm:$0xff]
      %v351 = vld [vmem:[%s198 + $0x38] sm:$0xff]
      %v352 = vld [vmem:[%s198 + $0x40] sm:$0xff]
      %v353 = vld [vmem:[%s198 + $0x48] sm:$0xff]
      %v354 = vld [vmem:[%s198 + $0x50] sm:$0xff]
      %v355 = vld [vmem:[%s198 + $0x58] sm:$0xff]
      %v356 = vld [vmem:[%s198 + $0x60] sm:$0xff]
      %v357 = vld [vmem:[%s198 + $0x68] sm:$0xff]
      %v358 = vld [vmem:[%s198 + $0x70] sm:$0xff]
      %v359 = vld [vmem:[%s198 + $0x78] sm:$0xff]
      %v360 = vld [vmem:[%s198 + $0x80] sm:$0xff]
      %v361 = vld [vmem:[%s198 + $0x88] sm:$0xff]
      %v362 = vld [vmem:[%s198 + $0x90] sm:$0xff]
      %v363 = vld [vmem:[%s198 + $0x98] sm:$0xff]
      %v364 = vld [vmem:[%s198 + $0xa0] sm:$0xff]
      %v365 = vld [vmem:[%s198 + $0xa8] sm:$0xff]
      %v366 = vld [vmem:[%s198 + $0xb0] sm:$0xff]
      %v367 = vld [vmem:[%s198 + $0xb8] sm:$0xff]
      %v368 = vld [vmem:[%s198 + $0xc0] sm:$0xff]
      %v369 = vld [vmem:[%s198 + $0xc8] sm:$0xff]
      %v370 = vld [vmem:[%s198 + $0xd0] sm:$0xff]
      %v371 = vld [vmem:[%s198 + $0xd8] sm:$0xff]
      %v372 = vld [vmem:[%s198 + $0xe0] sm:$0xff]
      %v373 = vld [vmem:[%s198 + $0xe8] sm:$0xff]
      %v374 = vld [vmem:[%s198 + $0xf0] sm:$0xff]
      %v375 = vld [vmem:[%s198 + $0xf8] sm:$0xff]
      %v376 = vld [vmem:[%s198 + $0x100] sm:$0xff]
      %v377 = vld [vmem:[%s198 + $0x108] sm:$0xff]
      %v378 = vld [vmem:[%s198 + $0x110] sm:$0xff]
      %v379 = vld [vmem:[%s198 + $0x118] sm:$0xff]
      %v380 = vld [vmem:[%s198 + $0x120] sm:$0xff]
      %v381 = vld [vmem:[%s198 + $0x128] sm:$0xff]
      %v382 = vld [vmem:[%s198 + $0x130] sm:$0xff]
      %v383 = vld [vmem:[%s198 + $0x138] sm:$0xff]
      %v384 = vld [vmem:[%s198 + $0x140] sm:$0xff]
      %v385 = vld [vmem:[%s198 + $0x148] sm:$0xff]
      %v386 = vld [vmem:[%s198 + $0x150] sm:$0xff]
      %v387 = vld [vmem:[%s198 + $0x158] sm:$0xff]
      %v388 = vld [vmem:[%s198 + $0x160] sm:$0xff]
      %v389 = vld [vmem:[%s198 + $0x168] sm:$0xff]
      %v390 = vld [vmem:[%s198 + $0x170] sm:$0xff]
      %v391 = vld [vmem:[%s198 + $0x178] sm:$0xff]
      %v392 = vld [vmem:[%s198 + $0x180] sm:$0xff]
      %v393 = vld [vmem:[%s198 + $0x188] sm:$0xff]
      %v394 = vld [vmem:[%s198 + $0x190] sm:$0xff]
      %v395 = vld [vmem:[%s198 + $0x198] sm:$0xff]
      %v396 = vld [vmem:[%s198 + $0x1a0] sm:$0xff]
      %v397 = vld [vmem:[%s198 + $0x1a8] sm:$0xff]
      %v398 = vld [vmem:[%s198 + $0x1b0] sm:$0xff]
      %v399 = vld [vmem:[%s198 + $0x1b8] sm:$0xff]
      %v400 = vld [vmem:[%s198 + $0x1c0] sm:$0xff]
      %v401 = vld [vmem:[%s198 + $0x1c8] sm:$0xff]
      %v402 = vld [vmem:[%s198 + $0x1d0] sm:$0xff]
      %v403 = vld [vmem:[%s198 + $0x1d8] sm:$0xff]
      %v404 = vld [vmem:[%s198 + $0x1e0] sm:$0xff]
      %v405 = vld [vmem:[%s198 + $0x1e8] sm:$0xff]
      %v406 = vld [vmem:[%s198 + $0x1f0] sm:$0xff]
      %v407 = vld [vmem:[%s198 + $0x1f8] sm:$0xff]
      %v408 = vld [vmem:[%s204] sm:$0xf]
      %v409 = vld [vmem:[%s204 + $0x4] sm:$0xf]
      %v410 = vld [vmem:[%s204 + $0x8] sm:$0xf]
      %v411 = vld [vmem:[%s204 + $0xc] sm:$0xf]
      %v412 = vld [vmem:[%s204 + $0x10] sm:$0xf]
      %v413 = vld [vmem:[%s204 + $0x14] sm:$0xf]
      %v414 = vld [vmem:[%s204 + $0x18] sm:$0xf]
      %v415 = vld [vmem:[%s204 + $0x1c] sm:$0xf]
      %v416 = vld [vmem:[%s204 + $0x20] sm:$0xf]
      %v417 = vld [vmem:[%s204 + $0x24] sm:$0xf]
      %v418 = vld [vmem:[%s204 + $0x28] sm:$0xf]
      %v419 = vld [vmem:[%s204 + $0x2c] sm:$0xf]
      %v420 = vld [vmem:[%s204 + $0x30] sm:$0xf]
      %v421 = vld [vmem:[%s204 + $0x34] sm:$0xf]
      %v422 = vld [vmem:[%s204 + $0x38] sm:$0xf]
      %v423 = vld [vmem:[%s204 + $0x3c] sm:$0xf]
      %v424 = vld [vmem:[%s204 + $0x40] sm:$0xf]
      %v425 = vld [vmem:[%s204 + $0x44] sm:$0xf]
      %v426 = vld [vmem:[%s204 + $0x48] sm:$0xf]
      %v427 = vld [vmem:[%s204 + $0x4c] sm:$0xf]
      %v428 = vld [vmem:[%s204 + $0x50] sm:$0xf]
      %v429 = vld [vmem:[%s204 + $0x54] sm:$0xf]
      %v430 = vld [vmem:[%s204 + $0x58] sm:$0x3]
      %v495 = vunpack.c.l.b16 %v344
      %v496 = vunpack.c.h.b16 %v344
      %v497 = vunpack.c.l.b16 %v345
      %v498 = vunpack.c.h.b16 %v345
      %v499 = vunpack.c.l.b16 %v346
      %v500 = vunpack.c.h.b16 %v346
      %v501 = vunpack.c.l.b16 %v347
      %v502 = vunpack.c.h.b16 %v347
      %v503 = vunpack.c.l.b16 %v348
      %v504 = vunpack.c.h.b16 %v348
      %v505 = vunpack.c.l.b16 %v349
      %v506 = vunpack.c.h.b16 %v349
      %v507 = vunpack.c.l.b16 %v350
      %v508 = vunpack.c.h.b16 %v350
      %v509 = vunpack.c.l.b16 %v351
      %v510 = vunpack.c.h.b16 %v351
      %v511 = vunpack.c.l.b16 %v352
      %v512 = vunpack.c.h.b16 %v352
      %v513 = vunpack.c.l.b16 %v353
      %v514 = vunpack.c.h.b16 %v353
      %v515 = vunpack.c.l.b16 %v354
      %v516 = vunpack.c.h.b16 %v354
      %v517 = vunpack.c.l.b16 %v355
      %v518 = vunpack.c.h.b16 %v355
      %v519 = vunpack.c.l.b16 %v356
      %v520 = vunpack.c.h.b16 %v356
      %v521 = vunpack.c.l.b16 %v357
      %v522 = vunpack.c.h.b16 %v357
      %v523 = vunpack.c.l.b16 %v358
      %v524 = vunpack.c.h.b16 %v358
      %v525 = vunpack.c.l.b16 %v359
      %v526 = vunpack.c.h.b16 %v359
      %v527 = vunpack.c.l.b16 %v360
      %v528 = vunpack.c.h.b16 %v360
      %v529 = vunpack.c.l.b16 %v361
      %v530 = vunpack.c.h.b16 %v361
      %v531 = vunpack.c.l.b16 %v362
      %v532 = vunpack.c.h.b16 %v362
      %v533 = vunpack.c.l.b16 %v363
      %v534 = vunpack.c.h.b16 %v363
      %v535 = vunpack.c.l.b16 %v364
      %v536 = vunpack.c.h.b16 %v364
      %v537 = vunpack.c.l.b16 %v365
      %v538 = vunpack.c.h.b16 %v365
      %v539 = vunpack.c.l.b16 %v366
      %v540 = vunpack.c.h.b16 %v366
      %v541 = vunpack.c.l.b16 %v367
      %v542 = vunpack.c.h.b16 %v367
      %v543 = vunpack.c.l.b16 %v368
      %v544 = vunpack.c.h.b16 %v368
      %v545 = vunpack.c.l.b16 %v369
      %v546 = vunpack.c.h.b16 %v369
      %v547 = vunpack.c.l.b16 %v370
      %v548 = vunpack.c.h.b16 %v370
      %v549 = vunpack.c.l.b16 %v371
      %v550 = vunpack.c.h.b16 %v371
      %v551 = vunpack.c.l.b16 %v372
      %v552 = vunpack.c.h.b16 %v372
      %v553 = vunpack.c.l.b16 %v373
      %v554 = vunpack.c.h.b16 %v373
      %v555 = vunpack.c.l.b16 %v374
      %v556 = vunpack.c.h.b16 %v374
      %v557 = vunpack.c.l.b16 %v375
      %v558 = vunpack.c.h.b16 %v375
      %v559 = vunpack.c.l.b16 %v376
      %v560 = vunpack.c.h.b16 %v376
      %v561 = vunpack.c.l.b16 %v377
      %v562 = vunpack.c.h.b16 %v377
      %v563 = vunpack.c.l.b16 %v378
      %v564 = vunpack.c.h.b16 %v378
      %v565 = vunpack.c.l.b16 %v379
      %v566 = vunpack.c.h.b16 %v379
      %v567 = vunpack.c.l.b16 %v380
      %v568 = vunpack.c.h.b16 %v380
      %v569 = vunpack.c.l.b16 %v381
      %v570 = vunpack.c.h.b16 %v381
      %v571 = vunpack.c.l.b16 %v382
      %v572 = vunpack.c.h.b16 %v382
      %v573 = vunpack.c.l.b16 %v383
      %v574 = vunpack.c.h.b16 %v383
      %v575 = vunpack.c.l.b16 %v384
      %v576 = vunpack.c.h.b16 %v384
      %v577 = vunpack.c.l.b16 %v385
      %v578 = vunpack.c.h.b16 %v385
      %v579 = vunpack.c.l.b16 %v386
      %v580 = vunpack.c.h.b16 %v386
      %v581 = vunpack.c.l.b16 %v387
      %v582 = vunpack.c.h.b16 %v387
      %v583 = vunpack.c.l.b16 %v388
      %v584 = vunpack.c.h.b16 %v388
      %v585 = vunpack.c.l.b16 %v389
      %v586 = vunpack.c.h.b16 %v389
      %v587 = vunpack.c.l.b16 %v390
      %v588 = vunpack.c.h.b16 %v390
      %v589 = vunpack.c.l.b16 %v391
      %v590 = vunpack.c.h.b16 %v391
      %v591 = vunpack.c.l.b16 %v392
      %v592 = vunpack.c.h.b16 %v392
      %v593 = vunpack.c.l.b16 %v393
      %v594 = vunpack.c.h.b16 %v393
      %v595 = vunpack.c.l.b16 %v394
      %v596 = vunpack.c.h.b16 %v394
      %v597 = vunpack.c.l.b16 %v395
      %v598 = vunpack.c.h.b16 %v395
      %v599 = vunpack.c.l.b16 %v396
      %v600 = vunpack.c.h.b16 %v396
      %v601 = vunpack.c.l.b16 %v397
      %v602 = vunpack.c.h.b16 %v397
      %v603 = vunpack.c.l.b16 %v398
      %v604 = vunpack.c.h.b16 %v398
      %v605 = vunpack.c.l.b16 %v399
      %v606 = vunpack.c.h.b16 %v399
      %v607 = vunpack.c.l.b16 %v400
      %v608 = vunpack.c.h.b16 %v400
      %v609 = vunpack.c.l.b16 %v401
      %v610 = vunpack.c.h.b16 %v401
      %v611 = vunpack.c.l.b16 %v402
      %v612 = vunpack.c.h.b16 %v402
      %v613 = vunpack.c.l.b16 %v403
      %v614 = vunpack.c.h.b16 %v403
      %v615 = vunpack.c.l.b16 %v404
      %v616 = vunpack.c.h.b16 %v404
      %v617 = vunpack.c.l.b16 %v405
      %v618 = vunpack.c.h.b16 %v405
      %v619 = vunpack.c.l.b16 %v406
      %v620 = vunpack.c.h.b16 %v406
      %v621 = vunpack.c.l.b16 %v407
      %v622 = vunpack.c.h.b16 %v407
      %v623 = vpack.c.b16 %v497, %v495
      %v624 = vpack.c.b16 %v498, %v496
      %v625 = vpack.c.b16 %v501, %v499
      %v626 = vpack.c.b16 %v502, %v500
      %v627 = vpack.c.b16 %v505, %v503
      %v628 = vpack.c.b16 %v506, %v504
      %v629 = vpack.c.b16 %v509, %v507
      %v630 = vpack.c.b16 %v510, %v508
      %v631 = vpack.c.b16 %v513, %v511
      %v632 = vpack.c.b16 %v514, %v512
      %v633 = vpack.c.b16 %v517, %v515
      %v634 = vpack.c.b16 %v518, %v516
      %v635 = vpack.c.b16 %v521, %v519
      %v636 = vpack.c.b16 %v522, %v520
      %v637 = vpack.c.b16 %v525, %v523
      %v638 = vpack.c.b16 %v526, %v524
      %v639 = vpack.c.b16 %v529, %v527
      %v640 = vpack.c.b16 %v530, %v528
      %v641 = vpack.c.b16 %v533, %v531
      %v642 = vpack.c.b16 %v534, %v532
      %v643 = vpack.c.b16 %v537, %v535
      %v644 = vpack.c.b16 %v538, %v536
      %v645 = vpack.c.b16 %v541, %v539
      %v646 = vpack.c.b16 %v542, %v540
      %v647 = vpack.c.b16 %v545, %v543
      %v648 = vpack.c.b16 %v546, %v544
      %v649 = vpack.c.b16 %v549, %v547
      %v650 = vpack.c.b16 %v550, %v548
      %v651 = vpack.c.b16 %v553, %v551
      %v652 = vpack.c.b16 %v554, %v552
      %v653 = vpack.c.b16 %v557, %v555
      %v654 = vpack.c.b16 %v558, %v556
      %v655 = vpack.c.b16 %v561, %v559
      %v656 = vpack.c.b16 %v562, %v560
      %v657 = vpack.c.b16 %v565, %v563
      %v658 = vpack.c.b16 %v566, %v564
      %v659 = vpack.c.b16 %v569, %v567
      %v660 = vpack.c.b16 %v570, %v568
      %v661 = vpack.c.b16 %v573, %v571
      %v662 = vpack.c.b16 %v574, %v572
      %v663 = vpack.c.b16 %v577, %v575
      %v664 = vpack.c.b16 %v578, %v576
      %v665 = vpack.c.b16 %v581, %v579
      %v666 = vpack.c.b16 %v582, %v580
      %v667 = vpack.c.b16 %v585, %v583
      %v668 = vpack.c.b16 %v586, %v584
      %v669 = vpack.c.b16 %v589, %v587
      %v670 = vpack.c.b16 %v590, %v588
      %v671 = vpack.c.b16 %v593, %v591
      %v672 = vpack.c.b16 %v594, %v592
      %v673 = vpack.c.b16 %v597, %v595
      %v674 = vpack.c.b16 %v598, %v596
      %v675 = vpack.c.b16 %v601, %v599
      %v676 = vpack.c.b16 %v602, %v600
      %v677 = vpack.c.b16 %v605, %v603
      %v678 = vpack.c.b16 %v606, %v604
      %v679 = vpack.c.b16 %v609, %v607
      %v680 = vpack.c.b16 %v610, %v608
      %v681 = vpack.c.b16 %v613, %v611
      %v682 = vpack.c.b16 %v614, %v612
      %v683 = vpack.c.b16 %v617, %v615
      %v684 = vpack.c.b16 %v618, %v616
      %v685 = vpack.c.b16 %v621, %v619
      %v686 = vpack.c.b16 %v622, %v620
      %v742 = vunpack.c.l.b16 %v408
      %v743 = vunpack.c.l.b16 %v409
      %v744 = vunpack.c.l.b16 %v410
      %v745 = vunpack.c.l.b16 %v411
      %v746 = vunpack.c.l.b16 %v412
      %v747 = vunpack.c.l.b16 %v413
      %v748 = vunpack.c.l.b16 %v414
      %v749 = vunpack.c.l.b16 %v415
      %v750 = vunpack.c.l.b16 %v416
      %v751 = vunpack.c.l.b16 %v417
      %v752 = vunpack.c.l.b16 %v418
      %v753 = vunpack.c.l.b16 %v419
      %v754 = vunpack.c.l.b16 %v420
      %v755 = vunpack.c.l.b16 %v421
      %v756 = vunpack.c.l.b16 %v422
      %v757 = vunpack.c.l.b16 %v423
      %v758 = vunpack.c.l.b16 %v424
      %v759 = vunpack.c.l.b16 %v425
      %v760 = vunpack.c.l.b16 %v426
      %v761 = vunpack.c.l.b16 %v427
      %v762 = vunpack.c.l.b16 %v428
      %v763 = vunpack.c.l.b16 %v429
      %v764 = vunpack.c.l.b16 %v430
      %v765 = vpack.c.b16 %v743, %v742
      %v766 = vpack.c.b16 %v745, %v744
      %v767 = vpack.c.b16 %v747, %v746
      %v768 = vpack.c.b16 %v749, %v748
      %v769 = vpack.c.b16 %v751, %v750
      %v770 = vpack.c.b16 %v753, %v752
      %v771 = vpack.c.b16 %v755, %v754
      %v772 = vpack.c.b16 %v757, %v756
      %v773 = vpack.c.b16 %v759, %v758
      %v774 = vpack.c.b16 %v761, %v760
      %v775 = vpack.c.b16 %v763, %v762
      %v776 = vpack.c.b16 %v764, %v764
      %vm788 = vcmask 424960
      %v790 = vsel %vm788, %v624, 0
      %v793 = vsel %vm788, %v626, 0
      %v796 = vsel %vm788, %v628, 0
      %v799 = vsel %vm788, %v630, 0
      %v802 = vsel %vm788, %v632, 0
      %v805 = vsel %vm788, %v634, 0
      %v808 = vsel %vm788, %v636, 0
      %v811 = vsel %vm788, %v638, 0
      %v814 = vsel %vm788, %v640, 0
      %v817 = vsel %vm788, %v642, 0
      %v820 = vsel %vm788, %v644, 0
      %v823 = vsel %vm788, %v646, 0
      %v826 = vsel %vm788, %v648, 0
      %v829 = vsel %vm788, %v650, 0
      %v832 = vsel %vm788, %v652, 0
      %v835 = vsel %vm788, %v654, 0
      %v838 = vsel %vm788, %v656, 0
      %v841 = vsel %vm788, %v658, 0
      %v844 = vsel %vm788, %v660, 0
      %v847 = vsel %vm788, %v662, 0
      %v850 = vsel %vm788, %v664, 0
      %v853 = vsel %vm788, %v666, 0
      %v856 = vsel %vm788, %v668, 0
      %v859 = vsel %vm788, %v670, 0
      %v862 = vsel %vm788, %v672, 0
      %v865 = vsel %vm788, %v674, 0
      %v868 = vsel %vm788, %v676, 0
      %v871 = vsel %vm788, %v678, 0
      %v874 = vsel %vm788, %v680, 0
      %v877 = vsel %vm788, %v682, 0
      %v880 = vsel %vm788, %v684, 0
      %v883 = vsel %vm788, %v686, 0
      %vm885 = vcmask 1041408
      %v887 = vsel %vm885, %v776, 0
      %889 = vmatpush.bf16.msra.mxu0 %v772
      %890 = vmatpush.bf16.msra.mxu0 %v771
      %891 = vmatpush.bf16.msra.mxu0 %v770
      %892 = vmatpush.bf16.msra.mxu0 %v769
      %893 = vmatpush.bf16.msra.mxu0 %v768
      %894 = vmatpush.bf16.msra.mxu0 %v767
      %895 = vmatpush.bf16.msra.mxu0 %v766
      %896 = vmatpush.bf16.msra.mxu0 %v765
      %897 = vmatmul.bf16.gmra.mxu0 %v623
      %v898 = vpop.f32.mrf.mxu0
      %v899 = vadd.f32 0.0, %v898
      %v900 = vpop.f32.mrf.mxu0
      %v901 = vadd.f32 0.0, %v900
      %902 = vmatmul.bf16.gmra.mxu0 %v625
      %v903 = vpop.f32.mrf.mxu0
      %v904 = vadd.f32 0.0, %v903
      %v905 = vpop.f32.mrf.mxu0
      %v906 = vadd.f32 0.0, %v905
      %907 = vmatmul.bf16.gmra.mxu0 %v627
      %v908 = vpop.f32.mrf.mxu0
      %v909 = vadd.f32 0.0, %v908
      %v910 = vpop.f32.mrf.mxu0
      %v911 = vadd.f32 0.0, %v910
      %912 = vmatmul.bf16.gmra.mxu0 %v629
      %v913 = vpop.f32.mrf.mxu0
      %v914 = vadd.f32 0.0, %v913
      %v915 = vpop.f32.mrf.mxu0
      %v916 = vadd.f32 0.0, %v915
      %917 = vmatmul.bf16.gmra.mxu0 %v631
      %v918 = vpop.f32.mrf.mxu0
      %v919 = vadd.f32 0.0, %v918
      %v920 = vpop.f32.mrf.mxu0
      %v921 = vadd.f32 0.0, %v920
      %922 = vmatmul.bf16.gmra.mxu0 %v633
      %v923 = vpop.f32.mrf.mxu0
      %v924 = vadd.f32 0.0, %v923
      %v925 = vpop.f32.mrf.mxu0
      %v926 = vadd.f32 0.0, %v925
      %927 = vmatmul.bf16.gmra.mxu0 %v635
      %v928 = vpop.f32.mrf.mxu0
      %v929 = vadd.f32 0.0, %v928
      %v930 = vpop.f32.mrf.mxu0
      %v931 = vadd.f32 0.0, %v930
      %932 = vmatmul.bf16.gmra.mxu0 %v637
      %v933 = vpop.f32.mrf.mxu0
      %v934 = vadd.f32 0.0, %v933
      %v935 = vpop.f32.mrf.mxu0
      %v936 = vadd.f32 0.0, %v935
      %937 = vmatmul.bf16.gmra.mxu0 %v639
      %v938 = vpop.f32.mrf.mxu0
      %v939 = vadd.f32 0.0, %v938
      %v940 = vpop.f32.mrf.mxu0
      %v941 = vadd.f32 0.0, %v940
      %942 = vmatmul.bf16.gmra.mxu0 %v641
      %v943 = vpop.f32.mrf.mxu0
      %v944 = vadd.f32 0.0, %v943
      %v945 = vpop.f32.mrf.mxu0
      %v946 = vadd.f32 0.0, %v945
      %947 = vmatmul.bf16.gmra.mxu0 %v643
      %v948 = vpop.f32.mrf.mxu0
      %v949 = vadd.f32 0.0, %v948
      %v950 = vpop.f32.mrf.mxu0
      %v951 = vadd.f32 0.0, %v950
      %952 = vmatmul.bf16.gmra.mxu0 %v645
      %v953 = vpop.f32.mrf.mxu0
      %v954 = vadd.f32 0.0, %v953
      %v955 = vpop.f32.mrf.mxu0
      %v956 = vadd.f32 0.0, %v955
      %957 = vmatmul.bf16.gmra.mxu0 %v647
      %v958 = vpop.f32.mrf.mxu0
      %v959 = vadd.f32 0.0, %v958
      %v960 = vpop.f32.mrf.mxu0
      %v961 = vadd.f32 0.0, %v960
      %962 = vmatmul.bf16.gmra.mxu0 %v649
      %v963 = vpop.f32.mrf.mxu0
      %v964 = vadd.f32 0.0, %v963
      %v965 = vpop.f32.mrf.mxu0
      %v966 = vadd.f32 0.0, %v965
      %967 = vmatmul.bf16.gmra.mxu0 %v651
      %v968 = vpop.f32.mrf.mxu0
      %v969 = vadd.f32 0.0, %v968
      %v970 = vpop.f32.mrf.mxu0
      %v971 = vadd.f32 0.0, %v970
      %972 = vmatmul.bf16.gmra.mxu0 %v653
      %v973 = vpop.f32.mrf.mxu0
      %v974 = vadd.f32 0.0, %v973
      %v975 = vpop.f32.mrf.mxu0
      %v976 = vadd.f32 0.0, %v975
      %977 = vmatmul.bf16.gmra.mxu0 %v655
      %v978 = vpop.f32.mrf.mxu0
      %v979 = vadd.f32 0.0, %v978
      %v980 = vpop.f32.mrf.mxu0
      %v981 = vadd.f32 0.0, %v980
      %982 = vmatmul.bf16.gmra.mxu0 %v657
      %v983 = vpop.f32.mrf.mxu0
      %v984 = vadd.f32 0.0, %v983
      %v985 = vpop.f32.mrf.mxu0
      %v986 = vadd.f32 0.0, %v985
      %987 = vmatmul.bf16.gmra.mxu0 %v659
      %v988 = vpop.f32.mrf.mxu0
      %v989 = vadd.f32 0.0, %v988
      %v990 = vpop.f32.mrf.mxu0
      %v991 = vadd.f32 0.0, %v990
      %992 = vmatmul.bf16.gmra.mxu0 %v661
      %v993 = vpop.f32.mrf.mxu0
      %v994 = vadd.f32 0.0, %v993
      %v995 = vpop.f32.mrf.mxu0
      %v996 = vadd.f32 0.0, %v995
      %997 = vmatmul.bf16.gmra.mxu0 %v663
      %v998 = vpop.f32.mrf.mxu0
      %v999 = vadd.f32 0.0, %v998
      %v1000 = vpop.f32.mrf.mxu0
      %v1001 = vadd.f32 0.0, %v1000
      %1002 = vmatmul.bf16.gmra.mxu0 %v665
      %v1003 = vpop.f32.mrf.mxu0
      %v1004 = vadd.f32 0.0, %v1003
      %v1005 = vpop.f32.mrf.mxu0
      %v1006 = vadd.f32 0.0, %v1005
      %1007 = vmatmul.bf16.gmra.mxu0 %v667
      %v1008 = vpop.f32.mrf.mxu0
      %v1009 = vadd.f32 0.0, %v1008
      %v1010 = vpop.f32.mrf.mxu0
      %v1011 = vadd.f32 0.0, %v1010
      %1012 = vmatmul.bf16.gmra.mxu0 %v669
      %v1013 = vpop.f32.mrf.mxu0
      %v1014 = vadd.f32 0.0, %v1013
      %v1015 = vpop.f32.mrf.mxu0
      %v1016 = vadd.f32 0.0, %v1015
      %1017 = vmatmul.bf16.gmra.mxu0 %v671
      %v1018 = vpop.f32.mrf.mxu0
      %v1019 = vadd.f32 0.0, %v1018
      %v1020 = vpop.f32.mrf.mxu0
      %v1021 = vadd.f32 0.0, %v1020
      %1022 = vmatmul.bf16.gmra.mxu0 %v673
      %v1023 = vpop.f32.mrf.mxu0
      %v1024 = vadd.f32 0.0, %v1023
      %v1025 = vpop.f32.mrf.mxu0
      %v1026 = vadd.f32 0.0, %v1025
      %1027 = vmatmul.bf16.gmra.mxu0 %v675
      %v1028 = vpop.f32.mrf.mxu0
      %v1029 = vadd.f32 0.0, %v1028
      %v1030 = vpop.f32.mrf.mxu0
      %v1031 = vadd.f32 0.0, %v1030
      %1032 = vmatmul.bf16.gmra.mxu0 %v677
      %v1033 = vpop.f32.mrf.mxu0
      %v1034 = vadd.f32 0.0, %v1033
      %v1035 = vpop.f32.mrf.mxu0
      %v1036 = vadd.f32 0.0, %v1035
      %1037 = vmatmul.bf16.gmra.mxu0 %v679
      %v1038 = vpop.f32.mrf.mxu0
      %v1039 = vadd.f32 0.0, %v1038
      %v1040 = vpop.f32.mrf.mxu0
      %v1041 = vadd.f32 0.0, %v1040
      %1042 = vmatmul.bf16.gmra.mxu0 %v681
      %v1043 = vpop.f32.mrf.mxu0
      %v1044 = vadd.f32 0.0, %v1043
      %v1045 = vpop.f32.mrf.mxu0
      %v1046 = vadd.f32 0.0, %v1045
      %1047 = vmatmul.bf16.gmra.mxu0 %v683
      %v1048 = vpop.f32.mrf.mxu0
      %v1049 = vadd.f32 0.0, %v1048
      %v1050 = vpop.f32.mrf.mxu0
      %v1051 = vadd.f32 0.0, %v1050
      %1052 = vmatmul.bf16.gmra.mxu0 %v685
      %v1053 = vpop.f32.mrf.mxu0
      %v1054 = vadd.f32 0.0, %v1053
      %v1055 = vpop.f32.mrf.mxu0
      %v1056 = vadd.f32 0.0, %v1055
      %1057 = vdwg.mxu0
      %1058 = vmatpush.bf16.msra.mxu0 0
      %1059 = vmatpush.bf16.msra.mxu0 0
      %1060 = vmatpush.bf16.msra.mxu0 0
      %1061 = vmatpush.bf16.msra.mxu0 0
      %1062 = vmatpush.bf16.msra.mxu0 %v887
      %1063 = vmatpush.bf16.msra.mxu0 %v775
      %1064 = vmatpush.bf16.msra.mxu0 %v774
      %1065 = vmatpush.bf16.msra.mxu0 %v773
      %1066 = vmatmul.bf16.gmra.mxu0 %v790
      %v1067 = vpop.f32.mrf.mxu0
      %v1068 = vadd.f32 %v899, %v1067
      %v1069 = vpop.f32.mrf.mxu0
      %v1070 = vadd.f32 %v901, %v1069
      %1071 = vmatmul.bf16.gmra.mxu0 %v793
      %v1072 = vpop.f32.mrf.mxu0
      %v1073 = vadd.f32 %v904, %v1072
      %v1074 = vpop.f32.mrf.mxu0
      %v1075 = vadd.f32 %v906, %v1074
      %1076 = vmatmul.bf16.gmra.mxu0 %v796
      %v1077 = vpop.f32.mrf.mxu0
      %v1078 = vadd.f32 %v909, %v1077
      %v1079 = vpop.f32.mrf.mxu0
      %v1080 = vadd.f32 %v911, %v1079
      %1081 = vmatmul.bf16.gmra.mxu0 %v799
      %v1082 = vpop.f32.mrf.mxu0
      %v1083 = vadd.f32 %v914, %v1082
      %v1084 = vpop.f32.mrf.mxu0
      %v1085 = vadd.f32 %v916, %v1084
      %1086 = vmatmul.bf16.gmra.mxu0 %v802
      %v1087 = vpop.f32.mrf.mxu0
      %v1088 = vadd.f32 %v919, %v1087
      %v1089 = vpop.f32.mrf.mxu0
      %v1090 = vadd.f32 %v921, %v1089
      %1091 = vmatmul.bf16.gmra.mxu0 %v805
      %v1092 = vpop.f32.mrf.mxu0
      %v1093 = vadd.f32 %v924, %v1092
      %v1094 = vpop.f32.mrf.mxu0
      %v1095 = vadd.f32 %v926, %v1094
      %1096 = vmatmul.bf16.gmra.mxu0 %v808
      %v1097 = vpop.f32.mrf.mxu0
      %v1098 = vadd.f32 %v929, %v1097
      %v1099 = vpop.f32.mrf.mxu0
      %v1100 = vadd.f32 %v931, %v1099
      %1101 = vmatmul.bf16.gmra.mxu0 %v811
      %v1102 = vpop.f32.mrf.mxu0
      %v1103 = vadd.f32 %v934, %v1102
      %v1104 = vpop.f32.mrf.mxu0
      %v1105 = vadd.f32 %v936, %v1104
      %1106 = vmatmul.bf16.gmra.mxu0 %v814
      %v1107 = vpop.f32.mrf.mxu0
      %v1108 = vadd.f32 %v939, %v1107
      %v1109 = vpop.f32.mrf.mxu0
      %v1110 = vadd.f32 %v941, %v1109
      %1111 = vmatmul.bf16.gmra.mxu0 %v817
      %v1112 = vpop.f32.mrf.mxu0
      %v1113 = vadd.f32 %v944, %v1112
      %v1114 = vpop.f32.mrf.mxu0
      %v1115 = vadd.f32 %v946, %v1114
      %1116 = vmatmul.bf16.gmra.mxu0 %v820
      %v1117 = vpop.f32.mrf.mxu0
      %v1118 = vadd.f32 %v949, %v1117
      %v1119 = vpop.f32.mrf.mxu0
      %v1120 = vadd.f32 %v951, %v1119
      %1121 = vmatmul.bf16.gmra.mxu0 %v823
      %v1122 = vpop.f32.mrf.mxu0
      %v1123 = vadd.f32 %v954, %v1122
      %v1124 = vpop.f32.mrf.mxu0
      %v1125 = vadd.f32 %v956, %v1124
      %1126 = vmatmul.bf16.gmra.mxu0 %v826
      %v1127 = vpop.f32.mrf.mxu0
      %v1128 = vadd.f32 %v959, %v1127
      %v1129 = vpop.f32.mrf.mxu0
      %v1130 = vadd.f32 %v961, %v1129
      %1131 = vmatmul.bf16.gmra.mxu0 %v829
      %v1132 = vpop.f32.mrf.mxu0
      %v1133 = vadd.f32 %v964, %v1132
      %v1134 = vpop.f32.mrf.mxu0
      %v1135 = vadd.f32 %v966, %v1134
      %1136 = vmatmul.bf16.gmra.mxu0 %v832
      %v1137 = vpop.f32.mrf.mxu0
      %v1138 = vadd.f32 %v969, %v1137
      %v1139 = vpop.f32.mrf.mxu0
      %v1140 = vadd.f32 %v971, %v1139
      %1141 = vmatmul.bf16.gmra.mxu0 %v835
      %v1142 = vpop.f32.mrf.mxu0
      %v1143 = vadd.f32 %v974, %v1142
      %v1144 = vpop.f32.mrf.mxu0
      %v1145 = vadd.f32 %v976, %v1144
      %1146 = vmatmul.bf16.gmra.mxu0 %v838
      %v1147 = vpop.f32.mrf.mxu0
      %v1148 = vadd.f32 %v979, %v1147
      %v1149 = vpop.f32.mrf.mxu0
      %v1150 = vadd.f32 %v981, %v1149
      %1151 = vmatmul.bf16.gmra.mxu0 %v841
      %v1152 = vpop.f32.mrf.mxu0
      %v1153 = vadd.f32 %v984, %v1152
      %v1154 = vpop.f32.mrf.mxu0
      %v1155 = vadd.f32 %v986, %v1154
      %1156 = vmatmul.bf16.gmra.mxu0 %v844
      %v1157 = vpop.f32.mrf.mxu0
      %v1158 = vadd.f32 %v989, %v1157
      %v1159 = vpop.f32.mrf.mxu0
      %v1160 = vadd.f32 %v991, %v1159
      %1161 = vmatmul.bf16.gmra.mxu0 %v847
      %v1162 = vpop.f32.mrf.mxu0
      %v1163 = vadd.f32 %v994, %v1162
      %v1164 = vpop.f32.mrf.mxu0
      %v1165 = vadd.f32 %v996, %v1164
      %1166 = vmatmul.bf16.gmra.mxu0 %v850
      %v1167 = vpop.f32.mrf.mxu0
      %v1168 = vadd.f32 %v999, %v1167
      %v1169 = vpop.f32.mrf.mxu0
      %v1170 = vadd.f32 %v1001, %v1169
      %1171 = vmatmul.bf16.gmra.mxu0 %v853
      %v1172 = vpop.f32.mrf.mxu0
      %v1173 = vadd.f32 %v1004, %v1172
      %v1174 = vpop.f32.mrf.mxu0
      %v1175 = vadd.f32 %v1006, %v1174
      %1176 = vmatmul.bf16.gmra.mxu0 %v856
      %v1177 = vpop.f32.mrf.mxu0
      %v1178 = vadd.f32 %v1009, %v1177
      %v1179 = vpop.f32.mrf.mxu0
      %v1180 = vadd.f32 %v1011, %v1179
      %1181 = vmatmul.bf16.gmra.mxu0 %v859
      %v1182 = vpop.f32.mrf.mxu0
      %v1183 = vadd.f32 %v1014, %v1182
      %v1184 = vpop.f32.mrf.mxu0
      %v1185 = vadd.f32 %v1016, %v1184
      %1186 = vmatmul.bf16.gmra.mxu0 %v862
      %v1187 = vpop.f32.mrf.mxu0
      %v1188 = vadd.f32 %v1019, %v1187
      %v1189 = vpop.f32.mrf.mxu0
      %v1190 = vadd.f32 %v1021, %v1189
      %1191 = vmatmul.bf16.gmra.mxu0 %v865
      %v1192 = vpop.f32.mrf.mxu0
      %v1193 = vadd.f32 %v1024, %v1192
      %v1194 = vpop.f32.mrf.mxu0
      %v1195 = vadd.f32 %v1026, %v1194
      %1196 = vmatmul.bf16.gmra.mxu0 %v868
      %v1197 = vpop.f32.mrf.mxu0
      %v1198 = vadd.f32 %v1029, %v1197
      %v1199 = vpop.f32.mrf.mxu0
      %v1200 = vadd.f32 %v1031, %v1199
      %1201 = vmatmul.bf16.gmra.mxu0 %v871
      %v1202 = vpop.f32.mrf.mxu0
      %v1203 = vadd.f32 %v1034, %v1202
      %v1204 = vpop.f32.mrf.mxu0
      %v1205 = vadd.f32 %v1036, %v1204
      %1206 = vmatmul.bf16.gmra.mxu0 %v874
      %v1207 = vpop.f32.mrf.mxu0
      %v1208 = vadd.f32 %v1039, %v1207
      %v1209 = vpop.f32.mrf.mxu0
      %v1210 = vadd.f32 %v1041, %v1209
      %1211 = vmatmul.bf16.gmra.mxu0 %v877
      %v1212 = vpop.f32.mrf.mxu0
      %v1213 = vadd.f32 %v1044, %v1212
      %v1214 = vpop.f32.mrf.mxu0
      %v1215 = vadd.f32 %v1046, %v1214
      %1216 = vmatmul.bf16.gmra.mxu0 %v880
      %v1217 = vpop.f32.mrf.mxu0
      %v1218 = vadd.f32 %v1049, %v1217
      %v1219 = vpop.f32.mrf.mxu0
      %v1220 = vadd.f32 %v1051, %v1219
      %1221 = vmatmul.bf16.gmra.mxu0 %v883
      %v1222 = vpop.f32.mrf.mxu0
      %v1223 = vadd.f32 %v1054, %v1222
      %v1224 = vpop.f32.mrf.mxu0
      %v1225 = vadd.f32 %v1056, %v1224
      %1226 = vdwg.mxu0
      %v1227 = vadd.f32 %v280, %v1068
      %v1228 = vadd.f32 %v281, %v1070
      %v1229 = vadd.f32 %v282, %v1073
      %v1230 = vadd.f32 %v283, %v1075
      %v1231 = vadd.f32 %v284, %v1078
      %v1232 = vadd.f32 %v285, %v1080
      %v1233 = vadd.f32 %v286, %v1083
      %v1234 = vadd.f32 %v287, %v1085
      %v1235 = vadd.f32 %v288, %v1088
      %v1236 = vadd.f32 %v289, %v1090
      %v1237 = vadd.f32 %v290, %v1093
      %v1238 = vadd.f32 %v291, %v1095
      %v1239 = vadd.f32 %v292, %v1098
      %v1240 = vadd.f32 %v293, %v1100
      %v1241 = vadd.f32 %v294, %v1103
      %v1242 = vadd.f32 %v295, %v1105
      %v1243 = vadd.f32 %v296, %v1108
      %v1244 = vadd.f32 %v297, %v1110
      %v1245 = vadd.f32 %v298, %v1113
      %v1246 = vadd.f32 %v299, %v1115
      %v1247 = vadd.f32 %v300, %v1118
      %v1248 = vadd.f32 %v301, %v1120
      %v1249 = vadd.f32 %v302, %v1123
      %v1250 = vadd.f32 %v303, %v1125
      %v1251 = vadd.f32 %v304, %v1128
      %v1252 = vadd.f32 %v305, %v1130
      %v1253 = vadd.f32 %v306, %v1133
      %v1254 = vadd.f32 %v307, %v1135
      %v1255 = vadd.f32 %v308, %v1138
      %v1256 = vadd.f32 %v309, %v1140
      %v1257 = vadd.f32 %v310, %v1143
      %v1258 = vadd.f32 %v311, %v1145
      %v1259 = vadd.f32 %v312, %v1148
      %v1260 = vadd.f32 %v313, %v1150
      %v1261 = vadd.f32 %v314, %v1153
      %v1262 = vadd.f32 %v315, %v1155
      %v1263 = vadd.f32 %v316, %v1158
      %v1264 = vadd.f32 %v317, %v1160
      %v1265 = vadd.f32 %v318, %v1163
      %v1266 = vadd.f32 %v319, %v1165
      %v1267 = vadd.f32 %v320, %v1168
      %v1268 = vadd.f32 %v321, %v1170
      %v1269 = vadd.f32 %v322, %v1173
      %v1270 = vadd.f32 %v323, %v1175
      %v1271 = vadd.f32 %v324, %v1178
      %v1272 = vadd.f32 %v325, %v1180
      %v1273 = vadd.f32 %v326, %v1183
      %v1274 = vadd.f32 %v327, %v1185
      %v1275 = vadd.f32 %v328, %v1188
      %v1276 = vadd.f32 %v329, %v1190
      %v1277 = vadd.f32 %v330, %v1193
      %v1278 = vadd.f32 %v331, %v1195
      %v1279 = vadd.f32 %v332, %v1198
      %v1280 = vadd.f32 %v333, %v1200
      %v1281 = vadd.f32 %v334, %v1203
      %v1282 = vadd.f32 %v335, %v1205
      %v1283 = vadd.f32 %v336, %v1208
      %v1284 = vadd.f32 %v337, %v1210
      %v1285 = vadd.f32 %v338, %v1213
      %v1286 = vadd.f32 %v339, %v1215
      %v1287 = vadd.f32 %v340, %v1218
      %v1288 = vadd.f32 %v341, %v1220
      %v1289 = vadd.f32 %v342, %v1223
      %v1290 = vadd.f32 %v343, %v1225
      %vm1291 = vcmask 261120
      %1292 = vst.msk [vmem:[#allocation2] sm:$0xff] %vm1291, %v1227
      %1293 = vst.msk [vmem:[#allocation2 + $0x8] sm:$0xff] %vm1291, %v1228
      %1294 = vst.msk [vmem:[#allocation2 + $0x10] sm:$0xff] %vm1291, %v1229
      %1295 = vst.msk [vmem:[#allocation2 + $0x18] sm:$0xff] %vm1291, %v1230
      %1296 = vst.msk [vmem:[#allocation2 + $0x20] sm:$0xff] %vm1291, %v1231
      %1297 = vst.msk [vmem:[#allocation2 + $0x28] sm:$0xff] %vm1291, %v1232
      %1298 = vst.msk [vmem:[#allocation2 + $0x30] sm:$0xff] %vm1291, %v1233
      %1299 = vst.msk [vmem:[#allocation2 + $0x38] sm:$0xff] %vm1291, %v1234
      %1300 = vst.msk [vmem:[#allocation2 + $0x40] sm:$0xff] %vm1291, %v1235
      %1301 = vst.msk [vmem:[#allocation2 + $0x48] sm:$0xff] %vm1291, %v1236
      %1302 = vst.msk [vmem:[#allocation2 + $0x50] sm:$0xff] %vm1291, %v1237
      %1303 = vst.msk [vmem:[#allocation2 + $0x58] sm:$0xff] %vm1291, %v1238
      %1304 = vst.msk [vmem:[#allocation2 + $0x60] sm:$0xff] %vm1291, %v1239
      %1305 = vst.msk [vmem:[#allocation2 + $0x68] sm:$0xff] %vm1291, %v1240
      %1306 = vst.msk [vmem:[#allocation2 + $0x70] sm:$0xff] %vm1291, %v1241
      %1307 = vst.msk [vmem:[#allocation2 + $0x78] sm:$0xff] %vm1291, %v1242
      %1308 = vst.msk [vmem:[#allocation2 + $0x80] sm:$0xff] %vm1291, %v1243
      %1309 = vst.msk [vmem:[#allocation2 + $0x88] sm:$0xff] %vm1291, %v1244
      %1310 = vst.msk [vmem:[#allocation2 + $0x90] sm:$0xff] %vm1291, %v1245
      %1311 = vst.msk [vmem:[#allocation2 + $0x98] sm:$0xff] %vm1291, %v1246
      %1312 = vst.msk [vmem:[#allocation2 + $0xa0] sm:$0xff] %vm1291, %v1247
      %1313 = vst.msk [vmem:[#allocation2 + $0xa8] sm:$0xff] %vm1291, %v1248
      %1314 = vst.msk [vmem:[#allocation2 + $0xb0] sm:$0xff] %vm1291, %v1249
      %1315 = vst.msk [vmem:[#allocation2 + $0xb8] sm:$0xff] %vm1291, %v1250
      %1316 = vst.msk [vmem:[#allocation2 + $0xc0] sm:$0xff] %vm1291, %v1251
      %1317 = vst.msk [vmem:[#allocation2 + $0xc8] sm:$0xff] %vm1291, %v1252
      %1318 = vst.msk [vmem:[#allocation2 + $0xd0] sm:$0xff] %vm1291, %v1253
      %1319 = vst.msk [vmem:[#allocation2 + $0xd8] sm:$0xff] %vm1291, %v1254
      %1320 = vst.msk [vmem:[#allocation2 + $0xe0] sm:$0xff] %vm1291, %v1255
      %1321 = vst.msk [vmem:[#allocation2 + $0xe8] sm:$0xff] %vm1291, %v1256
      %1322 = vst.msk [vmem:[#allocation2 + $0xf0] sm:$0xff] %vm1291, %v1257
      %1323 = vst.msk [vmem:[#allocation2 + $0xf8] sm:$0xff] %vm1291, %v1258
      %1324 = vst.msk [vmem:[#allocation2 + $0x100] sm:$0xff] %vm1291, %v1259
      %1325 = vst.msk [vmem:[#allocation2 + $0x108] sm:$0xff] %vm1291, %v1260
      %1326 = vst.msk [vmem:[#allocation2 + $0x110] sm:$0xff] %vm1291, %v1261
      %1327 = vst.msk [vmem:[#allocation2 + $0x118] sm:$0xff] %vm1291, %v1262
      %1328 = vst.msk [vmem:[#allocation2 + $0x120] sm:$0xff] %vm1291, %v1263
      %1329 = vst.msk [vmem:[#allocation2 + $0x128] sm:$0xff] %vm1291, %v1264
      %1330 = vst.msk [vmem:[#allocation2 + $0x130] sm:$0xff] %vm1291, %v1265
      %1331 = vst.msk [vmem:[#allocation2 + $0x138] sm:$0xff] %vm1291, %v1266
      %1332 = vst.msk [vmem:[#allocation2 + $0x140] sm:$0xff] %vm1291, %v1267
      %1333 = vst.msk [vmem:[#allocation2 + $0x148] sm:$0xff] %vm1291, %v1268
      %1334 = vst.msk [vmem:[#allocation2 + $0x150] sm:$0xff] %vm1291, %v1269
      %1335 = vst.msk [vmem:[#allocation2 + $0x158] sm:$0xff] %vm1291, %v1270
      %1336 = vst.msk [vmem:[#allocation2 + $0x160] sm:$0xff] %vm1291, %v1271
      %1337 = vst.msk [vmem:[#allocation2 + $0x168] sm:$0xff] %vm1291, %v1272
      %1338 = vst.msk [vmem:[#allocation2 + $0x170] sm:$0xff] %vm1291, %v1273
      %1339 = vst.msk [vmem:[#allocation2 + $0x178] sm:$0xff] %vm1291, %v1274
      %1340 = vst.msk [vmem:[#allocation2 + $0x180] sm:$0xff] %vm1291, %v1275
      %1341 = vst.msk [vmem:[#allocation2 + $0x188] sm:$0xff] %vm1291, %v1276
      %1342 = vst.msk [vmem:[#allocation2 + $0x190] sm:$0xff] %vm1291, %v1277
      %1343 = vst.msk [vmem:[#allocation2 + $0x198] sm:$0xff] %vm1291, %v1278
      %1344 = vst.msk [vmem:[#allocation2 + $0x1a0] sm:$0xff] %vm1291, %v1279
      %1345 = vst.msk [vmem:[#allocation2 + $0x1a8] sm:$0xff] %vm1291, %v1280
      %1346 = vst.msk [vmem:[#allocation2 + $0x1b0] sm:$0xff] %vm1291, %v1281
      %1347 = vst.msk [vmem:[#allocation2 + $0x1b8] sm:$0xff] %vm1291, %v1282
      %1348 = vst.msk [vmem:[#allocation2 + $0x1c0] sm:$0xff] %vm1291, %v1283
      %1349 = vst.msk [vmem:[#allocation2 + $0x1c8] sm:$0xff] %vm1291, %v1284
      %1350 = vst.msk [vmem:[#allocation2 + $0x1d0] sm:$0xff] %vm1291, %v1285
      %1351 = vst.msk [vmem:[#allocation2 + $0x1d8] sm:$0xff] %vm1291, %v1286
      %1352 = vst.msk [vmem:[#allocation2 + $0x1e0] sm:$0xff] %vm1291, %v1287
      %1353 = vst.msk [vmem:[#allocation2 + $0x1e8] sm:$0xff] %vm1291, %v1288
      %1354 = vst.msk [vmem:[#allocation2 + $0x1f0] sm:$0xff] %vm1291, %v1289
      %1355 = vst.msk [vmem:[#allocation2 + $0x1f8] sm:$0xff] %vm1291, %v1290
      %p1356 = scmp.eq.s32.totalorder %s19, 2
      // Predicated region
      $region37: #{gesture3dnet_forward.8} parent=31 // pred_check
        %p1357 = pneg %p1356
      $region38: #{gesture3dnet_forward.8} parent=31 // pred_check_branch
        %1359 = sbr.rel (%p1357) target = $region40
      $region39: #{gesture3dnet_forward.8} parent=31 // pred_region
        %v1360 = vld [vmem:[#allocation2] sm:$0xff]
        %v1361 = vld [vmem:[#allocation2 + $0x8] sm:$0xff]
        %v1362 = vld [vmem:[#allocation2 + $0x10] sm:$0xff]
        %v1363 = vld [vmem:[#allocation2 + $0x18] sm:$0xff]
        %v1364 = vld [vmem:[#allocation2 + $0x20] sm:$0xff]
        %v1365 = vld [vmem:[#allocation2 + $0x28] sm:$0xff]
        %v1366 = vld [vmem:[#allocation2 + $0x30] sm:$0xff]
        %v1367 = vld [vmem:[#allocation2 + $0x38] sm:$0xff]
        %v1368 = vld [vmem:[#allocation2 + $0x40] sm:$0xff]
        %v1369 = vld [vmem:[#allocation2 + $0x48] sm:$0xff]
        %v1370 = vld [vmem:[#allocation2 + $0x50] sm:$0xff]
        %v1371 = vld [vmem:[#allocation2 + $0x58] sm:$0xff]
        %v1372 = vld [vmem:[#allocation2 + $0x60] sm:$0xff]
        %v1373 = vld [vmem:[#allocation2 + $0x68] sm:$0xff]
        %v1374 = vld [vmem:[#allocation2 + $0x70] sm:$0xff]
        %v1375 = vld [vmem:[#allocation2 + $0x78] sm:$0xff]
        %v1376 = vld [vmem:[#allocation2 + $0x80] sm:$0xff]
        %v1377 = vld [vmem:[#allocation2 + $0x88] sm:$0xff]
        %v1378 = vld [vmem:[#allocation2 + $0x90] sm:$0xff]
        %v1379 = vld [vmem:[#allocation2 + $0x98] sm:$0xff]
        %v1380 = vld [vmem:[#allocation2 + $0xa0] sm:$0xff]
        %v1381 = vld [vmem:[#allocation2 + $0xa8] sm:$0xff]
        %v1382 = vld [vmem:[#allocation2 + $0xb0] sm:$0xff]
        %v1383 = vld [vmem:[#allocation2 + $0xb8] sm:$0xff]
        %v1384 = vld [vmem:[#allocation2 + $0xc0] sm:$0xff]
        %v1385 = vld [vmem:[#allocation2 + $0xc8] sm:$0xff]
        %v1386 = vld [vmem:[#allocation2 + $0xd0] sm:$0xff]
        %v1387 = vld [vmem:[#allocation2 + $0xd8] sm:$0xff]
        %v1388 = vld [vmem:[#allocation2 + $0xe0] sm:$0xff]
        %v1389 = vld [vmem:[#allocation2 + $0xe8] sm:$0xff]
        %v1390 = vld [vmem:[#allocation2 + $0xf0] sm:$0xff]
        %v1391 = vld [vmem:[#allocation2 + $0xf8] sm:$0xff]
        %v1392 = vld [vmem:[#allocation2 + $0x100] sm:$0xff]
        %v1393 = vld [vmem:[#allocation2 + $0x108] sm:$0xff]
        %v1394 = vld [vmem:[#allocation2 + $0x110] sm:$0xff]
        %v1395 = vld [vmem:[#allocation2 + $0x118] sm:$0xff]
        %v1396 = vld [vmem:[#allocation2 + $0x120] sm:$0xff]
        %v1397 = vld [vmem:[#allocation2 + $0x128] sm:$0xff]
        %v1398 = vld [vmem:[#allocation2 + $0x130] sm:$0xff]
        %v1399 = vld [vmem:[#allocation2 + $0x138] sm:$0xff]
        %v1400 = vld [vmem:[#allocation2 + $0x140] sm:$0xff]
        %v1401 = vld [vmem:[#allocation2 + $0x148] sm:$0xff]
        %v1402 = vld [vmem:[#allocation2 + $0x150] sm:$0xff]
        %v1403 = vld [vmem:[#allocation2 + $0x158] sm:$0xff]
        %v1404 = vld [vmem:[#allocation2 + $0x160] sm:$0xff]
        %v1405 = vld [vmem:[#allocation2 + $0x168] sm:$0xff]
        %v1406 = vld [vmem:[#allocation2 + $0x170] sm:$0xff]
        %v1407 = vld [vmem:[#allocation2 + $0x178] sm:$0xff]
        %v1408 = vld [vmem:[#allocation2 + $0x180] sm:$0xff]
        %v1409 = vld [vmem:[#allocation2 + $0x188] sm:$0xff]
        %v1410 = vld [vmem:[#allocation2 + $0x190] sm:$0xff]
        %v1411 = vld [vmem:[#allocation2 + $0x198] sm:$0xff]
        %v1412 = vld [vmem:[#allocation2 + $0x1a0] sm:$0xff]
        %v1413 = vld [vmem:[#allocation2 + $0x1a8] sm:$0xff]
        %v1414 = vld [vmem:[#allocation2 + $0x1b0] sm:$0xff]
        %v1415 = vld [vmem:[#allocation2 + $0x1b8] sm:$0xff]
        %v1416 = vld [vmem:[#allocation2 + $0x1c0] sm:$0xff]
        %v1417 = vld [vmem:[#allocation2 + $0x1c8] sm:$0xff]
        %v1418 = vld [vmem:[#allocation2 + $0x1d0] sm:$0xff]
        %v1419 = vld [vmem:[#allocation2 + $0x1d8] sm:$0xff]
        %v1420 = vld [vmem:[#allocation2 + $0x1e0] sm:$0xff]
        %v1421 = vld [vmem:[#allocation2 + $0x1e8] sm:$0xff]
        %v1422 = vld [vmem:[#allocation2 + $0x1f0] sm:$0xff]
        %v1423 = vld [vmem:[#allocation2 + $0x1f8] sm:$0xff]
        %v1424 = vmax.f32 %v1360, %v1376
        %v1425 = vmax.f32 %v1361, %v1377
        %v1426 = vmax.f32 %v1362, %v1378
        %v1427 = vmax.f32 %v1363, %v1379
        %v1428 = vmax.f32 %v1364, %v1380
        %v1429 = vmax.f32 %v1365, %v1381
        %v1430 = vmax.f32 %v1366, %v1382
        %v1431 = vmax.f32 %v1367, %v1383
        %v1432 = vmax.f32 %v1368, %v1384
        %v1433 = vmax.f32 %v1369, %v1385
        %v1434 = vmax.f32 %v1370, %v1386
        %v1435 = vmax.f32 %v1371, %v1387
        %v1436 = vmax.f32 %v1372, %v1388
        %v1437 = vmax.f32 %v1373, %v1389
        %v1438 = vmax.f32 %v1374, %v1390
        %v1439 = vmax.f32 %v1375, %v1391
        %v1440 = vmax.f32 %v1424, %v1392
        %v1441 = vmax.f32 %v1425, %v1393
        %v1442 = vmax.f32 %v1426, %v1394
        %v1443 = vmax.f32 %v1427, %v1395
        %v1444 = vmax.f32 %v1428, %v1396
        %v1445 = vmax.f32 %v1429, %v1397
        %v1446 = vmax.f32 %v1430, %v1398
        %v1447 = vmax.f32 %v1431, %v1399
        %v1448 = vmax.f32 %v1432, %v1400
        %v1449 = vmax.f32 %v1433, %v1401
        %v1450 = vmax.f32 %v1434, %v1402
        %v1451 = vmax.f32 %v1435, %v1403
        %v1452 = vmax.f32 %v1436, %v1404
        %v1453 = vmax.f32 %v1437, %v1405
        %v1454 = vmax.f32 %v1438, %v1406
        %v1455 = vmax.f32 %v1439, %v1407
        %v1456 = vmax.f32 %v1440, %v1408
        %v1457 = vmax.f32 %v1441, %v1409
        %v1458 = vmax.f32 %v1442, %v1410
        %v1459 = vmax.f32 %v1443, %v1411
        %v1460 = vmax.f32 %v1444, %v1412
        %v1461 = vmax.f32 %v1445, %v1413
        %v1462 = vmax.f32 %v1446, %v1414
        %v1463 = vmax.f32 %v1447, %v1415
        %v1464 = vmax.f32 %v1448, %v1416
        %v1465 = vmax.f32 %v1449, %v1417
        %v1466 = vmax.f32 %v1450, %v1418
        %v1467 = vmax.f32 %v1451, %v1419
        %v1468 = vmax.f32 %v1452, %v1420
        %v1469 = vmax.f32 %v1453, %v1421
        %v1470 = vmax.f32 %v1454, %v1422
        %v1471 = vmax.f32 %v1455, %v1423
        %v1472 = vld [vmem:[%s2] sm:$0x1]
        %v1474 = vperm.slane %v1472, 0
        %v1476 = vadd.f32 %v1456, %v1474
        %v1477 = vadd.f32 %v1457, %v1474
        %v1478 = vadd.f32 %v1458, %v1474
        %v1479 = vadd.f32 %v1459, %v1474
        %v1480 = vadd.f32 %v1460, %v1474
        %v1481 = vadd.f32 %v1461, %v1474
        %v1482 = vadd.f32 %v1462, %v1474
        %v1483 = vadd.f32 %v1463, %v1474
        %v1484 = vadd.f32 %v1464, %v1474
        %v1485 = vadd.f32 %v1465, %v1474
        %v1486 = vadd.f32 %v1466, %v1474
        %v1487 = vadd.f32 %v1467, %v1474
        %v1488 = vadd.f32 %v1468, %v1474
        %v1489 = vadd.f32 %v1469, %v1474
        %v1490 = vadd.f32 %v1470, %v1474
        %v1491 = vadd.f32 %v1471, %v1474
        %v1492 = vmax.f32 %v1476, 0.0
        %v1493 = vmax.f32 %v1477, 0.0
        %v1494 = vmax.f32 %v1478, 0.0
        %v1495 = vmax.f32 %v1479, 0.0
        %v1496 = vmax.f32 %v1480, 0.0
        %v1497 = vmax.f32 %v1481, 0.0
        %v1498 = vmax.f32 %v1482, 0.0
        %v1499 = vmax.f32 %v1483, 0.0
        %v1500 = vmax.f32 %v1484, 0.0
        %v1501 = vmax.f32 %v1485, 0.0
        %v1502 = vmax.f32 %v1486, 0.0
        %v1503 = vmax.f32 %v1487, 0.0
        %v1504 = vmax.f32 %v1488, 0.0
        %v1505 = vmax.f32 %v1489, 0.0
        %v1506 = vmax.f32 %v1490, 0.0
        %v1507 = vmax.f32 %v1491, 0.0
        %v1508 = vpack.c.bf16 %v1492, %v1492
        %v1509 = vpack.c.bf16 %v1493, %v1493
        %v1510 = vpack.c.bf16 %v1494, %v1494
        %v1511 = vpack.c.bf16 %v1495, %v1495
        %v1512 = vpack.c.bf16 %v1496, %v1496
        %v1513 = vpack.c.bf16 %v1497, %v1497
        %v1514 = vpack.c.bf16 %v1498, %v1498
        %v1515 = vpack.c.bf16 %v1499, %v1499
        %v1516 = vpack.c.bf16 %v1500, %v1500
        %v1517 = vpack.c.bf16 %v1501, %v1501
        %v1518 = vpack.c.bf16 %v1502, %v1502
        %v1519 = vpack.c.bf16 %v1503, %v1503
        %v1520 = vpack.c.bf16 %v1504, %v1504
        %v1521 = vpack.c.bf16 %v1505, %v1505
        %v1522 = vpack.c.bf16 %v1506, %v1506
        %v1523 = vpack.c.bf16 %v1507, %v1507
        %vm1524 = vcmask 257024
        %1525 = vst.msk [vmem:[%s209] sm:$0xf] %vm1524, %v1508
        %1526 = vst.msk [vmem:[%s209 + $0x4] sm:$0xf] %vm1524, %v1509
        %1527 = vst.msk [vmem:[%s209 + $0x8] sm:$0xf] %vm1524, %v1510
        %1528 = vst.msk [vmem:[%s209 + $0xc] sm:$0xf] %vm1524, %v1511
        %1529 = vst.msk [vmem:[%s209 + $0x10] sm:$0xf] %vm1524, %v1512
        %1530 = vst.msk [vmem:[%s209 + $0x14] sm:$0xf] %vm1524, %v1513
        %1531 = vst.msk [vmem:[%s209 + $0x18] sm:$0xf] %vm1524, %v1514
        %1532 = vst.msk [vmem:[%s209 + $0x1c] sm:$0xf] %vm1524, %v1515
        %1533 = vst.msk [vmem:[%s209 + $0x20] sm:$0xf] %vm1524, %v1516
        %1534 = vst.msk [vmem:[%s209 + $0x24] sm:$0xf] %vm1524, %v1517
        %1535 = vst.msk [vmem:[%s209 + $0x28] sm:$0xf] %vm1524, %v1518
        %1536 = vst.msk [vmem:[%s209 + $0x2c] sm:$0xf] %vm1524, %v1519
        %1537 = vst.msk [vmem:[%s209 + $0x30] sm:$0xf] %vm1524, %v1520
        %1538 = vst.msk [vmem:[%s209 + $0x34] sm:$0xf] %vm1524, %v1521
        %1539 = vst.msk [vmem:[%s209 + $0x38] sm:$0xf] %vm1524, %v1522
        %1540 = vst.msk [vmem:[%s209 + $0x3c] sm:$0xf] %vm1524, %v1523
      $region40: #{gesture3dnet_forward.8} parent=31 // pred_fallthru
        _
      %p1541 = scmp.lt.s32.totalorder %s18, 3
      %s1542 = scalar_select %p1541, %s18, 3
      %s1543 = smul.addr %s1542, 16
      %s1544 = smul.addr %s1543, 4
      %s1545 = scalar_lea.vmem %s3, %s1544
      // Predicated region
      $region41: #{gesture3dnet_forward.8} parent=31 // pred_check
        %p1546 = pneg %p119
      $region42: #{gesture3dnet_forward.8} parent=31 // pred_check_branch
        %1548 = sbr.rel (%p1546) target = $region44
      $region43: #{gesture3dnet_forward.8} parent=31 // pred_region
        _
      $region44: #{gesture3dnet_forward.8} parent=31 // pred_fallthru
        _
    $region32: #{gesture3dnet_forward.8} parent=5 // pred_fallthru
      _
    %p1549 = scmp.le.s32.totalorder 2, %s9
    // Predicated region
    $region45: #{gesture3dnet_forward.8} parent=5 // pred_check
      %p1550 = pneg %p1549
    $region46: #{gesture3dnet_forward.8} parent=5 // pred_check_branch
      %1552 = sbr.rel (%p1550) target = $region48
    $region47: #{gesture3dnet_forward.8} parent=5 // pred_region
      %s1553 = ssub.s32 %s9, 2
      // Predicated region
      $region49: #{gesture3dnet_forward.8} parent=47 // pred_check
        %p1554 = pneg %p125
      $region50: #{gesture3dnet_forward.8} parent=47 // pred_check_branch
        %1556 = sbr.rel (%p1554) target = $region52
      $region51: #{gesture3dnet_forward.8} parent=47 // pred_region
        %p1557 = scmp.lt.s32.totalorder %s20, 3
        %s1558 = scalar_select %p1557, %s20, 3
        %s1559 = smul.addr %s1558, 16
        %s1560 = smul.addr %s1559, 4
        %s1561 = scalar_lea.vmem %s3, %s1560
      $region52: #{gesture3dnet_forward.8} parent=47 // pred_fallthru
        _
    $region48: #{gesture3dnet_forward.8} parent=5 // pred_fallthru
      _
  $region6: #{gesture3dnet_forward.8} parent=0 // loop_footer
    %s13 = sadd.s32 1, %s9
  $region7: #{gesture3dnet_forward.8} parent=0 // loop_footer_branch
    %8 = sbr.rel target = $region3
  $region8: #{gesture3dnet_forward.8} parent=0 // loop_exit
    _

// kernel: gesture3dnet_forward.9
$region0: #{gesture3dnet_forward.9}
  #allocation0 [shape = 'u32[]', space=smem, size = 0x4, offset = 0x4, fixed_abs, tag = 'smem constant byte address 0x4 - core index']
  #allocation1 [shape = 'u32[72,128]{1,0:T(1,128)}', space=vmem, size = 0x9000, scoped, tag = 'internal scratch']
  #allocation2 [shape = 'f32[32,64]{1,0:T(8,128)}', space=vmem, size = 0x4000, scoped, tag = 'scratch operand']
  %s0 = inlined_call_operand.vmem [shape: bf16[6,32,288], index: 0, kind: input, shape index: {}]
  %s1 = inlined_call_operand.vmem [shape: bf16[3,288,64], index: 1, kind: input, shape index: {}]
  %s2 = inlined_call_operand.vmem [shape: f32[1,64], index: 2, kind: input, shape index: {}]
  %s3 = inlined_call_operand.vmem [shape: bf16[4,32,64], index: 3, kind: output, shape index: {}]
  %s4 = sld [smem:[#allocation0]]
  $region53: #{gesture3dnet_forward.9} parent=0
    _
  %s6 = ssub.s32 1, %s4
  %s7 = scalar_select 0, %s6, %s4
  loop: start=0, step=1, limit=14
  $region2: #{gesture3dnet_forward.9} parent=0 // loop_pre_header
    _
  $region3: #{gesture3dnet_forward.9} parent=0 // loop_header
    %s9 = sphi 0, %s13
    %p10 = scmp.ge.s32.totalorder %s9, 14
    %s16 = sphi 0, %s28
    %s17 = sphi 0, %s24
    %s18 = sphi 0, %s16
    %s19 = sphi 0, %s17
    %s20 = sphi 0, %s18
    %s21 = sphi 0, %s19
    %s33 = sphi 0, %s35
    %s36 = sphi 0, %s33
    %s37 = sphi 0, %s36
    %s53 = sphi 0, %s37
    %s59 = sphi 0, %s61
    %s62 = sphi 0, %s59
    %s63 = sphi 0, %s62
    %s79 = sphi 0, %s63
    %s83 = sphi 0, %s83
    %s85 = sphi 0, %s83
    %s86 = sphi 0, %s85
    %s100 = sphi 0, %s86
    %s106 = sphi 0, %s108
    %s109 = sphi 0, %s106
    %s110 = sphi 0, %s109
    %s126 = sphi 0, %s110
  $region4: #{gesture3dnet_forward.9} parent=0 // loop_header_branch
    %12 = sbr.rel (%p10) target = $region8
  $region5: #{gesture3dnet_forward.9} parent=0 // loop_body
    %s14 = ssub.s32 %s9, 1
    %s15 = ssub.s32 %s9, 2
    %s22 = sadd.s32 1, %s17
    %p23 = scmp.ge.s32.totalorder %s22, 3
    %s24 = scalar_select %p23, 0, %s22
    %s25 = sadd.s32 1, %s16
    %s26 = scalar_select %p23, %s25, %s16
    %p27 = scmp.ge.s32.totalorder %s26, 4
    %s28 = scalar_select %p27, 0, %s26
    %s29 = sadd.s32 %s16, %s17
    %s30 = sadd.s32 %s28, %s24
    %s31 = ssub.s32 %s29, %s30
    %p32 = scmp.eq.s32.totalorder %s31, 0
    %s34 = sadd.s32 %s33, 1
    %s35 = scalar_select %p32, %s33, %s34
    %p38 = pneg %p32
    %p39 = scmp.eq.s32.totalorder %s9, 11
    %p40 = por %p38, %p39
    %p41 = scmp.ne.s32.totalorder %s33, %s36
    %p42 = scmp.eq.s32.totalorder %s9, 0
    %p43 = por %p41, %p42
    %p44 = scmp.ne.s32.totalorder %s33, %s36
    %p45 = scmp.eq.s32.totalorder %s14, 11
    %p46 = por %p44, %p45
    %p47 = scmp.ne.s32.totalorder %s36, %s37
    %p48 = scmp.eq.s32.totalorder %s14, 0
    %p49 = por %p47, %p48
    %p50 = scmp.ne.s32.totalorder %s36, %s37
    %p51 = scmp.eq.s32.totalorder %s15, 11
    %p52 = por %p50, %p51
    %p54 = scmp.ne.s32.totalorder %s37, %s53
    %p55 = scmp.eq.s32.totalorder %s15, 0
    %p56 = por %p54, %p55
    %s57 = ssub.s32 %s17, %s24
    %p58 = scmp.eq.s32.totalorder %s57, 0
    %s60 = sadd.s32 %s59, 1
    %s61 = scalar_select %p58, %s59, %s60
    %p64 = pneg %p58
    %p65 = scmp.eq.s32.totalorder %s9, 11
    %p66 = por %p64, %p65
    %p67 = scmp.ne.s32.totalorder %s59, %s62
    %p68 = scmp.eq.s32.totalorder %s9, 0
    %p69 = por %p67, %p68
    %p70 = scmp.ne.s32.totalorder %s59, %s62
    %p71 = scmp.eq.s32.totalorder %s14, 11
    %p72 = por %p70, %p71
    %p73 = scmp.ne.s32.totalorder %s62, %s63
    %p74 = scmp.eq.s32.totalorder %s14, 0
    %p75 = por %p73, %p74
    %p76 = scmp.ne.s32.totalorder %s62, %s63
    %p77 = scmp.eq.s32.totalorder %s15, 11
    %p78 = por %p76, %p77
    %p80 = scmp.ne.s32.totalorder %s63, %s79
    %p81 = scmp.eq.s32.totalorder %s15, 0
    %p82 = por %p80, %p81
    %s84 = sadd.s32 %s83, 1
    %p87 = scmp.eq.s32.totalorder %s9, 11
    %p88 = scmp.ne.s32.totalorder %s83, %s85
    %p89 = scmp.eq.s32.totalorder %s9, 0
    %p90 = por %p88, %p89
    %p91 = scmp.ne.s32.totalorder %s83, %s85
    %p92 = scmp.eq.s32.totalorder %s14, 11
    %p93 = por %p91, %p92
    %p94 = scmp.ne.s32.totalorder %s85, %s86
    %p95 = scmp.eq.s32.totalorder %s14, 0
    %p96 = por %p94, %p95
    %p97 = scmp.ne.s32.totalorder %s85, %s86
    %p98 = scmp.eq.s32.totalorder %s15, 11
    %p99 = por %p97, %p98
    %p101 = scmp.ne.s32.totalorder %s86, %s100
    %p102 = scmp.eq.s32.totalorder %s15, 0
    %p103 = por %p101, %p102
    %s104 = ssub.s32 %s16, %s28
    %p105 = scmp.eq.s32.totalorder %s104, 0
    %s107 = sadd.s32 %s106, 1
    %s108 = scalar_select %p105, %s106, %s107
    %p111 = pneg %p105
    %p112 = scmp.eq.s32.totalorder %s9, 11
    %p113 = por %p111, %p112
    %p114 = scmp.ne.s32.totalorder %s106, %s109
    %p115 = scmp.eq.s32.totalorder %s9, 0
    %p116 = por %p114, %p115
    %p117 = scmp.ne.s32.totalorder %s106, %s109
    %p118 = scmp.eq.s32.totalorder %s14, 11
    %p119 = por %p117, %p118
    %p120 = scmp.ne.s32.totalorder %s109, %s110
    %p121 = scmp.eq.s32.totalorder %s14, 0
    %p122 = por %p120, %p121
    %p123 = scmp.ne.s32.totalorder %s109, %s110
    %p124 = scmp.eq.s32.totalorder %s15, 11
    %p125 = por %p123, %p124
    %p127 = scmp.ne.s32.totalorder %s110, %s126
    %p128 = scmp.eq.s32.totalorder %s15, 0
    %p129 = por %p127, %p128
    %p130 = scmp.le.s32.totalorder 1, %s9
    %p131 = scmp.lt.s32.totalorder %s9, 13
    %p132 = pnand %p130, %p131
    %p133 = pneg %p132
    // Predicated region
    $region9: #{gesture3dnet_forward.9} parent=5 // pred_check
      _
    $region10: #{gesture3dnet_forward.9} parent=5 // pred_check_branch
      %135 = sbr.rel (%p132) target = $region12
    $region11: #{gesture3dnet_forward.9} parent=5 // pred_region
      %s136 = ssub.s32 %s9, 1
      // Predicated region
      $region13: #{gesture3dnet_forward.9} parent=11 // pred_check
        %p137 = pneg %p96
      $region14: #{gesture3dnet_forward.9} parent=11 // pred_check_branch
        %139 = sbr.rel (%p137) target = $region16
      $region15: #{gesture3dnet_forward.9} parent=11 // pred_region
        _
      $region16: #{gesture3dnet_forward.9} parent=11 // pred_fallthru
        _
    $region12: #{gesture3dnet_forward.9} parent=5 // pred_fallthru
      _
    %p140 = scmp.lt.s32.totalorder %s9, 12
    // Predicated region
    $region17: #{gesture3dnet_forward.9} parent=5 // pred_check
      %p141 = pneg %p140
    $region18: #{gesture3dnet_forward.9} parent=5 // pred_check_branch
      %143 = sbr.rel (%p141) target = $region20
    $region19: #{gesture3dnet_forward.9} parent=5 // pred_region
      // Predicated region
      $region21: #{gesture3dnet_forward.9} parent=19 // pred_check
        %p144 = pneg %p43
      $region22: #{gesture3dnet_forward.9} parent=19 // pred_check_branch
        %146 = sbr.rel (%p144) target = $region24
      $region23: #{gesture3dnet_forward.9} parent=19 // pred_region
        %s147 = sadd.s32 %s16, %s17
        %p148 = scmp.lt.s32.totalorder %s147, 5
        %s149 = scalar_select %p148, %s147, 5
        %s150 = smul.addr %s149, 12
        %s151 = smul.addr %s150, 4
        %s152 = scalar_lea.vmem %s0, %s151
        %s153 = sadd.s32 %s16, %s17
      $region24: #{gesture3dnet_forward.9} parent=19 // pred_fallthru
        _
      // Predicated region
      $region25: #{gesture3dnet_forward.9} parent=19 // pred_check
        %p154 = pneg %p69
      $region26: #{gesture3dnet_forward.9} parent=19 // pred_check_branch
        %156 = sbr.rel (%p154) target = $region28
      $region27: #{gesture3dnet_forward.9} parent=19 // pred_region
        %p157 = scmp.lt.s32.totalorder %s17, 2
        %s158 = scalar_select %p157, %s17, 2
        %s159 = smul.addr %s158, 36
        %s160 = smul.addr %s159, 4
        %s161 = scalar_lea.vmem %s1, %s160
      $region28: #{gesture3dnet_forward.9} parent=19 // pred_fallthru
        _
    $region20: #{gesture3dnet_forward.9} parent=5 // pred_fallthru
      _
    %p162 = scmp.le.s32.totalorder 1, %s9
    %p163 = scmp.lt.s32.totalorder %s9, 13
    %p164 = pnand %p162, %p163
    %p165 = pneg %p164
    // Predicated region
    $region29: #{gesture3dnet_forward.9} parent=5 // pred_check
      _
    $region30: #{gesture3dnet_forward.9} parent=5 // pred_check_branch
      %167 = sbr.rel (%p164) target = $region32
    $region31: #{gesture3dnet_forward.9} parent=5 // pred_region
      %s168 = ssub.s32 %s9, 1
      %s169 = sadd.s32 %s18, %s19
      %p170 = scmp.lt.s32.totalorder %s169, 5
      %s171 = scalar_select %p170, %s169, 5
      %s172 = smul.addr %s171, 12
      %s173 = smul.addr %s172, 4
      %s174 = scalar_lea.vmem %s0, %s173
      %p175 = pneg %p49
      %p176 = pneg %p46
      %p177 = scmp.lt.s32.totalorder %s19, 2
      %s178 = scalar_select %p177, %s19, 2
      %s179 = smul.addr %s178, 36
      %s180 = smul.addr %s179, 4
      %s181 = scalar_lea.vmem %s1, %s180
      %p182 = pneg %p75
      %p183 = pneg %p72
      %p184 = pneg %p96
      %p185 = pneg %p93
      %p186 = pneg %p122
      %p187 = pneg %p119
      %p188 = scmp.lt.s32.totalorder %s18, 3
      %s189 = scalar_select %p188, %s18, 3
      %s190 = smul.addr %s189, 4
      %s191 = smul.addr %s190, 4
      %s192 = scalar_lea.vmem %s3, %s191
      %s193 = sadd.s32 %s18, %s19
      %p194 = scmp.lt.s32.totalorder %s193, 5
      %s195 = scalar_select %p194, %s193, 5
      %s196 = smul.addr %s195, 12
      %s197 = smul.addr %s196, 4
      %s198 = scalar_lea.vmem %s0, %s197
      %s199 = sadd.s32 %s18, %s19
      %p200 = scmp.lt.s32.totalorder %s19, 2
      %s201 = scalar_select %p200, %s19, 2
      %s202 = smul.addr %s201, 36
      %s203 = smul.addr %s202, 4
      %s204 = scalar_lea.vmem %s1, %s203
      %p205 = scmp.lt.s32.totalorder %s18, 3
      %s206 = scalar_select %p205, %s18, 3
      %s207 = smul.addr %s206, 4
      %s208 = smul.addr %s207, 4
      %s209 = scalar_lea.vmem %s3, %s208
      %p211 = scmp.eq.s32.totalorder %s19, 0
      // Predicated region
      $region33: #{gesture3dnet_forward.9} parent=31 // pred_check
        %p212 = pneg %p211
      $region34: #{gesture3dnet_forward.9} parent=31 // pred_check_branch
        %214 = sbr.rel (%p212) target = $region36
      $region35: #{gesture3dnet_forward.9} parent=31 // pred_region
        %vm215 = vcmask 523264
        %216 = vst.msk [vmem:[#allocation2] sm:$0xff] %vm215, 0.0
        %217 = vst.msk [vmem:[#allocation2 + $0x8] sm:$0xff] %vm215, 0.0
        %218 = vst.msk [vmem:[#allocation2 + $0x10] sm:$0xff] %vm215, 0.0
        %219 = vst.msk [vmem:[#allocation2 + $0x18] sm:$0xff] %vm215, 0.0
      $region36: #{gesture3dnet_forward.9} parent=31 // pred_fallthru
        _
      %v220 = vld [vmem:[#allocation2] sm:$0xff]
      %v221 = vld [vmem:[#allocation2 + $0x8] sm:$0xff]
      %v222 = vld [vmem:[#allocation2 + $0x10] sm:$0xff]
      %v223 = vld [vmem:[#allocation2 + $0x18] sm:$0xff]
      %v224 = vld [vmem:[%s198] sm:$0xff]
      %v225 = vld [vmem:[%s198 + $0x8] sm:$0xf]
      %v226 = vld [vmem:[%s198 + $0xc] sm:$0xff]
      %v227 = vld [vmem:[%s198 + $0x14] sm:$0xf]
      %v228 = vld [vmem:[%s198 + $0x18] sm:$0xff]
      %v229 = vld [vmem:[%s198 + $0x20] sm:$0xf]
      %v230 = vld [vmem:[%s198 + $0x24] sm:$0xff]
      %v231 = vld [vmem:[%s198 + $0x2c] sm:$0xf]
      %v232 = vld [vmem:[%s204] sm:$0xf]
      %v233 = vld [vmem:[%s204 + $0x4] sm:$0xf]
      %v234 = vld [vmem:[%s204 + $0x8] sm:$0xf]
      %v235 = vld [vmem:[%s204 + $0xc] sm:$0xf]
      %v236 = vld [vmem:[%s204 + $0x10] sm:$0xf]
      %v237 = vld [vmem:[%s204 + $0x14] sm:$0xf]
      %v238 = vld [vmem:[%s204 + $0x18] sm:$0xf]
      %v239 = vld [vmem:[%s204 + $0x1c] sm:$0xf]
      %v240 = vld [vmem:[%s204 + $0x20] sm:$0xf]
      %v241 = vld [vmem:[%s204 + $0x24] sm:$0xf]
      %v242 = vld [vmem:[%s204 + $0x28] sm:$0xf]
      %v243 = vld [vmem:[%s204 + $0x2c] sm:$0xf]
      %v244 = vld [vmem:[%s204 + $0x30] sm:$0xf]
      %v245 = vld [vmem:[%s204 + $0x34] sm:$0xf]
      %v246 = vld [vmem:[%s204 + $0x38] sm:$0xf]
      %v247 = vld [vmem:[%s204 + $0x3c] sm:$0xf]
      %v248 = vld [vmem:[%s204 + $0x40] sm:$0xf]
      %v249 = vld [vmem:[%s204 + $0x44] sm:$0xf]
      %v250 = vld [vmem:[%s204 + $0x48] sm:$0xf]
      %v251 = vld [vmem:[%s204 + $0x4c] sm:$0xf]
      %v252 = vld [vmem:[%s204 + $0x50] sm:$0xf]
      %v253 = vld [vmem:[%s204 + $0x54] sm:$0xf]
      %v254 = vld [vmem:[%s204 + $0x58] sm:$0xf]
      %v255 = vld [vmem:[%s204 + $0x5c] sm:$0xf]
      %v256 = vld [vmem:[%s204 + $0x60] sm:$0xf]
      %v257 = vld [vmem:[%s204 + $0x64] sm:$0xf]
      %v258 = vld [vmem:[%s204 + $0x68] sm:$0xf]
      %v259 = vld [vmem:[%s204 + $0x6c] sm:$0xf]
      %v260 = vld [vmem:[%s204 + $0x70] sm:$0xf]
      %v261 = vld [vmem:[%s204 + $0x74] sm:$0xf]
      %v262 = vld [vmem:[%s204 + $0x78] sm:$0xf]
      %v263 = vld [vmem:[%s204 + $0x7c] sm:$0xf]
      %v264 = vld [vmem:[%s204 + $0x80] sm:$0xf]
      %v265 = vld [vmem:[%s204 + $0x84] sm:$0xf]
      %v266 = vld [vmem:[%s204 + $0x88] sm:$0xf]
      %v267 = vld [vmem:[%s204 + $0x8c] sm:$0xf]
      %v276 = vunpack.c.l.b16 %v224
      %v277 = vunpack.c.h.b16 %v224
      %v278 = vunpack.c.l.b16 %v225
      %v279 = vunpack.c.l.b16 %v226
      %v280 = vunpack.c.h.b16 %v226
      %v281 = vunpack.c.l.b16 %v227
      %v282 = vunpack.c.l.b16 %v228
      %v283 = vunpack.c.h.b16 %v228
      %v284 = vunpack.c.l.b16 %v229
      %v285 = vunpack.c.l.b16 %v230
      %v286 = vunpack.c.h.b16 %v230
      %v287 = vunpack.c.l.b16 %v231
      %v288 = vpack.c.b16 %v279, %v276
      %v289 = vpack.c.b16 %v280, %v277
      %v290 = vpack.c.b16 %v281, %v278
      %v291 = vpack.c.b16 %v285, %v282
      %v292 = vpack.c.b16 %v286, %v283
      %v293 = vpack.c.b16 %v287, %v284
      %v334 = vunpack.c.l.b16 %v232
      %v335 = vunpack.c.l.b16 %v233
      %v336 = vunpack.c.l.b16 %v234
      %v337 = vunpack.c.l.b16 %v235
      %v338 = vunpack.c.l.b16 %v236
      %v339 = vunpack.c.l.b16 %v237
      %v340 = vunpack.c.l.b16 %v238
      %v341 = vunpack.c.l.b16 %v239
      %v342 = vunpack.c.l.b16 %v240
      %v343 = vunpack.c.l.b16 %v241
      %v344 = vunpack.c.l.b16 %v242
      %v345 = vunpack.c.l.b16 %v243
      %v346 = vunpack.c.l.b16 %v244
      %v347 = vunpack.c.l.b16 %v245
      %v348 = vunpack.c.l.b16 %v246
      %v349 = vunpack.c.l.b16 %v247
      %v350 = vunpack.c.l.b16 %v248
      %v351 = vunpack.c.l.b16 %v249
      %v352 = vunpack.c.l.b16 %v250
      %v353 = vunpack.c.l.b16 %v251
      %v354 = vunpack.c.l.b16 %v252
      %v355 = vunpack.c.l.b16 %v253
      %v356 = vunpack.c.l.b16 %v254
      %v357 = vunpack.c.l.b16 %v255
      %v358 = vunpack.c.l.b16 %v256
      %v359 = vunpack.c.l.b16 %v257
      %v360 = vunpack.c.l.b16 %v258
      %v361 = vunpack.c.l.b16 %v259
      %v362 = vunpack.c.l.b16 %v260
      %v363 = vunpack.c.l.b16 %v261
      %v364 = vunpack.c.l.b16 %v262
      %v365 = vunpack.c.l.b16 %v263
      %v366 = vunpack.c.l.b16 %v264
      %v367 = vunpack.c.l.b16 %v265
      %v368 = vunpack.c.l.b16 %v266
      %v369 = vunpack.c.l.b16 %v267
      %v370 = vpack.c.b16 %v335, %v334
      %v371 = vpack.c.b16 %v337, %v336
      %v372 = vpack.c.b16 %v339, %v338
      %v373 = vpack.c.b16 %v341, %v340
      %v374 = vpack.c.b16 %v343, %v342
      %v375 = vpack.c.b16 %v345, %v344
      %v376 = vpack.c.b16 %v347, %v346
      %v377 = vpack.c.b16 %v349, %v348
      %v378 = vpack.c.b16 %v351, %v350
      %v379 = vpack.c.b16 %v353, %v352
      %v380 = vpack.c.b16 %v355, %v354
      %v381 = vpack.c.b16 %v357, %v356
      %v382 = vpack.c.b16 %v359, %v358
      %v383 = vpack.c.b16 %v361, %v360
      %v384 = vpack.c.b16 %v363, %v362
      %v385 = vpack.c.b16 %v365, %v364
      %v386 = vpack.c.b16 %v367, %v366
      %v387 = vpack.c.b16 %v369, %v368
      %vm406 = vcmask 261120
      %v408 = vsel %vm406, %v290, 0
      %v411 = vsel %vm406, %v293, 0
      %413 = vmatpush.bf16.msra.mxu0 %v377
      %414 = vmatpush.bf16.msra.mxu0 %v376
      %415 = vmatpush.bf16.msra.mxu0 %v375
      %416 = vmatpush.bf16.msra.mxu0 %v374
      %417 = vmatpush.bf16.msra.mxu0 %v373
      %418 = vmatpush.bf16.msra.mxu0 %v372
      %419 = vmatpush.bf16.msra.mxu0 %v371
      %420 = vmatpush.bf16.msra.mxu0 %v370
      %421 = vmatmul.bf16.gmra.mxu0 %v288
      %v422 = vpop.f32.mrf.mxu0
      %v423 = vadd.f32 0.0, %v422
      %v424 = vpop.f32.mrf.mxu0
      %v425 = vadd.f32 0.0, %v424
      %426 = vmatmul.bf16.gmra.mxu0 %v291
      %v427 = vpop.f32.mrf.mxu0
      %v428 = vadd.f32 0.0, %v427
      %v429 = vpop.f32.mrf.mxu0
      %v430 = vadd.f32 0.0, %v429
      %431 = vdwg.mxu0
      %432 = vmatpush.bf16.msra.mxu0 %v385
      %433 = vmatpush.bf16.msra.mxu0 %v384
      %434 = vmatpush.bf16.msra.mxu0 %v383
      %435 = vmatpush.bf16.msra.mxu0 %v382
      %436 = vmatpush.bf16.msra.mxu0 %v381
      %437 = vmatpush.bf16.msra.mxu0 %v380
      %438 = vmatpush.bf16.msra.mxu0 %v379
      %439 = vmatpush.bf16.msra.mxu0 %v378
      %440 = vmatmul.bf16.gmra.mxu0 %v289
      %v441 = vpop.f32.mrf.mxu0
      %v442 = vadd.f32 %v423, %v441
      %v443 = vpop.f32.mrf.mxu0
      %v444 = vadd.f32 %v425, %v443
      %445 = vmatmul.bf16.gmra.mxu0 %v292
      %v446 = vpop.f32.mrf.mxu0
      %v447 = vadd.f32 %v428, %v446
      %v448 = vpop.f32.mrf.mxu0
      %v449 = vadd.f32 %v430, %v448
      %450 = vdwg.mxu0
      %451 = vmatpush.bf16.msra.mxu0 0
      %452 = vmatpush.bf16.msra.mxu0 0
      %453 = vmatpush.bf16.msra.mxu0 0
      %454 = vmatpush.bf16.msra.mxu0 0
      %455 = vmatpush.bf16.msra.mxu0 0
      %456 = vmatpush.bf16.msra.mxu0 0
      %457 = vmatpush.bf16.msra.mxu0 %v387
      %458 = vmatpush.bf16.msra.mxu0 %v386
      %459 = vmatmul.bf16.gmra.mxu0 %v408
      %v460 = vpop.f32.mrf.mxu0
      %v461 = vadd.f32 %v442, %v460
      %v462 = vpop.f32.mrf.mxu0
      %v463 = vadd.f32 %v444, %v462
      %464 = vmatmul.bf16.gmra.mxu0 %v411
      %v465 = vpop.f32.mrf.mxu0
      %v466 = vadd.f32 %v447, %v465
      %v467 = vpop.f32.mrf.mxu0
      %v468 = vadd.f32 %v449, %v467
      %469 = vdwg.mxu0
      %v470 = vadd.f32 %v220, %v461
      %v471 = vadd.f32 %v221, %v463
      %v472 = vadd.f32 %v222, %v466
      %v473 = vadd.f32 %v223, %v468
      %vm474 = vcmask 523264
      %475 = vst.msk [vmem:[#allocation2] sm:$0xff] %vm474, %v470
      %476 = vst.msk [vmem:[#allocation2 + $0x8] sm:$0xff] %vm474, %v471
      %477 = vst.msk [vmem:[#allocation2 + $0x10] sm:$0xff] %vm474, %v472
      %478 = vst.msk [vmem:[#allocation2 + $0x18] sm:$0xff] %vm474, %v473
      %p479 = scmp.eq.s32.totalorder %s19, 2
      // Predicated region
      $region37: #{gesture3dnet_forward.9} parent=31 // pred_check
        %p480 = pneg %p479
      $region38: #{gesture3dnet_forward.9} parent=31 // pred_check_branch
        %482 = sbr.rel (%p480) target = $region40
      $region39: #{gesture3dnet_forward.9} parent=31 // pred_region
        %v483 = vld [vmem:[#allocation2] sm:$0xff]
        %v484 = vld [vmem:[#allocation2 + $0x8] sm:$0xff]
        %v485 = vld [vmem:[#allocation2 + $0x10] sm:$0xff]
        %v486 = vld [vmem:[#allocation2 + $0x18] sm:$0xff]
        %v487 = vld [vmem:[%s2] sm:$0x1]
        %v489 = vperm.slane %v487, 0
        %v491 = vadd.f32 %v483, %v489
        %v492 = vadd.f32 %v484, %v489
        %v493 = vadd.f32 %v485, %v489
        %v494 = vadd.f32 %v486, %v489
        %v495 = vmax.f32 %v491, 0.0
        %v496 = vmax.f32 %v492, 0.0
        %v497 = vmax.f32 %v493, 0.0
        %v498 = vmax.f32 %v494, 0.0
        %v499 = vpack.c.bf16 %v495, %v495
        %v500 = vpack.c.bf16 %v496, %v496
        %v501 = vpack.c.bf16 %v497, %v497
        %v502 = vpack.c.bf16 %v498, %v498
        %vm503 = vcmask 519168
        %504 = vst.msk [vmem:[%s209] sm:$0xf] %vm503, %v499
        %505 = vst.msk [vmem:[%s209 + $0x4] sm:$0xf] %vm503, %v500
        %506 = vst.msk [vmem:[%s209 + $0x8] sm:$0xf] %vm503, %v501
        %507 = vst.msk [vmem:[%s209 + $0xc] sm:$0xf] %vm503, %v502
      $region40: #{gesture3dnet_forward.9} parent=31 // pred_fallthru
        _
      %p508 = scmp.lt.s32.totalorder %s18, 3
      %s509 = scalar_select %p508, %s18, 3
      %s510 = smul.addr %s509, 4
      %s511 = smul.addr %s510, 4
      %s512 = scalar_lea.vmem %s3, %s511
      // Predicated region
      $region41: #{gesture3dnet_forward.9} parent=31 // pred_check
        %p513 = pneg %p119
      $region42: #{gesture3dnet_forward.9} parent=31 // pred_check_branch
        %515 = sbr.rel (%p513) target = $region44
      $region43: #{gesture3dnet_forward.9} parent=31 // pred_region
        _
      $region44: #{gesture3dnet_forward.9} parent=31 // pred_fallthru
        _
    $region32: #{gesture3dnet_forward.9} parent=5 // pred_fallthru
      _
    %p516 = scmp.le.s32.totalorder 2, %s9
    // Predicated region
    $region45: #{gesture3dnet_forward.9} parent=5 // pred_check
      %p517 = pneg %p516
    $region46: #{gesture3dnet_forward.9} parent=5 // pred_check_branch
      %519 = sbr.rel (%p517) target = $region48
    $region47: #{gesture3dnet_forward.9} parent=5 // pred_region
      %s520 = ssub.s32 %s9, 2
      // Predicated region
      $region49: #{gesture3dnet_forward.9} parent=47 // pred_check
        %p521 = pneg %p125
      $region50: #{gesture3dnet_forward.9} parent=47 // pred_check_branch
        %523 = sbr.rel (%p521) target = $region52
      $region51: #{gesture3dnet_forward.9} parent=47 // pred_region
        %p524 = scmp.lt.s32.totalorder %s20, 3
        %s525 = scalar_select %p524, %s20, 3
        %s526 = smul.addr %s525, 4
        %s527 = smul.addr %s526, 4
        %s528 = scalar_lea.vmem %s3, %s527
      $region52: #{gesture3dnet_forward.9} parent=47 // pred_fallthru
        _
    $region48: #{gesture3dnet_forward.9} parent=5 // pred_fallthru
      _
  $region6: #{gesture3dnet_forward.9} parent=0 // loop_footer
    %s13 = sadd.s32 1, %s9
  $region7: #{gesture3dnet_forward.9} parent=0 // loop_footer_branch
    %8 = sbr.rel target = $region3
  $region8: #{gesture3dnet_forward.9} parent=0 // loop_exit
    _

// kernel: gesture3dnet_forward.10
$region0: #{gesture3dnet_forward.10}
  #allocation0 [shape = 'u32[]', space=smem, size = 0x4, offset = 0x4, fixed_abs, tag = 'smem constant byte address 0x4 - core index']
  #allocation1 [shape = 'u32[72,128]{1,0:T(1,128)}', space=vmem, size = 0x9000, scoped, tag = 'internal scratch']
  #allocation2 [shape = 'f32[32,64]{1,0:T(8,128)}', space=vmem, size = 0x4000, scoped, tag = 'scratch operand']
  %s0 = inlined_call_operand.vmem [shape: bf16[6,32,576], index: 0, kind: input, shape index: {}]
  %s1 = inlined_call_operand.vmem [shape: bf16[3,576,64], index: 1, kind: input, shape index: {}]
  %s2 = inlined_call_operand.vmem [shape: f32[1,64], index: 2, kind: input, shape index: {}]
  %s3 = inlined_call_operand.vmem [shape: bf16[4,32,32], index: 3, kind: input, shape index: {}]
  %s4 = inlined_call_operand.vmem [shape: bf16[32,64], index: 4, kind: input, shape index: {}]
  %s5 = inlined_call_operand.vmem [shape: f32[1,64], index: 5, kind: input, shape index: {}]
  %s6 = inlined_call_operand.vmem [shape: bf16[4,32,64], index: 6, kind: output, shape index: {}]
  %s7 = sld [smem:[#allocation0]]
  $region65: #{gesture3dnet_forward.10} parent=0
    _
  %s9 = ssub.s32 1, %s7
  %s10 = scalar_select 0, %s9, %s7
  loop: start=0, step=1, limit=14
  $region2: #{gesture3dnet_forward.10} parent=0 // loop_pre_header
    _
  $region3: #{gesture3dnet_forward.10} parent=0 // loop_header
    %s12 = sphi 0, %s16
    %p13 = scmp.ge.s32.totalorder %s12, 14
    %s19 = sphi 0, %s31
    %s20 = sphi 0, %s27
    %s21 = sphi 0, %s19
    %s22 = sphi 0, %s20
    %s23 = sphi 0, %s21
    %s24 = sphi 0, %s22
    %s36 = sphi 0, %s38
    %s39 = sphi 0, %s36
    %s40 = sphi 0, %s39
    %s56 = sphi 0, %s40
    %s62 = sphi 0, %s64
    %s65 = sphi 0, %s62
    %s66 = sphi 0, %s65
    %s82 = sphi 0, %s66
    %s86 = sphi 0, %s86
    %s88 = sphi 0, %s86
    %s89 = sphi 0, %s88
    %s103 = sphi 0, %s89
    %s109 = sphi 0, %s111
    %s112 = sphi 0, %s109
    %s113 = sphi 0, %s112
    %s129 = sphi 0, %s113
    %s133 = sphi 0, %s133
    %s135 = sphi 0, %s133
    %s136 = sphi 0, %s135
    %s150 = sphi 0, %s136
    %s154 = sphi 0, %s154
    %s156 = sphi 0, %s154
    %s157 = sphi 0, %s156
    %s171 = sphi 0, %s157
    %s177 = sphi 0, %s179
    %s180 = sphi 0, %s177
    %s181 = sphi 0, %s180
    %s197 = sphi 0, %s181
  $region4: #{gesture3dnet_forward.10} parent=0 // loop_header_branch
    %15 = sbr.rel (%p13) target = $region8
  $region5: #{gesture3dnet_forward.10} parent=0 // loop_body
    %s17 = ssub.s32 %s12, 1
    %s18 = ssub.s32 %s12, 2
    %s25 = sadd.s32 1, %s20
    %p26 = scmp.ge.s32.totalorder %s25, 3
    %s27 = scalar_select %p26, 0, %s25
    %s28 = sadd.s32 1, %s19
    %s29 = scalar_select %p26, %s28, %s19
    %p30 = scmp.ge.s32.totalorder %s29, 4
    %s31 = scalar_select %p30, 0, %s29
    %s32 = sadd.s32 %s19, %s20
    %s33 = sadd.s32 %s31, %s27
    %s34 = ssub.s32 %s32, %s33
    %p35 = scmp.eq.s32.totalorder %s34, 0
    %s37 = sadd.s32 %s36, 1
    %s38 = scalar_select %p35, %s36, %s37
    %p41 = pneg %p35
    %p42 = scmp.eq.s32.totalorder %s12, 11
    %p43 = por %p41, %p42
    %p44 = scmp.ne.s32.totalorder %s36, %s39
    %p45 = scmp.eq.s32.totalorder %s12, 0
    %p46 = por %p44, %p45
    %p47 = scmp.ne.s32.totalorder %s36, %s39
    %p48 = scmp.eq.s32.totalorder %s17, 11
    %p49 = por %p47, %p48
    %p50 = scmp.ne.s32.totalorder %s39, %s40
    %p51 = scmp.eq.s32.totalorder %s17, 0
    %p52 = por %p50, %p51
    %p53 = scmp.ne.s32.totalorder %s39, %s40
    %p54 = scmp.eq.s32.totalorder %s18, 11
    %p55 = por %p53, %p54
    %p57 = scmp.ne.s32.totalorder %s40, %s56
    %p58 = scmp.eq.s32.totalorder %s18, 0
    %p59 = por %p57, %p58
    %s60 = ssub.s32 %s20, %s27
    %p61 = scmp.eq.s32.totalorder %s60, 0
    %s63 = sadd.s32 %s62, 1
    %s64 = scalar_select %p61, %s62, %s63
    %p67 = pneg %p61
    %p68 = scmp.eq.s32.totalorder %s12, 11
    %p69 = por %p67, %p68
    %p70 = scmp.ne.s32.totalorder %s62, %s65
    %p71 = scmp.eq.s32.totalorder %s12, 0
    %p72 = por %p70, %p71
    %p73 = scmp.ne.s32.totalorder %s62, %s65
    %p74 = scmp.eq.s32.totalorder %s17, 11
    %p75 = por %p73, %p74
    %p76 = scmp.ne.s32.totalorder %s65, %s66
    %p77 = scmp.eq.s32.totalorder %s17, 0
    %p78 = por %p76, %p77
    %p79 = scmp.ne.s32.totalorder %s65, %s66
    %p80 = scmp.eq.s32.totalorder %s18, 11
    %p81 = por %p79, %p80
    %p83 = scmp.ne.s32.totalorder %s66, %s82
    %p84 = scmp.eq.s32.totalorder %s18, 0
    %p85 = por %p83, %p84
    %s87 = sadd.s32 %s86, 1
    %p90 = scmp.eq.s32.totalorder %s12, 11
    %p91 = scmp.ne.s32.totalorder %s86, %s88
    %p92 = scmp.eq.s32.totalorder %s12, 0
    %p93 = por %p91, %p92
    %p94 = scmp.ne.s32.totalorder %s86, %s88
    %p95 = scmp.eq.s32.totalorder %s17, 11
    %p96 = por %p94, %p95
    %p97 = scmp.ne.s32.totalorder %s88, %s89
    %p98 = scmp.eq.s32.totalorder %s17, 0
    %p99 = por %p97, %p98
    %p100 = scmp.ne.s32.totalorder %s88, %s89
    %p101 = scmp.eq.s32.totalorder %s18, 11
    %p102 = por %p100, %p101
    %p104 = scmp.ne.s32.totalorder %s89, %s103
    %p105 = scmp.eq.s32.totalorder %s18, 0
    %p106 = por %p104, %p105
    %s107 = ssub.s32 %s19, %s31
    %p108 = scmp.eq.s32.totalorder %s107, 0
    %s110 = sadd.s32 %s109, 1
    %s111 = scalar_select %p108, %s109, %s110
    %p114 = pneg %p108
    %p115 = scmp.eq.s32.totalorder %s12, 11
    %p116 = por %p114, %p115
    %p117 = scmp.ne.s32.totalorder %s109, %s112
    %p118 = scmp.eq.s32.totalorder %s12, 0
    %p119 = por %p117, %p118
    %p120 = scmp.ne.s32.totalorder %s109, %s112
    %p121 = scmp.eq.s32.totalorder %s17, 11
    %p122 = por %p120, %p121
    %p123 = scmp.ne.s32.totalorder %s112, %s113
    %p124 = scmp.eq.s32.totalorder %s17, 0
    %p125 = por %p123, %p124
    %p126 = scmp.ne.s32.totalorder %s112, %s113
    %p127 = scmp.eq.s32.totalorder %s18, 11
    %p128 = por %p126, %p127
    %p130 = scmp.ne.s32.totalorder %s113, %s129
    %p131 = scmp.eq.s32.totalorder %s18, 0
    %p132 = por %p130, %p131
    %s134 = sadd.s32 %s133, 1
    %p137 = scmp.eq.s32.totalorder %s12, 11
    %p138 = scmp.ne.s32.totalorder %s133, %s135
    %p139 = scmp.eq.s32.totalorder %s12, 0
    %p140 = por %p138, %p139
    %p141 = scmp.ne.s32.totalorder %s133, %s135
    %p142 = scmp.eq.s32.totalorder %s17, 11
    %p143 = por %p141, %p142
    %p144 = scmp.ne.s32.totalorder %s135, %s136
    %p145 = scmp.eq.s32.totalorder %s17, 0
    %p146 = por %p144, %p145
    %p147 = scmp.ne.s32.totalorder %s135, %s136
    %p148 = scmp.eq.s32.totalorder %s18, 11
    %p149 = por %p147, %p148
    %p151 = scmp.ne.s32.totalorder %s136, %s150
    %p152 = scmp.eq.s32.totalorder %s18, 0
    %p153 = por %p151, %p152
    %s155 = sadd.s32 %s154, 1
    %p158 = scmp.eq.s32.totalorder %s12, 11
    %p159 = scmp.ne.s32.totalorder %s154, %s156
    %p160 = scmp.eq.s32.totalorder %s12, 0
    %p161 = por %p159, %p160
    %p162 = scmp.ne.s32.totalorder %s154, %s156
    %p163 = scmp.eq.s32.totalorder %s17, 11
    %p164 = por %p162, %p163
    %p165 = scmp.ne.s32.totalorder %s156, %s157
    %p166 = scmp.eq.s32.totalorder %s17, 0
    %p167 = por %p165, %p166
    %p168 = scmp.ne.s32.totalorder %s156, %s157
    %p169 = scmp.eq.s32.totalorder %s18, 11
    %p170 = por %p168, %p169
    %p172 = scmp.ne.s32.totalorder %s157, %s171
    %p173 = scmp.eq.s32.totalorder %s18, 0
    %p174 = por %p172, %p173
    %s175 = ssub.s32 %s19, %s31
    %p176 = scmp.eq.s32.totalorder %s175, 0
    %s178 = sadd.s32 %s177, 1
    %s179 = scalar_select %p176, %s177, %s178
    %p182 = pneg %p176
    %p183 = scmp.eq.s32.totalorder %s12, 11
    %p184 = por %p182, %p183
    %p185 = scmp.ne.s32.totalorder %s177, %s180
    %p186 = scmp.eq.s32.totalorder %s12, 0
    %p187 = por %p185, %p186
    %p188 = scmp.ne.s32.totalorder %s177, %s180
    %p189 = scmp.eq.s32.totalorder %s17, 11
    %p190 = por %p188, %p189
    %p191 = scmp.ne.s32.totalorder %s180, %s181
    %p192 = scmp.eq.s32.totalorder %s17, 0
    %p193 = por %p191, %p192
    %p194 = scmp.ne.s32.totalorder %s180, %s181
    %p195 = scmp.eq.s32.totalorder %s18, 11
    %p196 = por %p194, %p195
    %p198 = scmp.ne.s32.totalorder %s181, %s197
    %p199 = scmp.eq.s32.totalorder %s18, 0
    %p200 = por %p198, %p199
    %p201 = scmp.le.s32.totalorder 1, %s12
    %p202 = scmp.lt.s32.totalorder %s12, 13
    %p203 = pnand %p201, %p202
    %p204 = pneg %p203
    // Predicated region
    $region9: #{gesture3dnet_forward.10} parent=5 // pred_check
      _
    $region10: #{gesture3dnet_forward.10} parent=5 // pred_check_branch
      %206 = sbr.rel (%p203) target = $region12
    $region11: #{gesture3dnet_forward.10} parent=5 // pred_region
      %s207 = ssub.s32 %s12, 1
      // Predicated region
      $region13: #{gesture3dnet_forward.10} parent=11 // pred_check
        %p208 = pneg %p99
      $region14: #{gesture3dnet_forward.10} parent=11 // pred_check_branch
        %210 = sbr.rel (%p208) target = $region16
      $region15: #{gesture3dnet_forward.10} parent=11 // pred_region
        _
      $region16: #{gesture3dnet_forward.10} parent=11 // pred_fallthru
        _
      // Predicated region
      $region17: #{gesture3dnet_forward.10} parent=11 // pred_check
        %p211 = pneg %p146
      $region18: #{gesture3dnet_forward.10} parent=11 // pred_check_branch
        %213 = sbr.rel (%p211) target = $region20
      $region19: #{gesture3dnet_forward.10} parent=11 // pred_region
        _
      $region20: #{gesture3dnet_forward.10} parent=11 // pred_fallthru
        _
      // Predicated region
      $region21: #{gesture3dnet_forward.10} parent=11 // pred_check
        %p214 = pneg %p167
      $region22: #{gesture3dnet_forward.10} parent=11 // pred_check_branch
        %216 = sbr.rel (%p214) target = $region24
      $region23: #{gesture3dnet_forward.10} parent=11 // pred_region
        _
      $region24: #{gesture3dnet_forward.10} parent=11 // pred_fallthru
        _
    $region12: #{gesture3dnet_forward.10} parent=5 // pred_fallthru
      _
    %p217 = scmp.lt.s32.totalorder %s12, 12
    // Predicated region
    $region25: #{gesture3dnet_forward.10} parent=5 // pred_check
      %p218 = pneg %p217
    $region26: #{gesture3dnet_forward.10} parent=5 // pred_check_branch
      %220 = sbr.rel (%p218) target = $region28
    $region27: #{gesture3dnet_forward.10} parent=5 // pred_region
      // Predicated region
      $region29: #{gesture3dnet_forward.10} parent=27 // pred_check
        %p221 = pneg %p46
      $region30: #{gesture3dnet_forward.10} parent=27 // pred_check_branch
        %223 = sbr.rel (%p221) target = $region32
      $region31: #{gesture3dnet_forward.10} parent=27 // pred_region
        %s224 = sadd.s32 %s19, %s20
        %p225 = scmp.lt.s32.totalorder %s224, 5
        %s226 = scalar_select %p225, %s224, 5
        %s227 = smul.addr %s226, 20
        %s228 = smul.addr %s227, 4
        %s229 = scalar_lea.vmem %s0, %s228
        %s230 = sadd.s32 %s19, %s20
      $region32: #{gesture3dnet_forward.10} parent=27 // pred_fallthru
        _
      // Predicated region
      $region33: #{gesture3dnet_forward.10} parent=27 // pred_check
        %p231 = pneg %p72
      $region34: #{gesture3dnet_forward.10} parent=27 // pred_check_branch
        %233 = sbr.rel (%p231) target = $region36
      $region35: #{gesture3dnet_forward.10} parent=27 // pred_region
        %p234 = scmp.lt.s32.totalorder %s20, 2
        %s235 = scalar_select %p234, %s20, 2
        %s236 = smul.addr %s235, 72
        %s237 = smul.addr %s236, 4
        %s238 = scalar_lea.vmem %s1, %s237
      $region36: #{gesture3dnet_forward.10} parent=27 // pred_fallthru
        _
      // Predicated region
      $region37: #{gesture3dnet_forward.10} parent=27 // pred_check
        %p239 = pneg %p119
      $region38: #{gesture3dnet_forward.10} parent=27 // pred_check_branch
        %241 = sbr.rel (%p239) target = $region40
      $region39: #{gesture3dnet_forward.10} parent=27 // pred_region
        %p242 = scmp.lt.s32.totalorder %s19, 3
        %s243 = scalar_select %p242, %s19, 3
        %s244 = smul.addr %s243, 4
        %s245 = smul.addr %s244, 4
        %s246 = scalar_lea.vmem %s3, %s245
      $region40: #{gesture3dnet_forward.10} parent=27 // pred_fallthru
        _
    $region28: #{gesture3dnet_forward.10} parent=5 // pred_fallthru
      _
    %p247 = scmp.le.s32.totalorder 1, %s12
    %p248 = scmp.lt.s32.totalorder %s12, 13
    %p249 = pnand %p247, %p248
    %p250 = pneg %p249
    // Predicated region
    $region41: #{gesture3dnet_forward.10} parent=5 // pred_check
      _
    $region42: #{gesture3dnet_forward.10} parent=5 // pred_check_branch
      %252 = sbr.rel (%p249) target = $region44
    $region43: #{gesture3dnet_forward.10} parent=5 // pred_region
      %s253 = ssub.s32 %s12, 1
      %s254 = sadd.s32 %s21, %s22
      %p255 = scmp.lt.s32.totalorder %s254, 5
      %s256 = scalar_select %p255, %s254, 5
      %s257 = smul.addr %s256, 20
      %s258 = smul.addr %s257, 4
      %s259 = scalar_lea.vmem %s0, %s258
      %p260 = pneg %p52
      %p261 = pneg %p49
      %p262 = scmp.lt.s32.totalorder %s22, 2
      %s263 = scalar_select %p262, %s22, 2
      %s264 = smul.addr %s263, 72
      %s265 = smul.addr %s264, 4
      %s266 = scalar_lea.vmem %s1, %s265
      %p267 = pneg %p78
      %p268 = pneg %p75
      %p269 = pneg %p99
      %p270 = pneg %p96
      %p271 = scmp.lt.s32.totalorder %s21, 3
      %s272 = scalar_select %p271, %s21, 3
      %s273 = smul.addr %s272, 4
      %s274 = smul.addr %s273, 4
      %s275 = scalar_lea.vmem %s3, %s274
      %p276 = pneg %p125
      %p277 = pneg %p122
      %p278 = pneg %p146
      %p279 = pneg %p143
      %p280 = pneg %p167
      %p281 = pneg %p164
      %p282 = pneg %p193
      %p283 = pneg %p190
      %p284 = scmp.lt.s32.totalorder %s21, 3
      %s285 = scalar_select %p284, %s21, 3
      %s286 = smul.addr %s285, 4
      %s287 = smul.addr %s286, 4
      %s288 = scalar_lea.vmem %s6, %s287
      %s289 = sadd.s32 %s21, %s22
      %p290 = scmp.lt.s32.totalorder %s289, 5
      %s291 = scalar_select %p290, %s289, 5
      %s292 = smul.addr %s291, 20
      %s293 = smul.addr %s292, 4
      %s294 = scalar_lea.vmem %s0, %s293
      %s295 = sadd.s32 %s21, %s22
      %p296 = scmp.lt.s32.totalorder %s22, 2
      %s297 = scalar_select %p296, %s22, 2
      %s298 = smul.addr %s297, 72
      %s299 = smul.addr %s298, 4
      %s300 = scalar_lea.vmem %s1, %s299
      %p301 = scmp.lt.s32.totalorder %s21, 3
      %s302 = scalar_select %p301, %s21, 3
      %s303 = smul.addr %s302, 4
      %s304 = smul.addr %s303, 4
      %s305 = scalar_lea.vmem %s3, %s304
      %p306 = scmp.lt.s32.totalorder %s21, 3
      %s307 = scalar_select %p306, %s21, 3
      %s308 = smul.addr %s307, 4
      %s309 = smul.addr %s308, 4
      %s310 = scalar_lea.vmem %s6, %s309
      %p312 = scmp.eq.s32.totalorder %s22, 0
      // Predicated region
      $region45: #{gesture3dnet_forward.10} parent=43 // pred_check
        %p313 = pneg %p312
      $region46: #{gesture3dnet_forward.10} parent=43 // pred_check_branch
        %315 = sbr.rel (%p313) target = $region48
      $region47: #{gesture3dnet_forward.10} parent=43 // pred_region
        %vm316 = vcmask 523264
        %317 = vst.msk [vmem:[#allocation2] sm:$0xff] %vm316, 0.0
        %318 = vst.msk [vmem:[#allocation2 + $0x8] sm:$0xff] %vm316, 0.0
        %319 = vst.msk [vmem:[#allocation2 + $0x10] sm:$0xff] %vm316, 0.0
        %320 = vst.msk [vmem:[#allocation2 + $0x18] sm:$0xff] %vm316, 0.0
      $region48: #{gesture3dnet_forward.10} parent=43 // pred_fallthru
        _
      %v321 = vld [vmem:[#allocation2] sm:$0xff]
      %v322 = vld [vmem:[#allocation2 + $0x8] sm:$0xff]
      %v323 = vld [vmem:[#allocation2 + $0x10] sm:$0xff]
      %v324 = vld [vmem:[#allocation2 + $0x18] sm:$0xff]
      %v325 = vld [vmem:[%s294] sm:$0xff]
      %v326 = vld [vmem:[%s294 + $0x8] sm:$0xff]
      %v327 = vld [vmem:[%s294 + $0x10] sm:$0xf]
      %v328 = vld [vmem:[%s294 + $0x14] sm:$0xff]
      %v329 = vld [vmem:[%s294 + $0x1c] sm:$0xff]
      %v330 = vld [vmem:[%s294 + $0x24] sm:$0xf]
      %v331 = vld [vmem:[%s294 + $0x28] sm:$0xff]
      %v332 = vld [vmem:[%s294 + $0x30] sm:$0xff]
      %v333 = vld [vmem:[%s294 + $0x38] sm:$0xf]
      %v334 = vld [vmem:[%s294 + $0x3c] sm:$0xff]
      %v335 = vld [vmem:[%s294 + $0x44] sm:$0xff]
      %v336 = vld [vmem:[%s294 + $0x4c] sm:$0xf]
      %v337 = vld [vmem:[%s300] sm:$0xf]
      %v338 = vld [vmem:[%s300 + $0x4] sm:$0xf]
      %v339 = vld [vmem:[%s300 + $0x8] sm:$0xf]
      %v340 = vld [vmem:[%s300 + $0xc] sm:$0xf]
      %v341 = vld [vmem:[%s300 + $0x10] sm:$0xf]
      %v342 = vld [vmem:[%s300 + $0x14] sm:$0xf]
      %v343 = vld [vmem:[%s300 + $0x18] sm:$0xf]
      %v344 = vld [vmem:[%s300 + $0x1c] sm:$0xf]
      %v345 = vld [vmem:[%s300 + $0x20] sm:$0xf]
      %v346 = vld [vmem:[%s300 + $0x24] sm:$0xf]
      %v347 = vld [vmem:[%s300 + $0x28] sm:$0xf]
      %v348 = vld [vmem:[%s300 + $0x2c] sm:$0xf]
      %v349 = vld [vmem:[%s300 + $0x30] sm:$0xf]
      %v350 = vld [vmem:[%s300 + $0x34] sm:$0xf]
      %v351 = vld [vmem:[%s300 + $0x38] sm:$0xf]
      %v352 = vld [vmem:[%s300 + $0x3c] sm:$0xf]
      %v353 = vld [vmem:[%s300 + $0x40] sm:$0xf]
      %v354 = vld [vmem:[%s300 + $0x44] sm:$0xf]
      %v355 = vld [vmem:[%s300 + $0x48] sm:$0xf]
      %v356 = vld [vmem:[%s300 + $0x4c] sm:$0xf]
      %v357 = vld [vmem:[%s300 + $0x50] sm:$0xf]
      %v358 = vld [vmem:[%s300 + $0x54] sm:$0xf]
      %v359 = vld [vmem:[%s300 + $0x58] sm:$0xf]
      %v360 = vld [vmem:[%s300 + $0x5c] sm:$0xf]
      %v361 = vld [vmem:[%s300 + $0x60] sm:$0xf]
      %v362 = vld [vmem:[%s300 + $0x64] sm:$0xf]
      %v363 = vld [vmem:[%s300 + $0x68] sm:$0xf]
      %v364 = vld [vmem:[%s300 + $0x6c] sm:$0xf]
      %v365 = vld [vmem:[%s300 + $0x70] sm:$0xf]
      %v366 = vld [vmem:[%s300 + $0x74] sm:$0xf]
      %v367 = vld [vmem:[%s300 + $0x78] sm:$0xf]
      %v368 = vld [vmem:[%s300 + $0x7c] sm:$0xf]
      %v369 = vld [vmem:[%s300 + $0x80] sm:$0xf]
      %v370 = vld [vmem:[%s300 + $0x84] sm:$0xf]
      %v371 = vld [vmem:[%s300 + $0x88] sm:$0xf]
      %v372 = vld [vmem:[%s300 + $0x8c] sm:$0xf]
      %v373 = vld [vmem:[%s300 + $0x90] sm:$0xf]
      %v374 = vld [vmem:[%s300 + $0x94] sm:$0xf]
      %v375 = vld [vmem:[%s300 + $0x98] sm:$0xf]
      %v376 = vld [vmem:[%s300 + $0x9c] sm:$0xf]
      %v377 = vld [vmem:[%s300 + $0xa0] sm:$0xf]
      %v378 = vld [vmem:[%s300 + $0xa4] sm:$0xf]
      %v379 = vld [vmem:[%s300 + $0xa8] sm:$0xf]
      %v380 = vld [vmem:[%s300 + $0xac] sm:$0xf]
      %v381 = vld [vmem:[%s300 + $0xb0] sm:$0xf]
      %v382 = vld [vmem:[%s300 + $0xb4] sm:$0xf]
      %v383 = vld [vmem:[%s300 + $0xb8] sm:$0xf]
      %v384 = vld [vmem:[%s300 + $0xbc] sm:$0xf]
      %v385 = vld [vmem:[%s300 + $0xc0] sm:$0xf]
      %v386 = vld [vmem:[%s300 + $0xc4] sm:$0xf]
      %v387 = vld [vmem:[%s300 + $0xc8] sm:$0xf]
      %v388 = vld [vmem:[%s300 + $0xcc] sm:$0xf]
      %v389 = vld [vmem:[%s300 + $0xd0] sm:$0xf]
      %v390 = vld [vmem:[%s300 + $0xd4] sm:$0xf]
      %v391 = vld [vmem:[%s300 + $0xd8] sm:$0xf]
      %v392 = vld [vmem:[%s300 + $0xdc] sm:$0xf]
      %v393 = vld [vmem:[%s300 + $0xe0] sm:$0xf]
      %v394 = vld [vmem:[%s300 + $0xe4] sm:$0xf]
      %v395 = vld [vmem:[%s300 + $0xe8] sm:$0xf]
      %v396 = vld [vmem:[%s300 + $0xec] sm:$0xf]
      %v397 = vld [vmem:[%s300 + $0xf0] sm:$0xf]
      %v398 = vld [vmem:[%s300 + $0xf4] sm:$0xf]
      %v399 = vld [vmem:[%s300 + $0xf8] sm:$0xf]
      %v400 = vld [vmem:[%s300 + $0xfc] sm:$0xf]
      %v401 = vld [vmem:[%s300 + $0x100] sm:$0xf]
      %v402 = vld [vmem:[%s300 + $0x104] sm:$0xf]
      %v403 = vld [vmem:[%s300 + $0x108] sm:$0xf]
      %v404 = vld [vmem:[%s300 + $0x10c] sm:$0xf]
      %v405 = vld [vmem:[%s300 + $0x110] sm:$0xf]
      %v406 = vld [vmem:[%s300 + $0x114] sm:$0xf]
      %v407 = vld [vmem:[%s300 + $0x118] sm:$0xf]
      %v408 = vld [vmem:[%s300 + $0x11c] sm:$0xf]
      %v421 = vunpack.c.l.b16 %v325
      %v422 = vunpack.c.h.b16 %v325
      %v423 = vunpack.c.l.b16 %v326
      %v424 = vunpack.c.h.b16 %v326
      %v425 = vunpack.c.l.b16 %v327
      %v426 = vunpack.c.l.b16 %v328
      %v427 = vunpack.c.h.b16 %v328
      %v428 = vunpack.c.l.b16 %v329
      %v429 = vunpack.c.h.b16 %v329
      %v430 = vunpack.c.l.b16 %v330
      %v431 = vunpack.c.l.b16 %v331
      %v432 = vunpack.c.h.b16 %v331
      %v433 = vunpack.c.l.b16 %v332
      %v434 = vunpack.c.h.b16 %v332
      %v435 = vunpack.c.l.b16 %v333
      %v436 = vunpack.c.l.b16 %v334
      %v437 = vunpack.c.h.b16 %v334
      %v438 = vunpack.c.l.b16 %v335
      %v439 = vunpack.c.h.b16 %v335
      %v440 = vunpack.c.l.b16 %v336
      %v441 = vpack.c.b16 %v426, %v421
      %v442 = vpack.c.b16 %v427, %v422
      %v443 = vpack.c.b16 %v428, %v423
      %v444 = vpack.c.b16 %v429, %v424
      %v445 = vpack.c.b16 %v430, %v425
      %v446 = vpack.c.b16 %v436, %v431
      %v447 = vpack.c.b16 %v437, %v432
      %v448 = vpack.c.b16 %v438, %v433
      %v449 = vpack.c.b16 %v439, %v434
      %v450 = vpack.c.b16 %v440, %v435
      %v531 = vunpack.c.l.b16 %v337
      %v532 = vunpack.c.l.b16 %v338
      %v533 = vunpack.c.l.b16 %v339
      %v534 = vunpack.c.l.b16 %v340
      %v535 = vunpack.c.l.b16 %v341
      %v536 = vunpack.c.l.b16 %v342
      %v537 = vunpack.c.l.b16 %v343
      %v538 = vunpack.c.l.b16 %v344
      %v539 = vunpack.c.l.b16 %v345
      %v540 = vunpack.c.l.b16 %v346
      %v541 = vunpack.c.l.b16 %v347
      %v542 = vunpack.c.l.b16 %v348
      %v543 = vunpack.c.l.b16 %v349
      %v544 = vunpack.c.l.b16 %v350
      %v545 = vunpack.c.l.b16 %v351
      %v546 = vunpack.c.l.b16 %v352
      %v547 = vunpack.c.l.b16 %v353
      %v548 = vunpack.c.l.b16 %v354
      %v549 = vunpack.c.l.b16 %v355
      %v550 = vunpack.c.l.b16 %v356
      %v551 = vunpack.c.l.b16 %v357
      %v552 = vunpack.c.l.b16 %v358
      %v553 = vunpack.c.l.b16 %v359
      %v554 = vunpack.c.l.b16 %v360
      %v555 = vunpack.c.l.b16 %v361
      %v556 = vunpack.c.l.b16 %v362
      %v557 = vunpack.c.l.b16 %v363
      %v558 = vunpack.c.l.b16 %v364
      %v559 = vunpack.c.l.b16 %v365
      %v560 = vunpack.c.l.b16 %v366
      %v561 = vunpack.c.l.b16 %v367
      %v562 = vunpack.c.l.b16 %v368
      %v563 = vunpack.c.l.b16 %v369
      %v564 = vunpack.c.l.b16 %v370
      %v565 = vunpack.c.l.b16 %v371
      %v566 = vunpack.c.l.b16 %v372
      %v567 = vunpack.c.l.b16 %v373
      %v568 = vunpack.c.l.b16 %v374
      %v569 = vunpack.c.l.b16 %v375
      %v570 = vunpack.c.l.b16 %v376
      %v571 = vunpack.c.l.b16 %v377
      %v572 = vunpack.c.l.b16 %v378
      %v573 = vunpack.c.l.b16 %v379
      %v574 = vunpack.c.l.b16 %v380
      %v575 = vunpack.c.l.b16 %v381
      %v576 = vunpack.c.l.b16 %v382
      %v577 = vunpack.c.l.b16 %v383
      %v578 = vunpack.c.l.b16 %v384
      %v579 = vunpack.c.l.b16 %v385
      %v580 = vunpack.c.l.b16 %v386
      %v581 = vunpack.c.l.b16 %v387
      %v582 = vunpack.c.l.b16 %v388
      %v583 = vunpack.c.l.b16 %v389
      %v584 = vunpack.c.l.b16 %v390
      %v585 = vunpack.c.l.b16 %v391
      %v586 = vunpack.c.l.b16 %v392
      %v587 = vunpack.c.l.b16 %v393
      %v588 = vunpack.c.l.b16 %v394
      %v589 = vunpack.c.l.b16 %v395
      %v590 = vunpack.c.l.b16 %v396
      %v591 = vunpack.c.l.b16 %v397
      %v592 = vunpack.c.l.b16 %v398
      %v593 = vunpack.c.l.b16 %v399
      %v594 = vunpack.c.l.b16 %v400
      %v595 = vunpack.c.l.b16 %v401
      %v596 = vunpack.c.l.b16 %v402
      %v597 = vunpack.c.l.b16 %v403
      %v598 = vunpack.c.l.b16 %v404
      %v599 = vunpack.c.l.b16 %v405
      %v600 = vunpack.c.l.b16 %v406
      %v601 = vunpack.c.l.b16 %v407
      %v602 = vunpack.c.l.b16 %v408
      %v603 = vpack.c.b16 %v532, %v531
      %v604 = vpack.c.b16 %v534, %v533
      %v605 = vpack.c.b16 %v536, %v535
      %v606 = vpack.c.b16 %v538, %v537
      %v607 = vpack.c.b16 %v540, %v539
      %v608 = vpack.c.b16 %v542, %v541
      %v609 = vpack.c.b16 %v544, %v543
      %v610 = vpack.c.b16 %v546, %v545
      %v611 = vpack.c.b16 %v548, %v547
      %v612 = vpack.c.b16 %v550, %v549
      %v613 = vpack.c.b16 %v552, %v551
      %v614 = vpack.c.b16 %v554, %v553
      %v615 = vpack.c.b16 %v556, %v555
      %v616 = vpack.c.b16 %v558, %v557
      %v617 = vpack.c.b16 %v560, %v559
      %v618 = vpack.c.b16 %v562, %v561
      %v619 = vpack.c.b16 %v564, %v563
      %v620 = vpack.c.b16 %v566, %v565
      %v621 = vpack.c.b16 %v568, %v567
      %v622 = vpack.c.b16 %v570, %v569
      %v623 = vpack.c.b16 %v572, %v571
      %v624 = vpack.c.b16 %v574, %v573
      %v625 = vpack.c.b16 %v576, %v575
      %v626 = vpack.c.b16 %v578, %v577
      %v627 = vpack.c.b16 %v580, %v579
      %v628 = vpack.c.b16 %v582, %v581
      %v629 = vpack.c.b16 %v584, %v583
      %v630 = vpack.c.b16 %v586, %v585
      %v631 = vpack.c.b16 %v588, %v587
      %v632 = vpack.c.b16 %v590, %v589
      %v633 = vpack.c.b16 %v592, %v591
      %v634 = vpack.c.b16 %v594, %v593
      %v635 = vpack.c.b16 %v596, %v595
      %v636 = vpack.c.b16 %v598, %v597
      %v637 = vpack.c.b16 %v600, %v599
      %v638 = vpack.c.b16 %v602, %v601
      %vm675 = vcmask 523264
      %v677 = vsel %vm675, %v445, 0
      %v680 = vsel %vm675, %v450, 0
      %682 = vmatpush.bf16.msra.mxu0 %v610
      %683 = vmatpush.bf16.msra.mxu0 %v609
      %684 = vmatpush.bf16.msra.mxu0 %v608
      %685 = vmatpush.bf16.msra.mxu0 %v607
      %686 = vmatpush.bf16.msra.mxu0 %v606
      %687 = vmatpush.bf16.msra.mxu0 %v605
      %688 = vmatpush.bf16.msra.mxu0 %v604
      %689 = vmatpush.bf16.msra.mxu0 %v603
      %690 = vmatmul.bf16.gmra.mxu0 %v441
      %v691 = vpop.f32.mrf.mxu0
      %v692 = vadd.f32 0.0, %v691
      %v693 = vpop.f32.mrf.mxu0
      %v694 = vadd.f32 0.0, %v693
      %695 = vmatmul.bf16.gmra.mxu0 %v446
      %v696 = vpop.f32.mrf.mxu0
      %v697 = vadd.f32 0.0, %v696
      %v698 = vpop.f32.mrf.mxu0
      %v699 = vadd.f32 0.0, %v698
      %700 = vdwg.mxu0
      %701 = vmatpush.bf16.msra.mxu0 %v618
      %702 = vmatpush.bf16.msra.mxu0 %v617
      %703 = vmatpush.bf16.msra.mxu0 %v616
      %704 = vmatpush.bf16.msra.mxu0 %v615
      %705 = vmatpush.bf16.msra.mxu0 %v614
      %706 = vmatpush.bf16.msra.mxu0 %v613
      %707 = vmatpush.bf16.msra.mxu0 %v612
      %708 = vmatpush.bf16.msra.mxu0 %v611
      %709 = vmatmul.bf16.gmra.mxu0 %v442
      %v710 = vpop.f32.mrf.mxu0
      %v711 = vadd.f32 %v692, %v710
      %v712 = vpop.f32.mrf.mxu0
      %v713 = vadd.f32 %v694, %v712
      %714 = vmatmul.bf16.gmra.mxu0 %v447
      %v715 = vpop.f32.mrf.mxu0
      %v716 = vadd.f32 %v697, %v715
      %v717 = vpop.f32.mrf.mxu0
      %v718 = vadd.f32 %v699, %v717
      %719 = vdwg.mxu0
      %720 = vmatpush.bf16.msra.mxu0 %v626
      %721 = vmatpush.bf16.msra.mxu0 %v625
      %722 = vmatpush.bf16.msra.mxu0 %v624
      %723 = vmatpush.bf16.msra.mxu0 %v623
      %724 = vmatpush.bf16.msra.mxu0 %v622
      %725 = vmatpush.bf16.msra.mxu0 %v621
      %726 = vmatpush.bf16.msra.mxu0 %v620
      %727 = vmatpush.bf16.msra.mxu0 %v619
      %728 = vmatmul.bf16.gmra.mxu0 %v443
      %v729 = vpop.f32.mrf.mxu0
      %v730 = vadd.f32 %v711, %v729
      %v731 = vpop.f32.mrf.mxu0
      %v732 = vadd.f32 %v713, %v731
      %733 = vmatmul.bf16.gmra.mxu0 %v448
      %v734 = vpop.f32.mrf.mxu0
      %v735 = vadd.f32 %v716, %v734
      %v736 = vpop.f32.mrf.mxu0
      %v737 = vadd.f32 %v718, %v736
      %738 = vdwg.mxu0
      %739 = vmatpush.bf16.msra.mxu0 %v634
      %740 = vmatpush.bf16.msra.mxu0 %v633
      %741 = vmatpush.bf16.msra.mxu0 %v632
      %742 = vmatpush.bf16.msra.mxu0 %v631
      %743 = vmatpush.bf16.msra.mxu0 %v630
      %744 = vmatpush.bf16.msra.mxu0 %v629
      %745 = vmatpush.bf16.msra.mxu0 %v628
      %746 = vmatpush.bf16.msra.mxu0 %v627
      %747 = vmatmul.bf16.gmra.mxu0 %v444
      %v748 = vpop.f32.mrf.mxu0
      %v749 = vadd.f32 %v730, %v748
      %v750 = vpop.f32.mrf.mxu0
      %v751 = vadd.f32 %v732, %v750
      %752 = vmatmul.bf16.gmra.mxu0 %v449
      %v753 = vpop.f32.mrf.mxu0
      %v754 = vadd.f32 %v735, %v753
      %v755 = vpop.f32.mrf.mxu0
      %v756 = vadd.f32 %v737, %v755
      %757 = vdwg.mxu0
      %758 = vmatpush.bf16.msra.mxu0 0
      %759 = vmatpush.bf16.msra.mxu0 0
      %760 = vmatpush.bf16.msra.mxu0 0
      %761 = vmatpush.bf16.msra.mxu0 0
      %762 = vmatpush.bf16.msra.mxu0 %v638
      %763 = vmatpush.bf16.msra.mxu0 %v637
      %764 = vmatpush.bf16.msra.mxu0 %v636
      %765 = vmatpush.bf16.msra.mxu0 %v635
      %766 = vmatmul.bf16.gmra.mxu0 %v677
      %v767 = vpop.f32.mrf.mxu0
      %v768 = vadd.f32 %v749, %v767
      %v769 = vpop.f32.mrf.mxu0
      %v770 = vadd.f32 %v751, %v769
      %771 = vmatmul.bf16.gmra.mxu0 %v680
      %v772 = vpop.f32.mrf.mxu0
      %v773 = vadd.f32 %v754, %v772
      %v774 = vpop.f32.mrf.mxu0
      %v775 = vadd.f32 %v756, %v774
      %776 = vdwg.mxu0
      %v777 = vadd.f32 %v321, %v768
      %v778 = vadd.f32 %v322, %v770
      %v779 = vadd.f32 %v323, %v773
      %v780 = vadd.f32 %v324, %v775
      %781 = vst.msk [vmem:[#allocation2] sm:$0xff] %vm675, %v777
      %782 = vst.msk [vmem:[#allocation2 + $0x8] sm:$0xff] %vm675, %v778
      %783 = vst.msk [vmem:[#allocation2 + $0x10] sm:$0xff] %vm675, %v779
      %784 = vst.msk [vmem:[#allocation2 + $0x18] sm:$0xff] %vm675, %v780
      %p785 = scmp.eq.s32.totalorder %s22, 2
      // Predicated region
      $region49: #{gesture3dnet_forward.10} parent=43 // pred_check
        %p786 = pneg %p785
      $region50: #{gesture3dnet_forward.10} parent=43 // pred_check_branch
        %788 = sbr.rel (%p786) target = $region52
      $region51: #{gesture3dnet_forward.10} parent=43 // pred_region
        %v789 = vld [vmem:[%s305] sm:$0xf]
        %v790 = vld [vmem:[%s305 + $0x4] sm:$0xf]
        %v791 = vld [vmem:[%s305 + $0x8] sm:$0xf]
        %v792 = vld [vmem:[%s305 + $0xc] sm:$0xf]
        %v793 = vld [vmem:[%s4] sm:$0xf]
        %v794 = vld [vmem:[%s4 + $0x4] sm:$0xf]
        %v795 = vld [vmem:[%s4 + $0x8] sm:$0xf]
        %v796 = vld [vmem:[%s4 + $0xc] sm:$0xf]
        %v801 = vunpack.c.l.b16 %v789
        %v802 = vunpack.c.l.b16 %v790
        %v803 = vunpack.c.l.b16 %v791
        %v804 = vunpack.c.l.b16 %v792
        %v805 = vpack.c.b16 %v802, %v801
        %v806 = vpack.c.b16 %v804, %v803
        %v811 = vunpack.c.l.b16 %v793
        %v812 = vunpack.c.l.b16 %v794
        %v813 = vunpack.c.l.b16 %v795
        %v814 = vunpack.c.l.b16 %v796
        %v815 = vpack.c.b16 %v812, %v811
        %v816 = vpack.c.b16 %v814, %v813
        %vm819 = vcmask 261120
        %v821 = vsel %vm819, %v805, 0
        %v824 = vsel %vm819, %v806, 0
        %826 = vmatpush.bf16.msra.mxu0 0
        %827 = vmatpush.bf16.msra.mxu0 0
        %828 = vmatpush.bf16.msra.mxu0 0
        %829 = vmatpush.bf16.msra.mxu0 0
        %830 = vmatpush.bf16.msra.mxu0 0
        %831 = vmatpush.bf16.msra.mxu0 0
        %832 = vmatpush.bf16.msra.mxu0 %v816
        %833 = vmatpush.bf16.msra.mxu0 %v815
        %834 = vmatmul.bf16.gmra.mxu0 %v821
        %v835 = vpop.f32.mrf.mxu0
        %v836 = vadd.f32 0.0, %v835
        %v837 = vpop.f32.mrf.mxu0
        %v838 = vadd.f32 0.0, %v837
        %839 = vmatmul.bf16.gmra.mxu0 %v824
        %v840 = vpop.f32.mrf.mxu0
        %v841 = vadd.f32 0.0, %v840
        %v842 = vpop.f32.mrf.mxu0
        %v843 = vadd.f32 0.0, %v842
        %844 = vdwg.mxu0
        %v845 = vld [vmem:[#allocation2] sm:$0xff]
        %v846 = vld [vmem:[#allocation2 + $0x8] sm:$0xff]
        %v847 = vld [vmem:[#allocation2 + $0x10] sm:$0xff]
        %v848 = vld [vmem:[#allocation2 + $0x18] sm:$0xff]
        %v849 = vld [vmem:[%s2] sm:$0x1]
        %v851 = vperm.slane %v849, 0
        %v853 = vadd.f32 %v845, %v851
        %v854 = vadd.f32 %v846, %v851
        %v855 = vadd.f32 %v847, %v851
        %v856 = vadd.f32 %v848, %v851
        %v857 = vadd.f32 %v853, %v836
        %v858 = vadd.f32 %v854, %v838
        %v859 = vadd.f32 %v855, %v841
        %v860 = vadd.f32 %v856, %v843
        %v861 = vld [vmem:[%s5] sm:$0x1]
        %v863 = vperm.slane %v861, 0
        %v865 = vadd.f32 %v857, %v863
        %v866 = vadd.f32 %v858, %v863
        %v867 = vadd.f32 %v859, %v863
        %v868 = vadd.f32 %v860, %v863
        %v869 = vmax.f32 %v865, 0.0
        %v870 = vmax.f32 %v866, 0.0
        %v871 = vmax.f32 %v867, 0.0
        %v872 = vmax.f32 %v868, 0.0
        %v873 = vpack.c.bf16 %v869, %v869
        %v874 = vpack.c.bf16 %v870, %v870
        %v875 = vpack.c.bf16 %v871, %v871
        %v876 = vpack.c.bf16 %v872, %v872
        %vm877 = vcmask 519168
        %878 = vst.msk [vmem:[%s310] sm:$0xf] %vm877, %v873
        %879 = vst.msk [vmem:[%s310 + $0x4] sm:$0xf] %vm877, %v874
        %880 = vst.msk [vmem:[%s310 + $0x8] sm:$0xf] %vm877, %v875
        %881 = vst.msk [vmem:[%s310 + $0xc] sm:$0xf] %vm877, %v876
      $region52: #{gesture3dnet_forward.10} parent=43 // pred_fallthru
        _
      %p882 = scmp.lt.s32.totalorder %s21, 3
      %s883 = scalar_select %p882, %s21, 3
      %s884 = smul.addr %s883, 4
      %s885 = smul.addr %s884, 4
      %s886 = scalar_lea.vmem %s6, %s885
      // Predicated region
      $region53: #{gesture3dnet_forward.10} parent=43 // pred_check
        %p887 = pneg %p190
      $region54: #{gesture3dnet_forward.10} parent=43 // pred_check_branch
        %889 = sbr.rel (%p887) target = $region56
      $region55: #{gesture3dnet_forward.10} parent=43 // pred_region
        _
      $region56: #{gesture3dnet_forward.10} parent=43 // pred_fallthru
        _
    $region44: #{gesture3dnet_forward.10} parent=5 // pred_fallthru
      _
    %p890 = scmp.le.s32.totalorder 2, %s12
    // Predicated region
    $region57: #{gesture3dnet_forward.10} parent=5 // pred_check
      %p891 = pneg %p890
    $region58: #{gesture3dnet_forward.10} parent=5 // pred_check_branch
      %893 = sbr.rel (%p891) target = $region60
    $region59: #{gesture3dnet_forward.10} parent=5 // pred_region
      %s894 = ssub.s32 %s12, 2
      // Predicated region
      $region61: #{gesture3dnet_forward.10} parent=59 // pred_check
        %p895 = pneg %p196
      $region62: #{gesture3dnet_forward.10} parent=59 // pred_check_branch
        %897 = sbr.rel (%p895) target = $region64
      $region63: #{gesture3dnet_forward.10} parent=59 // pred_region
        %p898 = scmp.lt.s32.totalorder %s23, 3
        %s899 = scalar_select %p898, %s23, 3
        %s900 = smul.addr %s899, 4
        %s901 = smul.addr %s900, 4
        %s902 = scalar_lea.vmem %s6, %s901
      $region64: #{gesture3dnet_forward.10} parent=59 // pred_fallthru
        _
    $region60: #{gesture3dnet_forward.10} parent=5 // pred_fallthru
      _
  $region6: #{gesture3dnet_forward.10} parent=0 // loop_footer
    %s16 = sadd.s32 1, %s12
  $region7: #{gesture3dnet_forward.10} parent=0 // loop_footer_branch
    %11 = sbr.rel target = $region3
  $region8: #{gesture3dnet_forward.10} parent=0 // loop_exit
    _

// kernel: gesture3dnet_forward.11
$region0: #{gesture3dnet_forward.11}
  #allocation0 [shape = 'u32[]', space=smem, size = 0x4, offset = 0x4, fixed_abs, tag = 'smem constant byte address 0x4 - core index']
  #allocation1 [shape = 'u32[72,128]{1,0:T(1,128)}', space=vmem, size = 0x9000, scoped, tag = 'internal scratch']
  #allocation2 [shape = 'f32[8,128]{1,0:T(8,128)}', space=vmem, size = 0x1000, scoped, tag = 'scratch operand']
  %s0 = inlined_call_operand.vmem [shape: bf16[6,8,576], index: 0, kind: input, shape index: {}]
  %s1 = inlined_call_operand.vmem [shape: bf16[3,576,128], index: 1, kind: input, shape index: {}]
  %s2 = inlined_call_operand.vmem [shape: f32[1,128], index: 2, kind: input, shape index: {}]
  %s3 = inlined_call_operand.vmem [shape: bf16[4,8,128], index: 3, kind: output, shape index: {}]
  %s4 = sld [smem:[#allocation0]]
  $region53: #{gesture3dnet_forward.11} parent=0
    _
  %s6 = ssub.s32 1, %s4
  %s7 = scalar_select 0, %s6, %s4
  loop: start=0, step=1, limit=14
  $region2: #{gesture3dnet_forward.11} parent=0 // loop_pre_header
    _
  $region3: #{gesture3dnet_forward.11} parent=0 // loop_header
    %s9 = sphi 0, %s13
    %p10 = scmp.ge.s32.totalorder %s9, 14
    %s16 = sphi 0, %s28
    %s17 = sphi 0, %s24
    %s18 = sphi 0, %s16
    %s19 = sphi 0, %s17
    %s20 = sphi 0, %s18
    %s21 = sphi 0, %s19
    %s33 = sphi 0, %s35
    %s36 = sphi 0, %s33
    %s37 = sphi 0, %s36
    %s53 = sphi 0, %s37
    %s59 = sphi 0, %s61
    %s62 = sphi 0, %s59
    %s63 = sphi 0, %s62
    %s79 = sphi 0, %s63
    %s83 = sphi 0, %s83
    %s85 = sphi 0, %s83
    %s86 = sphi 0, %s85
    %s100 = sphi 0, %s86
    %s106 = sphi 0, %s108
    %s109 = sphi 0, %s106
    %s110 = sphi 0, %s109
    %s126 = sphi 0, %s110
  $region4: #{gesture3dnet_forward.11} parent=0 // loop_header_branch
    %12 = sbr.rel (%p10) target = $region8
  $region5: #{gesture3dnet_forward.11} parent=0 // loop_body
    %s14 = ssub.s32 %s9, 1
    %s15 = ssub.s32 %s9, 2
    %s22 = sadd.s32 1, %s17
    %p23 = scmp.ge.s32.totalorder %s22, 3
    %s24 = scalar_select %p23, 0, %s22
    %s25 = sadd.s32 1, %s16
    %s26 = scalar_select %p23, %s25, %s16
    %p27 = scmp.ge.s32.totalorder %s26, 4
    %s28 = scalar_select %p27, 0, %s26
    %s29 = sadd.s32 %s16, %s17
    %s30 = sadd.s32 %s28, %s24
    %s31 = ssub.s32 %s29, %s30
    %p32 = scmp.eq.s32.totalorder %s31, 0
    %s34 = sadd.s32 %s33, 1
    %s35 = scalar_select %p32, %s33, %s34
    %p38 = pneg %p32
    %p39 = scmp.eq.s32.totalorder %s9, 11
    %p40 = por %p38, %p39
    %p41 = scmp.ne.s32.totalorder %s33, %s36
    %p42 = scmp.eq.s32.totalorder %s9, 0
    %p43 = por %p41, %p42
    %p44 = scmp.ne.s32.totalorder %s33, %s36
    %p45 = scmp.eq.s32.totalorder %s14, 11
    %p46 = por %p44, %p45
    %p47 = scmp.ne.s32.totalorder %s36, %s37
    %p48 = scmp.eq.s32.totalorder %s14, 0
    %p49 = por %p47, %p48
    %p50 = scmp.ne.s32.totalorder %s36, %s37
    %p51 = scmp.eq.s32.totalorder %s15, 11
    %p52 = por %p50, %p51
    %p54 = scmp.ne.s32.totalorder %s37, %s53
    %p55 = scmp.eq.s32.totalorder %s15, 0
    %p56 = por %p54, %p55
    %s57 = ssub.s32 %s17, %s24
    %p58 = scmp.eq.s32.totalorder %s57, 0
    %s60 = sadd.s32 %s59, 1
    %s61 = scalar_select %p58, %s59, %s60
    %p64 = pneg %p58
    %p65 = scmp.eq.s32.totalorder %s9, 11
    %p66 = por %p64, %p65
    %p67 = scmp.ne.s32.totalorder %s59, %s62
    %p68 = scmp.eq.s32.totalorder %s9, 0
    %p69 = por %p67, %p68
    %p70 = scmp.ne.s32.totalorder %s59, %s62
    %p71 = scmp.eq.s32.totalorder %s14, 11
    %p72 = por %p70, %p71
    %p73 = scmp.ne.s32.totalorder %s62, %s63
    %p74 = scmp.eq.s32.totalorder %s14, 0
    %p75 = por %p73, %p74
    %p76 = scmp.ne.s32.totalorder %s62, %s63
    %p77 = scmp.eq.s32.totalorder %s15, 11
    %p78 = por %p76, %p77
    %p80 = scmp.ne.s32.totalorder %s63, %s79
    %p81 = scmp.eq.s32.totalorder %s15, 0
    %p82 = por %p80, %p81
    %s84 = sadd.s32 %s83, 1
    %p87 = scmp.eq.s32.totalorder %s9, 11
    %p88 = scmp.ne.s32.totalorder %s83, %s85
    %p89 = scmp.eq.s32.totalorder %s9, 0
    %p90 = por %p88, %p89
    %p91 = scmp.ne.s32.totalorder %s83, %s85
    %p92 = scmp.eq.s32.totalorder %s14, 11
    %p93 = por %p91, %p92
    %p94 = scmp.ne.s32.totalorder %s85, %s86
    %p95 = scmp.eq.s32.totalorder %s14, 0
    %p96 = por %p94, %p95
    %p97 = scmp.ne.s32.totalorder %s85, %s86
    %p98 = scmp.eq.s32.totalorder %s15, 11
    %p99 = por %p97, %p98
    %p101 = scmp.ne.s32.totalorder %s86, %s100
    %p102 = scmp.eq.s32.totalorder %s15, 0
    %p103 = por %p101, %p102
    %s104 = ssub.s32 %s16, %s28
    %p105 = scmp.eq.s32.totalorder %s104, 0
    %s107 = sadd.s32 %s106, 1
    %s108 = scalar_select %p105, %s106, %s107
    %p111 = pneg %p105
    %p112 = scmp.eq.s32.totalorder %s9, 11
    %p113 = por %p111, %p112
    %p114 = scmp.ne.s32.totalorder %s106, %s109
    %p115 = scmp.eq.s32.totalorder %s9, 0
    %p116 = por %p114, %p115
    %p117 = scmp.ne.s32.totalorder %s106, %s109
    %p118 = scmp.eq.s32.totalorder %s14, 11
    %p119 = por %p117, %p118
    %p120 = scmp.ne.s32.totalorder %s109, %s110
    %p121 = scmp.eq.s32.totalorder %s14, 0
    %p122 = por %p120, %p121
    %p123 = scmp.ne.s32.totalorder %s109, %s110
    %p124 = scmp.eq.s32.totalorder %s15, 11
    %p125 = por %p123, %p124
    %p127 = scmp.ne.s32.totalorder %s110, %s126
    %p128 = scmp.eq.s32.totalorder %s15, 0
    %p129 = por %p127, %p128
    %p130 = scmp.le.s32.totalorder 1, %s9
    %p131 = scmp.lt.s32.totalorder %s9, 13
    %p132 = pnand %p130, %p131
    %p133 = pneg %p132
    // Predicated region
    $region9: #{gesture3dnet_forward.11} parent=5 // pred_check
      _
    $region10: #{gesture3dnet_forward.11} parent=5 // pred_check_branch
      %135 = sbr.rel (%p132) target = $region12
    $region11: #{gesture3dnet_forward.11} parent=5 // pred_region
      %s136 = ssub.s32 %s9, 1
      // Predicated region
      $region13: #{gesture3dnet_forward.11} parent=11 // pred_check
        %p137 = pneg %p96
      $region14: #{gesture3dnet_forward.11} parent=11 // pred_check_branch
        %139 = sbr.rel (%p137) target = $region16
      $region15: #{gesture3dnet_forward.11} parent=11 // pred_region
        _
      $region16: #{gesture3dnet_forward.11} parent=11 // pred_fallthru
        _
    $region12: #{gesture3dnet_forward.11} parent=5 // pred_fallthru
      _
    %p140 = scmp.lt.s32.totalorder %s9, 12
    // Predicated region
    $region17: #{gesture3dnet_forward.11} parent=5 // pred_check
      %p141 = pneg %p140
    $region18: #{gesture3dnet_forward.11} parent=5 // pred_check_branch
      %143 = sbr.rel (%p141) target = $region20
    $region19: #{gesture3dnet_forward.11} parent=5 // pred_region
      // Predicated region
      $region21: #{gesture3dnet_forward.11} parent=19 // pred_check
        %p144 = pneg %p43
      $region22: #{gesture3dnet_forward.11} parent=19 // pred_check_branch
        %146 = sbr.rel (%p144) target = $region24
      $region23: #{gesture3dnet_forward.11} parent=19 // pred_region
        %s147 = sadd.s32 %s16, %s17
        %p148 = scmp.lt.s32.totalorder %s147, 5
        %s149 = scalar_select %p148, %s147, 5
        %s150 = smul.addr %s149, 5
        %s151 = smul.addr %s150, 4
        %s152 = scalar_lea.vmem %s0, %s151
        %s153 = sadd.s32 %s16, %s17
      $region24: #{gesture3dnet_forward.11} parent=19 // pred_fallthru
        _
      // Predicated region
      $region25: #{gesture3dnet_forward.11} parent=19 // pred_check
        %p154 = pneg %p69
      $region26: #{gesture3dnet_forward.11} parent=19 // pred_check_branch
        %156 = sbr.rel (%p154) target = $region28
      $region27: #{gesture3dnet_forward.11} parent=19 // pred_region
        %p157 = scmp.lt.s32.totalorder %s17, 2
        %s158 = scalar_select %p157, %s17, 2
        %s159 = smul.addr %s158, 72
        %s160 = smul.addr %s159, 4
        %s161 = scalar_lea.vmem %s1, %s160
      $region28: #{gesture3dnet_forward.11} parent=19 // pred_fallthru
        _
    $region20: #{gesture3dnet_forward.11} parent=5 // pred_fallthru
      _
    %p162 = scmp.le.s32.totalorder 1, %s9
    %p163 = scmp.lt.s32.totalorder %s9, 13
    %p164 = pnand %p162, %p163
    %p165 = pneg %p164
    // Predicated region
    $region29: #{gesture3dnet_forward.11} parent=5 // pred_check
      _
    $region30: #{gesture3dnet_forward.11} parent=5 // pred_check_branch
      %167 = sbr.rel (%p164) target = $region32
    $region31: #{gesture3dnet_forward.11} parent=5 // pred_region
      %s168 = ssub.s32 %s9, 1
      %s169 = sadd.s32 %s18, %s19
      %p170 = scmp.lt.s32.totalorder %s169, 5
      %s171 = scalar_select %p170, %s169, 5
      %s172 = smul.addr %s171, 5
      %s173 = smul.addr %s172, 4
      %s174 = scalar_lea.vmem %s0, %s173
      %p175 = pneg %p49
      %p176 = pneg %p46
      %p177 = scmp.lt.s32.totalorder %s19, 2
      %s178 = scalar_select %p177, %s19, 2
      %s179 = smul.addr %s178, 72
      %s180 = smul.addr %s179, 4
      %s181 = scalar_lea.vmem %s1, %s180
      %p182 = pneg %p75
      %p183 = pneg %p72
      %p184 = pneg %p96
      %p185 = pneg %p93
      %p186 = pneg %p122
      %p187 = pneg %p119
      %p188 = scmp.lt.s32.totalorder %s18, 3
      %s189 = scalar_select %p188, %s18, 3
      %s190 = smul.addr %s189, 4
      %s191 = scalar_lea.vmem %s3, %s190
      %s192 = sadd.s32 %s18, %s19
      %p193 = scmp.lt.s32.totalorder %s192, 5
      %s194 = scalar_select %p193, %s192, 5
      %s195 = smul.addr %s194, 5
      %s196 = smul.addr %s195, 4
      %s197 = scalar_lea.vmem %s0, %s196
      %s198 = sadd.s32 %s18, %s19
      %p199 = scmp.lt.s32.totalorder %s19, 2
      %s200 = scalar_select %p199, %s19, 2
      %s201 = smul.addr %s200, 72
      %s202 = smul.addr %s201, 4
      %s203 = scalar_lea.vmem %s1, %s202
      %p204 = scmp.lt.s32.totalorder %s18, 3
      %s205 = scalar_select %p204, %s18, 3
      %s206 = smul.addr %s205, 4
      %s207 = scalar_lea.vmem %s3, %s206
      %p209 = scmp.eq.s32.totalorder %s19, 0
      // Predicated region
      $region33: #{gesture3dnet_forward.11} parent=31 // pred_check
        %p210 = pneg %p209
      $region34: #{gesture3dnet_forward.11} parent=31 // pred_check_branch
        %212 = sbr.rel (%p210) target = $region36
      $region35: #{gesture3dnet_forward.11} parent=31 // pred_region
        %213 = vst [vmem:[#allocation2] sm:$0xff] 0.0
      $region36: #{gesture3dnet_forward.11} parent=31 // pred_fallthru
        _
      %v214 = vld [vmem:[#allocation2] sm:$0xff]
      %v215 = vld [vmem:[%s197] sm:$0xff]
      %v216 = vld [vmem:[%s197 + $0x8] sm:$0xff]
      %v217 = vld [vmem:[%s197 + $0x10] sm:$0xf]
      %v218 = vld [vmem:[%s203] sm:$0xf]
      %v219 = vld [vmem:[%s203 + $0x4] sm:$0xf]
      %v220 = vld [vmem:[%s203 + $0x8] sm:$0xf]
      %v221 = vld [vmem:[%s203 + $0xc] sm:$0xf]
      %v222 = vld [vmem:[%s203 + $0x10] sm:$0xf]
      %v223 = vld [vmem:[%s203 + $0x14] sm:$0xf]
      %v224 = vld [vmem:[%s203 + $0x18] sm:$0xf]
      %v225 = vld [vmem:[%s203 + $0x1c] sm:$0xf]
      %v226 = vld [vmem:[%s203 + $0x20] sm:$0xf]
      %v227 = vld [vmem:[%s203 + $0x24] sm:$0xf]
      %v228 = vld [vmem:[%s203 + $0x28] sm:$0xf]
      %v229 = vld [vmem:[%s203 + $0x2c] sm:$0xf]
      %v230 = vld [vmem:[%s203 + $0x30] sm:$0xf]
      %v231 = vld [vmem:[%s203 + $0x34] sm:$0xf]
      %v232 = vld [vmem:[%s203 + $0x38] sm:$0xf]
      %v233 = vld [vmem:[%s203 + $0x3c] sm:$0xf]
      %v234 = vld [vmem:[%s203 + $0x40] sm:$0xf]
      %v235 = vld [vmem:[%s203 + $0x44] sm:$0xf]
      %v236 = vld [vmem:[%s203 + $0x48] sm:$0xf]
      %v237 = vld [vmem:[%s203 + $0x4c] sm:$0xf]
      %v238 = vld [vmem:[%s203 + $0x50] sm:$0xf]
      %v239 = vld [vmem:[%s203 + $0x54] sm:$0xf]
      %v240 = vld [vmem:[%s203 + $0x58] sm:$0xf]
      %v241 = vld [vmem:[%s203 + $0x5c] sm:$0xf]
      %v242 = vld [vmem:[%s203 + $0x60] sm:$0xf]
      %v243 = vld [vmem:[%s203 + $0x64] sm:$0xf]
      %v244 = vld [vmem:[%s203 + $0x68] sm:$0xf]
      %v245 = vld [vmem:[%s203 + $0x6c] sm:$0xf]
      %v246 = vld [vmem:[%s203 + $0x70] sm:$0xf]
      %v247 = vld [vmem:[%s203 + $0x74] sm:$0xf]
      %v248 = vld [vmem:[%s203 + $0x78] sm:$0xf]
      %v249 = vld [vmem:[%s203 + $0x7c] sm:$0xf]
      %v250 = vld [vmem:[%s203 + $0x80] sm:$0xf]
      %v251 = vld [vmem:[%s203 + $0x84] sm:$0xf]
      %v252 = vld [vmem:[%s203 + $0x88] sm:$0xf]
      %v253 = vld [vmem:[%s203 + $0x8c] sm:$0xf]
      %v254 = vld [vmem:[%s203 + $0x90] sm:$0xf]
      %v255 = vld [vmem:[%s203 + $0x94] sm:$0xf]
      %v256 = vld [vmem:[%s203 + $0x98] sm:$0xf]
      %v257 = vld [vmem:[%s203 + $0x9c] sm:$0xf]
      %v258 = vld [vmem:[%s203 + $0xa0] sm:$0xf]
      %v259 = vld [vmem:[%s203 + $0xa4] sm:$0xf]
      %v260 = vld [vmem:[%s203 + $0xa8] sm:$0xf]
      %v261 = vld [vmem:[%s203 + $0xac] sm:$0xf]
      %v262 = vld [vmem:[%s203 + $0xb0] sm:$0xf]
      %v263 = vld [vmem:[%s203 + $0xb4] sm:$0xf]
      %v264 = vld [vmem:[%s203 + $0xb8] sm:$0xf]
      %v265 = vld [vmem:[%s203 + $0xbc] sm:$0xf]
      %v266 = vld [vmem:[%s203 + $0xc0] sm:$0xf]
      %v267 = vld [vmem:[%s203 + $0xc4] sm:$0xf]
      %v268 = vld [vmem:[%s203 + $0xc8] sm:$0xf]
      %v269 = vld [vmem:[%s203 + $0xcc] sm:$0xf]
      %v270 = vld [vmem:[%s203 + $0xd0] sm:$0xf]
      %v271 = vld [vmem:[%s203 + $0xd4] sm:$0xf]
      %v272 = vld [vmem:[%s203 + $0xd8] sm:$0xf]
      %v273 = vld [vmem:[%s203 + $0xdc] sm:$0xf]
      %v274 = vld [vmem:[%s203 + $0xe0] sm:$0xf]
      %v275 = vld [vmem:[%s203 + $0xe4] sm:$0xf]
      %v276 = vld [vmem:[%s203 + $0xe8] sm:$0xf]
      %v277 = vld [vmem:[%s203 + $0xec] sm:$0xf]
      %v278 = vld [vmem:[%s203 + $0xf0] sm:$0xf]
      %v279 = vld [vmem:[%s203 + $0xf4] sm:$0xf]
      %v280 = vld [vmem:[%s203 + $0xf8] sm:$0xf]
      %v281 = vld [vmem:[%s203 + $0xfc] sm:$0xf]
      %v282 = vld [vmem:[%s203 + $0x100] sm:$0xf]
      %v283 = vld [vmem:[%s203 + $0x104] sm:$0xf]
      %v284 = vld [vmem:[%s203 + $0x108] sm:$0xf]
      %v285 = vld [vmem:[%s203 + $0x10c] sm:$0xf]
      %v286 = vld [vmem:[%s203 + $0x110] sm:$0xf]
      %v287 = vld [vmem:[%s203 + $0x114] sm:$0xf]
      %v288 = vld [vmem:[%s203 + $0x118] sm:$0xf]
      %v289 = vld [vmem:[%s203 + $0x11c] sm:$0xf]
      %v293 = vunpack.c.l.b16 %v215
      %v294 = vunpack.c.h.b16 %v215
      %v295 = vunpack.c.l.b16 %v216
      %v296 = vunpack.c.h.b16 %v216
      %v297 = vunpack.c.l.b16 %v217
      %v298 = vpack.c.b16 %v293, %v293
      %v299 = vpack.c.b16 %v294, %v294
      %v300 = vpack.c.b16 %v295, %v295
      %v301 = vpack.c.b16 %v296, %v296
      %v302 = vpack.c.b16 %v297, %v297
      %v379 = vunpack.c.l.b16 %v218
      %v380 = vunpack.c.l.b16 %v219
      %v381 = vunpack.c.l.b16 %v220
      %v382 = vunpack.c.l.b16 %v221
      %v383 = vunpack.c.l.b16 %v222
      %v384 = vunpack.c.l.b16 %v223
      %v385 = vunpack.c.l.b16 %v224
      %v386 = vunpack.c.l.b16 %v225
      %v387 = vunpack.c.l.b16 %v226
      %v388 = vunpack.c.l.b16 %v227
      %v389 = vunpack.c.l.b16 %v228
      %v390 = vunpack.c.l.b16 %v229
      %v391 = vunpack.c.l.b16 %v230
      %v392 = vunpack.c.l.b16 %v231
      %v393 = vunpack.c.l.b16 %v232
      %v394 = vunpack.c.l.b16 %v233
      %v395 = vunpack.c.l.b16 %v234
      %v396 = vunpack.c.l.b16 %v235
      %v397 = vunpack.c.l.b16 %v236
      %v398 = vunpack.c.l.b16 %v237
      %v399 = vunpack.c.l.b16 %v238
      %v400 = vunpack.c.l.b16 %v239
      %v401 = vunpack.c.l.b16 %v240
      %v402 = vunpack.c.l.b16 %v241
      %v403 = vunpack.c.l.b16 %v242
      %v404 = vunpack.c.l.b16 %v243
      %v405 = vunpack.c.l.b16 %v244
      %v406 = vunpack.c.l.b16 %v245
      %v407 = vunpack.c.l.b16 %v246
      %v408 = vunpack.c.l.b16 %v247
      %v409 = vunpack.c.l.b16 %v248
      %v410 = vunpack.c.l.b16 %v249
      %v411 = vunpack.c.l.b16 %v250
      %v412 = vunpack.c.l.b16 %v251
      %v413 = vunpack.c.l.b16 %v252
      %v414 = vunpack.c.l.b16 %v253
      %v415 = vunpack.c.l.b16 %v254
      %v416 = vunpack.c.l.b16 %v255
      %v417 = vunpack.c.l.b16 %v256
      %v418 = vunpack.c.l.b16 %v257
      %v419 = vunpack.c.l.b16 %v258
      %v420 = vunpack.c.l.b16 %v259
      %v421 = vunpack.c.l.b16 %v260
      %v422 = vunpack.c.l.b16 %v261
      %v423 = vunpack.c.l.b16 %v262
      %v424 = vunpack.c.l.b16 %v263
      %v425 = vunpack.c.l.b16 %v264
      %v426 = vunpack.c.l.b16 %v265
      %v427 = vunpack.c.l.b16 %v266
      %v428 = vunpack.c.l.b16 %v267
      %v429 = vunpack.c.l.b16 %v268
      %v430 = vunpack.c.l.b16 %v269
      %v431 = vunpack.c.l.b16 %v270
      %v432 = vunpack.c.l.b16 %v271
      %v433 = vunpack.c.l.b16 %v272
      %v434 = vunpack.c.l.b16 %v273
      %v435 = vunpack.c.l.b16 %v274
      %v436 = vunpack.c.l.b16 %v275
      %v437 = vunpack.c.l.b16 %v276
      %v438 = vunpack.c.l.b16 %v277
      %v439 = vunpack.c.l.b16 %v278
      %v440 = vunpack.c.l.b16 %v279
      %v441 = vunpack.c.l.b16 %v280
      %v442 = vunpack.c.l.b16 %v281
      %v443 = vunpack.c.l.b16 %v282
      %v444 = vunpack.c.l.b16 %v283
      %v445 = vunpack.c.l.b16 %v284
      %v446 = vunpack.c.l.b16 %v285
      %v447 = vunpack.c.l.b16 %v286
      %v448 = vunpack.c.l.b16 %v287
      %v449 = vunpack.c.l.b16 %v288
      %v450 = vunpack.c.l.b16 %v289
      %v451 = vpack.c.b16 %v380, %v379
      %v452 = vpack.c.b16 %v382, %v381
      %v453 = vpack.c.b16 %v384, %v383
      %v454 = vpack.c.b16 %v386, %v385
      %v455 = vpack.c.b16 %v388, %v387
      %v456 = vpack.c.b16 %v390, %v389
      %v457 = vpack.c.b16 %v392, %v391
      %v458 = vpack.c.b16 %v394, %v393
      %v459 = vpack.c.b16 %v396, %v395
      %v460 = vpack.c.b16 %v398, %v397
      %v461 = vpack.c.b16 %v400, %v399
      %v462 = vpack.c.b16 %v402, %v401
      %v463 = vpack.c.b16 %v404, %v403
      %v464 = vpack.c.b16 %v406, %v405
      %v465 = vpack.c.b16 %v408, %v407
      %v466 = vpack.c.b16 %v410, %v409
      %v467 = vpack.c.b16 %v412, %v411
      %v468 = vpack.c.b16 %v414, %v413
      %v469 = vpack.c.b16 %v416, %v415
      %v470 = vpack.c.b16 %v418, %v417
      %v471 = vpack.c.b16 %v420, %v419
      %v472 = vpack.c.b16 %v422, %v421
      %v473 = vpack.c.b16 %v424, %v423
      %v474 = vpack.c.b16 %v426, %v425
      %v475 = vpack.c.b16 %v428, %v427
      %v476 = vpack.c.b16 %v430, %v429
      %v477 = vpack.c.b16 %v432, %v431
      %v478 = vpack.c.b16 %v434, %v433
      %v479 = vpack.c.b16 %v436, %v435
      %v480 = vpack.c.b16 %v438, %v437
      %v481 = vpack.c.b16 %v440, %v439
      %v482 = vpack.c.b16 %v442, %v441
      %v483 = vpack.c.b16 %v444, %v443
      %v484 = vpack.c.b16 %v446, %v445
      %v485 = vpack.c.b16 %v448, %v447
      %v486 = vpack.c.b16 %v450, %v449
      %vm523 = vcmask 523264
      %v525 = vsel %vm523, %v302, 0
      %527 = vmatpush.bf16.msra.mxu0 %v458
      %528 = vmatpush.bf16.msra.mxu0 %v457
      %529 = vmatpush.bf16.msra.mxu0 %v456
      %530 = vmatpush.bf16.msra.mxu0 %v455
      %531 = vmatpush.bf16.msra.mxu0 %v454
      %532 = vmatpush.bf16.msra.mxu0 %v453
      %533 = vmatpush.bf16.msra.mxu0 %v452
      %534 = vmatpush.bf16.msra.mxu0 %v451
      %535 = vmatmul.bf16.gmra.mxu0 %v298
      %v536 = vpop.f32.mrf.mxu0
      %v537 = vadd.f32 0.0, %v536
      %v538 = vpop.f32.mrf.mxu0
      %539 = vdwg.mxu0
      %540 = vmatpush.bf16.msra.mxu0 %v466
      %541 = vmatpush.bf16.msra.mxu0 %v465
      %542 = vmatpush.bf16.msra.mxu0 %v464
      %543 = vmatpush.bf16.msra.mxu0 %v463
      %544 = vmatpush.bf16.msra.mxu0 %v462
      %545 = vmatpush.bf16.msra.mxu0 %v461
      %546 = vmatpush.bf16.msra.mxu0 %v460
      %547 = vmatpush.bf16.msra.mxu0 %v459
      %548 = vmatmul.bf16.gmra.mxu0 %v299
      %v549 = vpop.f32.mrf.mxu0
      %v550 = vadd.f32 %v537, %v549
      %v551 = vpop.f32.mrf.mxu0
      %552 = vdwg.mxu0
      %553 = vmatpush.bf16.msra.mxu0 %v474
      %554 = vmatpush.bf16.msra.mxu0 %v473
      %555 = vmatpush.bf16.msra.mxu0 %v472
      %556 = vmatpush.bf16.msra.mxu0 %v471
      %557 = vmatpush.bf16.msra.mxu0 %v470
      %558 = vmatpush.bf16.msra.mxu0 %v469
      %559 = vmatpush.bf16.msra.mxu0 %v468
      %560 = vmatpush.bf16.msra.mxu0 %v467
      %561 = vmatmul.bf16.gmra.mxu0 %v300
      %v562 = vpop.f32.mrf.mxu0
      %v563 = vadd.f32 %v550, %v562
      %v564 = vpop.f32.mrf.mxu0
      %565 = vdwg.mxu0
      %566 = vmatpush.bf16.msra.mxu0 %v482
      %567 = vmatpush.bf16.msra.mxu0 %v481
      %568 = vmatpush.bf16.msra.mxu0 %v480
      %569 = vmatpush.bf16.msra.mxu0 %v479
      %570 = vmatpush.bf16.msra.mxu0 %v478
      %571 = vmatpush.bf16.msra.mxu0 %v477
      %572 = vmatpush.bf16.msra.mxu0 %v476
      %573 = vmatpush.bf16.msra.mxu0 %v475
      %574 = vmatmul.bf16.gmra.mxu0 %v301
      %v575 = vpop.f32.mrf.mxu0
      %v576 = vadd.f32 %v563, %v575
      %v577 = vpop.f32.mrf.mxu0
      %578 = vdwg.mxu0
      %579 = vmatpush.bf16.msra.mxu0 0
      %580 = vmatpush.bf16.msra.mxu0 0
      %581 = vmatpush.bf16.msra.mxu0 0
      %582 = vmatpush.bf16.msra.mxu0 0
      %583 = vmatpush.bf16.msra.mxu0 %v486
      %584 = vmatpush.bf16.msra.mxu0 %v485
      %585 = vmatpush.bf16.msra.mxu0 %v484
      %586 = vmatpush.bf16.msra.mxu0 %v483
      %587 = vmatmul.bf16.gmra.mxu0 %v525
      %v588 = vpop.f32.mrf.mxu0
      %v589 = vadd.f32 %v576, %v588
      %v590 = vpop.f32.mrf.mxu0
      %591 = vdwg.mxu0
      %v592 = vadd.f32 %v214, %v589
      %593 = vst [vmem:[#allocation2] sm:$0xff] %v592
      %p594 = scmp.eq.s32.totalorder %s19, 2
      // Predicated region
      $region37: #{gesture3dnet_forward.11} parent=31 // pred_check
        %p595 = pneg %p594
      $region38: #{gesture3dnet_forward.11} parent=31 // pred_check_branch
        %597 = sbr.rel (%p595) target = $region40
      $region39: #{gesture3dnet_forward.11} parent=31 // pred_region
        %v598 = vld [vmem:[#allocation2] sm:$0xff]
        %v599 = vld [vmem:[%s2] sm:$0x1]
        %v601 = vperm.slane %v599, 0
        %v603 = vadd.f32 %v598, %v601
        %v604 = vmax.f32 %v603, 0.0
        %v605 = vpack.c.bf16 %v604, %v604
        %606 = vst [vmem:[%s207] sm:$0xf] %v605
      $region40: #{gesture3dnet_forward.11} parent=31 // pred_fallthru
        _
      %p607 = scmp.lt.s32.totalorder %s18, 3
      %s608 = scalar_select %p607, %s18, 3
      %s609 = smul.addr %s608, 4
      %s610 = scalar_lea.vmem %s3, %s609
      // Predicated region
      $region41: #{gesture3dnet_forward.11} parent=31 // pred_check
        %p611 = pneg %p119
      $region42: #{gesture3dnet_forward.11} parent=31 // pred_check_branch
        %613 = sbr.rel (%p611) target = $region44
      $region43: #{gesture3dnet_forward.11} parent=31 // pred_region
        _
      $region44: #{gesture3dnet_forward.11} parent=31 // pred_fallthru
        _
    $region32: #{gesture3dnet_forward.11} parent=5 // pred_fallthru
      _
    %p614 = scmp.le.s32.totalorder 2, %s9
    // Predicated region
    $region45: #{gesture3dnet_forward.11} parent=5 // pred_check
      %p615 = pneg %p614
    $region46: #{gesture3dnet_forward.11} parent=5 // pred_check_branch
      %617 = sbr.rel (%p615) target = $region48
    $region47: #{gesture3dnet_forward.11} parent=5 // pred_region
      %s618 = ssub.s32 %s9, 2
      // Predicated region
      $region49: #{gesture3dnet_forward.11} parent=47 // pred_check
        %p619 = pneg %p125
      $region50: #{gesture3dnet_forward.11} parent=47 // pred_check_branch
        %621 = sbr.rel (%p619) target = $region52
      $region51: #{gesture3dnet_forward.11} parent=47 // pred_region
        %p622 = scmp.lt.s32.totalorder %s20, 3
        %s623 = scalar_select %p622, %s20, 3
        %s624 = smul.addr %s623, 4
        %s625 = scalar_lea.vmem %s3, %s624
      $region52: #{gesture3dnet_forward.11} parent=47 // pred_fallthru
        _
    $region48: #{gesture3dnet_forward.11} parent=5 // pred_fallthru
      _
  $region6: #{gesture3dnet_forward.11} parent=0 // loop_footer
    %s13 = sadd.s32 1, %s9
  $region7: #{gesture3dnet_forward.11} parent=0 // loop_footer_branch
    %8 = sbr.rel target = $region3
  $region8: #{gesture3dnet_forward.11} parent=0 // loop_exit
    _

// kernel: gesture3dnet_forward.12
$region0: #{gesture3dnet_forward.12}
  #allocation0 [shape = 'u32[]', space=smem, size = 0x4, offset = 0x4, fixed_abs, tag = 'smem constant byte address 0x4 - core index']
  #allocation1 [shape = 'u32[72,128]{1,0:T(1,128)}', space=vmem, size = 0x9000, scoped, tag = 'internal scratch']
  #allocation2 [shape = 'f32[8,128]{1,0:T(8,128)}', space=vmem, size = 0x1000, scoped, tag = 'scratch operand']
  %s0 = inlined_call_operand.vmem [shape: bf16[6,8,1152], index: 0, kind: input, shape index: {}]
  %s1 = inlined_call_operand.vmem [shape: bf16[3,1152,128], index: 1, kind: input, shape index: {}]
  %s2 = inlined_call_operand.vmem [shape: f32[1,128], index: 2, kind: input, shape index: {}]
  %s3 = inlined_call_operand.vmem [shape: bf16[4,8,64], index: 3, kind: input, shape index: {}]
  %s4 = inlined_call_operand.vmem [shape: bf16[64,128], index: 4, kind: input, shape index: {}]
  %s5 = inlined_call_operand.vmem [shape: f32[1,128], index: 5, kind: input, shape index: {}]
  %s6 = inlined_call_operand.vmem [shape: bf16[4,8,128], index: 6, kind: output, shape index: {}]
  %s7 = sld [smem:[#allocation0]]
  $region65: #{gesture3dnet_forward.12} parent=0
    _
  %s9 = ssub.s32 1, %s7
  %s10 = scalar_select 0, %s9, %s7
  loop: start=0, step=1, limit=14
  $region2: #{gesture3dnet_forward.12} parent=0 // loop_pre_header
    _
  $region3: #{gesture3dnet_forward.12} parent=0 // loop_header
    %s12 = sphi 0, %s16
    %p13 = scmp.ge.s32.totalorder %s12, 14
    %s19 = sphi 0, %s31
    %s20 = sphi 0, %s27
    %s21 = sphi 0, %s19
    %s22 = sphi 0, %s20
    %s23 = sphi 0, %s21
    %s24 = sphi 0, %s22
    %s36 = sphi 0, %s38
    %s39 = sphi 0, %s36
    %s40 = sphi 0, %s39
    %s56 = sphi 0, %s40
    %s62 = sphi 0, %s64
    %s65 = sphi 0, %s62
    %s66 = sphi 0, %s65
    %s82 = sphi 0, %s66
    %s86 = sphi 0, %s86
    %s88 = sphi 0, %s86
    %s89 = sphi 0, %s88
    %s103 = sphi 0, %s89
    %s109 = sphi 0, %s111
    %s112 = sphi 0, %s109
    %s113 = sphi 0, %s112
    %s129 = sphi 0, %s113
    %s133 = sphi 0, %s133
    %s135 = sphi 0, %s133
    %s136 = sphi 0, %s135
    %s150 = sphi 0, %s136
    %s154 = sphi 0, %s154
    %s156 = sphi 0, %s154
    %s157 = sphi 0, %s156
    %s171 = sphi 0, %s157
    %s177 = sphi 0, %s179
    %s180 = sphi 0, %s177
    %s181 = sphi 0, %s180
    %s197 = sphi 0, %s181
  $region4: #{gesture3dnet_forward.12} parent=0 // loop_header_branch
    %15 = sbr.rel (%p13) target = $region8
  $region5: #{gesture3dnet_forward.12} parent=0 // loop_body
    %s17 = ssub.s32 %s12, 1
    %s18 = ssub.s32 %s12, 2
    %s25 = sadd.s32 1, %s20
    %p26 = scmp.ge.s32.totalorder %s25, 3
    %s27 = scalar_select %p26, 0, %s25
    %s28 = sadd.s32 1, %s19
    %s29 = scalar_select %p26, %s28, %s19
    %p30 = scmp.ge.s32.totalorder %s29, 4
    %s31 = scalar_select %p30, 0, %s29
    %s32 = sadd.s32 %s19, %s20
    %s33 = sadd.s32 %s31, %s27
    %s34 = ssub.s32 %s32, %s33
    %p35 = scmp.eq.s32.totalorder %s34, 0
    %s37 = sadd.s32 %s36, 1
    %s38 = scalar_select %p35, %s36, %s37
    %p41 = pneg %p35
    %p42 = scmp.eq.s32.totalorder %s12, 11
    %p43 = por %p41, %p42
    %p44 = scmp.ne.s32.totalorder %s36, %s39
    %p45 = scmp.eq.s32.totalorder %s12, 0
    %p46 = por %p44, %p45
    %p47 = scmp.ne.s32.totalorder %s36, %s39
    %p48 = scmp.eq.s32.totalorder %s17, 11
    %p49 = por %p47, %p48
    %p50 = scmp.ne.s32.totalorder %s39, %s40
    %p51 = scmp.eq.s32.totalorder %s17, 0
    %p52 = por %p50, %p51
    %p53 = scmp.ne.s32.totalorder %s39, %s40
    %p54 = scmp.eq.s32.totalorder %s18, 11
    %p55 = por %p53, %p54
    %p57 = scmp.ne.s32.totalorder %s40, %s56
    %p58 = scmp.eq.s32.totalorder %s18, 0
    %p59 = por %p57, %p58
    %s60 = ssub.s32 %s20, %s27
    %p61 = scmp.eq.s32.totalorder %s60, 0
    %s63 = sadd.s32 %s62, 1
    %s64 = scalar_select %p61, %s62, %s63
    %p67 = pneg %p61
    %p68 = scmp.eq.s32.totalorder %s12, 11
    %p69 = por %p67, %p68
    %p70 = scmp.ne.s32.totalorder %s62, %s65
    %p71 = scmp.eq.s32.totalorder %s12, 0
    %p72 = por %p70, %p71
    %p73 = scmp.ne.s32.totalorder %s62, %s65
    %p74 = scmp.eq.s32.totalorder %s17, 11
    %p75 = por %p73, %p74
    %p76 = scmp.ne.s32.totalorder %s65, %s66
    %p77 = scmp.eq.s32.totalorder %s17, 0
    %p78 = por %p76, %p77
    %p79 = scmp.ne.s32.totalorder %s65, %s66
    %p80 = scmp.eq.s32.totalorder %s18, 11
    %p81 = por %p79, %p80
    %p83 = scmp.ne.s32.totalorder %s66, %s82
    %p84 = scmp.eq.s32.totalorder %s18, 0
    %p85 = por %p83, %p84
    %s87 = sadd.s32 %s86, 1
    %p90 = scmp.eq.s32.totalorder %s12, 11
    %p91 = scmp.ne.s32.totalorder %s86, %s88
    %p92 = scmp.eq.s32.totalorder %s12, 0
    %p93 = por %p91, %p92
    %p94 = scmp.ne.s32.totalorder %s86, %s88
    %p95 = scmp.eq.s32.totalorder %s17, 11
    %p96 = por %p94, %p95
    %p97 = scmp.ne.s32.totalorder %s88, %s89
    %p98 = scmp.eq.s32.totalorder %s17, 0
    %p99 = por %p97, %p98
    %p100 = scmp.ne.s32.totalorder %s88, %s89
    %p101 = scmp.eq.s32.totalorder %s18, 11
    %p102 = por %p100, %p101
    %p104 = scmp.ne.s32.totalorder %s89, %s103
    %p105 = scmp.eq.s32.totalorder %s18, 0
    %p106 = por %p104, %p105
    %s107 = ssub.s32 %s19, %s31
    %p108 = scmp.eq.s32.totalorder %s107, 0
    %s110 = sadd.s32 %s109, 1
    %s111 = scalar_select %p108, %s109, %s110
    %p114 = pneg %p108
    %p115 = scmp.eq.s32.totalorder %s12, 11
    %p116 = por %p114, %p115
    %p117 = scmp.ne.s32.totalorder %s109, %s112
    %p118 = scmp.eq.s32.totalorder %s12, 0
    %p119 = por %p117, %p118
    %p120 = scmp.ne.s32.totalorder %s109, %s112
    %p121 = scmp.eq.s32.totalorder %s17, 11
    %p122 = por %p120, %p121
    %p123 = scmp.ne.s32.totalorder %s112, %s113
    %p124 = scmp.eq.s32.totalorder %s17, 0
    %p125 = por %p123, %p124
    %p126 = scmp.ne.s32.totalorder %s112, %s113
    %p127 = scmp.eq.s32.totalorder %s18, 11
    %p128 = por %p126, %p127
    %p130 = scmp.ne.s32.totalorder %s113, %s129
    %p131 = scmp.eq.s32.totalorder %s18, 0
    %p132 = por %p130, %p131
    %s134 = sadd.s32 %s133, 1
    %p137 = scmp.eq.s32.totalorder %s12, 11
    %p138 = scmp.ne.s32.totalorder %s133, %s135
    %p139 = scmp.eq.s32.totalorder %s12, 0
    %p140 = por %p138, %p139
    %p141 = scmp.ne.s32.totalorder %s133, %s135
    %p142 = scmp.eq.s32.totalorder %s17, 11
    %p143 = por %p141, %p142
    %p144 = scmp.ne.s32.totalorder %s135, %s136
    %p145 = scmp.eq.s32.totalorder %s17, 0
    %p146 = por %p144, %p145
    %p147 = scmp.ne.s32.totalorder %s135, %s136
    %p148 = scmp.eq.s32.totalorder %s18, 11
    %p149 = por %p147, %p148
    %p151 = scmp.ne.s32.totalorder %s136, %s150
    %p152 = scmp.eq.s32.totalorder %s18, 0
    %p153 = por %p151, %p152
    %s155 = sadd.s32 %s154, 1
    %p158 = scmp.eq.s32.totalorder %s12, 11
    %p159 = scmp.ne.s32.totalorder %s154, %s156
    %p160 = scmp.eq.s32.totalorder %s12, 0
    %p161 = por %p159, %p160
    %p162 = scmp.ne.s32.totalorder %s154, %s156
    %p163 = scmp.eq.s32.totalorder %s17, 11
    %p164 = por %p162, %p163
    %p165 = scmp.ne.s32.totalorder %s156, %s157
    %p166 = scmp.eq.s32.totalorder %s17, 0
    %p167 = por %p165, %p166
    %p168 = scmp.ne.s32.totalorder %s156, %s157
    %p169 = scmp.eq.s32.totalorder %s18, 11
    %p170 = por %p168, %p169
    %p172 = scmp.ne.s32.totalorder %s157, %s171
    %p173 = scmp.eq.s32.totalorder %s18, 0
    %p174 = por %p172, %p173
    %s175 = ssub.s32 %s19, %s31
    %p176 = scmp.eq.s32.totalorder %s175, 0
    %s178 = sadd.s32 %s177, 1
    %s179 = scalar_select %p176, %s177, %s178
    %p182 = pneg %p176
    %p183 = scmp.eq.s32.totalorder %s12, 11
    %p184 = por %p182, %p183
    %p185 = scmp.ne.s32.totalorder %s177, %s180
    %p186 = scmp.eq.s32.totalorder %s12, 0
    %p187 = por %p185, %p186
    %p188 = scmp.ne.s32.totalorder %s177, %s180
    %p189 = scmp.eq.s32.totalorder %s17, 11
    %p190 = por %p188, %p189
    %p191 = scmp.ne.s32.totalorder %s180, %s181
    %p192 = scmp.eq.s32.totalorder %s17, 0
    %p193 = por %p191, %p192
    %p194 = scmp.ne.s32.totalorder %s180, %s181
    %p195 = scmp.eq.s32.totalorder %s18, 11
    %p196 = por %p194, %p195
    %p198 = scmp.ne.s32.totalorder %s181, %s197
    %p199 = scmp.eq.s32.totalorder %s18, 0
    %p200 = por %p198, %p199
    %p201 = scmp.le.s32.totalorder 1, %s12
    %p202 = scmp.lt.s32.totalorder %s12, 13
    %p203 = pnand %p201, %p202
    %p204 = pneg %p203
    // Predicated region
    $region9: #{gesture3dnet_forward.12} parent=5 // pred_check
      _
    $region10: #{gesture3dnet_forward.12} parent=5 // pred_check_branch
      %206 = sbr.rel (%p203) target = $region12
    $region11: #{gesture3dnet_forward.12} parent=5 // pred_region
      %s207 = ssub.s32 %s12, 1
      // Predicated region
      $region13: #{gesture3dnet_forward.12} parent=11 // pred_check
        %p208 = pneg %p99
      $region14: #{gesture3dnet_forward.12} parent=11 // pred_check_branch
        %210 = sbr.rel (%p208) target = $region16
      $region15: #{gesture3dnet_forward.12} parent=11 // pred_region
        _
      $region16: #{gesture3dnet_forward.12} parent=11 // pred_fallthru
        _
      // Predicated region
      $region17: #{gesture3dnet_forward.12} parent=11 // pred_check
        %p211 = pneg %p146
      $region18: #{gesture3dnet_forward.12} parent=11 // pred_check_branch
        %213 = sbr.rel (%p211) target = $region20
      $region19: #{gesture3dnet_forward.12} parent=11 // pred_region
        _
      $region20: #{gesture3dnet_forward.12} parent=11 // pred_fallthru
        _
      // Predicated region
      $region21: #{gesture3dnet_forward.12} parent=11 // pred_check
        %p214 = pneg %p167
      $region22: #{gesture3dnet_forward.12} parent=11 // pred_check_branch
        %216 = sbr.rel (%p214) target = $region24
      $region23: #{gesture3dnet_forward.12} parent=11 // pred_region
        _
      $region24: #{gesture3dnet_forward.12} parent=11 // pred_fallthru
        _
    $region12: #{gesture3dnet_forward.12} parent=5 // pred_fallthru
      _
    %p217 = scmp.lt.s32.totalorder %s12, 12
    // Predicated region
    $region25: #{gesture3dnet_forward.12} parent=5 // pred_check
      %p218 = pneg %p217
    $region26: #{gesture3dnet_forward.12} parent=5 // pred_check_branch
      %220 = sbr.rel (%p218) target = $region28
    $region27: #{gesture3dnet_forward.12} parent=5 // pred_region
      // Predicated region
      $region29: #{gesture3dnet_forward.12} parent=27 // pred_check
        %p221 = pneg %p46
      $region30: #{gesture3dnet_forward.12} parent=27 // pred_check_branch
        %223 = sbr.rel (%p221) target = $region32
      $region31: #{gesture3dnet_forward.12} parent=27 // pred_region
        %s224 = sadd.s32 %s19, %s20
        %p225 = scmp.lt.s32.totalorder %s224, 5
        %s226 = scalar_select %p225, %s224, 5
        %s227 = smul.addr %s226, 9
        %s228 = smul.addr %s227, 4
        %s229 = scalar_lea.vmem %s0, %s228
        %s230 = sadd.s32 %s19, %s20
      $region32: #{gesture3dnet_forward.12} parent=27 // pred_fallthru
        _
      // Predicated region
      $region33: #{gesture3dnet_forward.12} parent=27 // pred_check
        %p231 = pneg %p72
      $region34: #{gesture3dnet_forward.12} parent=27 // pred_check_branch
        %233 = sbr.rel (%p231) target = $region36
      $region35: #{gesture3dnet_forward.12} parent=27 // pred_region
        %p234 = scmp.lt.s32.totalorder %s20, 2
        %s235 = scalar_select %p234, %s20, 2
        %s236 = smul.addr %s235, 144
        %s237 = smul.addr %s236, 4
        %s238 = scalar_lea.vmem %s1, %s237
      $region36: #{gesture3dnet_forward.12} parent=27 // pred_fallthru
        _
      // Predicated region
      $region37: #{gesture3dnet_forward.12} parent=27 // pred_check
        %p239 = pneg %p119
      $region38: #{gesture3dnet_forward.12} parent=27 // pred_check_branch
        %241 = sbr.rel (%p239) target = $region40
      $region39: #{gesture3dnet_forward.12} parent=27 // pred_region
        %p242 = scmp.lt.s32.totalorder %s19, 3
        %s243 = scalar_select %p242, %s19, 3
        %s244 = smul.addr %s243, 4
        %s245 = scalar_lea.vmem %s3, %s244
      $region40: #{gesture3dnet_forward.12} parent=27 // pred_fallthru
        _
    $region28: #{gesture3dnet_forward.12} parent=5 // pred_fallthru
      _
    %p246 = scmp.le.s32.totalorder 1, %s12
    %p247 = scmp.lt.s32.totalorder %s12, 13
    %p248 = pnand %p246, %p247
    %p249 = pneg %p248
    // Predicated region
    $region41: #{gesture3dnet_forward.12} parent=5 // pred_check
      _
    $region42: #{gesture3dnet_forward.12} parent=5 // pred_check_branch
      %251 = sbr.rel (%p248) target = $region44
    $region43: #{gesture3dnet_forward.12} parent=5 // pred_region
      %s252 = ssub.s32 %s12, 1
      %s253 = sadd.s32 %s21, %s22
      %p254 = scmp.lt.s32.totalorder %s253, 5
      %s255 = scalar_select %p254, %s253, 5
      %s256 = smul.addr %s255, 9
      %s257 = smul.addr %s256, 4
      %s258 = scalar_lea.vmem %s0, %s257
      %p259 = pneg %p52
      %p260 = pneg %p49
      %p261 = scmp.lt.s32.totalorder %s22, 2
      %s262 = scalar_select %p261, %s22, 2
      %s263 = smul.addr %s262, 144
      %s264 = smul.addr %s263, 4
      %s265 = scalar_lea.vmem %s1, %s264
      %p266 = pneg %p78
      %p267 = pneg %p75
      %p268 = pneg %p99
      %p269 = pneg %p96
      %p270 = scmp.lt.s32.totalorder %s21, 3
      %s271 = scalar_select %p270, %s21, 3
      %s272 = smul.addr %s271, 4
      %s273 = scalar_lea.vmem %s3, %s272
      %p274 = pneg %p125
      %p275 = pneg %p122
      %p276 = pneg %p146
      %p277 = pneg %p143
      %p278 = pneg %p167
      %p279 = pneg %p164
      %p280 = pneg %p193
      %p281 = pneg %p190
      %p282 = scmp.lt.s32.totalorder %s21, 3
      %s283 = scalar_select %p282, %s21, 3
      %s284 = smul.addr %s283, 4
      %s285 = scalar_lea.vmem %s6, %s284
      %s286 = sadd.s32 %s21, %s22
      %p287 = scmp.lt.s32.totalorder %s286, 5
      %s288 = scalar_select %p287, %s286, 5
      %s289 = smul.addr %s288, 9
      %s290 = smul.addr %s289, 4
      %s291 = scalar_lea.vmem %s0, %s290
      %s292 = sadd.s32 %s21, %s22
      %p293 = scmp.lt.s32.totalorder %s22, 2
      %s294 = scalar_select %p293, %s22, 2
      %s295 = smul.addr %s294, 144
      %s296 = smul.addr %s295, 4
      %s297 = scalar_lea.vmem %s1, %s296
      %p298 = scmp.lt.s32.totalorder %s21, 3
      %s299 = scalar_select %p298, %s21, 3
      %s300 = smul.addr %s299, 4
      %s301 = scalar_lea.vmem %s3, %s300
      %p302 = scmp.lt.s32.totalorder %s21, 3
      %s303 = scalar_select %p302, %s21, 3
      %s304 = smul.addr %s303, 4
      %s305 = scalar_lea.vmem %s6, %s304
      %p307 = scmp.eq.s32.totalorder %s22, 0
      // Predicated region
      $region45: #{gesture3dnet_forward.12} parent=43 // pred_check
        %p308 = pneg %p307
      $region46: #{gesture3dnet_forward.12} parent=43 // pred_check_branch
        %310 = sbr.rel (%p308) target = $region48
      $region47: #{gesture3dnet_forward.12} parent=43 // pred_region
        %311 = vst [vmem:[#allocation2] sm:$0xff] 0.0
      $region48: #{gesture3dnet_forward.12} parent=43 // pred_fallthru
        _
      %v312 = vld [vmem:[#allocation2] sm:$0xff]
      %v313 = vld [vmem:[%s291] sm:$0xff]
      %v314 = vld [vmem:[%s291 + $0x8] sm:$0xff]
      %v315 = vld [vmem:[%s291 + $0x10] sm:$0xff]
      %v316 = vld [vmem:[%s291 + $0x18] sm:$0xff]
      %v317 = vld [vmem:[%s291 + $0x20] sm:$0xf]
      %v318 = vld [vmem:[%s297] sm:$0xf]
      %v319 = vld [vmem:[%s297 + $0x4] sm:$0xf]
      %v320 = vld [vmem:[%s297 + $0x8] sm:$0xf]
      %v321 = vld [vmem:[%s297 + $0xc] sm:$0xf]
      %v322 = vld [vmem:[%s297 + $0x10] sm:$0xf]
      %v323 = vld [vmem:[%s297 + $0x14] sm:$0xf]
      %v324 = vld [vmem:[%s297 + $0x18] sm:$0xf]
      %v325 = vld [vmem:[%s297 + $0x1c] sm:$0xf]
      %v326 = vld [vmem:[%s297 + $0x20] sm:$0xf]
      %v327 = vld [vmem:[%s297 + $0x24] sm:$0xf]
      %v328 = vld [vmem:[%s297 + $0x28] sm:$0xf]
      %v329 = vld [vmem:[%s297 + $0x2c] sm:$0xf]
      %v330 = vld [vmem:[%s297 + $0x30] sm:$0xf]
      %v331 = vld [vmem:[%s297 + $0x34] sm:$0xf]
      %v332 = vld [vmem:[%s297 + $0x38] sm:$0xf]
      %v333 = vld [vmem:[%s297 + $0x3c] sm:$0xf]
      %v334 = vld [vmem:[%s297 + $0x40] sm:$0xf]
      %v335 = vld [vmem:[%s297 + $0x44] sm:$0xf]
      %v336 = vld [vmem:[%s297 + $0x48] sm:$0xf]
      %v337 = vld [vmem:[%s297 + $0x4c] sm:$0xf]
      %v338 = vld [vmem:[%s297 + $0x50] sm:$0xf]
      %v339 = vld [vmem:[%s297 + $0x54] sm:$0xf]
      %v340 = vld [vmem:[%s297 + $0x58] sm:$0xf]
      %v341 = vld [vmem:[%s297 + $0x5c] sm:$0xf]
      %v342 = vld [vmem:[%s297 + $0x60] sm:$0xf]
      %v343 = vld [vmem:[%s297 + $0x64] sm:$0xf]
      %v344 = vld [vmem:[%s297 + $0x68] sm:$0xf]
      %v345 = vld [vmem:[%s297 + $0x6c] sm:$0xf]
      %v346 = vld [vmem:[%s297 + $0x70] sm:$0xf]
      %v347 = vld [vmem:[%s297 + $0x74] sm:$0xf]
      %v348 = vld [vmem:[%s297 + $0x78] sm:$0xf]
      %v349 = vld [vmem:[%s297 + $0x7c] sm:$0xf]
      %v350 = vld [vmem:[%s297 + $0x80] sm:$0xf]
      %v351 = vld [vmem:[%s297 + $0x84] sm:$0xf]
      %v352 = vld [vmem:[%s297 + $0x88] sm:$0xf]
      %v353 = vld [vmem:[%s297 + $0x8c] sm:$0xf]
      %v354 = vld [vmem:[%s297 + $0x90] sm:$0xf]
      %v355 = vld [vmem:[%s297 + $0x94] sm:$0xf]
      %v356 = vld [vmem:[%s297 + $0x98] sm:$0xf]
      %v357 = vld [vmem:[%s297 + $0x9c] sm:$0xf]
      %v358 = vld [vmem:[%s297 + $0xa0] sm:$0xf]
      %v359 = vld [vmem:[%s297 + $0xa4] sm:$0xf]
      %v360 = vld [vmem:[%s297 + $0xa8] sm:$0xf]
      %v361 = vld [vmem:[%s297 + $0xac] sm:$0xf]
      %v362 = vld [vmem:[%s297 + $0xb0] sm:$0xf]
      %v363 = vld [vmem:[%s297 + $0xb4] sm:$0xf]
      %v364 = vld [vmem:[%s297 + $0xb8] sm:$0xf]
      %v365 = vld [vmem:[%s297 + $0xbc] sm:$0xf]
      %v366 = vld [vmem:[%s297 + $0xc0] sm:$0xf]
      %v367 = vld [vmem:[%s297 + $0xc4] sm:$0xf]
      %v368 = vld [vmem:[%s297 + $0xc8] sm:$0xf]
      %v369 = vld [vmem:[%s297 + $0xcc] sm:$0xf]
      %v370 = vld [vmem:[%s297 + $0xd0] sm:$0xf]
      %v371 = vld [vmem:[%s297 + $0xd4] sm:$0xf]
      %v372 = vld [vmem:[%s297 + $0xd8] sm:$0xf]
      %v373 = vld [vmem:[%s297 + $0xdc] sm:$0xf]
      %v374 = vld [vmem:[%s297 + $0xe0] sm:$0xf]
      %v375 = vld [vmem:[%s297 + $0xe4] sm:$0xf]
      %v376 = vld [vmem:[%s297 + $0xe8] sm:$0xf]
      %v377 = vld [vmem:[%s297 + $0xec] sm:$0xf]
      %v378 = vld [vmem:[%s297 + $0xf0] sm:$0xf]
      %v379 = vld [vmem:[%s297 + $0xf4] sm:$0xf]
      %v380 = vld [vmem:[%s297 + $0xf8] sm:$0xf]
      %v381 = vld [vmem:[%s297 + $0xfc] sm:$0xf]
      %v382 = vld [vmem:[%s297 + $0x100] sm:$0xf]
      %v383 = vld [vmem:[%s297 + $0x104] sm:$0xf]
      %v384 = vld [vmem:[%s297 + $0x108] sm:$0xf]
      %v385 = vld [vmem:[%s297 + $0x10c] sm:$0xf]
      %v386 = vld [vmem:[%s297 + $0x110] sm:$0xf]
      %v387 = vld [vmem:[%s297 + $0x114] sm:$0xf]
      %v388 = vld [vmem:[%s297 + $0x118] sm:$0xf]
      %v389 = vld [vmem:[%s297 + $0x11c] sm:$0xf]
      %v390 = vld [vmem:[%s297 + $0x120] sm:$0xf]
      %v391 = vld [vmem:[%s297 + $0x124] sm:$0xf]
      %v392 = vld [vmem:[%s297 + $0x128] sm:$0xf]
      %v393 = vld [vmem:[%s297 + $0x12c] sm:$0xf]
      %v394 = vld [vmem:[%s297 + $0x130] sm:$0xf]
      %v395 = vld [vmem:[%s297 + $0x134] sm:$0xf]
      %v396 = vld [vmem:[%s297 + $0x138] sm:$0xf]
      %v397 = vld [vmem:[%s297 + $0x13c] sm:$0xf]
      %v398 = vld [vmem:[%s297 + $0x140] sm:$0xf]
      %v399 = vld [vmem:[%s297 + $0x144] sm:$0xf]
      %v400 = vld [vmem:[%s297 + $0x148] sm:$0xf]
      %v401 = vld [vmem:[%s297 + $0x14c] sm:$0xf]
      %v402 = vld [vmem:[%s297 + $0x150] sm:$0xf]
      %v403 = vld [vmem:[%s297 + $0x154] sm:$0xf]
      %v404 = vld [vmem:[%s297 + $0x158] sm:$0xf]
      %v405 = vld [vmem:[%s297 + $0x15c] sm:$0xf]
      %v406 = vld [vmem:[%s297 + $0x160] sm:$0xf]
      %v407 = vld [vmem:[%s297 + $0x164] sm:$0xf]
      %v408 = vld [vmem:[%s297 + $0x168] sm:$0xf]
      %v409 = vld [vmem:[%s297 + $0x16c] sm:$0xf]
      %v410 = vld [vmem:[%s297 + $0x170] sm:$0xf]
      %v411 = vld [vmem:[%s297 + $0x174] sm:$0xf]
      %v412 = vld [vmem:[%s297 + $0x178] sm:$0xf]
      %v413 = vld [vmem:[%s297 + $0x17c] sm:$0xf]
      %v414 = vld [vmem:[%s297 + $0x180] sm:$0xf]
      %v415 = vld [vmem:[%s297 + $0x184] sm:$0xf]
      %v416 = vld [vmem:[%s297 + $0x188] sm:$0xf]
      %v417 = vld [vmem:[%s297 + $0x18c] sm:$0xf]
      %v418 = vld [vmem:[%s297 + $0x190] sm:$0xf]
      %v419 = vld [vmem:[%s297 + $0x194] sm:$0xf]
      %v420 = vld [vmem:[%s297 + $0x198] sm:$0xf]
      %v421 = vld [vmem:[%s297 + $0x19c] sm:$0xf]
      %v422 = vld [vmem:[%s297 + $0x1a0] sm:$0xf]
      %v423 = vld [vmem:[%s297 + $0x1a4] sm:$0xf]
      %v424 = vld [vmem:[%s297 + $0x1a8] sm:$0xf]
      %v425 = vld [vmem:[%s297 + $0x1ac] sm:$0xf]
      %v426 = vld [vmem:[%s297 + $0x1b0] sm:$0xf]
      %v427 = vld [vmem:[%s297 + $0x1b4] sm:$0xf]
      %v428 = vld [vmem:[%s297 + $0x1b8] sm:$0xf]
      %v429 = vld [vmem:[%s297 + $0x1bc] sm:$0xf]
      %v430 = vld [vmem:[%s297 + $0x1c0] sm:$0xf]
      %v431 = vld [vmem:[%s297 + $0x1c4] sm:$0xf]
      %v432 = vld [vmem:[%s297 + $0x1c8] sm:$0xf]
      %v433 = vld [vmem:[%s297 + $0x1cc] sm:$0xf]
      %v434 = vld [vmem:[%s297 + $0x1d0] sm:$0xf]
      %v435 = vld [vmem:[%s297 + $0x1d4] sm:$0xf]
      %v436 = vld [vmem:[%s297 + $0x1d8] sm:$0xf]
      %v437 = vld [vmem:[%s297 + $0x1dc] sm:$0xf]
      %v438 = vld [vmem:[%s297 + $0x1e0] sm:$0xf]
      %v439 = vld [vmem:[%s297 + $0x1e4] sm:$0xf]
      %v440 = vld [vmem:[%s297 + $0x1e8] sm:$0xf]
      %v441 = vld [vmem:[%s297 + $0x1ec] sm:$0xf]
      %v442 = vld [vmem:[%s297 + $0x1f0] sm:$0xf]
      %v443 = vld [vmem:[%s297 + $0x1f4] sm:$0xf]
      %v444 = vld [vmem:[%s297 + $0x1f8] sm:$0xf]
      %v445 = vld [vmem:[%s297 + $0x1fc] sm:$0xf]
      %v446 = vld [vmem:[%s297 + $0x200] sm:$0xf]
      %v447 = vld [vmem:[%s297 + $0x204] sm:$0xf]
      %v448 = vld [vmem:[%s297 + $0x208] sm:$0xf]
      %v449 = vld [vmem:[%s297 + $0x20c] sm:$0xf]
      %v450 = vld [vmem:[%s297 + $0x210] sm:$0xf]
      %v451 = vld [vmem:[%s297 + $0x214] sm:$0xf]
      %v452 = vld [vmem:[%s297 + $0x218] sm:$0xf]
      %v453 = vld [vmem:[%s297 + $0x21c] sm:$0xf]
      %v454 = vld [vmem:[%s297 + $0x220] sm:$0xf]
      %v455 = vld [vmem:[%s297 + $0x224] sm:$0xf]
      %v456 = vld [vmem:[%s297 + $0x228] sm:$0xf]
      %v457 = vld [vmem:[%s297 + $0x22c] sm:$0xf]
      %v458 = vld [vmem:[%s297 + $0x230] sm:$0xf]
      %v459 = vld [vmem:[%s297 + $0x234] sm:$0xf]
      %v460 = vld [vmem:[%s297 + $0x238] sm:$0xf]
      %v461 = vld [vmem:[%s297 + $0x23c] sm:$0xf]
      %v467 = vunpack.c.l.b16 %v313
      %v468 = vunpack.c.h.b16 %v313
      %v469 = vunpack.c.l.b16 %v314
      %v470 = vunpack.c.h.b16 %v314
      %v471 = vunpack.c.l.b16 %v315
      %v472 = vunpack.c.h.b16 %v315
      %v473 = vunpack.c.l.b16 %v316
      %v474 = vunpack.c.h.b16 %v316
      %v475 = vunpack.c.l.b16 %v317
      %v476 = vpack.c.b16 %v467, %v467
      %v477 = vpack.c.b16 %v468, %v468
      %v478 = vpack.c.b16 %v469, %v469
      %v479 = vpack.c.b16 %v470, %v470
      %v480 = vpack.c.b16 %v471, %v471
      %v481 = vpack.c.b16 %v472, %v472
      %v482 = vpack.c.b16 %v473, %v473
      %v483 = vpack.c.b16 %v474, %v474
      %v484 = vpack.c.b16 %v475, %v475
      %v638 = vunpack.c.l.b16 %v318
      %v639 = vunpack.c.l.b16 %v319
      %v640 = vunpack.c.l.b16 %v320
      %v641 = vunpack.c.l.b16 %v321
      %v642 = vunpack.c.l.b16 %v322
      %v643 = vunpack.c.l.b16 %v323
      %v644 = vunpack.c.l.b16 %v324
      %v645 = vunpack.c.l.b16 %v325
      %v646 = vunpack.c.l.b16 %v326
      %v647 = vunpack.c.l.b16 %v327
      %v648 = vunpack.c.l.b16 %v328
      %v649 = vunpack.c.l.b16 %v329
      %v650 = vunpack.c.l.b16 %v330
      %v651 = vunpack.c.l.b16 %v331
      %v652 = vunpack.c.l.b16 %v332
      %v653 = vunpack.c.l.b16 %v333
      %v654 = vunpack.c.l.b16 %v334
      %v655 = vunpack.c.l.b16 %v335
      %v656 = vunpack.c.l.b16 %v336
      %v657 = vunpack.c.l.b16 %v337
      %v658 = vunpack.c.l.b16 %v338
      %v659 = vunpack.c.l.b16 %v339
      %v660 = vunpack.c.l.b16 %v340
      %v661 = vunpack.c.l.b16 %v341
      %v662 = vunpack.c.l.b16 %v342
      %v663 = vunpack.c.l.b16 %v343
      %v664 = vunpack.c.l.b16 %v344
      %v665 = vunpack.c.l.b16 %v345
      %v666 = vunpack.c.l.b16 %v346
      %v667 = vunpack.c.l.b16 %v347
      %v668 = vunpack.c.l.b16 %v348
      %v669 = vunpack.c.l.b16 %v349
      %v670 = vunpack.c.l.b16 %v350
      %v671 = vunpack.c.l.b16 %v351
      %v672 = vunpack.c.l.b16 %v352
      %v673 = vunpack.c.l.b16 %v353
      %v674 = vunpack.c.l.b16 %v354
      %v675 = vunpack.c.l.b16 %v355
      %v676 = vunpack.c.l.b16 %v356
      %v677 = vunpack.c.l.b16 %v357
      %v678 = vunpack.c.l.b16 %v358
      %v679 = vunpack.c.l.b16 %v359
      %v680 = vunpack.c.l.b16 %v360
      %v681 = vunpack.c.l.b16 %v361
      %v682 = vunpack.c.l.b16 %v362
      %v683 = vunpack.c.l.b16 %v363
      %v684 = vunpack.c.l.b16 %v364
      %v685 = vunpack.c.l.b16 %v365
      %v686 = vunpack.c.l.b16 %v366
      %v687 = vunpack.c.l.b16 %v367
      %v688 = vunpack.c.l.b16 %v368
      %v689 = vunpack.c.l.b16 %v369
      %v690 = vunpack.c.l.b16 %v370
      %v691 = vunpack.c.l.b16 %v371
      %v692 = vunpack.c.l.b16 %v372
      %v693 = vunpack.c.l.b16 %v373
      %v694 = vunpack.c.l.b16 %v374
      %v695 = vunpack.c.l.b16 %v375
      %v696 = vunpack.c.l.b16 %v376
      %v697 = vunpack.c.l.b16 %v377
      %v698 = vunpack.c.l.b16 %v378
      %v699 = vunpack.c.l.b16 %v379
      %v700 = vunpack.c.l.b16 %v380
      %v701 = vunpack.c.l.b16 %v381
      %v702 = vunpack.c.l.b16 %v382
      %v703 = vunpack.c.l.b16 %v383
      %v704 = vunpack.c.l.b16 %v384
      %v705 = vunpack.c.l.b16 %v385
      %v706 = vunpack.c.l.b16 %v386
      %v707 = vunpack.c.l.b16 %v387
      %v708 = vunpack.c.l.b16 %v388
      %v709 = vunpack.c.l.b16 %v389
      %v710 = vunpack.c.l.b16 %v390
      %v711 = vunpack.c.l.b16 %v391
      %v712 = vunpack.c.l.b16 %v392
      %v713 = vunpack.c.l.b16 %v393
      %v714 = vunpack.c.l.b16 %v394
      %v715 = vunpack.c.l.b16 %v395
      %v716 = vunpack.c.l.b16 %v396
      %v717 = vunpack.c.l.b16 %v397
      %v718 = vunpack.c.l.b16 %v398
      %v719 = vunpack.c.l.b16 %v399
      %v720 = vunpack.c.l.b16 %v400
      %v721 = vunpack.c.l.b16 %v401
      %v722 = vunpack.c.l.b16 %v402
      %v723 = vunpack.c.l.b16 %v403
      %v724 = vunpack.c.l.b16 %v404
      %v725 = vunpack.c.l.b16 %v405
      %v726 = vunpack.c.l.b16 %v406
      %v727 = vunpack.c.l.b16 %v407
      %v728 = vunpack.c.l.b16 %v408
      %v729 = vunpack.c.l.b16 %v409
      %v730 = vunpack.c.l.b16 %v410
      %v731 = vunpack.c.l.b16 %v411
      %v732 = vunpack.c.l.b16 %v412
      %v733 = vunpack.c.l.b16 %v413
      %v734 = vunpack.c.l.b16 %v414
      %v735 = vunpack.c.l.b16 %v415
      %v736 = vunpack.c.l.b16 %v416
      %v737 = vunpack.c.l.b16 %v417
      %v738 = vunpack.c.l.b16 %v418
      %v739 = vunpack.c.l.b16 %v419
      %v740 = vunpack.c.l.b16 %v420
      %v741 = vunpack.c.l.b16 %v421
      %v742 = vunpack.c.l.b16 %v422
      %v743 = vunpack.c.l.b16 %v423
      %v744 = vunpack.c.l.b16 %v424
      %v745 = vunpack.c.l.b16 %v425
      %v746 = vunpack.c.l.b16 %v426
      %v747 = vunpack.c.l.b16 %v427
      %v748 = vunpack.c.l.b16 %v428
      %v749 = vunpack.c.l.b16 %v429
      %v750 = vunpack.c.l.b16 %v430
      %v751 = vunpack.c.l.b16 %v431
      %v752 = vunpack.c.l.b16 %v432
      %v753 = vunpack.c.l.b16 %v433
      %v754 = vunpack.c.l.b16 %v434
      %v755 = vunpack.c.l.b16 %v435
      %v756 = vunpack.c.l.b16 %v436
      %v757 = vunpack.c.l.b16 %v437
      %v758 = vunpack.c.l.b16 %v438
      %v759 = vunpack.c.l.b16 %v439
      %v760 = vunpack.c.l.b16 %v440
      %v761 = vunpack.c.l.b16 %v441
      %v762 = vunpack.c.l.b16 %v442
      %v763 = vunpack.c.l.b16 %v443
      %v764 = vunpack.c.l.b16 %v444
      %v765 = vunpack.c.l.b16 %v445
      %v766 = vunpack.c.l.b16 %v446
      %v767 = vunpack.c.l.b16 %v447
      %v768 = vunpack.c.l.b16 %v448
      %v769 = vunpack.c.l.b16 %v449
      %v770 = vunpack.c.l.b16 %v450
      %v771 = vunpack.c.l.b16 %v451
      %v772 = vunpack.c.l.b16 %v452
      %v773 = vunpack.c.l.b16 %v453
      %v774 = vunpack.c.l.b16 %v454
      %v775 = vunpack.c.l.b16 %v455
      %v776 = vunpack.c.l.b16 %v456
      %v777 = vunpack.c.l.b16 %v457
      %v778 = vunpack.c.l.b16 %v458
      %v779 = vunpack.c.l.b16 %v459
      %v780 = vunpack.c.l.b16 %v460
      %v781 = vunpack.c.l.b16 %v461
      %v782 = vpack.c.b16 %v639, %v638
      %v783 = vpack.c.b16 %v641, %v640
      %v784 = vpack.c.b16 %v643, %v642
      %v785 = vpack.c.b16 %v645, %v644
      %v786 = vpack.c.b16 %v647, %v646
      %v787 = vpack.c.b16 %v649, %v648
      %v788 = vpack.c.b16 %v651, %v650
      %v789 = vpack.c.b16 %v653, %v652
      %v790 = vpack.c.b16 %v655, %v654
      %v791 = vpack.c.b16 %v657, %v656
      %v792 = vpack.c.b16 %v659, %v658
      %v793 = vpack.c.b16 %v661, %v660
      %v794 = vpack.c.b16 %v663, %v662
      %v795 = vpack.c.b16 %v665, %v664
      %v796 = vpack.c.b16 %v667, %v666
      %v797 = vpack.c.b16 %v669, %v668
      %v798 = vpack.c.b16 %v671, %v670
      %v799 = vpack.c.b16 %v673, %v672
      %v800 = vpack.c.b16 %v675, %v674
      %v801 = vpack.c.b16 %v677, %v676
      %v802 = vpack.c.b16 %v679, %v678
      %v803 = vpack.c.b16 %v681, %v680
      %v804 = vpack.c.b16 %v683, %v682
      %v805 = vpack.c.b16 %v685, %v684
      %v806 = vpack.c.b16 %v687, %v686
      %v807 = vpack.c.b16 %v689, %v688
      %v808 = vpack.c.b16 %v691, %v690
      %v809 = vpack.c.b16 %v693, %v692
      %v810 = vpack.c.b16 %v695, %v694
      %v811 = vpack.c.b16 %v697, %v696
      %v812 = vpack.c.b16 %v699, %v698
      %v813 = vpack.c.b16 %v701, %v700
      %v814 = vpack.c.b16 %v703, %v702
      %v815 = vpack.c.b16 %v705, %v704
      %v816 = vpack.c.b16 %v707, %v706
      %v817 = vpack.c.b16 %v709, %v708
      %v818 = vpack.c.b16 %v711, %v710
      %v819 = vpack.c.b16 %v713, %v712
      %v820 = vpack.c.b16 %v715, %v714
      %v821 = vpack.c.b16 %v717, %v716
      %v822 = vpack.c.b16 %v719, %v718
      %v823 = vpack.c.b16 %v721, %v720
      %v824 = vpack.c.b16 %v723, %v722
      %v825 = vpack.c.b16 %v725, %v724
      %v826 = vpack.c.b16 %v727, %v726
      %v827 = vpack.c.b16 %v729, %v728
      %v828 = vpack.c.b16 %v731, %v730
      %v829 = vpack.c.b16 %v733, %v732
      %v830 = vpack.c.b16 %v735, %v734
      %v831 = vpack.c.b16 %v737, %v736
      %v832 = vpack.c.b16 %v739, %v738
      %v833 = vpack.c.b16 %v741, %v740
      %v834 = vpack.c.b16 %v743, %v742
      %v835 = vpack.c.b16 %v745, %v744
      %v836 = vpack.c.b16 %v747, %v746
      %v837 = vpack.c.b16 %v749, %v748
      %v838 = vpack.c.b16 %v751, %v750
      %v839 = vpack.c.b16 %v753, %v752
      %v840 = vpack.c.b16 %v755, %v754
      %v841 = vpack.c.b16 %v757, %v756
      %v842 = vpack.c.b16 %v759, %v758
      %v843 = vpack.c.b16 %v761, %v760
      %v844 = vpack.c.b16 %v763, %v762
      %v845 = vpack.c.b16 %v765, %v764
      %v846 = vpack.c.b16 %v767, %v766
      %v847 = vpack.c.b16 %v769, %v768
      %v848 = vpack.c.b16 %v771, %v770
      %v849 = vpack.c.b16 %v773, %v772
      %v850 = vpack.c.b16 %v775, %v774
      %v851 = vpack.c.b16 %v777, %v776
      %v852 = vpack.c.b16 %v779, %v778
      %v853 = vpack.c.b16 %v781, %v780
      %926 = vmatpush.bf16.msra.mxu0 %v789
      %927 = vmatpush.bf16.msra.mxu0 %v788
      %928 = vmatpush.bf16.msra.mxu0 %v787
      %929 = vmatpush.bf16.msra.mxu0 %v786
      %930 = vmatpush.bf16.msra.mxu0 %v785
      %931 = vmatpush.bf16.msra.mxu0 %v784
      %932 = vmatpush.bf16.msra.mxu0 %v783
      %933 = vmatpush.bf16.msra.mxu0 %v782
      %934 = vmatmul.bf16.gmra.mxu0 %v476
      %v935 = vpop.f32.mrf.mxu0
      %v936 = vadd.f32 0.0, %v935
      %v937 = vpop.f32.mrf.mxu0
      %938 = vdwg.mxu0
      %939 = vmatpush.bf16.msra.mxu0 %v797
      %940 = vmatpush.bf16.msra.mxu0 %v796
      %941 = vmatpush.bf16.msra.mxu0 %v795
      %942 = vmatpush.bf16.msra.mxu0 %v794
      %943 = vmatpush.bf16.msra.mxu0 %v793
      %944 = vmatpush.bf16.msra.mxu0 %v792
      %945 = vmatpush.bf16.msra.mxu0 %v791
      %946 = vmatpush.bf16.msra.mxu0 %v790
      %947 = vmatmul.bf16.gmra.mxu0 %v477
      %v948 = vpop.f32.mrf.mxu0
      %v949 = vadd.f32 %v936, %v948
      %v950 = vpop.f32.mrf.mxu0
      %951 = vdwg.mxu0
      %952 = vmatpush.bf16.msra.mxu0 %v805
      %953 = vmatpush.bf16.msra.mxu0 %v804
      %954 = vmatpush.bf16.msra.mxu0 %v803
      %955 = vmatpush.bf16.msra.mxu0 %v802
      %956 = vmatpush.bf16.msra.mxu0 %v801
      %957 = vmatpush.bf16.msra.mxu0 %v800
      %958 = vmatpush.bf16.msra.mxu0 %v799
      %959 = vmatpush.bf16.msra.mxu0 %v798
      %960 = vmatmul.bf16.gmra.mxu0 %v478
      %v961 = vpop.f32.mrf.mxu0
      %v962 = vadd.f32 %v949, %v961
      %v963 = vpop.f32.mrf.mxu0
      %964 = vdwg.mxu0
      %965 = vmatpush.bf16.msra.mxu0 %v813
      %966 = vmatpush.bf16.msra.mxu0 %v812
      %967 = vmatpush.bf16.msra.mxu0 %v811
      %968 = vmatpush.bf16.msra.mxu0 %v810
      %969 = vmatpush.bf16.msra.mxu0 %v809
      %970 = vmatpush.bf16.msra.mxu0 %v808
      %971 = vmatpush.bf16.msra.mxu0 %v807
      %972 = vmatpush.bf16.msra.mxu0 %v806
      %973 = vmatmul.bf16.gmra.mxu0 %v479
      %v974 = vpop.f32.mrf.mxu0
      %v975 = vadd.f32 %v962, %v974
      %v976 = vpop.f32.mrf.mxu0
      %977 = vdwg.mxu0
      %978 = vmatpush.bf16.msra.mxu0 %v821
      %979 = vmatpush.bf16.msra.mxu0 %v820
      %980 = vmatpush.bf16.msra.mxu0 %v819
      %981 = vmatpush.bf16.msra.mxu0 %v818
      %982 = vmatpush.bf16.msra.mxu0 %v817
      %983 = vmatpush.bf16.msra.mxu0 %v816
      %984 = vmatpush.bf16.msra.mxu0 %v815
      %985 = vmatpush.bf16.msra.mxu0 %v814
      %986 = vmatmul.bf16.gmra.mxu0 %v480
      %v987 = vpop.f32.mrf.mxu0
      %v988 = vadd.f32 %v975, %v987
      %v989 = vpop.f32.mrf.mxu0
      %990 = vdwg.mxu0
      %991 = vmatpush.bf16.msra.mxu0 %v829
      %992 = vmatpush.bf16.msra.mxu0 %v828
      %993 = vmatpush.bf16.msra.mxu0 %v827
      %994 = vmatpush.bf16.msra.mxu0 %v826
      %995 = vmatpush.bf16.msra.mxu0 %v825
      %996 = vmatpush.bf16.msra.mxu0 %v824
      %997 = vmatpush.bf16.msra.mxu0 %v823
      %998 = vmatpush.bf16.msra.mxu0 %v822
      %999 = vmatmul.bf16.gmra.mxu0 %v481
      %v1000 = vpop.f32.mrf.mxu0
      %v1001 = vadd.f32 %v988, %v1000
      %v1002 = vpop.f32.mrf.mxu0
      %1003 = vdwg.mxu0
      %1004 = vmatpush.bf16.msra.mxu0 %v837
      %1005 = vmatpush.bf16.msra.mxu0 %v836
      %1006 = vmatpush.bf16.msra.mxu0 %v835
      %1007 = vmatpush.bf16.msra.mxu0 %v834
      %1008 = vmatpush.bf16.msra.mxu0 %v833
      %1009 = vmatpush.bf16.msra.mxu0 %v832
      %1010 = vmatpush.bf16.msra.mxu0 %v831
      %1011 = vmatpush.bf16.msra.mxu0 %v830
      %1012 = vmatmul.bf16.gmra.mxu0 %v482
      %v1013 = vpop.f32.mrf.mxu0
      %v1014 = vadd.f32 %v1001, %v1013
      %v1015 = vpop.f32.mrf.mxu0
      %1016 = vdwg.mxu0
      %1017 = vmatpush.bf16.msra.mxu0 %v845
      %1018 = vmatpush.bf16.msra.mxu0 %v844
      %1019 = vmatpush.bf16.msra.mxu0 %v843
      %1020 = vmatpush.bf16.msra.mxu0 %v842
      %1021 = vmatpush.bf16.msra.mxu0 %v841
      %1022 = vmatpush.bf16.msra.mxu0 %v840
      %1023 = vmatpush.bf16.msra.mxu0 %v839
      %1024 = vmatpush.bf16.msra.mxu0 %v838
      %1025 = vmatmul.bf16.gmra.mxu0 %v483
      %v1026 = vpop.f32.mrf.mxu0
      %v1027 = vadd.f32 %v1014, %v1026
      %v1028 = vpop.f32.mrf.mxu0
      %1029 = vdwg.mxu0
      %1030 = vmatpush.bf16.msra.mxu0 %v853
      %1031 = vmatpush.bf16.msra.mxu0 %v852
      %1032 = vmatpush.bf16.msra.mxu0 %v851
      %1033 = vmatpush.bf16.msra.mxu0 %v850
      %1034 = vmatpush.bf16.msra.mxu0 %v849
      %1035 = vmatpush.bf16.msra.mxu0 %v848
      %1036 = vmatpush.bf16.msra.mxu0 %v847
      %1037 = vmatpush.bf16.msra.mxu0 %v846
      %1038 = vmatmul.bf16.gmra.mxu0 %v484
      %v1039 = vpop.f32.mrf.mxu0
      %v1040 = vadd.f32 %v1027, %v1039
      %v1041 = vpop.f32.mrf.mxu0
      %1042 = vdwg.mxu0
      %v1043 = vadd.f32 %v312, %v1040
      %1044 = vst [vmem:[#allocation2] sm:$0xff] %v1043
      %p1045 = scmp.eq.s32.totalorder %s22, 2
      // Predicated region
      $region49: #{gesture3dnet_forward.12} parent=43 // pred_check
        %p1046 = pneg %p1045
      $region50: #{gesture3dnet_forward.12} parent=43 // pred_check_branch
        %1048 = sbr.rel (%p1046) target = $region52
      $region51: #{gesture3dnet_forward.12} parent=43 // pred_region
        %v1049 = vld [vmem:[%s301] sm:$0xf]
        %v1050 = vld [vmem:[%s4] sm:$0xf]
        %v1051 = vld [vmem:[%s4 + $0x4] sm:$0xf]
        %v1052 = vld [vmem:[%s4 + $0x8] sm:$0xf]
        %v1053 = vld [vmem:[%s4 + $0xc] sm:$0xf]
        %v1054 = vld [vmem:[%s4 + $0x10] sm:$0xf]
        %v1055 = vld [vmem:[%s4 + $0x14] sm:$0xf]
        %v1056 = vld [vmem:[%s4 + $0x18] sm:$0xf]
        %v1057 = vld [vmem:[%s4 + $0x1c] sm:$0xf]
        %v1066 = vunpack.c.l.b16 %v1050
        %v1067 = vunpack.c.l.b16 %v1051
        %v1068 = vunpack.c.l.b16 %v1052
        %v1069 = vunpack.c.l.b16 %v1053
        %v1070 = vunpack.c.l.b16 %v1054
        %v1071 = vunpack.c.l.b16 %v1055
        %v1072 = vunpack.c.l.b16 %v1056
        %v1073 = vunpack.c.l.b16 %v1057
        %v1074 = vpack.c.b16 %v1067, %v1066
        %v1075 = vpack.c.b16 %v1069, %v1068
        %v1076 = vpack.c.b16 %v1071, %v1070
        %v1077 = vpack.c.b16 %v1073, %v1072
        %vm1082 = vcmask 523264
        %v1084 = vsel %vm1082, %v1049, 0
        %1086 = vmatpush.bf16.msra.mxu0 0
        %1087 = vmatpush.bf16.msra.mxu0 0
        %1088 = vmatpush.bf16.msra.mxu0 0
        %1089 = vmatpush.bf16.msra.mxu0 0
        %1090 = vmatpush.bf16.msra.mxu0 %v1077
        %1091 = vmatpush.bf16.msra.mxu0 %v1076
        %1092 = vmatpush.bf16.msra.mxu0 %v1075
        %1093 = vmatpush.bf16.msra.mxu0 %v1074
        %1094 = vmatmul.bf16.gmra.mxu0 %v1084
        %v1095 = vpop.f32.mrf.mxu0
        %v1096 = vadd.f32 0.0, %v1095
        %v1097 = vpop.f32.mrf.mxu0
        %1098 = vdwg.mxu0
        %v1099 = vld [vmem:[#allocation2] sm:$0xff]
        %v1100 = vld [vmem:[%s2] sm:$0x1]
        %v1102 = vperm.slane %v1100, 0
        %v1104 = vadd.f32 %v1099, %v1102
        %v1105 = vadd.f32 %v1104, %v1096
        %v1106 = vld [vmem:[%s5] sm:$0x1]
        %v1108 = vperm.slane %v1106, 0
        %v1110 = vadd.f32 %v1105, %v1108
        %v1111 = vmax.f32 %v1110, 0.0
        %v1112 = vpack.c.bf16 %v1111, %v1111
        %1113 = vst [vmem:[%s305] sm:$0xf] %v1112
      $region52: #{gesture3dnet_forward.12} parent=43 // pred_fallthru
        _
      %p1114 = scmp.lt.s32.totalorder %s21, 3
      %s1115 = scalar_select %p1114, %s21, 3
      %s1116 = smul.addr %s1115, 4
      %s1117 = scalar_lea.vmem %s6, %s1116
      // Predicated region
      $region53: #{gesture3dnet_forward.12} parent=43 // pred_check
        %p1118 = pneg %p190
      $region54: #{gesture3dnet_forward.12} parent=43 // pred_check_branch
        %1120 = sbr.rel (%p1118) target = $region56
      $region55: #{gesture3dnet_forward.12} parent=43 // pred_region
        _
      $region56: #{gesture3dnet_forward.12} parent=43 // pred_fallthru
        _
    $region44: #{gesture3dnet_forward.12} parent=5 // pred_fallthru
      _
    %p1121 = scmp.le.s32.totalorder 2, %s12
    // Predicated region
    $region57: #{gesture3dnet_forward.12} parent=5 // pred_check
      %p1122 = pneg %p1121
    $region58: #{gesture3dnet_forward.12} parent=5 // pred_check_branch
      %1124 = sbr.rel (%p1122) target = $region60
    $region59: #{gesture3dnet_forward.12} parent=5 // pred_region
      %s1125 = ssub.s32 %s12, 2
      // Predicated region
      $region61: #{gesture3dnet_forward.12} parent=59 // pred_check
        %p1126 = pneg %p196
      $region62: #{gesture3dnet_forward.12} parent=59 // pred_check_branch
        %1128 = sbr.rel (%p1126) target = $region64
      $region63: #{gesture3dnet_forward.12} parent=59 // pred_region
        %p1129 = scmp.lt.s32.totalorder %s23, 3
        %s1130 = scalar_select %p1129, %s23, 3
        %s1131 = smul.addr %s1130, 4
        %s1132 = scalar_lea.vmem %s6, %s1131
      $region64: #{gesture3dnet_forward.12} parent=59 // pred_fallthru
        _
    $region60: #{gesture3dnet_forward.12} parent=5 // pred_fallthru
      _
  $region6: #{gesture3dnet_forward.12} parent=0 // loop_footer
    %s16 = sadd.s32 1, %s12
  $region7: #{gesture3dnet_forward.12} parent=0 // loop_footer_branch
    %11 = sbr.rel target = $region3
  $region8: #{gesture3dnet_forward.12} parent=0 // loop_exit
    _

// kernel: gesture3dnet_forward.13
$region0: #{gesture3dnet_forward.13}
  #allocation0 [shape = 'u32[]', space=smem, size = 0x4, offset = 0x4, fixed_abs, tag = 'smem constant byte address 0x4 - core index']
  #allocation1 [shape = 'u32[72,128]{1,0:T(1,128)}', space=vmem, size = 0x9000, scoped, tag = 'internal scratch']
  #allocation2 [shape = 'f32[2,256]{1,0:T(2,128)}', space=vmem, size = 0x800, scoped, tag = 'scratch operand']
  %s0 = inlined_call_operand.vmem [shape: bf16[6,2,1152], index: 0, kind: input, shape index: {}]
  %s1 = inlined_call_operand.vmem [shape: bf16[3,1152,256], index: 1, kind: input, shape index: {}]
  %s2 = inlined_call_operand.vmem [shape: f32[1,256], index: 2, kind: input, shape index: {}]
  %s3 = inlined_call_operand.vmem [shape: bf16[4,2,256], index: 3, kind: output, shape index: {}]
  %s4 = sld [smem:[#allocation0]]
  $region53: #{gesture3dnet_forward.13} parent=0
    _
  %s6 = ssub.s32 1, %s4
  %s7 = scalar_select 0, %s6, %s4
  loop: start=0, step=1, limit=14
  $region2: #{gesture3dnet_forward.13} parent=0 // loop_pre_header
    _
  $region3: #{gesture3dnet_forward.13} parent=0 // loop_header
    %s9 = sphi 0, %s13
    %p10 = scmp.ge.s32.totalorder %s9, 14
    %s16 = sphi 0, %s28
    %s17 = sphi 0, %s24
    %s18 = sphi 0, %s16
    %s19 = sphi 0, %s17
    %s20 = sphi 0, %s18
    %s21 = sphi 0, %s19
    %s33 = sphi 0, %s35
    %s36 = sphi 0, %s33
    %s37 = sphi 0, %s36
    %s53 = sphi 0, %s37
    %s59 = sphi 0, %s61
    %s62 = sphi 0, %s59
    %s63 = sphi 0, %s62
    %s79 = sphi 0, %s63
    %s83 = sphi 0, %s83
    %s85 = sphi 0, %s83
    %s86 = sphi 0, %s85
    %s100 = sphi 0, %s86
    %s106 = sphi 0, %s108
    %s109 = sphi 0, %s106
    %s110 = sphi 0, %s109
    %s126 = sphi 0, %s110
  $region4: #{gesture3dnet_forward.13} parent=0 // loop_header_branch
    %12 = sbr.rel (%p10) target = $region8
  $region5: #{gesture3dnet_forward.13} parent=0 // loop_body
    %s14 = ssub.s32 %s9, 1
    %s15 = ssub.s32 %s9, 2
    %s22 = sadd.s32 1, %s17
    %p23 = scmp.ge.s32.totalorder %s22, 3
    %s24 = scalar_select %p23, 0, %s22
    %s25 = sadd.s32 1, %s16
    %s26 = scalar_select %p23, %s25, %s16
    %p27 = scmp.ge.s32.totalorder %s26, 4
    %s28 = scalar_select %p27, 0, %s26
    %s29 = sadd.s32 %s16, %s17
    %s30 = sadd.s32 %s28, %s24
    %s31 = ssub.s32 %s29, %s30
    %p32 = scmp.eq.s32.totalorder %s31, 0
    %s34 = sadd.s32 %s33, 1
    %s35 = scalar_select %p32, %s33, %s34
    %p38 = pneg %p32
    %p39 = scmp.eq.s32.totalorder %s9, 11
    %p40 = por %p38, %p39
    %p41 = scmp.ne.s32.totalorder %s33, %s36
    %p42 = scmp.eq.s32.totalorder %s9, 0
    %p43 = por %p41, %p42
    %p44 = scmp.ne.s32.totalorder %s33, %s36
    %p45 = scmp.eq.s32.totalorder %s14, 11
    %p46 = por %p44, %p45
    %p47 = scmp.ne.s32.totalorder %s36, %s37
    %p48 = scmp.eq.s32.totalorder %s14, 0
    %p49 = por %p47, %p48
    %p50 = scmp.ne.s32.totalorder %s36, %s37
    %p51 = scmp.eq.s32.totalorder %s15, 11
    %p52 = por %p50, %p51
    %p54 = scmp.ne.s32.totalorder %s37, %s53
    %p55 = scmp.eq.s32.totalorder %s15, 0
    %p56 = por %p54, %p55
    %s57 = ssub.s32 %s17, %s24
    %p58 = scmp.eq.s32.totalorder %s57, 0
    %s60 = sadd.s32 %s59, 1
    %s61 = scalar_select %p58, %s59, %s60
    %p64 = pneg %p58
    %p65 = scmp.eq.s32.totalorder %s9, 11
    %p66 = por %p64, %p65
    %p67 = scmp.ne.s32.totalorder %s59, %s62
    %p68 = scmp.eq.s32.totalorder %s9, 0
    %p69 = por %p67, %p68
    %p70 = scmp.ne.s32.totalorder %s59, %s62
    %p71 = scmp.eq.s32.totalorder %s14, 11
    %p72 = por %p70, %p71
    %p73 = scmp.ne.s32.totalorder %s62, %s63
    %p74 = scmp.eq.s32.totalorder %s14, 0
    %p75 = por %p73, %p74
    %p76 = scmp.ne.s32.totalorder %s62, %s63
    %p77 = scmp.eq.s32.totalorder %s15, 11
    %p78 = por %p76, %p77
    %p80 = scmp.ne.s32.totalorder %s63, %s79
    %p81 = scmp.eq.s32.totalorder %s15, 0
    %p82 = por %p80, %p81
    %s84 = sadd.s32 %s83, 1
    %p87 = scmp.eq.s32.totalorder %s9, 11
    %p88 = scmp.ne.s32.totalorder %s83, %s85
    %p89 = scmp.eq.s32.totalorder %s9, 0
    %p90 = por %p88, %p89
    %p91 = scmp.ne.s32.totalorder %s83, %s85
    %p92 = scmp.eq.s32.totalorder %s14, 11
    %p93 = por %p91, %p92
    %p94 = scmp.ne.s32.totalorder %s85, %s86
    %p95 = scmp.eq.s32.totalorder %s14, 0
    %p96 = por %p94, %p95
    %p97 = scmp.ne.s32.totalorder %s85, %s86
    %p98 = scmp.eq.s32.totalorder %s15, 11
    %p99 = por %p97, %p98
    %p101 = scmp.ne.s32.totalorder %s86, %s100
    %p102 = scmp.eq.s32.totalorder %s15, 0
    %p103 = por %p101, %p102
    %s104 = ssub.s32 %s16, %s28
    %p105 = scmp.eq.s32.totalorder %s104, 0
    %s107 = sadd.s32 %s106, 1
    %s108 = scalar_select %p105, %s106, %s107
    %p111 = pneg %p105
    %p112 = scmp.eq.s32.totalorder %s9, 11
    %p113 = por %p111, %p112
    %p114 = scmp.ne.s32.totalorder %s106, %s109
    %p115 = scmp.eq.s32.totalorder %s9, 0
    %p116 = por %p114, %p115
    %p117 = scmp.ne.s32.totalorder %s106, %s109
    %p118 = scmp.eq.s32.totalorder %s14, 11
    %p119 = por %p117, %p118
    %p120 = scmp.ne.s32.totalorder %s109, %s110
    %p121 = scmp.eq.s32.totalorder %s14, 0
    %p122 = por %p120, %p121
    %p123 = scmp.ne.s32.totalorder %s109, %s110
    %p124 = scmp.eq.s32.totalorder %s15, 11
    %p125 = por %p123, %p124
    %p127 = scmp.ne.s32.totalorder %s110, %s126
    %p128 = scmp.eq.s32.totalorder %s15, 0
    %p129 = por %p127, %p128
    %p130 = scmp.le.s32.totalorder 1, %s9
    %p131 = scmp.lt.s32.totalorder %s9, 13
    %p132 = pnand %p130, %p131
    %p133 = pneg %p132
    // Predicated region
    $region9: #{gesture3dnet_forward.13} parent=5 // pred_check
      _
    $region10: #{gesture3dnet_forward.13} parent=5 // pred_check_branch
      %135 = sbr.rel (%p132) target = $region12
    $region11: #{gesture3dnet_forward.13} parent=5 // pred_region
      %s136 = ssub.s32 %s9, 1
      // Predicated region
      $region13: #{gesture3dnet_forward.13} parent=11 // pred_check
        %p137 = pneg %p96
      $region14: #{gesture3dnet_forward.13} parent=11 // pred_check_branch
        %139 = sbr.rel (%p137) target = $region16
      $region15: #{gesture3dnet_forward.13} parent=11 // pred_region
        _
      $region16: #{gesture3dnet_forward.13} parent=11 // pred_fallthru
        _
    $region12: #{gesture3dnet_forward.13} parent=5 // pred_fallthru
      _
    %p140 = scmp.lt.s32.totalorder %s9, 12
    // Predicated region
    $region17: #{gesture3dnet_forward.13} parent=5 // pred_check
      %p141 = pneg %p140
    $region18: #{gesture3dnet_forward.13} parent=5 // pred_check_branch
      %143 = sbr.rel (%p141) target = $region20
    $region19: #{gesture3dnet_forward.13} parent=5 // pred_region
      // Predicated region
      $region21: #{gesture3dnet_forward.13} parent=19 // pred_check
        %p144 = pneg %p43
      $region22: #{gesture3dnet_forward.13} parent=19 // pred_check_branch
        %146 = sbr.rel (%p144) target = $region24
      $region23: #{gesture3dnet_forward.13} parent=19 // pred_region
        %s147 = sadd.s32 %s16, %s17
        %p148 = scmp.lt.s32.totalorder %s147, 5
        %s149 = scalar_select %p148, %s147, 5
        %s150 = smul.addr %s149, 9
        %s151 = scalar_lea.vmem %s0, %s150
        %s152 = sadd.s32 %s16, %s17
      $region24: #{gesture3dnet_forward.13} parent=19 // pred_fallthru
        _
      // Predicated region
      $region25: #{gesture3dnet_forward.13} parent=19 // pred_check
        %p153 = pneg %p69
      $region26: #{gesture3dnet_forward.13} parent=19 // pred_check_branch
        %155 = sbr.rel (%p153) target = $region28
      $region27: #{gesture3dnet_forward.13} parent=19 // pred_region
        %p156 = scmp.lt.s32.totalorder %s17, 2
        %s157 = scalar_select %p156, %s17, 2
        %s158 = smul.addr %s157, 288
        %s159 = smul.addr %s158, 4
        %s160 = scalar_lea.vmem %s1, %s159
      $region28: #{gesture3dnet_forward.13} parent=19 // pred_fallthru
        _
    $region20: #{gesture3dnet_forward.13} parent=5 // pred_fallthru
      _
    %p161 = scmp.le.s32.totalorder 1, %s9
    %p162 = scmp.lt.s32.totalorder %s9, 13
    %p163 = pnand %p161, %p162
    %p164 = pneg %p163
    // Predicated region
    $region29: #{gesture3dnet_forward.13} parent=5 // pred_check
      _
    $region30: #{gesture3dnet_forward.13} parent=5 // pred_check_branch
      %166 = sbr.rel (%p163) target = $region32
    $region31: #{gesture3dnet_forward.13} parent=5 // pred_region
      %s167 = ssub.s32 %s9, 1
      %s168 = sadd.s32 %s18, %s19
      %p169 = scmp.lt.s32.totalorder %s168, 5
      %s170 = scalar_select %p169, %s168, 5
      %s171 = smul.addr %s170, 9
      %s172 = scalar_lea.vmem %s0, %s171
      %p173 = pneg %p49
      %p174 = pneg %p46
      %p175 = scmp.lt.s32.totalorder %s19, 2
      %s176 = scalar_select %p175, %s19, 2
      %s177 = smul.addr %s176, 288
      %s178 = smul.addr %s177, 4
      %s179 = scalar_lea.vmem %s1, %s178
      %p180 = pneg %p75
      %p181 = pneg %p72
      %p182 = pneg %p96
      %p183 = pneg %p93
      %p184 = pneg %p122
      %p185 = pneg %p119
      %p186 = scmp.lt.s32.totalorder %s18, 3
      %s187 = scalar_select %p186, %s18, 3
      %s188 = smul.addr %s187, 2
      %s189 = scalar_lea.vmem %s3, %s188
      %s190 = sadd.s32 %s18, %s19
      %p191 = scmp.lt.s32.totalorder %s190, 5
      %s192 = scalar_select %p191, %s190, 5
      %s193 = smul.addr %s192, 9
      %s194 = scalar_lea.vmem %s0, %s193
      %s195 = sadd.s32 %s18, %s19
      %p196 = scmp.lt.s32.totalorder %s19, 2
      %s197 = scalar_select %p196, %s19, 2
      %s198 = smul.addr %s197, 288
      %s199 = smul.addr %s198, 4
      %s200 = scalar_lea.vmem %s1, %s199
      %p201 = scmp.lt.s32.totalorder %s18, 3
      %s202 = scalar_select %p201, %s18, 3
      %s203 = smul.addr %s202, 2
      %s204 = scalar_lea.vmem %s3, %s203
      %p205 = scmp.eq.s32.totalorder %s19, 0
      // Predicated region
      $region33: #{gesture3dnet_forward.13} parent=31 // pred_check
        %p206 = pneg %p205
      $region34: #{gesture3dnet_forward.13} parent=31 // pred_check_branch
        %208 = sbr.rel (%p206) target = $region36
      $region35: #{gesture3dnet_forward.13} parent=31 // pred_region
        %209 = vst [vmem:[#allocation2] sm:$0xf] 0.0
      $region36: #{gesture3dnet_forward.13} parent=31 // pred_fallthru
        _
      %v210 = vld [vmem:[#allocation2] sm:$0xf]
      %v211 = vld [vmem:[%s194] sm:$0xff]
      %v212 = vld [vmem:[%s194 + $0x8] sm:$0x1]
      %v213 = vld [vmem:[%s200] sm:$0xff]
      %v214 = vld [vmem:[%s200 + $0x8] sm:$0xff]
      %v215 = vld [vmem:[%s200 + $0x10] sm:$0xff]
      %v216 = vld [vmem:[%s200 + $0x18] sm:$0xff]
      %v217 = vld [vmem:[%s200 + $0x20] sm:$0xff]
      %v218 = vld [vmem:[%s200 + $0x28] sm:$0xff]
      %v219 = vld [vmem:[%s200 + $0x30] sm:$0xff]
      %v220 = vld [vmem:[%s200 + $0x38] sm:$0xff]
      %v221 = vld [vmem:[%s200 + $0x40] sm:$0xff]
      %v222 = vld [vmem:[%s200 + $0x48] sm:$0xff]
      %v223 = vld [vmem:[%s200 + $0x50] sm:$0xff]
      %v224 = vld [vmem:[%s200 + $0x58] sm:$0xff]
      %v225 = vld [vmem:[%s200 + $0x60] sm:$0xff]
      %v226 = vld [vmem:[%s200 + $0x68] sm:$0xff]
      %v227 = vld [vmem:[%s200 + $0x70] sm:$0xff]
      %v228 = vld [vmem:[%s200 + $0x78] sm:$0xff]
      %v229 = vld [vmem:[%s200 + $0x80] sm:$0xff]
      %v230 = vld [vmem:[%s200 + $0x88] sm:$0xff]
      %v231 = vld [vmem:[%s200 + $0x90] sm:$0xff]
      %v232 = vld [vmem:[%s200 + $0x98] sm:$0xff]
      %v233 = vld [vmem:[%s200 + $0xa0] sm:$0xff]
      %v234 = vld [vmem:[%s200 + $0xa8] sm:$0xff]
      %v235 = vld [vmem:[%s200 + $0xb0] sm:$0xff]
      %v236 = vld [vmem:[%s200 + $0xb8] sm:$0xff]
      %v237 = vld [vmem:[%s200 + $0xc0] sm:$0xff]
      %v238 = vld [vmem:[%s200 + $0xc8] sm:$0xff]
      %v239 = vld [vmem:[%s200 + $0xd0] sm:$0xff]
      %v240 = vld [vmem:[%s200 + $0xd8] sm:$0xff]
      %v241 = vld [vmem:[%s200 + $0xe0] sm:$0xff]
      %v242 = vld [vmem:[%s200 + $0xe8] sm:$0xff]
      %v243 = vld [vmem:[%s200 + $0xf0] sm:$0xff]
      %v244 = vld [vmem:[%s200 + $0xf8] sm:$0xff]
      %v245 = vld [vmem:[%s200 + $0x100] sm:$0xff]
      %v246 = vld [vmem:[%s200 + $0x108] sm:$0xff]
      %v247 = vld [vmem:[%s200 + $0x110] sm:$0xff]
      %v248 = vld [vmem:[%s200 + $0x118] sm:$0xff]
      %v249 = vld [vmem:[%s200 + $0x120] sm:$0xff]
      %v250 = vld [vmem:[%s200 + $0x128] sm:$0xff]
      %v251 = vld [vmem:[%s200 + $0x130] sm:$0xff]
      %v252 = vld [vmem:[%s200 + $0x138] sm:$0xff]
      %v253 = vld [vmem:[%s200 + $0x140] sm:$0xff]
      %v254 = vld [vmem:[%s200 + $0x148] sm:$0xff]
      %v255 = vld [vmem:[%s200 + $0x150] sm:$0xff]
      %v256 = vld [vmem:[%s200 + $0x158] sm:$0xff]
      %v257 = vld [vmem:[%s200 + $0x160] sm:$0xff]
      %v258 = vld [vmem:[%s200 + $0x168] sm:$0xff]
      %v259 = vld [vmem:[%s200 + $0x170] sm:$0xff]
      %v260 = vld [vmem:[%s200 + $0x178] sm:$0xff]
      %v261 = vld [vmem:[%s200 + $0x180] sm:$0xff]
      %v262 = vld [vmem:[%s200 + $0x188] sm:$0xff]
      %v263 = vld [vmem:[%s200 + $0x190] sm:$0xff]
      %v264 = vld [vmem:[%s200 + $0x198] sm:$0xff]
      %v265 = vld [vmem:[%s200 + $0x1a0] sm:$0xff]
      %v266 = vld [vmem:[%s200 + $0x1a8] sm:$0xff]
      %v267 = vld [vmem:[%s200 + $0x1b0] sm:$0xff]
      %v268 = vld [vmem:[%s200 + $0x1b8] sm:$0xff]
      %v269 = vld [vmem:[%s200 + $0x1c0] sm:$0xff]
      %v270 = vld [vmem:[%s200 + $0x1c8] sm:$0xff]
      %v271 = vld [vmem:[%s200 + $0x1d0] sm:$0xff]
      %v272 = vld [vmem:[%s200 + $0x1d8] sm:$0xff]
      %v273 = vld [vmem:[%s200 + $0x1e0] sm:$0xff]
      %v274 = vld [vmem:[%s200 + $0x1e8] sm:$0xff]
      %v275 = vld [vmem:[%s200 + $0x1f0] sm:$0xff]
      %v276 = vld [vmem:[%s200 + $0x1f8] sm:$0xff]
      %v277 = vld [vmem:[%s200 + $0x200] sm:$0xff]
      %v278 = vld [vmem:[%s200 + $0x208] sm:$0xff]
      %v279 = vld [vmem:[%s200 + $0x210] sm:$0xff]
      %v280 = vld [vmem:[%s200 + $0x218] sm:$0xff]
      %v281 = vld [vmem:[%s200 + $0x220] sm:$0xff]
      %v282 = vld [vmem:[%s200 + $0x228] sm:$0xff]
      %v283 = vld [vmem:[%s200 + $0x230] sm:$0xff]
      %v284 = vld [vmem:[%s200 + $0x238] sm:$0xff]
      %v285 = vld [vmem:[%s200 + $0x240] sm:$0xff]
      %v286 = vld [vmem:[%s200 + $0x248] sm:$0xff]
      %v287 = vld [vmem:[%s200 + $0x250] sm:$0xff]
      %v288 = vld [vmem:[%s200 + $0x258] sm:$0xff]
      %v289 = vld [vmem:[%s200 + $0x260] sm:$0xff]
      %v290 = vld [vmem:[%s200 + $0x268] sm:$0xff]
      %v291 = vld [vmem:[%s200 + $0x270] sm:$0xff]
      %v292 = vld [vmem:[%s200 + $0x278] sm:$0xff]
      %v293 = vld [vmem:[%s200 + $0x280] sm:$0xff]
      %v294 = vld [vmem:[%s200 + $0x288] sm:$0xff]
      %v295 = vld [vmem:[%s200 + $0x290] sm:$0xff]
      %v296 = vld [vmem:[%s200 + $0x298] sm:$0xff]
      %v297 = vld [vmem:[%s200 + $0x2a0] sm:$0xff]
      %v298 = vld [vmem:[%s200 + $0x2a8] sm:$0xff]
      %v299 = vld [vmem:[%s200 + $0x2b0] sm:$0xff]
      %v300 = vld [vmem:[%s200 + $0x2b8] sm:$0xff]
      %v301 = vld [vmem:[%s200 + $0x2c0] sm:$0xff]
      %v302 = vld [vmem:[%s200 + $0x2c8] sm:$0xff]
      %v303 = vld [vmem:[%s200 + $0x2d0] sm:$0xff]
      %v304 = vld [vmem:[%s200 + $0x2d8] sm:$0xff]
      %v305 = vld [vmem:[%s200 + $0x2e0] sm:$0xff]
      %v306 = vld [vmem:[%s200 + $0x2e8] sm:$0xff]
      %v307 = vld [vmem:[%s200 + $0x2f0] sm:$0xff]
      %v308 = vld [vmem:[%s200 + $0x2f8] sm:$0xff]
      %v309 = vld [vmem:[%s200 + $0x300] sm:$0xff]
      %v310 = vld [vmem:[%s200 + $0x308] sm:$0xff]
      %v311 = vld [vmem:[%s200 + $0x310] sm:$0xff]
      %v312 = vld [vmem:[%s200 + $0x318] sm:$0xff]
      %v313 = vld [vmem:[%s200 + $0x320] sm:$0xff]
      %v314 = vld [vmem:[%s200 + $0x328] sm:$0xff]
      %v315 = vld [vmem:[%s200 + $0x330] sm:$0xff]
      %v316 = vld [vmem:[%s200 + $0x338] sm:$0xff]
      %v317 = vld [vmem:[%s200 + $0x340] sm:$0xff]
      %v318 = vld [vmem:[%s200 + $0x348] sm:$0xff]
      %v319 = vld [vmem:[%s200 + $0x350] sm:$0xff]
      %v320 = vld [vmem:[%s200 + $0x358] sm:$0xff]
      %v321 = vld [vmem:[%s200 + $0x360] sm:$0xff]
      %v322 = vld [vmem:[%s200 + $0x368] sm:$0xff]
      %v323 = vld [vmem:[%s200 + $0x370] sm:$0xff]
      %v324 = vld [vmem:[%s200 + $0x378] sm:$0xff]
      %v325 = vld [vmem:[%s200 + $0x380] sm:$0xff]
      %v326 = vld [vmem:[%s200 + $0x388] sm:$0xff]
      %v327 = vld [vmem:[%s200 + $0x390] sm:$0xff]
      %v328 = vld [vmem:[%s200 + $0x398] sm:$0xff]
      %v329 = vld [vmem:[%s200 + $0x3a0] sm:$0xff]
      %v330 = vld [vmem:[%s200 + $0x3a8] sm:$0xff]
      %v331 = vld [vmem:[%s200 + $0x3b0] sm:$0xff]
      %v332 = vld [vmem:[%s200 + $0x3b8] sm:$0xff]
      %v333 = vld [vmem:[%s200 + $0x3c0] sm:$0xff]
      %v334 = vld [vmem:[%s200 + $0x3c8] sm:$0xff]
      %v335 = vld [vmem:[%s200 + $0x3d0] sm:$0xff]
      %v336 = vld [vmem:[%s200 + $0x3d8] sm:$0xff]
      %v337 = vld [vmem:[%s200 + $0x3e0] sm:$0xff]
      %v338 = vld [vmem:[%s200 + $0x3e8] sm:$0xff]
      %v339 = vld [vmem:[%s200 + $0x3f0] sm:$0xff]
      %v340 = vld [vmem:[%s200 + $0x3f8] sm:$0xff]
      %v341 = vld [vmem:[%s200 + $0x400] sm:$0xff]
      %v342 = vld [vmem:[%s200 + $0x408] sm:$0xff]
      %v343 = vld [vmem:[%s200 + $0x410] sm:$0xff]
      %v344 = vld [vmem:[%s200 + $0x418] sm:$0xff]
      %v345 = vld [vmem:[%s200 + $0x420] sm:$0xff]
      %v346 = vld [vmem:[%s200 + $0x428] sm:$0xff]
      %v347 = vld [vmem:[%s200 + $0x430] sm:$0xff]
      %v348 = vld [vmem:[%s200 + $0x438] sm:$0xff]
      %v349 = vld [vmem:[%s200 + $0x440] sm:$0xff]
      %v350 = vld [vmem:[%s200 + $0x448] sm:$0xff]
      %v351 = vld [vmem:[%s200 + $0x450] sm:$0xff]
      %v352 = vld [vmem:[%s200 + $0x458] sm:$0xff]
      %v353 = vld [vmem:[%s200 + $0x460] sm:$0xff]
      %v354 = vld [vmem:[%s200 + $0x468] sm:$0xff]
      %v355 = vld [vmem:[%s200 + $0x470] sm:$0xff]
      %v356 = vld [vmem:[%s200 + $0x478] sm:$0xff]
      %358 = vst [vmem:[#allocation1] ss:$9 sm:$0xff] %v211
      %v359 = vld [vmem:[#allocation1] sm:$0xff]
      %v360 = vld [vmem:[#allocation1 + $0x9] sm:$0xff]
      %v361 = vld [vmem:[#allocation1 + $0x12] sm:$0xff]
      %v362 = vld [vmem:[#allocation1 + $0x1b] sm:$0xff]
      %v363 = vld [vmem:[#allocation1 + $0x24] sm:$0xff]
      %v364 = vld [vmem:[#allocation1 + $0x2d] sm:$0xff]
      %v365 = vld [vmem:[#allocation1 + $0x36] sm:$0xff]
      %v366 = vld [vmem:[#allocation1 + $0x3f] sm:$0xff]
      %368 = vst [vmem:[#allocation1] ss:$9 sm:$0xff] %v212
      %v369 = vld [vmem:[#allocation1] sm:$0xff]
      %v523 = vunpack.c.l.b16 %v213
      %v524 = vunpack.c.h.b16 %v213
      %v525 = vunpack.c.l.b16 %v214
      %v526 = vunpack.c.h.b16 %v214
      %v527 = vunpack.c.l.b16 %v215
      %v528 = vunpack.c.h.b16 %v215
      %v529 = vunpack.c.l.b16 %v216
      %v530 = vunpack.c.h.b16 %v216
      %v531 = vunpack.c.l.b16 %v217
      %v532 = vunpack.c.h.b16 %v217
      %v533 = vunpack.c.l.b16 %v218
      %v534 = vunpack.c.h.b16 %v218
      %v535 = vunpack.c.l.b16 %v219
      %v536 = vunpack.c.h.b16 %v219
      %v537 = vunpack.c.l.b16 %v220
      %v538 = vunpack.c.h.b16 %v220
      %v539 = vunpack.c.l.b16 %v221
      %v540 = vunpack.c.h.b16 %v221
      %v541 = vunpack.c.l.b16 %v222
      %v542 = vunpack.c.h.b16 %v222
      %v543 = vunpack.c.l.b16 %v223
      %v544 = vunpack.c.h.b16 %v223
      %v545 = vunpack.c.l.b16 %v224
      %v546 = vunpack.c.h.b16 %v224
      %v547 = vunpack.c.l.b16 %v225
      %v548 = vunpack.c.h.b16 %v225
      %v549 = vunpack.c.l.b16 %v226
      %v550 = vunpack.c.h.b16 %v226
      %v551 = vunpack.c.l.b16 %v227
      %v552 = vunpack.c.h.b16 %v227
      %v553 = vunpack.c.l.b16 %v228
      %v554 = vunpack.c.h.b16 %v228
      %v555 = vunpack.c.l.b16 %v229
      %v556 = vunpack.c.h.b16 %v229
      %v557 = vunpack.c.l.b16 %v230
      %v558 = vunpack.c.h.b16 %v230
      %v559 = vunpack.c.l.b16 %v231
      %v560 = vunpack.c.h.b16 %v231
      %v561 = vunpack.c.l.b16 %v232
      %v562 = vunpack.c.h.b16 %v232
      %v563 = vunpack.c.l.b16 %v233
      %v564 = vunpack.c.h.b16 %v233
      %v565 = vunpack.c.l.b16 %v234
      %v566 = vunpack.c.h.b16 %v234
      %v567 = vunpack.c.l.b16 %v235
      %v568 = vunpack.c.h.b16 %v235
      %v569 = vunpack.c.l.b16 %v236
      %v570 = vunpack.c.h.b16 %v236
      %v571 = vunpack.c.l.b16 %v237
      %v572 = vunpack.c.h.b16 %v237
      %v573 = vunpack.c.l.b16 %v238
      %v574 = vunpack.c.h.b16 %v238
      %v575 = vunpack.c.l.b16 %v239
      %v576 = vunpack.c.h.b16 %v239
      %v577 = vunpack.c.l.b16 %v240
      %v578 = vunpack.c.h.b16 %v240
      %v579 = vunpack.c.l.b16 %v241
      %v580 = vunpack.c.h.b16 %v241
      %v581 = vunpack.c.l.b16 %v242
      %v582 = vunpack.c.h.b16 %v242
      %v583 = vunpack.c.l.b16 %v243
      %v584 = vunpack.c.h.b16 %v243
      %v585 = vunpack.c.l.b16 %v244
      %v586 = vunpack.c.h.b16 %v244
      %v587 = vunpack.c.l.b16 %v245
      %v588 = vunpack.c.h.b16 %v245
      %v589 = vunpack.c.l.b16 %v246
      %v590 = vunpack.c.h.b16 %v246
      %v591 = vunpack.c.l.b16 %v247
      %v592 = vunpack.c.h.b16 %v247
      %v593 = vunpack.c.l.b16 %v248
      %v594 = vunpack.c.h.b16 %v248
      %v595 = vunpack.c.l.b16 %v249
      %v596 = vunpack.c.h.b16 %v249
      %v597 = vunpack.c.l.b16 %v250
      %v598 = vunpack.c.h.b16 %v250
      %v599 = vunpack.c.l.b16 %v251
      %v600 = vunpack.c.h.b16 %v251
      %v601 = vunpack.c.l.b16 %v252
      %v602 = vunpack.c.h.b16 %v252
      %v603 = vunpack.c.l.b16 %v253
      %v604 = vunpack.c.h.b16 %v253
      %v605 = vunpack.c.l.b16 %v254
      %v606 = vunpack.c.h.b16 %v254
      %v607 = vunpack.c.l.b16 %v255
      %v608 = vunpack.c.h.b16 %v255
      %v609 = vunpack.c.l.b16 %v256
      %v610 = vunpack.c.h.b16 %v256
      %v611 = vunpack.c.l.b16 %v257
      %v612 = vunpack.c.h.b16 %v257
      %v613 = vunpack.c.l.b16 %v258
      %v614 = vunpack.c.h.b16 %v258
      %v615 = vunpack.c.l.b16 %v259
      %v616 = vunpack.c.h.b16 %v259
      %v617 = vunpack.c.l.b16 %v260
      %v618 = vunpack.c.h.b16 %v260
      %v619 = vunpack.c.l.b16 %v261
      %v620 = vunpack.c.h.b16 %v261
      %v621 = vunpack.c.l.b16 %v262
      %v622 = vunpack.c.h.b16 %v262
      %v623 = vunpack.c.l.b16 %v263
      %v624 = vunpack.c.h.b16 %v263
      %v625 = vunpack.c.l.b16 %v264
      %v626 = vunpack.c.h.b16 %v264
      %v627 = vunpack.c.l.b16 %v265
      %v628 = vunpack.c.h.b16 %v265
      %v629 = vunpack.c.l.b16 %v266
      %v630 = vunpack.c.h.b16 %v266
      %v631 = vunpack.c.l.b16 %v267
      %v632 = vunpack.c.h.b16 %v267
      %v633 = vunpack.c.l.b16 %v268
      %v634 = vunpack.c.h.b16 %v268
      %v635 = vunpack.c.l.b16 %v269
      %v636 = vunpack.c.h.b16 %v269
      %v637 = vunpack.c.l.b16 %v270
      %v638 = vunpack.c.h.b16 %v270
      %v639 = vunpack.c.l.b16 %v271
      %v640 = vunpack.c.h.b16 %v271
      %v641 = vunpack.c.l.b16 %v272
      %v642 = vunpack.c.h.b16 %v272
      %v643 = vunpack.c.l.b16 %v273
      %v644 = vunpack.c.h.b16 %v273
      %v645 = vunpack.c.l.b16 %v274
      %v646 = vunpack.c.h.b16 %v274
      %v647 = vunpack.c.l.b16 %v275
      %v648 = vunpack.c.h.b16 %v275
      %v649 = vunpack.c.l.b16 %v276
      %v650 = vunpack.c.h.b16 %v276
      %v651 = vunpack.c.l.b16 %v277
      %v652 = vunpack.c.h.b16 %v277
      %v653 = vunpack.c.l.b16 %v278
      %v654 = vunpack.c.h.b16 %v278
      %v655 = vunpack.c.l.b16 %v279
      %v656 = vunpack.c.h.b16 %v279
      %v657 = vunpack.c.l.b16 %v280
      %v658 = vunpack.c.h.b16 %v280
      %v659 = vunpack.c.l.b16 %v281
      %v660 = vunpack.c.h.b16 %v281
      %v661 = vunpack.c.l.b16 %v282
      %v662 = vunpack.c.h.b16 %v282
      %v663 = vunpack.c.l.b16 %v283
      %v664 = vunpack.c.h.b16 %v283
      %v665 = vunpack.c.l.b16 %v284
      %v666 = vunpack.c.h.b16 %v284
      %v667 = vunpack.c.l.b16 %v285
      %v668 = vunpack.c.h.b16 %v285
      %v669 = vunpack.c.l.b16 %v286
      %v670 = vunpack.c.h.b16 %v286
      %v671 = vunpack.c.l.b16 %v287
      %v672 = vunpack.c.h.b16 %v287
      %v673 = vunpack.c.l.b16 %v288
      %v674 = vunpack.c.h.b16 %v288
      %v675 = vunpack.c.l.b16 %v289
      %v676 = vunpack.c.h.b16 %v289
      %v677 = vunpack.c.l.b16 %v290
      %v678 = vunpack.c.h.b16 %v290
      %v679 = vunpack.c.l.b16 %v291
      %v680 = vunpack.c.h.b16 %v291
      %v681 = vunpack.c.l.b16 %v292
      %v682 = vunpack.c.h.b16 %v292
      %v683 = vunpack.c.l.b16 %v293
      %v684 = vunpack.c.h.b16 %v293
      %v685 = vunpack.c.l.b16 %v294
      %v686 = vunpack.c.h.b16 %v294
      %v687 = vunpack.c.l.b16 %v295
      %v688 = vunpack.c.h.b16 %v295
      %v689 = vunpack.c.l.b16 %v296
      %v690 = vunpack.c.h.b16 %v296
      %v691 = vunpack.c.l.b16 %v297
      %v692 = vunpack.c.h.b16 %v297
      %v693 = vunpack.c.l.b16 %v298
      %v694 = vunpack.c.h.b16 %v298
      %v695 = vunpack.c.l.b16 %v299
      %v696 = vunpack.c.h.b16 %v299
      %v697 = vunpack.c.l.b16 %v300
      %v698 = vunpack.c.h.b16 %v300
      %v699 = vunpack.c.l.b16 %v301
      %v700 = vunpack.c.h.b16 %v301
      %v701 = vunpack.c.l.b16 %v302
      %v702 = vunpack.c.h.b16 %v302
      %v703 = vunpack.c.l.b16 %v303
      %v704 = vunpack.c.h.b16 %v303
      %v705 = vunpack.c.l.b16 %v304
      %v706 = vunpack.c.h.b16 %v304
      %v707 = vunpack.c.l.b16 %v305
      %v708 = vunpack.c.h.b16 %v305
      %v709 = vunpack.c.l.b16 %v306
      %v710 = vunpack.c.h.b16 %v306
      %v711 = vunpack.c.l.b16 %v307
      %v712 = vunpack.c.h.b16 %v307
      %v713 = vunpack.c.l.b16 %v308
      %v714 = vunpack.c.h.b16 %v308
      %v715 = vunpack.c.l.b16 %v309
      %v716 = vunpack.c.h.b16 %v309
      %v717 = vunpack.c.l.b16 %v310
      %v718 = vunpack.c.h.b16 %v310
      %v719 = vunpack.c.l.b16 %v311
      %v720 = vunpack.c.h.b16 %v311
      %v721 = vunpack.c.l.b16 %v312
      %v722 = vunpack.c.h.b16 %v312
      %v723 = vunpack.c.l.b16 %v313
      %v724 = vunpack.c.h.b16 %v313
      %v725 = vunpack.c.l.b16 %v314
      %v726 = vunpack.c.h.b16 %v314
      %v727 = vunpack.c.l.b16 %v315
      %v728 = vunpack.c.h.b16 %v315
      %v729 = vunpack.c.l.b16 %v316
      %v730 = vunpack.c.h.b16 %v316
      %v731 = vunpack.c.l.b16 %v317
      %v732 = vunpack.c.h.b16 %v317
      %v733 = vunpack.c.l.b16 %v318
      %v734 = vunpack.c.h.b16 %v318
      %v735 = vunpack.c.l.b16 %v319
      %v736 = vunpack.c.h.b16 %v319
      %v737 = vunpack.c.l.b16 %v320
      %v738 = vunpack.c.h.b16 %v320
      %v739 = vunpack.c.l.b16 %v321
      %v740 = vunpack.c.h.b16 %v321
      %v741 = vunpack.c.l.b16 %v322
      %v742 = vunpack.c.h.b16 %v322
      %v743 = vunpack.c.l.b16 %v323
      %v744 = vunpack.c.h.b16 %v323
      %v745 = vunpack.c.l.b16 %v324
      %v746 = vunpack.c.h.b16 %v324
      %v747 = vunpack.c.l.b16 %v325
      %v748 = vunpack.c.h.b16 %v325
      %v749 = vunpack.c.l.b16 %v326
      %v750 = vunpack.c.h.b16 %v326
      %v751 = vunpack.c.l.b16 %v327
      %v752 = vunpack.c.h.b16 %v327
      %v753 = vunpack.c.l.b16 %v328
      %v754 = vunpack.c.h.b16 %v328
      %v755 = vunpack.c.l.b16 %v329
      %v756 = vunpack.c.h.b16 %v329
      %v757 = vunpack.c.l.b16 %v330
      %v758 = vunpack.c.h.b16 %v330
      %v759 = vunpack.c.l.b16 %v331
      %v760 = vunpack.c.h.b16 %v331
      %v761 = vunpack.c.l.b16 %v332
      %v762 = vunpack.c.h.b16 %v332
      %v763 = vunpack.c.l.b16 %v333
      %v764 = vunpack.c.h.b16 %v333
      %v765 = vunpack.c.l.b16 %v334
      %v766 = vunpack.c.h.b16 %v334
      %v767 = vunpack.c.l.b16 %v335
      %v768 = vunpack.c.h.b16 %v335
      %v769 = vunpack.c.l.b16 %v336
      %v770 = vunpack.c.h.b16 %v336
      %v771 = vunpack.c.l.b16 %v337
      %v772 = vunpack.c.h.b16 %v337
      %v773 = vunpack.c.l.b16 %v338
      %v774 = vunpack.c.h.b16 %v338
      %v775 = vunpack.c.l.b16 %v339
      %v776 = vunpack.c.h.b16 %v339
      %v777 = vunpack.c.l.b16 %v340
      %v778 = vunpack.c.h.b16 %v340
      %v779 = vunpack.c.l.b16 %v341
      %v780 = vunpack.c.h.b16 %v341
      %v781 = vunpack.c.l.b16 %v342
      %v782 = vunpack.c.h.b16 %v342
      %v783 = vunpack.c.l.b16 %v343
      %v784 = vunpack.c.h.b16 %v343
      %v785 = vunpack.c.l.b16 %v344
      %v786 = vunpack.c.h.b16 %v344
      %v787 = vunpack.c.l.b16 %v345
      %v788 = vunpack.c.h.b16 %v345
      %v789 = vunpack.c.l.b16 %v346
      %v790 = vunpack.c.h.b16 %v346
      %v791 = vunpack.c.l.b16 %v347
      %v792 = vunpack.c.h.b16 %v347
      %v793 = vunpack.c.l.b16 %v348
      %v794 = vunpack.c.h.b16 %v348
      %v795 = vunpack.c.l.b16 %v349
      %v796 = vunpack.c.h.b16 %v349
      %v797 = vunpack.c.l.b16 %v350
      %v798 = vunpack.c.h.b16 %v350
      %v799 = vunpack.c.l.b16 %v351
      %v800 = vunpack.c.h.b16 %v351
      %v801 = vunpack.c.l.b16 %v352
      %v802 = vunpack.c.h.b16 %v352
      %v803 = vunpack.c.l.b16 %v353
      %v804 = vunpack.c.h.b16 %v353
      %v805 = vunpack.c.l.b16 %v354
      %v806 = vunpack.c.h.b16 %v354
      %v807 = vunpack.c.l.b16 %v355
      %v808 = vunpack.c.h.b16 %v355
      %v809 = vunpack.c.l.b16 %v356
      %v810 = vunpack.c.h.b16 %v356
      %v811 = vpack.c.b16 %v525, %v523
      %v812 = vpack.c.b16 %v526, %v524
      %v813 = vpack.c.b16 %v529, %v527
      %v814 = vpack.c.b16 %v530, %v528
      %v815 = vpack.c.b16 %v533, %v531
      %v816 = vpack.c.b16 %v534, %v532
      %v817 = vpack.c.b16 %v537, %v535
      %v818 = vpack.c.b16 %v538, %v536
      %v819 = vpack.c.b16 %v541, %v539
      %v820 = vpack.c.b16 %v542, %v540
      %v821 = vpack.c.b16 %v545, %v543
      %v822 = vpack.c.b16 %v546, %v544
      %v823 = vpack.c.b16 %v549, %v547
      %v824 = vpack.c.b16 %v550, %v548
      %v825 = vpack.c.b16 %v553, %v551
      %v826 = vpack.c.b16 %v554, %v552
      %v827 = vpack.c.b16 %v557, %v555
      %v828 = vpack.c.b16 %v558, %v556
      %v829 = vpack.c.b16 %v561, %v559
      %v830 = vpack.c.b16 %v562, %v560
      %v831 = vpack.c.b16 %v565, %v563
      %v832 = vpack.c.b16 %v566, %v564
      %v833 = vpack.c.b16 %v569, %v567
      %v834 = vpack.c.b16 %v570, %v568
      %v835 = vpack.c.b16 %v573, %v571
      %v836 = vpack.c.b16 %v574, %v572
      %v837 = vpack.c.b16 %v577, %v575
      %v838 = vpack.c.b16 %v578, %v576
      %v839 = vpack.c.b16 %v581, %v579
      %v840 = vpack.c.b16 %v582, %v580
      %v841 = vpack.c.b16 %v585, %v583
      %v842 = vpack.c.b16 %v586, %v584
      %v843 = vpack.c.b16 %v589, %v587
      %v844 = vpack.c.b16 %v590, %v588
      %v845 = vpack.c.b16 %v593, %v591
      %v846 = vpack.c.b16 %v594, %v592
      %v847 = vpack.c.b16 %v597, %v595
      %v848 = vpack.c.b16 %v598, %v596
      %v849 = vpack.c.b16 %v601, %v599
      %v850 = vpack.c.b16 %v602, %v600
      %v851 = vpack.c.b16 %v605, %v603
      %v852 = vpack.c.b16 %v606, %v604
      %v853 = vpack.c.b16 %v609, %v607
      %v854 = vpack.c.b16 %v610, %v608
      %v855 = vpack.c.b16 %v613, %v611
      %v856 = vpack.c.b16 %v614, %v612
      %v857 = vpack.c.b16 %v617, %v615
      %v858 = vpack.c.b16 %v618, %v616
      %v859 = vpack.c.b16 %v621, %v619
      %v860 = vpack.c.b16 %v622, %v620
      %v861 = vpack.c.b16 %v625, %v623
      %v862 = vpack.c.b16 %v626, %v624
      %v863 = vpack.c.b16 %v629, %v627
      %v864 = vpack.c.b16 %v630, %v628
      %v865 = vpack.c.b16 %v633, %v631
      %v866 = vpack.c.b16 %v634, %v632
      %v867 = vpack.c.b16 %v637, %v635
      %v868 = vpack.c.b16 %v638, %v636
      %v869 = vpack.c.b16 %v641, %v639
      %v870 = vpack.c.b16 %v642, %v640
      %v871 = vpack.c.b16 %v645, %v643
      %v872 = vpack.c.b16 %v646, %v644
      %v873 = vpack.c.b16 %v649, %v647
      %v874 = vpack.c.b16 %v650, %v648
      %v875 = vpack.c.b16 %v653, %v651
      %v876 = vpack.c.b16 %v654, %v652
      %v877 = vpack.c.b16 %v657, %v655
      %v878 = vpack.c.b16 %v658, %v656
      %v879 = vpack.c.b16 %v661, %v659
      %v880 = vpack.c.b16 %v662, %v660
      %v881 = vpack.c.b16 %v665, %v663
      %v882 = vpack.c.b16 %v666, %v664
      %v883 = vpack.c.b16 %v669, %v667
      %v884 = vpack.c.b16 %v670, %v668
      %v885 = vpack.c.b16 %v673, %v671
      %v886 = vpack.c.b16 %v674, %v672
      %v887 = vpack.c.b16 %v677, %v675
      %v888 = vpack.c.b16 %v678, %v676
      %v889 = vpack.c.b16 %v681, %v679
      %v890 = vpack.c.b16 %v682, %v680
      %v891 = vpack.c.b16 %v685, %v683
      %v892 = vpack.c.b16 %v686, %v684
      %v893 = vpack.c.b16 %v689, %v687
      %v894 = vpack.c.b16 %v690, %v688
      %v895 = vpack.c.b16 %v693, %v691
      %v896 = vpack.c.b16 %v694, %v692
      %v897 = vpack.c.b16 %v697, %v695
      %v898 = vpack.c.b16 %v698, %v696
      %v899 = vpack.c.b16 %v701, %v699
      %v900 = vpack.c.b16 %v702, %v700
      %v901 = vpack.c.b16 %v705, %v703
      %v902 = vpack.c.b16 %v706, %v704
      %v903 = vpack.c.b16 %v709, %v707
      %v904 = vpack.c.b16 %v710, %v708
      %v905 = vpack.c.b16 %v713, %v711
      %v906 = vpack.c.b16 %v714, %v712
      %v907 = vpack.c.b16 %v717, %v715
      %v908 = vpack.c.b16 %v718, %v716
      %v909 = vpack.c.b16 %v721, %v719
      %v910 = vpack.c.b16 %v722, %v720
      %v911 = vpack.c.b16 %v725, %v723
      %v912 = vpack.c.b16 %v726, %v724
      %v913 = vpack.c.b16 %v729, %v727
      %v914 = vpack.c.b16 %v730, %v728
      %v915 = vpack.c.b16 %v733, %v731
      %v916 = vpack.c.b16 %v734, %v732
      %v917 = vpack.c.b16 %v737, %v735
      %v918 = vpack.c.b16 %v738, %v736
      %v919 = vpack.c.b16 %v741, %v739
      %v920 = vpack.c.b16 %v742, %v740
      %v921 = vpack.c.b16 %v745, %v743
      %v922 = vpack.c.b16 %v746, %v744
      %v923 = vpack.c.b16 %v749, %v747
      %v924 = vpack.c.b16 %v750, %v748
      %v925 = vpack.c.b16 %v753, %v751
      %v926 = vpack.c.b16 %v754, %v752
      %v927 = vpack.c.b16 %v757, %v755
      %v928 = vpack.c.b16 %v758, %v756
      %v929 = vpack.c.b16 %v761, %v759
      %v930 = vpack.c.b16 %v762, %v760
      %v931 = vpack.c.b16 %v765, %v763
      %v932 = vpack.c.b16 %v766, %v764
      %v933 = vpack.c.b16 %v769, %v767
      %v934 = vpack.c.b16 %v770, %v768
      %v935 = vpack.c.b16 %v773, %v771
      %v936 = vpack.c.b16 %v774, %v772
      %v937 = vpack.c.b16 %v777, %v775
      %v938 = vpack.c.b16 %v778, %v776
      %v939 = vpack.c.b16 %v781, %v779
      %v940 = vpack.c.b16 %v782, %v780
      %v941 = vpack.c.b16 %v785, %v783
      %v942 = vpack.c.b16 %v786, %v784
      %v943 = vpack.c.b16 %v789, %v787
      %v944 = vpack.c.b16 %v790, %v788
      %v945 = vpack.c.b16 %v793, %v791
      %v946 = vpack.c.b16 %v794, %v792
      %v947 = vpack.c.b16 %v797, %v795
      %v948 = vpack.c.b16 %v798, %v796
      %v949 = vpack.c.b16 %v801, %v799
      %v950 = vpack.c.b16 %v802, %v800
      %v951 = vpack.c.b16 %v805, %v803
      %v952 = vpack.c.b16 %v806, %v804
      %v953 = vpack.c.b16 %v809, %v807
      %v954 = vpack.c.b16 %v810, %v808
      %1099 = vmatpush.bf16.msra.mxu0 %v825
      %1100 = vmatpush.bf16.msra.mxu0 %v823
      %1101 = vmatpush.bf16.msra.mxu0 %v821
      %1102 = vmatpush.bf16.msra.mxu0 %v819
      %1103 = vmatpush.bf16.msra.mxu0 %v817
      %1104 = vmatpush.bf16.msra.mxu0 %v815
      %1105 = vmatpush.bf16.msra.mxu0 %v813
      %1106 = vmatpush.bf16.msra.mxu0 %v811
      %1107 = vmatmul.bf16.gmra.mxu0 %v359
      %v1108 = vpop.f32.mrf.mxu0
      %v1109 = vadd.f32 0.0, %v1108
      %v1110 = vpop.f32.mrf.mxu0
      %1111 = vdwg.mxu0
      %1112 = vmatpush.bf16.msra.mxu0 %v841
      %1113 = vmatpush.bf16.msra.mxu0 %v839
      %1114 = vmatpush.bf16.msra.mxu0 %v837
      %1115 = vmatpush.bf16.msra.mxu0 %v835
      %1116 = vmatpush.bf16.msra.mxu0 %v833
      %1117 = vmatpush.bf16.msra.mxu0 %v831
      %1118 = vmatpush.bf16.msra.mxu0 %v829
      %1119 = vmatpush.bf16.msra.mxu0 %v827
      %1120 = vmatmul.bf16.gmra.mxu0 %v360
      %v1121 = vpop.f32.mrf.mxu0
      %v1122 = vadd.f32 %v1109, %v1121
      %v1123 = vpop.f32.mrf.mxu0
      %1124 = vdwg.mxu0
      %1125 = vmatpush.bf16.msra.mxu0 %v857
      %1126 = vmatpush.bf16.msra.mxu0 %v855
      %1127 = vmatpush.bf16.msra.mxu0 %v853
      %1128 = vmatpush.bf16.msra.mxu0 %v851
      %1129 = vmatpush.bf16.msra.mxu0 %v849
      %1130 = vmatpush.bf16.msra.mxu0 %v847
      %1131 = vmatpush.bf16.msra.mxu0 %v845
      %1132 = vmatpush.bf16.msra.mxu0 %v843
      %1133 = vmatmul.bf16.gmra.mxu0 %v361
      %v1134 = vpop.f32.mrf.mxu0
      %v1135 = vadd.f32 %v1122, %v1134
      %v1136 = vpop.f32.mrf.mxu0
      %1137 = vdwg.mxu0
      %1138 = vmatpush.bf16.msra.mxu0 %v873
      %1139 = vmatpush.bf16.msra.mxu0 %v871
      %1140 = vmatpush.bf16.msra.mxu0 %v869
      %1141 = vmatpush.bf16.msra.mxu0 %v867
      %1142 = vmatpush.bf16.msra.mxu0 %v865
      %1143 = vmatpush.bf16.msra.mxu0 %v863
      %1144 = vmatpush.bf16.msra.mxu0 %v861
      %1145 = vmatpush.bf16.msra.mxu0 %v859
      %1146 = vmatmul.bf16.gmra.mxu0 %v362
      %v1147 = vpop.f32.mrf.mxu0
      %v1148 = vadd.f32 %v1135, %v1147
      %v1149 = vpop.f32.mrf.mxu0
      %1150 = vdwg.mxu0
      %1151 = vmatpush.bf16.msra.mxu0 %v889
      %1152 = vmatpush.bf16.msra.mxu0 %v887
      %1153 = vmatpush.bf16.msra.mxu0 %v885
      %1154 = vmatpush.bf16.msra.mxu0 %v883
      %1155 = vmatpush.bf16.msra.mxu0 %v881
      %1156 = vmatpush.bf16.msra.mxu0 %v879
      %1157 = vmatpush.bf16.msra.mxu0 %v877
      %1158 = vmatpush.bf16.msra.mxu0 %v875
      %1159 = vmatmul.bf16.gmra.mxu0 %v363
      %v1160 = vpop.f32.mrf.mxu0
      %v1161 = vadd.f32 %v1148, %v1160
      %v1162 = vpop.f32.mrf.mxu0
      %1163 = vdwg.mxu0
      %1164 = vmatpush.bf16.msra.mxu0 %v905
      %1165 = vmatpush.bf16.msra.mxu0 %v903
      %1166 = vmatpush.bf16.msra.mxu0 %v901
      %1167 = vmatpush.bf16.msra.mxu0 %v899
      %1168 = vmatpush.bf16.msra.mxu0 %v897
      %1169 = vmatpush.bf16.msra.mxu0 %v895
      %1170 = vmatpush.bf16.msra.mxu0 %v893
      %1171 = vmatpush.bf16.msra.mxu0 %v891
      %1172 = vmatmul.bf16.gmra.mxu0 %v364
      %v1173 = vpop.f32.mrf.mxu0
      %v1174 = vadd.f32 %v1161, %v1173
      %v1175 = vpop.f32.mrf.mxu0
      %1176 = vdwg.mxu0
      %1177 = vmatpush.bf16.msra.mxu0 %v921
      %1178 = vmatpush.bf16.msra.mxu0 %v919
      %1179 = vmatpush.bf16.msra.mxu0 %v917
      %1180 = vmatpush.bf16.msra.mxu0 %v915
      %1181 = vmatpush.bf16.msra.mxu0 %v913
      %1182 = vmatpush.bf16.msra.mxu0 %v911
      %1183 = vmatpush.bf16.msra.mxu0 %v909
      %1184 = vmatpush.bf16.msra.mxu0 %v907
      %1185 = vmatmul.bf16.gmra.mxu0 %v365
      %v1186 = vpop.f32.mrf.mxu0
      %v1187 = vadd.f32 %v1174, %v1186
      %v1188 = vpop.f32.mrf.mxu0
      %1189 = vdwg.mxu0
      %1190 = vmatpush.bf16.msra.mxu0 %v937
      %1191 = vmatpush.bf16.msra.mxu0 %v935
      %1192 = vmatpush.bf16.msra.mxu0 %v933
      %1193 = vmatpush.bf16.msra.mxu0 %v931
      %1194 = vmatpush.bf16.msra.mxu0 %v929
      %1195 = vmatpush.bf16.msra.mxu0 %v927
      %1196 = vmatpush.bf16.msra.mxu0 %v925
      %1197 = vmatpush.bf16.msra.mxu0 %v923
      %1198 = vmatmul.bf16.gmra.mxu0 %v366
      %v1199 = vpop.f32.mrf.mxu0
      %v1200 = vadd.f32 %v1187, %v1199
      %v1201 = vpop.f32.mrf.mxu0
      %1202 = vdwg.mxu0
      %1203 = vmatpush.bf16.msra.mxu0 %v953
      %1204 = vmatpush.bf16.msra.mxu0 %v951
      %1205 = vmatpush.bf16.msra.mxu0 %v949
      %1206 = vmatpush.bf16.msra.mxu0 %v947
      %1207 = vmatpush.bf16.msra.mxu0 %v945
      %1208 = vmatpush.bf16.msra.mxu0 %v943
      %1209 = vmatpush.bf16.msra.mxu0 %v941
      %1210 = vmatpush.bf16.msra.mxu0 %v939
      %1211 = vmatmul.bf16.gmra.mxu0 %v369
      %v1212 = vpop.f32.mrf.mxu0
      %v1213 = vadd.f32 %v1200, %v1212
      %v1214 = vpop.f32.mrf.mxu0
      %1215 = vdwg.mxu0
      %1216 = vmatpush.bf16.msra.mxu0 %v826
      %1217 = vmatpush.bf16.msra.mxu0 %v824
      %1218 = vmatpush.bf16.msra.mxu0 %v822
      %1219 = vmatpush.bf16.msra.mxu0 %v820
      %1220 = vmatpush.bf16.msra.mxu0 %v818
      %1221 = vmatpush.bf16.msra.mxu0 %v816
      %1222 = vmatpush.bf16.msra.mxu0 %v814
      %1223 = vmatpush.bf16.msra.mxu0 %v812
      %1224 = vmatmul.bf16.gmra.mxu0 %v359
      %v1225 = vpop.f32.mrf.mxu0
      %v1226 = vadd.f32 0.0, %v1225
      %v1227 = vpop.f32.mrf.mxu0
      %1228 = vdwg.mxu0
      %1229 = vmatpush.bf16.msra.mxu0 %v842
      %1230 = vmatpush.bf16.msra.mxu0 %v840
      %1231 = vmatpush.bf16.msra.mxu0 %v838
      %1232 = vmatpush.bf16.msra.mxu0 %v836
      %1233 = vmatpush.bf16.msra.mxu0 %v834
      %1234 = vmatpush.bf16.msra.mxu0 %v832
      %1235 = vmatpush.bf16.msra.mxu0 %v830
      %1236 = vmatpush.bf16.msra.mxu0 %v828
      %1237 = vmatmul.bf16.gmra.mxu0 %v360
      %v1238 = vpop.f32.mrf.mxu0
      %v1239 = vadd.f32 %v1226, %v1238
      %v1240 = vpop.f32.mrf.mxu0
      %1241 = vdwg.mxu0
      %1242 = vmatpush.bf16.msra.mxu0 %v858
      %1243 = vmatpush.bf16.msra.mxu0 %v856
      %1244 = vmatpush.bf16.msra.mxu0 %v854
      %1245 = vmatpush.bf16.msra.mxu0 %v852
      %1246 = vmatpush.bf16.msra.mxu0 %v850
      %1247 = vmatpush.bf16.msra.mxu0 %v848
      %1248 = vmatpush.bf16.msra.mxu0 %v846
      %1249 = vmatpush.bf16.msra.mxu0 %v844
      %1250 = vmatmul.bf16.gmra.mxu0 %v361
      %v1251 = vpop.f32.mrf.mxu0
      %v1252 = vadd.f32 %v1239, %v1251
      %v1253 = vpop.f32.mrf.mxu0
      %1254 = vdwg.mxu0
      %1255 = vmatpush.bf16.msra.mxu0 %v874
      %1256 = vmatpush.bf16.msra.mxu0 %v872
      %1257 = vmatpush.bf16.msra.mxu0 %v870
      %1258 = vmatpush.bf16.msra.mxu0 %v868
      %1259 = vmatpush.bf16.msra.mxu0 %v866
      %1260 = vmatpush.bf16.msra.mxu0 %v864
      %1261 = vmatpush.bf16.msra.mxu0 %v862
      %1262 = vmatpush.bf16.msra.mxu0 %v860
      %1263 = vmatmul.bf16.gmra.mxu0 %v362
      %v1264 = vpop.f32.mrf.mxu0
      %v1265 = vadd.f32 %v1252, %v1264
      %v1266 = vpop.f32.mrf.mxu0
      %1267 = vdwg.mxu0
      %1268 = vmatpush.bf16.msra.mxu0 %v890
      %1269 = vmatpush.bf16.msra.mxu0 %v888
      %1270 = vmatpush.bf16.msra.mxu0 %v886
      %1271 = vmatpush.bf16.msra.mxu0 %v884
      %1272 = vmatpush.bf16.msra.mxu0 %v882
      %1273 = vmatpush.bf16.msra.mxu0 %v880
      %1274 = vmatpush.bf16.msra.mxu0 %v878
      %1275 = vmatpush.bf16.msra.mxu0 %v876
      %1276 = vmatmul.bf16.gmra.mxu0 %v363
      %v1277 = vpop.f32.mrf.mxu0
      %v1278 = vadd.f32 %v1265, %v1277
      %v1279 = vpop.f32.mrf.mxu0
      %1280 = vdwg.mxu0
      %1281 = vmatpush.bf16.msra.mxu0 %v906
      %1282 = vmatpush.bf16.msra.mxu0 %v904
      %1283 = vmatpush.bf16.msra.mxu0 %v902
      %1284 = vmatpush.bf16.msra.mxu0 %v900
      %1285 = vmatpush.bf16.msra.mxu0 %v898
      %1286 = vmatpush.bf16.msra.mxu0 %v896
      %1287 = vmatpush.bf16.msra.mxu0 %v894
      %1288 = vmatpush.bf16.msra.mxu0 %v892
      %1289 = vmatmul.bf16.gmra.mxu0 %v364
      %v1290 = vpop.f32.mrf.mxu0
      %v1291 = vadd.f32 %v1278, %v1290
      %v1292 = vpop.f32.mrf.mxu0
      %1293 = vdwg.mxu0
      %1294 = vmatpush.bf16.msra.mxu0 %v922
      %1295 = vmatpush.bf16.msra.mxu0 %v920
      %1296 = vmatpush.bf16.msra.mxu0 %v918
      %1297 = vmatpush.bf16.msra.mxu0 %v916
      %1298 = vmatpush.bf16.msra.mxu0 %v914
      %1299 = vmatpush.bf16.msra.mxu0 %v912
      %1300 = vmatpush.bf16.msra.mxu0 %v910
      %1301 = vmatpush.bf16.msra.mxu0 %v908
      %1302 = vmatmul.bf16.gmra.mxu0 %v365
      %v1303 = vpop.f32.mrf.mxu0
      %v1304 = vadd.f32 %v1291, %v1303
      %v1305 = vpop.f32.mrf.mxu0
      %1306 = vdwg.mxu0
      %1307 = vmatpush.bf16.msra.mxu0 %v938
      %1308 = vmatpush.bf16.msra.mxu0 %v936
      %1309 = vmatpush.bf16.msra.mxu0 %v934
      %1310 = vmatpush.bf16.msra.mxu0 %v932
      %1311 = vmatpush.bf16.msra.mxu0 %v930
      %1312 = vmatpush.bf16.msra.mxu0 %v928
      %1313 = vmatpush.bf16.msra.mxu0 %v926
      %1314 = vmatpush.bf16.msra.mxu0 %v924
      %1315 = vmatmul.bf16.gmra.mxu0 %v366
      %v1316 = vpop.f32.mrf.mxu0
      %v1317 = vadd.f32 %v1304, %v1316
      %v1318 = vpop.f32.mrf.mxu0
      %1319 = vdwg.mxu0
      %1320 = vmatpush.bf16.msra.mxu0 %v954
      %1321 = vmatpush.bf16.msra.mxu0 %v952
      %1322 = vmatpush.bf16.msra.mxu0 %v950
      %1323 = vmatpush.bf16.msra.mxu0 %v948
      %1324 = vmatpush.bf16.msra.mxu0 %v946
      %1325 = vmatpush.bf16.msra.mxu0 %v944
      %1326 = vmatpush.bf16.msra.mxu0 %v942
      %1327 = vmatpush.bf16.msra.mxu0 %v940
      %1328 = vmatmul.bf16.gmra.mxu0 %v369
      %v1329 = vpop.f32.mrf.mxu0
      %v1330 = vadd.f32 %v1317, %v1329
      %v1331 = vpop.f32.mrf.mxu0
      %1332 = vdwg.mxu0
      %v1335 = vrot.slane %v1330, 6
      %vm1336 = vcmask 1041408
      %v1337 = vsel %vm1336, %v1213, %v1335
      %v1339 = vadd.f32 %v210, %v1337
      %1340 = vst [vmem:[#allocation2] sm:$0xf] %v1339
      %p1341 = scmp.eq.s32.totalorder %s19, 2
      // Predicated region
      $region37: #{gesture3dnet_forward.13} parent=31 // pred_check
        %p1342 = pneg %p1341
      $region38: #{gesture3dnet_forward.13} parent=31 // pred_check_branch
        %1344 = sbr.rel (%p1342) target = $region40
      $region39: #{gesture3dnet_forward.13} parent=31 // pred_region
        %v1345 = vld [vmem:[#allocation2] sm:$0xf]
        %v1346 = vld [vmem:[%s2] sm:$0x3]
        %v1348 = vperm.slane %v1346, 0
        %v1349 = vperm.slane %v1346, 1
        %v1350 = vrot.slane %v1349, 6
        %v1351 = vsel %vm1336, %v1348, %v1350
        %v1353 = vadd.f32 %v1345, %v1351
        %v1354 = vmax.f32 %v1353, 0.0
        %1356 = vst [vmem:[#allocation1] ss:$4 sm:$0xff] %v1354
        %v1357 = vld.sshfl [vmem:[#allocation1] sm:$0xff pattern:$0x73625140]
        %v1358 = vld.sshfl [vmem:[#allocation1 + $0x8] sm:$0xff pattern:$0x73625140]
        %v1361 = vpack.c.bf16 %v1358, %v1357
        %v1363 = vrot.slane %v1361, 3
        %vm1364 = vcmask 1040384
        %v1367 = vsel %vm1364, %v1361, %v1363
        %1369 = vst [vmem:[%s204] sm:$0x3] %v1367
      $region40: #{gesture3dnet_forward.13} parent=31 // pred_fallthru
        _
      %p1370 = scmp.lt.s32.totalorder %s18, 3
      %s1371 = scalar_select %p1370, %s18, 3
      %s1372 = smul.addr %s1371, 2
      %s1373 = scalar_lea.vmem %s3, %s1372
      // Predicated region
      $region41: #{gesture3dnet_forward.13} parent=31 // pred_check
        %p1374 = pneg %p119
      $region42: #{gesture3dnet_forward.13} parent=31 // pred_check_branch
        %1376 = sbr.rel (%p1374) target = $region44
      $region43: #{gesture3dnet_forward.13} parent=31 // pred_region
        _
      $region44: #{gesture3dnet_forward.13} parent=31 // pred_fallthru
        _
    $region32: #{gesture3dnet_forward.13} parent=5 // pred_fallthru
      _
    %p1377 = scmp.le.s32.totalorder 2, %s9
    // Predicated region
    $region45: #{gesture3dnet_forward.13} parent=5 // pred_check
      %p1378 = pneg %p1377
    $region46: #{gesture3dnet_forward.13} parent=5 // pred_check_branch
      %1380 = sbr.rel (%p1378) target = $region48
    $region47: #{gesture3dnet_forward.13} parent=5 // pred_region
      %s1381 = ssub.s32 %s9, 2
      // Predicated region
      $region49: #{gesture3dnet_forward.13} parent=47 // pred_check
        %p1382 = pneg %p125
      $region50: #{gesture3dnet_forward.13} parent=47 // pred_check_branch
        %1384 = sbr.rel (%p1382) target = $region52
      $region51: #{gesture3dnet_forward.13} parent=47 // pred_region
        %p1385 = scmp.lt.s32.totalorder %s20, 3
        %s1386 = scalar_select %p1385, %s20, 3
        %s1387 = smul.addr %s1386, 2
        %s1388 = scalar_lea.vmem %s3, %s1387
      $region52: #{gesture3dnet_forward.13} parent=47 // pred_fallthru
        _
    $region48: #{gesture3dnet_forward.13} parent=5 // pred_fallthru
      _
  $region6: #{gesture3dnet_forward.13} parent=0 // loop_footer
    %s13 = sadd.s32 1, %s9
  $region7: #{gesture3dnet_forward.13} parent=0 // loop_footer_branch
    %8 = sbr.rel target = $region3
  $region8: #{gesture3dnet_forward.13} parent=0 // loop_exit
    _

// kernel: gesture3dnet_forward.15
$region0: #{gesture3dnet_forward.15}
  #allocation0 [shape = 'u32[]', space=smem, size = 0x4, offset = 0x4, fixed_abs, tag = 'smem constant byte address 0x4 - core index']
  #allocation1 [shape = 'u32[72,128]{1,0:T(1,128)}', space=vmem, size = 0x9000, scoped, tag = 'internal scratch']
  %s0 = inlined_call_operand.vmem [shape: bf16[8,256], index: 0, kind: input, shape index: {}]
  %s1 = inlined_call_operand.vmem [shape: bf16[2,8], index: 1, kind: input, shape index: {}]
  %s2 = inlined_call_operand.vmem [shape: bf16[256,128], index: 2, kind: input, shape index: {}]
  %s3 = inlined_call_operand.vmem [shape: f32[1,128], index: 3, kind: input, shape index: {}]
  %s4 = inlined_call_operand.vmem [shape: bf16[128,7], index: 4, kind: input, shape index: {}]
  %s5 = inlined_call_operand.vmem [shape: f32[1,7], index: 5, kind: input, shape index: {}]
  %s6 = inlined_call_operand.hbm [shape: f32[2,7], index: 6, kind: output, shape index: {}]
  %s7 = sld [smem:[#allocation0]]
  $region34: #{gesture3dnet_forward.15} parent=0
    _
  %s9 = ssub.s32 1, %s7
  %s10 = scalar_select 0, %s9, %s7
  $region1: #{gesture3dnet_forward.15} parent=0
    #allocation2 [shape = 'u8[1024]{0}', space=vmem, size = 0x400, scoped, tag = 'output window, operand 0, single buffered']
    #allocation3 [shape = 's32[1]{0}', space=sflag, size = 0x4, scoped, tag = 'scoped memory for gesture3dnet_forward.15']
    %11 = vsyncpa [#allocation3], 0
    // Predicated region
    $region2: #{gesture3dnet_forward.15} parent=1 // pred_check
      _
    $region3: #{gesture3dnet_forward.15} parent=1 // pred_check_branch
      %13 = sbr.rel (0) target = $region5
    $region4: #{gesture3dnet_forward.15} parent=1 // pred_region
      _
    $region5: #{gesture3dnet_forward.15} parent=1 // pred_fallthru
      _
    // Predicated region
    $region6: #{gesture3dnet_forward.15} parent=1 // pred_check
      _
    $region7: #{gesture3dnet_forward.15} parent=1 // pred_check_branch
      %15 = sbr.rel (0) target = $region9
    $region8: #{gesture3dnet_forward.15} parent=1 // pred_region
      _
    $region9: #{gesture3dnet_forward.15} parent=1 // pred_fallthru
      _
    // Predicated region
    $region10: #{gesture3dnet_forward.15} parent=1 // pred_check
      _
    $region11: #{gesture3dnet_forward.15} parent=1 // pred_check_branch
      %17 = sbr.rel (0) target = $region13
    $region12: #{gesture3dnet_forward.15} parent=1 // pred_region
      _
    $region13: #{gesture3dnet_forward.15} parent=1 // pred_fallthru
      _
    // Predicated region
    $region14: #{gesture3dnet_forward.15} parent=1 // pred_check
      _
    $region15: #{gesture3dnet_forward.15} parent=1 // pred_check_branch
      %19 = sbr.rel (0) target = $region17
    $region16: #{gesture3dnet_forward.15} parent=1 // pred_region
      _
    $region17: #{gesture3dnet_forward.15} parent=1 // pred_fallthru
      _
    // Predicated region
    $region18: #{gesture3dnet_forward.15} parent=1 // pred_check
      _
    $region19: #{gesture3dnet_forward.15} parent=1 // pred_check_branch
      %21 = sbr.rel (0) target = $region21
    $region20: #{gesture3dnet_forward.15} parent=1 // pred_region
      _
    $region21: #{gesture3dnet_forward.15} parent=1 // pred_fallthru
      _
    // Predicated region
    $region22: #{gesture3dnet_forward.15} parent=1 // pred_check
      _
    $region23: #{gesture3dnet_forward.15} parent=1 // pred_check_branch
      %23 = sbr.rel (0) target = $region25
    $region24: #{gesture3dnet_forward.15} parent=1 // pred_region
      _
    $region25: #{gesture3dnet_forward.15} parent=1 // pred_fallthru
      _
    %v25 = vld [vmem:[%s1] sm:$0x1]
    %v26 = vld [vmem:[%s0] sm:$0xff]
    %v28 = vunpack.c.l.b16 %v26
    %v29 = vunpack.c.h.b16 %v26
    %v30 = vpack.c.b16 %v28, %v28
    %v31 = vpack.c.b16 %v29, %v29
    %vm32 = vcmask 64512
    %v34 = vsel %vm32, %v25, 0
    %vm36 = vcmask 1043456
    %v38 = vsel %vm36, %v30, 0
    %v41 = vsel %vm36, %v31, 0
    %43 = vmatpush.bf16.msra.mxu0 0
    %44 = vmatpush.bf16.msra.mxu0 0
    %45 = vmatpush.bf16.msra.mxu0 0
    %46 = vmatpush.bf16.msra.mxu0 0
    %47 = vmatpush.bf16.msra.mxu0 0
    %48 = vmatpush.bf16.msra.mxu0 0
    %49 = vmatpush.bf16.msra.mxu0 0
    %50 = vmatpush.bf16.msra.mxu0 %v38
    %51 = vmatmul.bf16.gmra.mxu0 %v34
    %v52 = vpop.f32.mrf.mxu0
    %v53 = vadd.f32 0.0, %v52
    %v54 = vpop.f32.mrf.mxu0
    %55 = vdwg.mxu0
    %56 = vmatpush.bf16.msra.mxu0 0
    %57 = vmatpush.bf16.msra.mxu0 0
    %58 = vmatpush.bf16.msra.mxu0 0
    %59 = vmatpush.bf16.msra.mxu0 0
    %60 = vmatpush.bf16.msra.mxu0 0
    %61 = vmatpush.bf16.msra.mxu0 0
    %62 = vmatpush.bf16.msra.mxu0 0
    %63 = vmatpush.bf16.msra.mxu0 %v41
    %64 = vmatmul.bf16.gmra.mxu0 %v34
    %v65 = vpop.f32.mrf.mxu0
    %v66 = vadd.f32 0.0, %v65
    %v67 = vpop.f32.mrf.mxu0
    %68 = vdwg.mxu0
    %v69 = vpack.c.bf16 %v53, %v53
    %v70 = vpack.c.bf16 %v66, %v66
    %v71 = vld [vmem:[%s2] sm:$0xf]
    %v72 = vld [vmem:[%s2 + $0x4] sm:$0xf]
    %v73 = vld [vmem:[%s2 + $0x8] sm:$0xf]
    %v74 = vld [vmem:[%s2 + $0xc] sm:$0xf]
    %v75 = vld [vmem:[%s2 + $0x10] sm:$0xf]
    %v76 = vld [vmem:[%s2 + $0x14] sm:$0xf]
    %v77 = vld [vmem:[%s2 + $0x18] sm:$0xf]
    %v78 = vld [vmem:[%s2 + $0x1c] sm:$0xf]
    %v79 = vld [vmem:[%s2 + $0x20] sm:$0xf]
    %v80 = vld [vmem:[%s2 + $0x24] sm:$0xf]
    %v81 = vld [vmem:[%s2 + $0x28] sm:$0xf]
    %v82 = vld [vmem:[%s2 + $0x2c] sm:$0xf]
    %v83 = vld [vmem:[%s2 + $0x30] sm:$0xf]
    %v84 = vld [vmem:[%s2 + $0x34] sm:$0xf]
    %v85 = vld [vmem:[%s2 + $0x38] sm:$0xf]
    %v86 = vld [vmem:[%s2 + $0x3c] sm:$0xf]
    %v87 = vld [vmem:[%s2 + $0x40] sm:$0xf]
    %v88 = vld [vmem:[%s2 + $0x44] sm:$0xf]
    %v89 = vld [vmem:[%s2 + $0x48] sm:$0xf]
    %v90 = vld [vmem:[%s2 + $0x4c] sm:$0xf]
    %v91 = vld [vmem:[%s2 + $0x50] sm:$0xf]
    %v92 = vld [vmem:[%s2 + $0x54] sm:$0xf]
    %v93 = vld [vmem:[%s2 + $0x58] sm:$0xf]
    %v94 = vld [vmem:[%s2 + $0x5c] sm:$0xf]
    %v95 = vld [vmem:[%s2 + $0x60] sm:$0xf]
    %v96 = vld [vmem:[%s2 + $0x64] sm:$0xf]
    %v97 = vld [vmem:[%s2 + $0x68] sm:$0xf]
    %v98 = vld [vmem:[%s2 + $0x6c] sm:$0xf]
    %v99 = vld [vmem:[%s2 + $0x70] sm:$0xf]
    %v100 = vld [vmem:[%s2 + $0x74] sm:$0xf]
    %v101 = vld [vmem:[%s2 + $0x78] sm:$0xf]
    %v102 = vld [vmem:[%s2 + $0x7c] sm:$0xf]
    %v103 = vld [vmem:[%s3] sm:$0x1]
    %v105 = vperm.slane %v103, 0
    %v139 = vunpack.c.l.b16 %v71
    %v140 = vunpack.c.l.b16 %v72
    %v141 = vunpack.c.l.b16 %v73
    %v142 = vunpack.c.l.b16 %v74
    %v143 = vunpack.c.l.b16 %v75
    %v144 = vunpack.c.l.b16 %v76
    %v145 = vunpack.c.l.b16 %v77
    %v146 = vunpack.c.l.b16 %v78
    %v147 = vunpack.c.l.b16 %v79
    %v148 = vunpack.c.l.b16 %v80
    %v149 = vunpack.c.l.b16 %v81
    %v150 = vunpack.c.l.b16 %v82
    %v151 = vunpack.c.l.b16 %v83
    %v152 = vunpack.c.l.b16 %v84
    %v153 = vunpack.c.l.b16 %v85
    %v154 = vunpack.c.l.b16 %v86
    %v155 = vunpack.c.l.b16 %v87
    %v156 = vunpack.c.l.b16 %v88
    %v157 = vunpack.c.l.b16 %v89
    %v158 = vunpack.c.l.b16 %v90
    %v159 = vunpack.c.l.b16 %v91
    %v160 = vunpack.c.l.b16 %v92
    %v161 = vunpack.c.l.b16 %v93
    %v162 = vunpack.c.l.b16 %v94
    %v163 = vunpack.c.l.b16 %v95
    %v164 = vunpack.c.l.b16 %v96
    %v165 = vunpack.c.l.b16 %v97
    %v166 = vunpack.c.l.b16 %v98
    %v167 = vunpack.c.l.b16 %v99
    %v168 = vunpack.c.l.b16 %v100
    %v169 = vunpack.c.l.b16 %v101
    %v170 = vunpack.c.l.b16 %v102
    %v171 = vpack.c.b16 %v140, %v139
    %v172 = vpack.c.b16 %v142, %v141
    %v173 = vpack.c.b16 %v144, %v143
    %v174 = vpack.c.b16 %v146, %v145
    %v175 = vpack.c.b16 %v148, %v147
    %v176 = vpack.c.b16 %v150, %v149
    %v177 = vpack.c.b16 %v152, %v151
    %v178 = vpack.c.b16 %v154, %v153
    %v179 = vpack.c.b16 %v156, %v155
    %v180 = vpack.c.b16 %v158, %v157
    %v181 = vpack.c.b16 %v160, %v159
    %v182 = vpack.c.b16 %v162, %v161
    %v183 = vpack.c.b16 %v164, %v163
    %v184 = vpack.c.b16 %v166, %v165
    %v185 = vpack.c.b16 %v168, %v167
    %v186 = vpack.c.b16 %v170, %v169
    %203 = vmatpush.bf16.msra.mxu0 %v178
    %204 = vmatpush.bf16.msra.mxu0 %v177
    %205 = vmatpush.bf16.msra.mxu0 %v176
    %206 = vmatpush.bf16.msra.mxu0 %v175
    %207 = vmatpush.bf16.msra.mxu0 %v174
    %208 = vmatpush.bf16.msra.mxu0 %v173
    %209 = vmatpush.bf16.msra.mxu0 %v172
    %210 = vmatpush.bf16.msra.mxu0 %v171
    %211 = vmatmul.bf16.gmra.mxu0 %v69
    %v212 = vpop.f32.mrf.mxu0
    %v213 = vadd.f32 %v105, %v212
    %v214 = vpop.f32.mrf.mxu0
    %215 = vdwg.mxu0
    %216 = vmatpush.bf16.msra.mxu0 %v186
    %217 = vmatpush.bf16.msra.mxu0 %v185
    %218 = vmatpush.bf16.msra.mxu0 %v184
    %219 = vmatpush.bf16.msra.mxu0 %v183
    %220 = vmatpush.bf16.msra.mxu0 %v182
    %221 = vmatpush.bf16.msra.mxu0 %v181
    %222 = vmatpush.bf16.msra.mxu0 %v180
    %223 = vmatpush.bf16.msra.mxu0 %v179
    %224 = vmatmul.bf16.gmra.mxu0 %v70
    %v225 = vpop.f32.mrf.mxu0
    %v226 = vadd.f32 %v213, %v225
    %v227 = vpop.f32.mrf.mxu0
    %228 = vdwg.mxu0
    %v229 = vmax.f32 %v226, 0.0
    %v230 = vpack.c.bf16 %v229, %v229
    %v231 = vld [vmem:[%s4] sm:$0xf]
    %v232 = vld [vmem:[%s4 + $0x4] sm:$0xf]
    %v233 = vld [vmem:[%s4 + $0x8] sm:$0xf]
    %v234 = vld [vmem:[%s4 + $0xc] sm:$0xf]
    %v235 = vld [vmem:[%s4 + $0x10] sm:$0xf]
    %v236 = vld [vmem:[%s4 + $0x14] sm:$0xf]
    %v237 = vld [vmem:[%s4 + $0x18] sm:$0xf]
    %v238 = vld [vmem:[%s4 + $0x1c] sm:$0xf]
    %v239 = vld [vmem:[%s4 + $0x20] sm:$0xf]
    %v240 = vld [vmem:[%s4 + $0x24] sm:$0xf]
    %v241 = vld [vmem:[%s4 + $0x28] sm:$0xf]
    %v242 = vld [vmem:[%s4 + $0x2c] sm:$0xf]
    %v243 = vld [vmem:[%s4 + $0x30] sm:$0xf]
    %v244 = vld [vmem:[%s4 + $0x34] sm:$0xf]
    %v245 = vld [vmem:[%s4 + $0x38] sm:$0xf]
    %v246 = vld [vmem:[%s4 + $0x3c] sm:$0xf]
    %v247 = vld [vmem:[%s5] sm:$0x1]
    %v249 = vperm.slane %v247, 0
    %v267 = vunpack.c.l.b16 %v231
    %v268 = vunpack.c.l.b16 %v232
    %v269 = vunpack.c.l.b16 %v233
    %v270 = vunpack.c.l.b16 %v234
    %v271 = vunpack.c.l.b16 %v235
    %v272 = vunpack.c.l.b16 %v236
    %v273 = vunpack.c.l.b16 %v237
    %v274 = vunpack.c.l.b16 %v238
    %v275 = vunpack.c.l.b16 %v239
    %v276 = vunpack.c.l.b16 %v240
    %v277 = vunpack.c.l.b16 %v241
    %v278 = vunpack.c.l.b16 %v242
    %v279 = vunpack.c.l.b16 %v243
    %v280 = vunpack.c.l.b16 %v244
    %v281 = vunpack.c.l.b16 %v245
    %v282 = vunpack.c.l.b16 %v246
    %v283 = vpack.c.b16 %v268, %v267
    %v284 = vpack.c.b16 %v270, %v269
    %v285 = vpack.c.b16 %v272, %v271
    %v286 = vpack.c.b16 %v274, %v273
    %v287 = vpack.c.b16 %v276, %v275
    %v288 = vpack.c.b16 %v278, %v277
    %v289 = vpack.c.b16 %v280, %v279
    %v290 = vpack.c.b16 %v282, %v281
    %299 = vmatpush.bf16.msra.mxu0 %v290
    %300 = vmatpush.bf16.msra.mxu0 %v289
    %301 = vmatpush.bf16.msra.mxu0 %v288
    %302 = vmatpush.bf16.msra.mxu0 %v287
    %303 = vmatpush.bf16.msra.mxu0 %v286
    %304 = vmatpush.bf16.msra.mxu0 %v285
    %305 = vmatpush.bf16.msra.mxu0 %v284
    %306 = vmatpush.bf16.msra.mxu0 %v283
    %307 = vmatmul.bf16.gmra.mxu0 %v230
    %v308 = vpop.f32.mrf.mxu0
    %v309 = vadd.f32 %v249, %v308
    %v310 = vpop.f32.mrf.mxu0
    %311 = vdwg.mxu0
    %vm312 = vcmask 50176
    %313 = vst.msk [vmem:[#allocation2] sm:$0x3] %vm312, %v309
    // Predicated region
    $region26: #{gesture3dnet_forward.15} parent=1 // pred_check
      _
    $region27: #{gesture3dnet_forward.15} parent=1 // pred_check_branch
      %315 = sbr.rel (0) target = $region29
    $region28: #{gesture3dnet_forward.15} parent=1 // pred_region
      %317 = vsyncadd [#allocation3], 0
      %s319 = sshll.u32 [#allocation2], 4
      %s320 = int_to_ptr.vmem [resolvable:$true] %s319
      %s321 = sshll.u32 %s6, 4
      %s322 = int_to_ptr.hbm [resolvable:$true] %s321
      %324 = dma.vmem_to_hbm [thread:$0]  %s320, 32, %s322, [#allocation3]
    $region29: #{gesture3dnet_forward.15} parent=1 // pred_fallthru
      _
    // Predicated region
    $region30: #{gesture3dnet_forward.15} parent=1 // pred_check
      _
    $region31: #{gesture3dnet_forward.15} parent=1 // pred_check_branch
      %326 = sbr.rel (0) target = $region33
    $region32: #{gesture3dnet_forward.15} parent=1 // pred_region
      %328 = dma.done [#allocation3], 32
    $region33: #{gesture3dnet_forward.15} parent=1 // pred_fallthru
      _
    %329 = vsyncpa [#allocation3], 1

// kernel: gesture3dnet_forward.14
$region0: #{gesture3dnet_forward.14}
  #allocation0 [shape = 'u32[]', space=smem, size = 0x4, offset = 0x4, fixed_abs, tag = 'smem constant byte address 0x4 - core index']
  #allocation1 [shape = 'u32[72,128]{1,0:T(1,128)}', space=vmem, size = 0x9000, scoped, tag = 'internal scratch']
  #allocation2 [shape = 'f32[2,256]{1,0:T(2,128)}', space=vmem, size = 0x800, scoped, tag = 'scratch operand']
  %s0 = inlined_call_operand.vmem [shape: bf16[6,2,2304], index: 0, kind: input, shape index: {}]
  %s1 = inlined_call_operand.vmem [shape: bf16[3,2304,256], index: 1, kind: input, shape index: {}]
  %s2 = inlined_call_operand.vmem [shape: f32[1,256], index: 2, kind: input, shape index: {}]
  %s3 = inlined_call_operand.vmem [shape: bf16[4,2,128], index: 3, kind: input, shape index: {}]
  %s4 = inlined_call_operand.vmem [shape: bf16[128,256], index: 4, kind: input, shape index: {}]
  %s5 = inlined_call_operand.vmem [shape: f32[1,256], index: 5, kind: input, shape index: {}]
  %s6 = inlined_call_operand.vmem [shape: bf16[4,2,256], index: 6, kind: output, shape index: {}]
  %s7 = sld [smem:[#allocation0]]
  $region65: #{gesture3dnet_forward.14} parent=0
    _
  %s9 = ssub.s32 1, %s7
  %s10 = scalar_select 0, %s9, %s7
  loop: start=0, step=1, limit=14
  $region2: #{gesture3dnet_forward.14} parent=0 // loop_pre_header
    _
  $region3: #{gesture3dnet_forward.14} parent=0 // loop_header
    %s12 = sphi 0, %s16
    %p13 = scmp.ge.s32.totalorder %s12, 14
    %s19 = sphi 0, %s31
    %s20 = sphi 0, %s27
    %s21 = sphi 0, %s19
    %s22 = sphi 0, %s20
    %s23 = sphi 0, %s21
    %s24 = sphi 0, %s22
    %s36 = sphi 0, %s38
    %s39 = sphi 0, %s36
    %s40 = sphi 0, %s39
    %s56 = sphi 0, %s40
    %s62 = sphi 0, %s64
    %s65 = sphi 0, %s62
    %s66 = sphi 0, %s65
    %s82 = sphi 0, %s66
    %s86 = sphi 0, %s86
    %s88 = sphi 0, %s86
    %s89 = sphi 0, %s88
    %s103 = sphi 0, %s89
    %s109 = sphi 0, %s111
    %s112 = sphi 0, %s109
    %s113 = sphi 0, %s112
    %s129 = sphi 0, %s113
    %s133 = sphi 0, %s133
    %s135 = sphi 0, %s133
    %s136 = sphi 0, %s135
    %s150 = sphi 0, %s136
    %s154 = sphi 0, %s154
    %s156 = sphi 0, %s154
    %s157 = sphi 0, %s156
    %s171 = sphi 0, %s157
    %s177 = sphi 0, %s179
    %s180 = sphi 0, %s177
    %s181 = sphi 0, %s180
    %s197 = sphi 0, %s181
  $region4: #{gesture3dnet_forward.14} parent=0 // loop_header_branch
    %15 = sbr.rel (%p13) target = $region8
  $region5: #{gesture3dnet_forward.14} parent=0 // loop_body
    %s17 = ssub.s32 %s12, 1
    %s18 = ssub.s32 %s12, 2
    %s25 = sadd.s32 1, %s20
    %p26 = scmp.ge.s32.totalorder %s25, 3
    %s27 = scalar_select %p26, 0, %s25
    %s28 = sadd.s32 1, %s19
    %s29 = scalar_select %p26, %s28, %s19
    %p30 = scmp.ge.s32.totalorder %s29, 4
    %s31 = scalar_select %p30, 0, %s29
    %s32 = sadd.s32 %s19, %s20
    %s33 = sadd.s32 %s31, %s27
    %s34 = ssub.s32 %s32, %s33
    %p35 = scmp.eq.s32.totalorder %s34, 0
    %s37 = sadd.s32 %s36, 1
    %s38 = scalar_select %p35, %s36, %s37
    %p41 = pneg %p35
    %p42 = scmp.eq.s32.totalorder %s12, 11
    %p43 = por %p41, %p42
    %p44 = scmp.ne.s32.totalorder %s36, %s39
    %p45 = scmp.eq.s32.totalorder %s12, 0
    %p46 = por %p44, %p45
    %p47 = scmp.ne.s32.totalorder %s36, %s39
    %p48 = scmp.eq.s32.totalorder %s17, 11
    %p49 = por %p47, %p48
    %p50 = scmp.ne.s32.totalorder %s39, %s40
    %p51 = scmp.eq.s32.totalorder %s17, 0
    %p52 = por %p50, %p51
    %p53 = scmp.ne.s32.totalorder %s39, %s40
    %p54 = scmp.eq.s32.totalorder %s18, 11
    %p55 = por %p53, %p54
    %p57 = scmp.ne.s32.totalorder %s40, %s56
    %p58 = scmp.eq.s32.totalorder %s18, 0
    %p59 = por %p57, %p58
    %s60 = ssub.s32 %s20, %s27
    %p61 = scmp.eq.s32.totalorder %s60, 0
    %s63 = sadd.s32 %s62, 1
    %s64 = scalar_select %p61, %s62, %s63
    %p67 = pneg %p61
    %p68 = scmp.eq.s32.totalorder %s12, 11
    %p69 = por %p67, %p68
    %p70 = scmp.ne.s32.totalorder %s62, %s65
    %p71 = scmp.eq.s32.totalorder %s12, 0
    %p72 = por %p70, %p71
    %p73 = scmp.ne.s32.totalorder %s62, %s65
    %p74 = scmp.eq.s32.totalorder %s17, 11
    %p75 = por %p73, %p74
    %p76 = scmp.ne.s32.totalorder %s65, %s66
    %p77 = scmp.eq.s32.totalorder %s17, 0
    %p78 = por %p76, %p77
    %p79 = scmp.ne.s32.totalorder %s65, %s66
    %p80 = scmp.eq.s32.totalorder %s18, 11
    %p81 = por %p79, %p80
    %p83 = scmp.ne.s32.totalorder %s66, %s82
    %p84 = scmp.eq.s32.totalorder %s18, 0
    %p85 = por %p83, %p84
    %s87 = sadd.s32 %s86, 1
    %p90 = scmp.eq.s32.totalorder %s12, 11
    %p91 = scmp.ne.s32.totalorder %s86, %s88
    %p92 = scmp.eq.s32.totalorder %s12, 0
    %p93 = por %p91, %p92
    %p94 = scmp.ne.s32.totalorder %s86, %s88
    %p95 = scmp.eq.s32.totalorder %s17, 11
    %p96 = por %p94, %p95
    %p97 = scmp.ne.s32.totalorder %s88, %s89
    %p98 = scmp.eq.s32.totalorder %s17, 0
    %p99 = por %p97, %p98
    %p100 = scmp.ne.s32.totalorder %s88, %s89
    %p101 = scmp.eq.s32.totalorder %s18, 11
    %p102 = por %p100, %p101
    %p104 = scmp.ne.s32.totalorder %s89, %s103
    %p105 = scmp.eq.s32.totalorder %s18, 0
    %p106 = por %p104, %p105
    %s107 = ssub.s32 %s19, %s31
    %p108 = scmp.eq.s32.totalorder %s107, 0
    %s110 = sadd.s32 %s109, 1
    %s111 = scalar_select %p108, %s109, %s110
    %p114 = pneg %p108
    %p115 = scmp.eq.s32.totalorder %s12, 11
    %p116 = por %p114, %p115
    %p117 = scmp.ne.s32.totalorder %s109, %s112
    %p118 = scmp.eq.s32.totalorder %s12, 0
    %p119 = por %p117, %p118
    %p120 = scmp.ne.s32.totalorder %s109, %s112
    %p121 = scmp.eq.s32.totalorder %s17, 11
    %p122 = por %p120, %p121
    %p123 = scmp.ne.s32.totalorder %s112, %s113
    %p124 = scmp.eq.s32.totalorder %s17, 0
    %p125 = por %p123, %p124
    %p126 = scmp.ne.s32.totalorder %s112, %s113
    %p127 = scmp.eq.s32.totalorder %s18, 11
    %p128 = por %p126, %p127
    %p130 = scmp.ne.s32.totalorder %s113, %s129
    %p131 = scmp.eq.s32.totalorder %s18, 0
    %p132 = por %p130, %p131
    %s134 = sadd.s32 %s133, 1
    %p137 = scmp.eq.s32.totalorder %s12, 11
    %p138 = scmp.ne.s32.totalorder %s133, %s135
    %p139 = scmp.eq.s32.totalorder %s12, 0
    %p140 = por %p138, %p139
    %p141 = scmp.ne.s32.totalorder %s133, %s135
    %p142 = scmp.eq.s32.totalorder %s17, 11
    %p143 = por %p141, %p142
    %p144 = scmp.ne.s32.totalorder %s135, %s136
    %p145 = scmp.eq.s32.totalorder %s17, 0
    %p146 = por %p144, %p145
    %p147 = scmp.ne.s32.totalorder %s135, %s136
    %p148 = scmp.eq.s32.totalorder %s18, 11
    %p149 = por %p147, %p148
    %p151 = scmp.ne.s32.totalorder %s136, %s150
    %p152 = scmp.eq.s32.totalorder %s18, 0
    %p153 = por %p151, %p152
    %s155 = sadd.s32 %s154, 1
    %p158 = scmp.eq.s32.totalorder %s12, 11
    %p159 = scmp.ne.s32.totalorder %s154, %s156
    %p160 = scmp.eq.s32.totalorder %s12, 0
    %p161 = por %p159, %p160
    %p162 = scmp.ne.s32.totalorder %s154, %s156
    %p163 = scmp.eq.s32.totalorder %s17, 11
    %p164 = por %p162, %p163
    %p165 = scmp.ne.s32.totalorder %s156, %s157
    %p166 = scmp.eq.s32.totalorder %s17, 0
    %p167 = por %p165, %p166
    %p168 = scmp.ne.s32.totalorder %s156, %s157
    %p169 = scmp.eq.s32.totalorder %s18, 11
    %p170 = por %p168, %p169
    %p172 = scmp.ne.s32.totalorder %s157, %s171
    %p173 = scmp.eq.s32.totalorder %s18, 0
    %p174 = por %p172, %p173
    %s175 = ssub.s32 %s19, %s31
    %p176 = scmp.eq.s32.totalorder %s175, 0
    %s178 = sadd.s32 %s177, 1
    %s179 = scalar_select %p176, %s177, %s178
    %p182 = pneg %p176
    %p183 = scmp.eq.s32.totalorder %s12, 11
    %p184 = por %p182, %p183
    %p185 = scmp.ne.s32.totalorder %s177, %s180
    %p186 = scmp.eq.s32.totalorder %s12, 0
    %p187 = por %p185, %p186
    %p188 = scmp.ne.s32.totalorder %s177, %s180
    %p189 = scmp.eq.s32.totalorder %s17, 11
    %p190 = por %p188, %p189
    %p191 = scmp.ne.s32.totalorder %s180, %s181
    %p192 = scmp.eq.s32.totalorder %s17, 0
    %p193 = por %p191, %p192
    %p194 = scmp.ne.s32.totalorder %s180, %s181
    %p195 = scmp.eq.s32.totalorder %s18, 11
    %p196 = por %p194, %p195
    %p198 = scmp.ne.s32.totalorder %s181, %s197
    %p199 = scmp.eq.s32.totalorder %s18, 0
    %p200 = por %p198, %p199
    %p201 = scmp.le.s32.totalorder 1, %s12
    %p202 = scmp.lt.s32.totalorder %s12, 13
    %p203 = pnand %p201, %p202
    %p204 = pneg %p203
    // Predicated region
    $region9: #{gesture3dnet_forward.14} parent=5 // pred_check
      _
    $region10: #{gesture3dnet_forward.14} parent=5 // pred_check_branch
      %206 = sbr.rel (%p203) target = $region12
    $region11: #{gesture3dnet_forward.14} parent=5 // pred_region
      %s207 = ssub.s32 %s12, 1
      // Predicated region
      $region13: #{gesture3dnet_forward.14} parent=11 // pred_check
        %p208 = pneg %p99
      $region14: #{gesture3dnet_forward.14} parent=11 // pred_check_branch
        %210 = sbr.rel (%p208) target = $region16
      $region15: #{gesture3dnet_forward.14} parent=11 // pred_region
        _
      $region16: #{gesture3dnet_forward.14} parent=11 // pred_fallthru
        _
      // Predicated region
      $region17: #{gesture3dnet_forward.14} parent=11 // pred_check
        %p211 = pneg %p146
      $region18: #{gesture3dnet_forward.14} parent=11 // pred_check_branch
        %213 = sbr.rel (%p211) target = $region20
      $region19: #{gesture3dnet_forward.14} parent=11 // pred_region
        _
      $region20: #{gesture3dnet_forward.14} parent=11 // pred_fallthru
        _
      // Predicated region
      $region21: #{gesture3dnet_forward.14} parent=11 // pred_check
        %p214 = pneg %p167
      $region22: #{gesture3dnet_forward.14} parent=11 // pred_check_branch
        %216 = sbr.rel (%p214) target = $region24
      $region23: #{gesture3dnet_forward.14} parent=11 // pred_region
        _
      $region24: #{gesture3dnet_forward.14} parent=11 // pred_fallthru
        _
    $region12: #{gesture3dnet_forward.14} parent=5 // pred_fallthru
      _
    %p217 = scmp.lt.s32.totalorder %s12, 12
    // Predicated region
    $region25: #{gesture3dnet_forward.14} parent=5 // pred_check
      %p218 = pneg %p217
    $region26: #{gesture3dnet_forward.14} parent=5 // pred_check_branch
      %220 = sbr.rel (%p218) target = $region28
    $region27: #{gesture3dnet_forward.14} parent=5 // pred_region
      // Predicated region
      $region29: #{gesture3dnet_forward.14} parent=27 // pred_check
        %p221 = pneg %p46
      $region30: #{gesture3dnet_forward.14} parent=27 // pred_check_branch
        %223 = sbr.rel (%p221) target = $region32
      $region31: #{gesture3dnet_forward.14} parent=27 // pred_region
        %s224 = sadd.s32 %s19, %s20
        %p225 = scmp.lt.s32.totalorder %s224, 5
        %s226 = scalar_select %p225, %s224, 5
        %s227 = smul.addr %s226, 18
        %s228 = scalar_lea.vmem %s0, %s227
        %s229 = sadd.s32 %s19, %s20
      $region32: #{gesture3dnet_forward.14} parent=27 // pred_fallthru
        _
      // Predicated region
      $region33: #{gesture3dnet_forward.14} parent=27 // pred_check
        %p230 = pneg %p72
      $region34: #{gesture3dnet_forward.14} parent=27 // pred_check_branch
        %232 = sbr.rel (%p230) target = $region36
      $region35: #{gesture3dnet_forward.14} parent=27 // pred_region
        %p233 = scmp.lt.s32.totalorder %s20, 2
        %s234 = scalar_select %p233, %s20, 2
        %s235 = smul.addr %s234, 576
        %s236 = smul.addr %s235, 4
        %s237 = scalar_lea.vmem %s1, %s236
      $region36: #{gesture3dnet_forward.14} parent=27 // pred_fallthru
        _
      // Predicated region
      $region37: #{gesture3dnet_forward.14} parent=27 // pred_check
        %p238 = pneg %p119
      $region38: #{gesture3dnet_forward.14} parent=27 // pred_check_branch
        %240 = sbr.rel (%p238) target = $region40
      $region39: #{gesture3dnet_forward.14} parent=27 // pred_region
        %p241 = scmp.lt.s32.totalorder %s19, 3
        %s242 = scalar_select %p241, %s19, 3
        %s243 = scalar_lea.vmem %s3, %s242
      $region40: #{gesture3dnet_forward.14} parent=27 // pred_fallthru
        _
    $region28: #{gesture3dnet_forward.14} parent=5 // pred_fallthru
      _
    %p244 = scmp.le.s32.totalorder 1, %s12
    %p245 = scmp.lt.s32.totalorder %s12, 13
    %p246 = pnand %p244, %p245
    %p247 = pneg %p246
    // Predicated region
    $region41: #{gesture3dnet_forward.14} parent=5 // pred_check
      _
    $region42: #{gesture3dnet_forward.14} parent=5 // pred_check_branch
      %249 = sbr.rel (%p246) target = $region44
    $region43: #{gesture3dnet_forward.14} parent=5 // pred_region
      %s250 = ssub.s32 %s12, 1
      %s251 = sadd.s32 %s21, %s22
      %p252 = scmp.lt.s32.totalorder %s251, 5
      %s253 = scalar_select %p252, %s251, 5
      %s254 = smul.addr %s253, 18
      %s255 = scalar_lea.vmem %s0, %s254
      %p256 = pneg %p52
      %p257 = pneg %p49
      %p258 = scmp.lt.s32.totalorder %s22, 2
      %s259 = scalar_select %p258, %s22, 2
      %s260 = smul.addr %s259, 576
      %s261 = smul.addr %s260, 4
      %s262 = scalar_lea.vmem %s1, %s261
      %p263 = pneg %p78
      %p264 = pneg %p75
      %p265 = pneg %p99
      %p266 = pneg %p96
      %p267 = scmp.lt.s32.totalorder %s21, 3
      %s268 = scalar_select %p267, %s21, 3
      %s269 = scalar_lea.vmem %s3, %s268
      %p270 = pneg %p125
      %p271 = pneg %p122
      %p272 = pneg %p146
      %p273 = pneg %p143
      %p274 = pneg %p167
      %p275 = pneg %p164
      %p276 = pneg %p193
      %p277 = pneg %p190
      %p278 = scmp.lt.s32.totalorder %s21, 3
      %s279 = scalar_select %p278, %s21, 3
      %s280 = smul.addr %s279, 2
      %s281 = scalar_lea.vmem %s6, %s280
      %s282 = sadd.s32 %s21, %s22
      %p283 = scmp.lt.s32.totalorder %s282, 5
      %s284 = scalar_select %p283, %s282, 5
      %s285 = smul.addr %s284, 18
      %s286 = scalar_lea.vmem %s0, %s285
      %s287 = sadd.s32 %s21, %s22
      %p288 = scmp.lt.s32.totalorder %s22, 2
      %s289 = scalar_select %p288, %s22, 2
      %s290 = smul.addr %s289, 576
      %s291 = smul.addr %s290, 4
      %s292 = scalar_lea.vmem %s1, %s291
      %p293 = scmp.lt.s32.totalorder %s21, 3
      %s294 = scalar_select %p293, %s21, 3
      %s295 = scalar_lea.vmem %s3, %s294
      %p296 = scmp.lt.s32.totalorder %s21, 3
      %s297 = scalar_select %p296, %s21, 3
      %s298 = smul.addr %s297, 2
      %s299 = scalar_lea.vmem %s6, %s298
      %p300 = scmp.eq.s32.totalorder %s22, 0
      // Predicated region
      $region45: #{gesture3dnet_forward.14} parent=43 // pred_check
        %p301 = pneg %p300
      $region46: #{gesture3dnet_forward.14} parent=43 // pred_check_branch
        %303 = sbr.rel (%p301) target = $region48
      $region47: #{gesture3dnet_forward.14} parent=43 // pred_region
        %304 = vst [vmem:[#allocation2] sm:$0xf] 0.0
      $region48: #{gesture3dnet_forward.14} parent=43 // pred_fallthru
        _
      %v305 = vld [vmem:[#allocation2] sm:$0xf]
      %v306 = vld [vmem:[%s286] sm:$0xff]
      %v307 = vld [vmem:[%s286 + $0x8] sm:$0xff]
      %v308 = vld [vmem:[%s286 + $0x10] sm:$0x3]
      %v309 = vld [vmem:[%s292] sm:$0xff]
      %v310 = vld [vmem:[%s292 + $0x8] sm:$0xff]
      %v311 = vld [vmem:[%s292 + $0x10] sm:$0xff]
      %v312 = vld [vmem:[%s292 + $0x18] sm:$0xff]
      %v313 = vld [vmem:[%s292 + $0x20] sm:$0xff]
      %v314 = vld [vmem:[%s292 + $0x28] sm:$0xff]
      %v315 = vld [vmem:[%s292 + $0x30] sm:$0xff]
      %v316 = vld [vmem:[%s292 + $0x38] sm:$0xff]
      %v317 = vld [vmem:[%s292 + $0x40] sm:$0xff]
      %v318 = vld [vmem:[%s292 + $0x48] sm:$0xff]
      %v319 = vld [vmem:[%s292 + $0x50] sm:$0xff]
      %v320 = vld [vmem:[%s292 + $0x58] sm:$0xff]
      %v321 = vld [vmem:[%s292 + $0x60] sm:$0xff]
      %v322 = vld [vmem:[%s292 + $0x68] sm:$0xff]
      %v323 = vld [vmem:[%s292 + $0x70] sm:$0xff]
      %v324 = vld [vmem:[%s292 + $0x78] sm:$0xff]
      %v325 = vld [vmem:[%s292 + $0x80] sm:$0xff]
      %v326 = vld [vmem:[%s292 + $0x88] sm:$0xff]
      %v327 = vld [vmem:[%s292 + $0x90] sm:$0xff]
      %v328 = vld [vmem:[%s292 + $0x98] sm:$0xff]
      %v329 = vld [vmem:[%s292 + $0xa0] sm:$0xff]
      %v330 = vld [vmem:[%s292 + $0xa8] sm:$0xff]
      %v331 = vld [vmem:[%s292 + $0xb0] sm:$0xff]
      %v332 = vld [vmem:[%s292 + $0xb8] sm:$0xff]
      %v333 = vld [vmem:[%s292 + $0xc0] sm:$0xff]
      %v334 = vld [vmem:[%s292 + $0xc8] sm:$0xff]
      %v335 = vld [vmem:[%s292 + $0xd0] sm:$0xff]
      %v336 = vld [vmem:[%s292 + $0xd8] sm:$0xff]
      %v337 = vld [vmem:[%s292 + $0xe0] sm:$0xff]
      %v338 = vld [vmem:[%s292 + $0xe8] sm:$0xff]
      %v339 = vld [vmem:[%s292 + $0xf0] sm:$0xff]
      %v340 = vld [vmem:[%s292 + $0xf8] sm:$0xff]
      %v341 = vld [vmem:[%s292 + $0x100] sm:$0xff]
      %v342 = vld [vmem:[%s292 + $0x108] sm:$0xff]
      %v343 = vld [vmem:[%s292 + $0x110] sm:$0xff]
      %v344 = vld [vmem:[%s292 + $0x118] sm:$0xff]
      %v345 = vld [vmem:[%s292 + $0x120] sm:$0xff]
      %v346 = vld [vmem:[%s292 + $0x128] sm:$0xff]
      %v347 = vld [vmem:[%s292 + $0x130] sm:$0xff]
      %v348 = vld [vmem:[%s292 + $0x138] sm:$0xff]
      %v349 = vld [vmem:[%s292 + $0x140] sm:$0xff]
      %v350 = vld [vmem:[%s292 + $0x148] sm:$0xff]
      %v351 = vld [vmem:[%s292 + $0x150] sm:$0xff]
      %v352 = vld [vmem:[%s292 + $0x158] sm:$0xff]
      %v353 = vld [vmem:[%s292 + $0x160] sm:$0xff]
      %v354 = vld [vmem:[%s292 + $0x168] sm:$0xff]
      %v355 = vld [vmem:[%s292 + $0x170] sm:$0xff]
      %v356 = vld [vmem:[%s292 + $0x178] sm:$0xff]
      %v357 = vld [vmem:[%s292 + $0x180] sm:$0xff]
      %v358 = vld [vmem:[%s292 + $0x188] sm:$0xff]
      %v359 = vld [vmem:[%s292 + $0x190] sm:$0xff]
      %v360 = vld [vmem:[%s292 + $0x198] sm:$0xff]
      %v361 = vld [vmem:[%s292 + $0x1a0] sm:$0xff]
      %v362 = vld [vmem:[%s292 + $0x1a8] sm:$0xff]
      %v363 = vld [vmem:[%s292 + $0x1b0] sm:$0xff]
      %v364 = vld [vmem:[%s292 + $0x1b8] sm:$0xff]
      %v365 = vld [vmem:[%s292 + $0x1c0] sm:$0xff]
      %v366 = vld [vmem:[%s292 + $0x1c8] sm:$0xff]
      %v367 = vld [vmem:[%s292 + $0x1d0] sm:$0xff]
      %v368 = vld [vmem:[%s292 + $0x1d8] sm:$0xff]
      %v369 = vld [vmem:[%s292 + $0x1e0] sm:$0xff]
      %v370 = vld [vmem:[%s292 + $0x1e8] sm:$0xff]
      %v371 = vld [vmem:[%s292 + $0x1f0] sm:$0xff]
      %v372 = vld [vmem:[%s292 + $0x1f8] sm:$0xff]
      %v373 = vld [vmem:[%s292 + $0x200] sm:$0xff]
      %v374 = vld [vmem:[%s292 + $0x208] sm:$0xff]
      %v375 = vld [vmem:[%s292 + $0x210] sm:$0xff]
      %v376 = vld [vmem:[%s292 + $0x218] sm:$0xff]
      %v377 = vld [vmem:[%s292 + $0x220] sm:$0xff]
      %v378 = vld [vmem:[%s292 + $0x228] sm:$0xff]
      %v379 = vld [vmem:[%s292 + $0x230] sm:$0xff]
      %v380 = vld [vmem:[%s292 + $0x238] sm:$0xff]
      %v381 = vld [vmem:[%s292 + $0x240] sm:$0xff]
      %v382 = vld [vmem:[%s292 + $0x248] sm:$0xff]
      %v383 = vld [vmem:[%s292 + $0x250] sm:$0xff]
      %v384 = vld [vmem:[%s292 + $0x258] sm:$0xff]
      %v385 = vld [vmem:[%s292 + $0x260] sm:$0xff]
      %v386 = vld [vmem:[%s292 + $0x268] sm:$0xff]
      %v387 = vld [vmem:[%s292 + $0x270] sm:$0xff]
      %v388 = vld [vmem:[%s292 + $0x278] sm:$0xff]
      %v389 = vld [vmem:[%s292 + $0x280] sm:$0xff]
      %v390 = vld [vmem:[%s292 + $0x288] sm:$0xff]
      %v391 = vld [vmem:[%s292 + $0x290] sm:$0xff]
      %v392 = vld [vmem:[%s292 + $0x298] sm:$0xff]
      %v393 = vld [vmem:[%s292 + $0x2a0] sm:$0xff]
      %v394 = vld [vmem:[%s292 + $0x2a8] sm:$0xff]
      %v395 = vld [vmem:[%s292 + $0x2b0] sm:$0xff]
      %v396 = vld [vmem:[%s292 + $0x2b8] sm:$0xff]
      %v397 = vld [vmem:[%s292 + $0x2c0] sm:$0xff]
      %v398 = vld [vmem:[%s292 + $0x2c8] sm:$0xff]
      %v399 = vld [vmem:[%s292 + $0x2d0] sm:$0xff]
      %v400 = vld [vmem:[%s292 + $0x2d8] sm:$0xff]
      %v401 = vld [vmem:[%s292 + $0x2e0] sm:$0xff]
      %v402 = vld [vmem:[%s292 + $0x2e8] sm:$0xff]
      %v403 = vld [vmem:[%s292 + $0x2f0] sm:$0xff]
      %v404 = vld [vmem:[%s292 + $0x2f8] sm:$0xff]
      %v405 = vld [vmem:[%s292 + $0x300] sm:$0xff]
      %v406 = vld [vmem:[%s292 + $0x308] sm:$0xff]
      %v407 = vld [vmem:[%s292 + $0x310] sm:$0xff]
      %v408 = vld [vmem:[%s292 + $0x318] sm:$0xff]
      %v409 = vld [vmem:[%s292 + $0x320] sm:$0xff]
      %v410 = vld [vmem:[%s292 + $0x328] sm:$0xff]
      %v411 = vld [vmem:[%s292 + $0x330] sm:$0xff]
      %v412 = vld [vmem:[%s292 + $0x338] sm:$0xff]
      %v413 = vld [vmem:[%s292 + $0x340] sm:$0xff]
      %v414 = vld [vmem:[%s292 + $0x348] sm:$0xff]
      %v415 = vld [vmem:[%s292 + $0x350] sm:$0xff]
      %v416 = vld [vmem:[%s292 + $0x358] sm:$0xff]
      %v417 = vld [vmem:[%s292 + $0x360] sm:$0xff]
      %v418 = vld [vmem:[%s292 + $0x368] sm:$0xff]
      %v419 = vld [vmem:[%s292 + $0x370] sm:$0xff]
      %v420 = vld [vmem:[%s292 + $0x378] sm:$0xff]
      %v421 = vld [vmem:[%s292 + $0x380] sm:$0xff]
      %v422 = vld [vmem:[%s292 + $0x388] sm:$0xff]
      %v423 = vld [vmem:[%s292 + $0x390] sm:$0xff]
      %v424 = vld [vmem:[%s292 + $0x398] sm:$0xff]
      %v425 = vld [vmem:[%s292 + $0x3a0] sm:$0xff]
      %v426 = vld [vmem:[%s292 + $0x3a8] sm:$0xff]
      %v427 = vld [vmem:[%s292 + $0x3b0] sm:$0xff]
      %v428 = vld [vmem:[%s292 + $0x3b8] sm:$0xff]
      %v429 = vld [vmem:[%s292 + $0x3c0] sm:$0xff]
      %v430 = vld [vmem:[%s292 + $0x3c8] sm:$0xff]
      %v431 = vld [vmem:[%s292 + $0x3d0] sm:$0xff]
      %v432 = vld [vmem:[%s292 + $0x3d8] sm:$0xff]
      %v433 = vld [vmem:[%s292 + $0x3e0] sm:$0xff]
      %v434 = vld [vmem:[%s292 + $0x3e8] sm:$0xff]
      %v435 = vld [vmem:[%s292 + $0x3f0] sm:$0xff]
      %v436 = vld [vmem:[%s292 + $0x3f8] sm:$0xff]
      %v437 = vld [vmem:[%s292 + $0x400] sm:$0xff]
      %v438 = vld [vmem:[%s292 + $0x408] sm:$0xff]
      %v439 = vld [vmem:[%s292 + $0x410] sm:$0xff]
      %v440 = vld [vmem:[%s292 + $0x418] sm:$0xff]
      %v441 = vld [vmem:[%s292 + $0x420] sm:$0xff]
      %v442 = vld [vmem:[%s292 + $0x428] sm:$0xff]
      %v443 = vld [vmem:[%s292 + $0x430] sm:$0xff]
      %v444 = vld [vmem:[%s292 + $0x438] sm:$0xff]
      %v445 = vld [vmem:[%s292 + $0x440] sm:$0xff]
      %v446 = vld [vmem:[%s292 + $0x448] sm:$0xff]
      %v447 = vld [vmem:[%s292 + $0x450] sm:$0xff]
      %v448 = vld [vmem:[%s292 + $0x458] sm:$0xff]
      %v449 = vld [vmem:[%s292 + $0x460] sm:$0xff]
      %v450 = vld [vmem:[%s292 + $0x468] sm:$0xff]
      %v451 = vld [vmem:[%s292 + $0x470] sm:$0xff]
      %v452 = vld [vmem:[%s292 + $0x478] sm:$0xff]
      %v453 = vld [vmem:[%s292 + $0x480] sm:$0xff]
      %v454 = vld [vmem:[%s292 + $0x488] sm:$0xff]
      %v455 = vld [vmem:[%s292 + $0x490] sm:$0xff]
      %v456 = vld [vmem:[%s292 + $0x498] sm:$0xff]
      %v457 = vld [vmem:[%s292 + $0x4a0] sm:$0xff]
      %v458 = vld [vmem:[%s292 + $0x4a8] sm:$0xff]
      %v459 = vld [vmem:[%s292 + $0x4b0] sm:$0xff]
      %v460 = vld [vmem:[%s292 + $0x4b8] sm:$0xff]
      %v461 = vld [vmem:[%s292 + $0x4c0] sm:$0xff]
      %v462 = vld [vmem:[%s292 + $0x4c8] sm:$0xff]
      %v463 = vld [vmem:[%s292 + $0x4d0] sm:$0xff]
      %v464 = vld [vmem:[%s292 + $0x4d8] sm:$0xff]
      %v465 = vld [vmem:[%s292 + $0x4e0] sm:$0xff]
      %v466 = vld [vmem:[%s292 + $0x4e8] sm:$0xff]
      %v467 = vld [vmem:[%s292 + $0x4f0] sm:$0xff]
      %v468 = vld [vmem:[%s292 + $0x4f8] sm:$0xff]
      %v469 = vld [vmem:[%s292 + $0x500] sm:$0xff]
      %v470 = vld [vmem:[%s292 + $0x508] sm:$0xff]
      %v471 = vld [vmem:[%s292 + $0x510] sm:$0xff]
      %v472 = vld [vmem:[%s292 + $0x518] sm:$0xff]
      %v473 = vld [vmem:[%s292 + $0x520] sm:$0xff]
      %v474 = vld [vmem:[%s292 + $0x528] sm:$0xff]
      %v475 = vld [vmem:[%s292 + $0x530] sm:$0xff]
      %v476 = vld [vmem:[%s292 + $0x538] sm:$0xff]
      %v477 = vld [vmem:[%s292 + $0x540] sm:$0xff]
      %v478 = vld [vmem:[%s292 + $0x548] sm:$0xff]
      %v479 = vld [vmem:[%s292 + $0x550] sm:$0xff]
      %v480 = vld [vmem:[%s292 + $0x558] sm:$0xff]
      %v481 = vld [vmem:[%s292 + $0x560] sm:$0xff]
      %v482 = vld [vmem:[%s292 + $0x568] sm:$0xff]
      %v483 = vld [vmem:[%s292 + $0x570] sm:$0xff]
      %v484 = vld [vmem:[%s292 + $0x578] sm:$0xff]
      %v485 = vld [vmem:[%s292 + $0x580] sm:$0xff]
      %v486 = vld [vmem:[%s292 + $0x588] sm:$0xff]
      %v487 = vld [vmem:[%s292 + $0x590] sm:$0xff]
      %v488 = vld [vmem:[%s292 + $0x598] sm:$0xff]
      %v489 = vld [vmem:[%s292 + $0x5a0] sm:$0xff]
      %v490 = vld [vmem:[%s292 + $0x5a8] sm:$0xff]
      %v491 = vld [vmem:[%s292 + $0x5b0] sm:$0xff]
      %v492 = vld [vmem:[%s292 + $0x5b8] sm:$0xff]
      %v493 = vld [vmem:[%s292 + $0x5c0] sm:$0xff]
      %v494 = vld [vmem:[%s292 + $0x5c8] sm:$0xff]
      %v495 = vld [vmem:[%s292 + $0x5d0] sm:$0xff]
      %v496 = vld [vmem:[%s292 + $0x5d8] sm:$0xff]
      %v497 = vld [vmem:[%s292 + $0x5e0] sm:$0xff]
      %v498 = vld [vmem:[%s292 + $0x5e8] sm:$0xff]
      %v499 = vld [vmem:[%s292 + $0x5f0] sm:$0xff]
      %v500 = vld [vmem:[%s292 + $0x5f8] sm:$0xff]
      %v501 = vld [vmem:[%s292 + $0x600] sm:$0xff]
      %v502 = vld [vmem:[%s292 + $0x608] sm:$0xff]
      %v503 = vld [vmem:[%s292 + $0x610] sm:$0xff]
      %v504 = vld [vmem:[%s292 + $0x618] sm:$0xff]
      %v505 = vld [vmem:[%s292 + $0x620] sm:$0xff]
      %v506 = vld [vmem:[%s292 + $0x628] sm:$0xff]
      %v507 = vld [vmem:[%s292 + $0x630] sm:$0xff]
      %v508 = vld [vmem:[%s292 + $0x638] sm:$0xff]
      %v509 = vld [vmem:[%s292 + $0x640] sm:$0xff]
      %v510 = vld [vmem:[%s292 + $0x648] sm:$0xff]
      %v511 = vld [vmem:[%s292 + $0x650] sm:$0xff]
      %v512 = vld [vmem:[%s292 + $0x658] sm:$0xff]
      %v513 = vld [vmem:[%s292 + $0x660] sm:$0xff]
      %v514 = vld [vmem:[%s292 + $0x668] sm:$0xff]
      %v515 = vld [vmem:[%s292 + $0x670] sm:$0xff]
      %v516 = vld [vmem:[%s292 + $0x678] sm:$0xff]
      %v517 = vld [vmem:[%s292 + $0x680] sm:$0xff]
      %v518 = vld [vmem:[%s292 + $0x688] sm:$0xff]
      %v519 = vld [vmem:[%s292 + $0x690] sm:$0xff]
      %v520 = vld [vmem:[%s292 + $0x698] sm:$0xff]
      %v521 = vld [vmem:[%s292 + $0x6a0] sm:$0xff]
      %v522 = vld [vmem:[%s292 + $0x6a8] sm:$0xff]
      %v523 = vld [vmem:[%s292 + $0x6b0] sm:$0xff]
      %v524 = vld [vmem:[%s292 + $0x6b8] sm:$0xff]
      %v525 = vld [vmem:[%s292 + $0x6c0] sm:$0xff]
      %v526 = vld [vmem:[%s292 + $0x6c8] sm:$0xff]
      %v527 = vld [vmem:[%s292 + $0x6d0] sm:$0xff]
      %v528 = vld [vmem:[%s292 + $0x6d8] sm:$0xff]
      %v529 = vld [vmem:[%s292 + $0x6e0] sm:$0xff]
      %v530 = vld [vmem:[%s292 + $0x6e8] sm:$0xff]
      %v531 = vld [vmem:[%s292 + $0x6f0] sm:$0xff]
      %v532 = vld [vmem:[%s292 + $0x6f8] sm:$0xff]
      %v533 = vld [vmem:[%s292 + $0x700] sm:$0xff]
      %v534 = vld [vmem:[%s292 + $0x708] sm:$0xff]
      %v535 = vld [vmem:[%s292 + $0x710] sm:$0xff]
      %v536 = vld [vmem:[%s292 + $0x718] sm:$0xff]
      %v537 = vld [vmem:[%s292 + $0x720] sm:$0xff]
      %v538 = vld [vmem:[%s292 + $0x728] sm:$0xff]
      %v539 = vld [vmem:[%s292 + $0x730] sm:$0xff]
      %v540 = vld [vmem:[%s292 + $0x738] sm:$0xff]
      %v541 = vld [vmem:[%s292 + $0x740] sm:$0xff]
      %v542 = vld [vmem:[%s292 + $0x748] sm:$0xff]
      %v543 = vld [vmem:[%s292 + $0x750] sm:$0xff]
      %v544 = vld [vmem:[%s292 + $0x758] sm:$0xff]
      %v545 = vld [vmem:[%s292 + $0x760] sm:$0xff]
      %v546 = vld [vmem:[%s292 + $0x768] sm:$0xff]
      %v547 = vld [vmem:[%s292 + $0x770] sm:$0xff]
      %v548 = vld [vmem:[%s292 + $0x778] sm:$0xff]
      %v549 = vld [vmem:[%s292 + $0x780] sm:$0xff]
      %v550 = vld [vmem:[%s292 + $0x788] sm:$0xff]
      %v551 = vld [vmem:[%s292 + $0x790] sm:$0xff]
      %v552 = vld [vmem:[%s292 + $0x798] sm:$0xff]
      %v553 = vld [vmem:[%s292 + $0x7a0] sm:$0xff]
      %v554 = vld [vmem:[%s292 + $0x7a8] sm:$0xff]
      %v555 = vld [vmem:[%s292 + $0x7b0] sm:$0xff]
      %v556 = vld [vmem:[%s292 + $0x7b8] sm:$0xff]
      %v557 = vld [vmem:[%s292 + $0x7c0] sm:$0xff]
      %v558 = vld [vmem:[%s292 + $0x7c8] sm:$0xff]
      %v559 = vld [vmem:[%s292 + $0x7d0] sm:$0xff]
      %v560 = vld [vmem:[%s292 + $0x7d8] sm:$0xff]
      %v561 = vld [vmem:[%s292 + $0x7e0] sm:$0xff]
      %v562 = vld [vmem:[%s292 + $0x7e8] sm:$0xff]
      %v563 = vld [vmem:[%s292 + $0x7f0] sm:$0xff]
      %v564 = vld [vmem:[%s292 + $0x7f8] sm:$0xff]
      %v565 = vld [vmem:[%s292 + $0x800] sm:$0xff]
      %v566 = vld [vmem:[%s292 + $0x808] sm:$0xff]
      %v567 = vld [vmem:[%s292 + $0x810] sm:$0xff]
      %v568 = vld [vmem:[%s292 + $0x818] sm:$0xff]
      %v569 = vld [vmem:[%s292 + $0x820] sm:$0xff]
      %v570 = vld [vmem:[%s292 + $0x828] sm:$0xff]
      %v571 = vld [vmem:[%s292 + $0x830] sm:$0xff]
      %v572 = vld [vmem:[%s292 + $0x838] sm:$0xff]
      %v573 = vld [vmem:[%s292 + $0x840] sm:$0xff]
      %v574 = vld [vmem:[%s292 + $0x848] sm:$0xff]
      %v575 = vld [vmem:[%s292 + $0x850] sm:$0xff]
      %v576 = vld [vmem:[%s292 + $0x858] sm:$0xff]
      %v577 = vld [vmem:[%s292 + $0x860] sm:$0xff]
      %v578 = vld [vmem:[%s292 + $0x868] sm:$0xff]
      %v579 = vld [vmem:[%s292 + $0x870] sm:$0xff]
      %v580 = vld [vmem:[%s292 + $0x878] sm:$0xff]
      %v581 = vld [vmem:[%s292 + $0x880] sm:$0xff]
      %v582 = vld [vmem:[%s292 + $0x888] sm:$0xff]
      %v583 = vld [vmem:[%s292 + $0x890] sm:$0xff]
      %v584 = vld [vmem:[%s292 + $0x898] sm:$0xff]
      %v585 = vld [vmem:[%s292 + $0x8a0] sm:$0xff]
      %v586 = vld [vmem:[%s292 + $0x8a8] sm:$0xff]
      %v587 = vld [vmem:[%s292 + $0x8b0] sm:$0xff]
      %v588 = vld [vmem:[%s292 + $0x8b8] sm:$0xff]
      %v589 = vld [vmem:[%s292 + $0x8c0] sm:$0xff]
      %v590 = vld [vmem:[%s292 + $0x8c8] sm:$0xff]
      %v591 = vld [vmem:[%s292 + $0x8d0] sm:$0xff]
      %v592 = vld [vmem:[%s292 + $0x8d8] sm:$0xff]
      %v593 = vld [vmem:[%s292 + $0x8e0] sm:$0xff]
      %v594 = vld [vmem:[%s292 + $0x8e8] sm:$0xff]
      %v595 = vld [vmem:[%s292 + $0x8f0] sm:$0xff]
      %v596 = vld [vmem:[%s292 + $0x8f8] sm:$0xff]
      %598 = vst [vmem:[#allocation1] ss:$9 sm:$0xff] %v306
      %v599 = vld [vmem:[#allocation1] sm:$0xff]
      %v600 = vld [vmem:[#allocation1 + $0x9] sm:$0xff]
      %v601 = vld [vmem:[#allocation1 + $0x12] sm:$0xff]
      %v602 = vld [vmem:[#allocation1 + $0x1b] sm:$0xff]
      %v603 = vld [vmem:[#allocation1 + $0x24] sm:$0xff]
      %v604 = vld [vmem:[#allocation1 + $0x2d] sm:$0xff]
      %v605 = vld [vmem:[#allocation1 + $0x36] sm:$0xff]
      %v606 = vld [vmem:[#allocation1 + $0x3f] sm:$0xff]
      %608 = vst [vmem:[#allocation1] ss:$9 sm:$0xff] %v307
      %v609 = vld [vmem:[#allocation1] sm:$0xff]
      %v610 = vld [vmem:[#allocation1 + $0x9] sm:$0xff]
      %v611 = vld [vmem:[#allocation1 + $0x12] sm:$0xff]
      %v612 = vld [vmem:[#allocation1 + $0x1b] sm:$0xff]
      %v613 = vld [vmem:[#allocation1 + $0x24] sm:$0xff]
      %v614 = vld [vmem:[#allocation1 + $0x2d] sm:$0xff]
      %v615 = vld [vmem:[#allocation1 + $0x36] sm:$0xff]
      %v616 = vld [vmem:[#allocation1 + $0x3f] sm:$0xff]
      %618 = vst [vmem:[#allocation1] ss:$9 sm:$0xff] %v308
      %v619 = vld [vmem:[#allocation1] sm:$0xff]
      %v620 = vld [vmem:[#allocation1 + $0x9] sm:$0xff]
      %v927 = vunpack.c.l.b16 %v309
      %v928 = vunpack.c.h.b16 %v309
      %v929 = vunpack.c.l.b16 %v310
      %v930 = vunpack.c.h.b16 %v310
      %v931 = vunpack.c.l.b16 %v311
      %v932 = vunpack.c.h.b16 %v311
      %v933 = vunpack.c.l.b16 %v312
      %v934 = vunpack.c.h.b16 %v312
      %v935 = vunpack.c.l.b16 %v313
      %v936 = vunpack.c.h.b16 %v313
      %v937 = vunpack.c.l.b16 %v314
      %v938 = vunpack.c.h.b16 %v314
      %v939 = vunpack.c.l.b16 %v315
      %v940 = vunpack.c.h.b16 %v315
      %v941 = vunpack.c.l.b16 %v316
      %v942 = vunpack.c.h.b16 %v316
      %v943 = vunpack.c.l.b16 %v317
      %v944 = vunpack.c.h.b16 %v317
      %v945 = vunpack.c.l.b16 %v318
      %v946 = vunpack.c.h.b16 %v318
      %v947 = vunpack.c.l.b16 %v319
      %v948 = vunpack.c.h.b16 %v319
      %v949 = vunpack.c.l.b16 %v320
      %v950 = vunpack.c.h.b16 %v320
      %v951 = vunpack.c.l.b16 %v321
      %v952 = vunpack.c.h.b16 %v321
      %v953 = vunpack.c.l.b16 %v322
      %v954 = vunpack.c.h.b16 %v322
      %v955 = vunpack.c.l.b16 %v323
      %v956 = vunpack.c.h.b16 %v323
      %v957 = vunpack.c.l.b16 %v324
      %v958 = vunpack.c.h.b16 %v324
      %v959 = vunpack.c.l.b16 %v325
      %v960 = vunpack.c.h.b16 %v325
      %v961 = vunpack.c.l.b16 %v326
      %v962 = vunpack.c.h.b16 %v326
      %v963 = vunpack.c.l.b16 %v327
      %v964 = vunpack.c.h.b16 %v327
      %v965 = vunpack.c.l.b16 %v328
      %v966 = vunpack.c.h.b16 %v328
      %v967 = vunpack.c.l.b16 %v329
      %v968 = vunpack.c.h.b16 %v329
      %v969 = vunpack.c.l.b16 %v330
      %v970 = vunpack.c.h.b16 %v330
      %v971 = vunpack.c.l.b16 %v331
      %v972 = vunpack.c.h.b16 %v331
      %v973 = vunpack.c.l.b16 %v332
      %v974 = vunpack.c.h.b16 %v332
      %v975 = vunpack.c.l.b16 %v333
      %v976 = vunpack.c.h.b16 %v333
      %v977 = vunpack.c.l.b16 %v334
      %v978 = vunpack.c.h.b16 %v334
      %v979 = vunpack.c.l.b16 %v335
      %v980 = vunpack.c.h.b16 %v335
      %v981 = vunpack.c.l.b16 %v336
      %v982 = vunpack.c.h.b16 %v336
      %v983 = vunpack.c.l.b16 %v337
      %v984 = vunpack.c.h.b16 %v337
      %v985 = vunpack.c.l.b16 %v338
      %v986 = vunpack.c.h.b16 %v338
      %v987 = vunpack.c.l.b16 %v339
      %v988 = vunpack.c.h.b16 %v339
      %v989 = vunpack.c.l.b16 %v340
      %v990 = vunpack.c.h.b16 %v340
      %v991 = vunpack.c.l.b16 %v341
      %v992 = vunpack.c.h.b16 %v341
      %v993 = vunpack.c.l.b16 %v342
      %v994 = vunpack.c.h.b16 %v342
      %v995 = vunpack.c.l.b16 %v343
      %v996 = vunpack.c.h.b16 %v343
      %v997 = vunpack.c.l.b16 %v344
      %v998 = vunpack.c.h.b16 %v344
      %v999 = vunpack.c.l.b16 %v345
      %v1000 = vunpack.c.h.b16 %v345
      %v1001 = vunpack.c.l.b16 %v346
      %v1002 = vunpack.c.h.b16 %v346
      %v1003 = vunpack.c.l.b16 %v347
      %v1004 = vunpack.c.h.b16 %v347
      %v1005 = vunpack.c.l.b16 %v348
      %v1006 = vunpack.c.h.b16 %v348
      %v1007 = vunpack.c.l.b16 %v349
      %v1008 = vunpack.c.h.b16 %v349
      %v1009 = vunpack.c.l.b16 %v350
      %v1010 = vunpack.c.h.b16 %v350
      %v1011 = vunpack.c.l.b16 %v351
      %v1012 = vunpack.c.h.b16 %v351
      %v1013 = vunpack.c.l.b16 %v352
      %v1014 = vunpack.c.h.b16 %v352
      %v1015 = vunpack.c.l.b16 %v353
      %v1016 = vunpack.c.h.b16 %v353
      %v1017 = vunpack.c.l.b16 %v354
      %v1018 = vunpack.c.h.b16 %v354
      %v1019 = vunpack.c.l.b16 %v355
      %v1020 = vunpack.c.h.b16 %v355
      %v1021 = vunpack.c.l.b16 %v356
      %v1022 = vunpack.c.h.b16 %v356
      %v1023 = vunpack.c.l.b16 %v357
      %v1024 = vunpack.c.h.b16 %v357
      %v1025 = vunpack.c.l.b16 %v358
      %v1026 = vunpack.c.h.b16 %v358
      %v1027 = vunpack.c.l.b16 %v359
      %v1028 = vunpack.c.h.b16 %v359
      %v1029 = vunpack.c.l.b16 %v360
      %v1030 = vunpack.c.h.b16 %v360
      %v1031 = vunpack.c.l.b16 %v361
      %v1032 = vunpack.c.h.b16 %v361
      %v1033 = vunpack.c.l.b16 %v362
      %v1034 = vunpack.c.h.b16 %v362
      %v1035 = vunpack.c.l.b16 %v363
      %v1036 = vunpack.c.h.b16 %v363
      %v1037 = vunpack.c.l.b16 %v364
      %v1038 = vunpack.c.h.b16 %v364
      %v1039 = vunpack.c.l.b16 %v365
      %v1040 = vunpack.c.h.b16 %v365
      %v1041 = vunpack.c.l.b16 %v366
      %v1042 = vunpack.c.h.b16 %v366
      %v1043 = vunpack.c.l.b16 %v367
      %v1044 = vunpack.c.h.b16 %v367
      %v1045 = vunpack.c.l.b16 %v368
      %v1046 = vunpack.c.h.b16 %v368
      %v1047 = vunpack.c.l.b16 %v369
      %v1048 = vunpack.c.h.b16 %v369
      %v1049 = vunpack.c.l.b16 %v370
      %v1050 = vunpack.c.h.b16 %v370
      %v1051 = vunpack.c.l.b16 %v371
      %v1052 = vunpack.c.h.b16 %v371
      %v1053 = vunpack.c.l.b16 %v372
      %v1054 = vunpack.c.h.b16 %v372
      %v1055 = vunpack.c.l.b16 %v373
      %v1056 = vunpack.c.h.b16 %v373
      %v1057 = vunpack.c.l.b16 %v374
      %v1058 = vunpack.c.h.b16 %v374
      %v1059 = vunpack.c.l.b16 %v375
      %v1060 = vunpack.c.h.b16 %v375
      %v1061 = vunpack.c.l.b16 %v376
      %v1062 = vunpack.c.h.b16 %v376
      %v1063 = vunpack.c.l.b16 %v377
      %v1064 = vunpack.c.h.b16 %v377
      %v1065 = vunpack.c.l.b16 %v378
      %v1066 = vunpack.c.h.b16 %v378
      %v1067 = vunpack.c.l.b16 %v379
      %v1068 = vunpack.c.h.b16 %v379
      %v1069 = vunpack.c.l.b16 %v380
      %v1070 = vunpack.c.h.b16 %v380
      %v1071 = vunpack.c.l.b16 %v381
      %v1072 = vunpack.c.h.b16 %v381
      %v1073 = vunpack.c.l.b16 %v382
      %v1074 = vunpack.c.h.b16 %v382
      %v1075 = vunpack.c.l.b16 %v383
      %v1076 = vunpack.c.h.b16 %v383
      %v1077 = vunpack.c.l.b16 %v384
      %v1078 = vunpack.c.h.b16 %v384
      %v1079 = vunpack.c.l.b16 %v385
      %v1080 = vunpack.c.h.b16 %v385
      %v1081 = vunpack.c.l.b16 %v386
      %v1082 = vunpack.c.h.b16 %v386
      %v1083 = vunpack.c.l.b16 %v387
      %v1084 = vunpack.c.h.b16 %v387
      %v1085 = vunpack.c.l.b16 %v388
      %v1086 = vunpack.c.h.b16 %v388
      %v1087 = vunpack.c.l.b16 %v389
      %v1088 = vunpack.c.h.b16 %v389
      %v1089 = vunpack.c.l.b16 %v390
      %v1090 = vunpack.c.h.b16 %v390
      %v1091 = vunpack.c.l.b16 %v391
      %v1092 = vunpack.c.h.b16 %v391
      %v1093 = vunpack.c.l.b16 %v392
      %v1094 = vunpack.c.h.b16 %v392
      %v1095 = vunpack.c.l.b16 %v393
      %v1096 = vunpack.c.h.b16 %v393
      %v1097 = vunpack.c.l.b16 %v394
      %v1098 = vunpack.c.h.b16 %v394
      %v1099 = vunpack.c.l.b16 %v395
      %v1100 = vunpack.c.h.b16 %v395
      %v1101 = vunpack.c.l.b16 %v396
      %v1102 = vunpack.c.h.b16 %v396
      %v1103 = vunpack.c.l.b16 %v397
      %v1104 = vunpack.c.h.b16 %v397
      %v1105 = vunpack.c.l.b16 %v398
      %v1106 = vunpack.c.h.b16 %v398
      %v1107 = vunpack.c.l.b16 %v399
      %v1108 = vunpack.c.h.b16 %v399
      %v1109 = vunpack.c.l.b16 %v400
      %v1110 = vunpack.c.h.b16 %v400
      %v1111 = vunpack.c.l.b16 %v401
      %v1112 = vunpack.c.h.b16 %v401
      %v1113 = vunpack.c.l.b16 %v402
      %v1114 = vunpack.c.h.b16 %v402
      %v1115 = vunpack.c.l.b16 %v403
      %v1116 = vunpack.c.h.b16 %v403
      %v1117 = vunpack.c.l.b16 %v404
      %v1118 = vunpack.c.h.b16 %v404
      %v1119 = vunpack.c.l.b16 %v405
      %v1120 = vunpack.c.h.b16 %v405
      %v1121 = vunpack.c.l.b16 %v406
      %v1122 = vunpack.c.h.b16 %v406
      %v1123 = vunpack.c.l.b16 %v407
      %v1124 = vunpack.c.h.b16 %v407
      %v1125 = vunpack.c.l.b16 %v408
      %v1126 = vunpack.c.h.b16 %v408
      %v1127 = vunpack.c.l.b16 %v409
      %v1128 = vunpack.c.h.b16 %v409
      %v1129 = vunpack.c.l.b16 %v410
      %v1130 = vunpack.c.h.b16 %v410
      %v1131 = vunpack.c.l.b16 %v411
      %v1132 = vunpack.c.h.b16 %v411
      %v1133 = vunpack.c.l.b16 %v412
      %v1134 = vunpack.c.h.b16 %v412
      %v1135 = vunpack.c.l.b16 %v413
      %v1136 = vunpack.c.h.b16 %v413
      %v1137 = vunpack.c.l.b16 %v414
      %v1138 = vunpack.c.h.b16 %v414
      %v1139 = vunpack.c.l.b16 %v415
      %v1140 = vunpack.c.h.b16 %v415
      %v1141 = vunpack.c.l.b16 %v416
      %v1142 = vunpack.c.h.b16 %v416
      %v1143 = vunpack.c.l.b16 %v417
      %v1144 = vunpack.c.h.b16 %v417
      %v1145 = vunpack.c.l.b16 %v418
      %v1146 = vunpack.c.h.b16 %v418
      %v1147 = vunpack.c.l.b16 %v419
      %v1148 = vunpack.c.h.b16 %v419
      %v1149 = vunpack.c.l.b16 %v420
      %v1150 = vunpack.c.h.b16 %v420
      %v1151 = vunpack.c.l.b16 %v421
      %v1152 = vunpack.c.h.b16 %v421
      %v1153 = vunpack.c.l.b16 %v422
      %v1154 = vunpack.c.h.b16 %v422
      %v1155 = vunpack.c.l.b16 %v423
      %v1156 = vunpack.c.h.b16 %v423
      %v1157 = vunpack.c.l.b16 %v424
      %v1158 = vunpack.c.h.b16 %v424
      %v1159 = vunpack.c.l.b16 %v425
      %v1160 = vunpack.c.h.b16 %v425
      %v1161 = vunpack.c.l.b16 %v426
      %v1162 = vunpack.c.h.b16 %v426
      %v1163 = vunpack.c.l.b16 %v427
      %v1164 = vunpack.c.h.b16 %v427
      %v1165 = vunpack.c.l.b16 %v428
      %v1166 = vunpack.c.h.b16 %v428
      %v1167 = vunpack.c.l.b16 %v429
      %v1168 = vunpack.c.h.b16 %v429
      %v1169 = vunpack.c.l.b16 %v430
      %v1170 = vunpack.c.h.b16 %v430
      %v1171 = vunpack.c.l.b16 %v431
      %v1172 = vunpack.c.h.b16 %v431
      %v1173 = vunpack.c.l.b16 %v432
      %v1174 = vunpack.c.h.b16 %v432
      %v1175 = vunpack.c.l.b16 %v433
      %v1176 = vunpack.c.h.b16 %v433
      %v1177 = vunpack.c.l.b16 %v434
      %v1178 = vunpack.c.h.b16 %v434
      %v1179 = vunpack.c.l.b16 %v435
      %v1180 = vunpack.c.h.b16 %v435
      %v1181 = vunpack.c.l.b16 %v436
      %v1182 = vunpack.c.h.b16 %v436
      %v1183 = vunpack.c.l.b16 %v437
      %v1184 = vunpack.c.h.b16 %v437
      %v1185 = vunpack.c.l.b16 %v438
      %v1186 = vunpack.c.h.b16 %v438
      %v1187 = vunpack.c.l.b16 %v439
      %v1188 = vunpack.c.h.b16 %v439
      %v1189 = vunpack.c.l.b16 %v440
      %v1190 = vunpack.c.h.b16 %v440
      %v1191 = vunpack.c.l.b16 %v441
      %v1192 = vunpack.c.h.b16 %v441
      %v1193 = vunpack.c.l.b16 %v442
      %v1194 = vunpack.c.h.b16 %v442
      %v1195 = vunpack.c.l.b16 %v443
      %v1196 = vunpack.c.h.b16 %v443
      %v1197 = vunpack.c.l.b16 %v444
      %v1198 = vunpack.c.h.b16 %v444
      %v1199 = vunpack.c.l.b16 %v445
      %v1200 = vunpack.c.h.b16 %v445
      %v1201 = vunpack.c.l.b16 %v446
      %v1202 = vunpack.c.h.b16 %v446
      %v1203 = vunpack.c.l.b16 %v447
      %v1204 = vunpack.c.h.b16 %v447
      %v1205 = vunpack.c.l.b16 %v448
      %v1206 = vunpack.c.h.b16 %v448
      %v1207 = vunpack.c.l.b16 %v449
      %v1208 = vunpack.c.h.b16 %v449
      %v1209 = vunpack.c.l.b16 %v450
      %v1210 = vunpack.c.h.b16 %v450
      %v1211 = vunpack.c.l.b16 %v451
      %v1212 = vunpack.c.h.b16 %v451
      %v1213 = vunpack.c.l.b16 %v452
      %v1214 = vunpack.c.h.b16 %v452
      %v1215 = vunpack.c.l.b16 %v453
      %v1216 = vunpack.c.h.b16 %v453
      %v1217 = vunpack.c.l.b16 %v454
      %v1218 = vunpack.c.h.b16 %v454
      %v1219 = vunpack.c.l.b16 %v455
      %v1220 = vunpack.c.h.b16 %v455
      %v1221 = vunpack.c.l.b16 %v456
      %v1222 = vunpack.c.h.b16 %v456
      %v1223 = vunpack.c.l.b16 %v457
      %v1224 = vunpack.c.h.b16 %v457
      %v1225 = vunpack.c.l.b16 %v458
      %v1226 = vunpack.c.h.b16 %v458
      %v1227 = vunpack.c.l.b16 %v459
      %v1228 = vunpack.c.h.b16 %v459
      %v1229 = vunpack.c.l.b16 %v460
      %v1230 = vunpack.c.h.b16 %v460
      %v1231 = vunpack.c.l.b16 %v461
      %v1232 = vunpack.c.h.b16 %v461
      %v1233 = vunpack.c.l.b16 %v462
      %v1234 = vunpack.c.h.b16 %v462
      %v1235 = vunpack.c.l.b16 %v463
      %v1236 = vunpack.c.h.b16 %v463
      %v1237 = vunpack.c.l.b16 %v464
      %v1238 = vunpack.c.h.b16 %v464
      %v1239 = vunpack.c.l.b16 %v465
      %v1240 = vunpack.c.h.b16 %v465
      %v1241 = vunpack.c.l.b16 %v466
      %v1242 = vunpack.c.h.b16 %v466
      %v1243 = vunpack.c.l.b16 %v467
      %v1244 = vunpack.c.h.b16 %v467
      %v1245 = vunpack.c.l.b16 %v468
      %v1246 = vunpack.c.h.b16 %v468
      %v1247 = vunpack.c.l.b16 %v469
      %v1248 = vunpack.c.h.b16 %v469
      %v1249 = vunpack.c.l.b16 %v470
      %v1250 = vunpack.c.h.b16 %v470
      %v1251 = vunpack.c.l.b16 %v471
      %v1252 = vunpack.c.h.b16 %v471
      %v1253 = vunpack.c.l.b16 %v472
      %v1254 = vunpack.c.h.b16 %v472
      %v1255 = vunpack.c.l.b16 %v473
      %v1256 = vunpack.c.h.b16 %v473
      %v1257 = vunpack.c.l.b16 %v474
      %v1258 = vunpack.c.h.b16 %v474
      %v1259 = vunpack.c.l.b16 %v475
      %v1260 = vunpack.c.h.b16 %v475
      %v1261 = vunpack.c.l.b16 %v476
      %v1262 = vunpack.c.h.b16 %v476
      %v1263 = vunpack.c.l.b16 %v477
      %v1264 = vunpack.c.h.b16 %v477
      %v1265 = vunpack.c.l.b16 %v478
      %v1266 = vunpack.c.h.b16 %v478
      %v1267 = vunpack.c.l.b16 %v479
      %v1268 = vunpack.c.h.b16 %v479
      %v1269 = vunpack.c.l.b16 %v480
      %v1270 = vunpack.c.h.b16 %v480
      %v1271 = vunpack.c.l.b16 %v481
      %v1272 = vunpack.c.h.b16 %v481
      %v1273 = vunpack.c.l.b16 %v482
      %v1274 = vunpack.c.h.b16 %v482
      %v1275 = vunpack.c.l.b16 %v483
      %v1276 = vunpack.c.h.b16 %v483
      %v1277 = vunpack.c.l.b16 %v484
      %v1278 = vunpack.c.h.b16 %v484
      %v1279 = vunpack.c.l.b16 %v485
      %v1280 = vunpack.c.h.b16 %v485
      %v1281 = vunpack.c.l.b16 %v486
      %v1282 = vunpack.c.h.b16 %v486
      %v1283 = vunpack.c.l.b16 %v487
      %v1284 = vunpack.c.h.b16 %v487
      %v1285 = vunpack.c.l.b16 %v488
      %v1286 = vunpack.c.h.b16 %v488
      %v1287 = vunpack.c.l.b16 %v489
      %v1288 = vunpack.c.h.b16 %v489
      %v1289 = vunpack.c.l.b16 %v490
      %v1290 = vunpack.c.h.b16 %v490
      %v1291 = vunpack.c.l.b16 %v491
      %v1292 = vunpack.c.h.b16 %v491
      %v1293 = vunpack.c.l.b16 %v492
      %v1294 = vunpack.c.h.b16 %v492
      %v1295 = vunpack.c.l.b16 %v493
      %v1296 = vunpack.c.h.b16 %v493
      %v1297 = vunpack.c.l.b16 %v494
      %v1298 = vunpack.c.h.b16 %v494
      %v1299 = vunpack.c.l.b16 %v495
      %v1300 = vunpack.c.h.b16 %v495
      %v1301 = vunpack.c.l.b16 %v496
      %v1302 = vunpack.c.h.b16 %v496
      %v1303 = vunpack.c.l.b16 %v497
      %v1304 = vunpack.c.h.b16 %v497
      %v1305 = vunpack.c.l.b16 %v498
      %v1306 = vunpack.c.h.b16 %v498
      %v1307 = vunpack.c.l.b16 %v499
      %v1308 = vunpack.c.h.b16 %v499
      %v1309 = vunpack.c.l.b16 %v500
      %v1310 = vunpack.c.h.b16 %v500
      %v1311 = vunpack.c.l.b16 %v501
      %v1312 = vunpack.c.h.b16 %v501
      %v1313 = vunpack.c.l.b16 %v502
      %v1314 = vunpack.c.h.b16 %v502
      %v1315 = vunpack.c.l.b16 %v503
      %v1316 = vunpack.c.h.b16 %v503
      %v1317 = vunpack.c.l.b16 %v504
      %v1318 = vunpack.c.h.b16 %v504
      %v1319 = vunpack.c.l.b16 %v505
      %v1320 = vunpack.c.h.b16 %v505
      %v1321 = vunpack.c.l.b16 %v506
      %v1322 = vunpack.c.h.b16 %v506
      %v1323 = vunpack.c.l.b16 %v507
      %v1324 = vunpack.c.h.b16 %v507
      %v1325 = vunpack.c.l.b16 %v508
      %v1326 = vunpack.c.h.b16 %v508
      %v1327 = vunpack.c.l.b16 %v509
      %v1328 = vunpack.c.h.b16 %v509
      %v1329 = vunpack.c.l.b16 %v510
      %v1330 = vunpack.c.h.b16 %v510
      %v1331 = vunpack.c.l.b16 %v511
      %v1332 = vunpack.c.h.b16 %v511
      %v1333 = vunpack.c.l.b16 %v512
      %v1334 = vunpack.c.h.b16 %v512
      %v1335 = vunpack.c.l.b16 %v513
      %v1336 = vunpack.c.h.b16 %v513
      %v1337 = vunpack.c.l.b16 %v514
      %v1338 = vunpack.c.h.b16 %v514
      %v1339 = vunpack.c.l.b16 %v515
      %v1340 = vunpack.c.h.b16 %v515
      %v1341 = vunpack.c.l.b16 %v516
      %v1342 = vunpack.c.h.b16 %v516
      %v1343 = vunpack.c.l.b16 %v517
      %v1344 = vunpack.c.h.b16 %v517
      %v1345 = vunpack.c.l.b16 %v518
      %v1346 = vunpack.c.h.b16 %v518
      %v1347 = vunpack.c.l.b16 %v519
      %v1348 = vunpack.c.h.b16 %v519
      %v1349 = vunpack.c.l.b16 %v520
      %v1350 = vunpack.c.h.b16 %v520
      %v1351 = vunpack.c.l.b16 %v521
      %v1352 = vunpack.c.h.b16 %v521
      %v1353 = vunpack.c.l.b16 %v522
      %v1354 = vunpack.c.h.b16 %v522
      %v1355 = vunpack.c.l.b16 %v523
      %v1356 = vunpack.c.h.b16 %v523
      %v1357 = vunpack.c.l.b16 %v524
      %v1358 = vunpack.c.h.b16 %v524
      %v1359 = vunpack.c.l.b16 %v525
      %v1360 = vunpack.c.h.b16 %v525
      %v1361 = vunpack.c.l.b16 %v526
      %v1362 = vunpack.c.h.b16 %v526
      %v1363 = vunpack.c.l.b16 %v527
      %v1364 = vunpack.c.h.b16 %v527
      %v1365 = vunpack.c.l.b16 %v528
      %v1366 = vunpack.c.h.b16 %v528
      %v1367 = vunpack.c.l.b16 %v529
      %v1368 = vunpack.c.h.b16 %v529
      %v1369 = vunpack.c.l.b16 %v530
      %v1370 = vunpack.c.h.b16 %v530
      %v1371 = vunpack.c.l.b16 %v531
      %v1372 = vunpack.c.h.b16 %v531
      %v1373 = vunpack.c.l.b16 %v532
      %v1374 = vunpack.c.h.b16 %v532
      %v1375 = vunpack.c.l.b16 %v533
      %v1376 = vunpack.c.h.b16 %v533
      %v1377 = vunpack.c.l.b16 %v534
      %v1378 = vunpack.c.h.b16 %v534
      %v1379 = vunpack.c.l.b16 %v535
      %v1380 = vunpack.c.h.b16 %v535
      %v1381 = vunpack.c.l.b16 %v536
      %v1382 = vunpack.c.h.b16 %v536
      %v1383 = vunpack.c.l.b16 %v537
      %v1384 = vunpack.c.h.b16 %v537
      %v1385 = vunpack.c.l.b16 %v538
      %v1386 = vunpack.c.h.b16 %v538
      %v1387 = vunpack.c.l.b16 %v539
      %v1388 = vunpack.c.h.b16 %v539
      %v1389 = vunpack.c.l.b16 %v540
      %v1390 = vunpack.c.h.b16 %v540
      %v1391 = vunpack.c.l.b16 %v541
      %v1392 = vunpack.c.h.b16 %v541
      %v1393 = vunpack.c.l.b16 %v542
      %v1394 = vunpack.c.h.b16 %v542
      %v1395 = vunpack.c.l.b16 %v543
      %v1396 = vunpack.c.h.b16 %v543
      %v1397 = vunpack.c.l.b16 %v544
      %v1398 = vunpack.c.h.b16 %v544
      %v1399 = vunpack.c.l.b16 %v545
      %v1400 = vunpack.c.h.b16 %v545
      %v1401 = vunpack.c.l.b16 %v546
      %v1402 = vunpack.c.h.b16 %v546
      %v1403 = vunpack.c.l.b16 %v547
      %v1404 = vunpack.c.h.b16 %v547
      %v1405 = vunpack.c.l.b16 %v548
      %v1406 = vunpack.c.h.b16 %v548
      %v1407 = vunpack.c.l.b16 %v549
      %v1408 = vunpack.c.h.b16 %v549
      %v1409 = vunpack.c.l.b16 %v550
      %v1410 = vunpack.c.h.b16 %v550
      %v1411 = vunpack.c.l.b16 %v551
      %v1412 = vunpack.c.h.b16 %v551
      %v1413 = vunpack.c.l.b16 %v552
      %v1414 = vunpack.c.h.b16 %v552
      %v1415 = vunpack.c.l.b16 %v553
      %v1416 = vunpack.c.h.b16 %v553
      %v1417 = vunpack.c.l.b16 %v554
      %v1418 = vunpack.c.h.b16 %v554
      %v1419 = vunpack.c.l.b16 %v555
      %v1420 = vunpack.c.h.b16 %v555
      %v1421 = vunpack.c.l.b16 %v556
      %v1422 = vunpack.c.h.b16 %v556
      %v1423 = vunpack.c.l.b16 %v557
      %v1424 = vunpack.c.h.b16 %v557
      %v1425 = vunpack.c.l.b16 %v558
      %v1426 = vunpack.c.h.b16 %v558
      %v1427 = vunpack.c.l.b16 %v559
      %v1428 = vunpack.c.h.b16 %v559
      %v1429 = vunpack.c.l.b16 %v560
      %v1430 = vunpack.c.h.b16 %v560
      %v1431 = vunpack.c.l.b16 %v561
      %v1432 = vunpack.c.h.b16 %v561
      %v1433 = vunpack.c.l.b16 %v562
      %v1434 = vunpack.c.h.b16 %v562
      %v1435 = vunpack.c.l.b16 %v563
      %v1436 = vunpack.c.h.b16 %v563
      %v1437 = vunpack.c.l.b16 %v564
      %v1438 = vunpack.c.h.b16 %v564
      %v1439 = vunpack.c.l.b16 %v565
      %v1440 = vunpack.c.h.b16 %v565
      %v1441 = vunpack.c.l.b16 %v566
      %v1442 = vunpack.c.h.b16 %v566
      %v1443 = vunpack.c.l.b16 %v567
      %v1444 = vunpack.c.h.b16 %v567
      %v1445 = vunpack.c.l.b16 %v568
      %v1446 = vunpack.c.h.b16 %v568
      %v1447 = vunpack.c.l.b16 %v569
      %v1448 = vunpack.c.h.b16 %v569
      %v1449 = vunpack.c.l.b16 %v570
      %v1450 = vunpack.c.h.b16 %v570
      %v1451 = vunpack.c.l.b16 %v571
      %v1452 = vunpack.c.h.b16 %v571
      %v1453 = vunpack.c.l.b16 %v572
      %v1454 = vunpack.c.h.b16 %v572
      %v1455 = vunpack.c.l.b16 %v573
      %v1456 = vunpack.c.h.b16 %v573
      %v1457 = vunpack.c.l.b16 %v574
      %v1458 = vunpack.c.h.b16 %v574
      %v1459 = vunpack.c.l.b16 %v575
      %v1460 = vunpack.c.h.b16 %v575
      %v1461 = vunpack.c.l.b16 %v576
      %v1462 = vunpack.c.h.b16 %v576
      %v1463 = vunpack.c.l.b16 %v577
      %v1464 = vunpack.c.h.b16 %v577
      %v1465 = vunpack.c.l.b16 %v578
      %v1466 = vunpack.c.h.b16 %v578
      %v1467 = vunpack.c.l.b16 %v579
      %v1468 = vunpack.c.h.b16 %v579
      %v1469 = vunpack.c.l.b16 %v580
      %v1470 = vunpack.c.h.b16 %v580
      %v1471 = vunpack.c.l.b16 %v581
      %v1472 = vunpack.c.h.b16 %v581
      %v1473 = vunpack.c.l.b16 %v582
      %v1474 = vunpack.c.h.b16 %v582
      %v1475 = vunpack.c.l.b16 %v583
      %v1476 = vunpack.c.h.b16 %v583
      %v1477 = vunpack.c.l.b16 %v584
      %v1478 = vunpack.c.h.b16 %v584
      %v1479 = vunpack.c.l.b16 %v585
      %v1480 = vunpack.c.h.b16 %v585
      %v1481 = vunpack.c.l.b16 %v586
      %v1482 = vunpack.c.h.b16 %v586
      %v1483 = vunpack.c.l.b16 %v587
      %v1484 = vunpack.c.h.b16 %v587
      %v1485 = vunpack.c.l.b16 %v588
      %v1486 = vunpack.c.h.b16 %v588
      %v1487 = vunpack.c.l.b16 %v589
      %v1488 = vunpack.c.h.b16 %v589
      %v1489 = vunpack.c.l.b16 %v590
      %v1490 = vunpack.c.h.b16 %v590
      %v1491 = vunpack.c.l.b16 %v591
      %v1492 = vunpack.c.h.b16 %v591
      %v1493 = vunpack.c.l.b16 %v592
      %v1494 = vunpack.c.h.b16 %v592
      %v1495 = vunpack.c.l.b16 %v593
      %v1496 = vunpack.c.h.b16 %v593
      %v1497 = vunpack.c.l.b16 %v594
      %v1498 = vunpack.c.h.b16 %v594
      %v1499 = vunpack.c.l.b16 %v595
      %v1500 = vunpack.c.h.b16 %v595
      %v1501 = vunpack.c.l.b16 %v596
      %v1502 = vunpack.c.h.b16 %v596
      %v1503 = vpack.c.b16 %v929, %v927
      %v1504 = vpack.c.b16 %v930, %v928
      %v1505 = vpack.c.b16 %v933, %v931
      %v1506 = vpack.c.b16 %v934, %v932
      %v1507 = vpack.c.b16 %v937, %v935
      %v1508 = vpack.c.b16 %v938, %v936
      %v1509 = vpack.c.b16 %v941, %v939
      %v1510 = vpack.c.b16 %v942, %v940
      %v1511 = vpack.c.b16 %v945, %v943
      %v1512 = vpack.c.b16 %v946, %v944
      %v1513 = vpack.c.b16 %v949, %v947
      %v1514 = vpack.c.b16 %v950, %v948
      %v1515 = vpack.c.b16 %v953, %v951
      %v1516 = vpack.c.b16 %v954, %v952
      %v1517 = vpack.c.b16 %v957, %v955
      %v1518 = vpack.c.b16 %v958, %v956
      %v1519 = vpack.c.b16 %v961, %v959
      %v1520 = vpack.c.b16 %v962, %v960
      %v1521 = vpack.c.b16 %v965, %v963
      %v1522 = vpack.c.b16 %v966, %v964
      %v1523 = vpack.c.b16 %v969, %v967
      %v1524 = vpack.c.b16 %v970, %v968
      %v1525 = vpack.c.b16 %v973, %v971
      %v1526 = vpack.c.b16 %v974, %v972
      %v1527 = vpack.c.b16 %v977, %v975
      %v1528 = vpack.c.b16 %v978, %v976
      %v1529 = vpack.c.b16 %v981, %v979
      %v1530 = vpack.c.b16 %v982, %v980
      %v1531 = vpack.c.b16 %v985, %v983
      %v1532 = vpack.c.b16 %v986, %v984
      %v1533 = vpack.c.b16 %v989, %v987
      %v1534 = vpack.c.b16 %v990, %v988
      %v1535 = vpack.c.b16 %v993, %v991
      %v1536 = vpack.c.b16 %v994, %v992
      %v1537 = vpack.c.b16 %v997, %v995
      %v1538 = vpack.c.b16 %v998, %v996
      %v1539 = vpack.c.b16 %v1001, %v999
      %v1540 = vpack.c.b16 %v1002, %v1000
      %v1541 = vpack.c.b16 %v1005, %v1003
      %v1542 = vpack.c.b16 %v1006, %v1004
      %v1543 = vpack.c.b16 %v1009, %v1007
      %v1544 = vpack.c.b16 %v1010, %v1008
      %v1545 = vpack.c.b16 %v1013, %v1011
      %v1546 = vpack.c.b16 %v1014, %v1012
      %v1547 = vpack.c.b16 %v1017, %v1015
      %v1548 = vpack.c.b16 %v1018, %v1016
      %v1549 = vpack.c.b16 %v1021, %v1019
      %v1550 = vpack.c.b16 %v1022, %v1020
      %v1551 = vpack.c.b16 %v1025, %v1023
      %v1552 = vpack.c.b16 %v1026, %v1024
      %v1553 = vpack.c.b16 %v1029, %v1027
      %v1554 = vpack.c.b16 %v1030, %v1028
      %v1555 = vpack.c.b16 %v1033, %v1031
      %v1556 = vpack.c.b16 %v1034, %v1032
      %v1557 = vpack.c.b16 %v1037, %v1035
      %v1558 = vpack.c.b16 %v1038, %v1036
      %v1559 = vpack.c.b16 %v1041, %v1039
      %v1560 = vpack.c.b16 %v1042, %v1040
      %v1561 = vpack.c.b16 %v1045, %v1043
      %v1562 = vpack.c.b16 %v1046, %v1044
      %v1563 = vpack.c.b16 %v1049, %v1047
      %v1564 = vpack.c.b16 %v1050, %v1048
      %v1565 = vpack.c.b16 %v1053, %v1051
      %v1566 = vpack.c.b16 %v1054, %v1052
      %v1567 = vpack.c.b16 %v1057, %v1055
      %v1568 = vpack.c.b16 %v1058, %v1056
      %v1569 = vpack.c.b16 %v1061, %v1059
      %v1570 = vpack.c.b16 %v1062, %v1060
      %v1571 = vpack.c.b16 %v1065, %v1063
      %v1572 = vpack.c.b16 %v1066, %v1064
      %v1573 = vpack.c.b16 %v1069, %v1067
      %v1574 = vpack.c.b16 %v1070, %v1068
      %v1575 = vpack.c.b16 %v1073, %v1071
      %v1576 = vpack.c.b16 %v1074, %v1072
      %v1577 = vpack.c.b16 %v1077, %v1075
      %v1578 = vpack.c.b16 %v1078, %v1076
      %v1579 = vpack.c.b16 %v1081, %v1079
      %v1580 = vpack.c.b16 %v1082, %v1080
      %v1581 = vpack.c.b16 %v1085, %v1083
      %v1582 = vpack.c.b16 %v1086, %v1084
      %v1583 = vpack.c.b16 %v1089, %v1087
      %v1584 = vpack.c.b16 %v1090, %v1088
      %v1585 = vpack.c.b16 %v1093, %v1091
      %v1586 = vpack.c.b16 %v1094, %v1092
      %v1587 = vpack.c.b16 %v1097, %v1095
      %v1588 = vpack.c.b16 %v1098, %v1096
      %v1589 = vpack.c.b16 %v1101, %v1099
      %v1590 = vpack.c.b16 %v1102, %v1100
      %v1591 = vpack.c.b16 %v1105, %v1103
      %v1592 = vpack.c.b16 %v1106, %v1104
      %v1593 = vpack.c.b16 %v1109, %v1107
      %v1594 = vpack.c.b16 %v1110, %v1108
      %v1595 = vpack.c.b16 %v1113, %v1111
      %v1596 = vpack.c.b16 %v1114, %v1112
      %v1597 = vpack.c.b16 %v1117, %v1115
      %v1598 = vpack.c.b16 %v1118, %v1116
      %v1599 = vpack.c.b16 %v1121, %v1119
      %v1600 = vpack.c.b16 %v1122, %v1120
      %v1601 = vpack.c.b16 %v1125, %v1123
      %v1602 = vpack.c.b16 %v1126, %v1124
      %v1603 = vpack.c.b16 %v1129, %v1127
      %v1604 = vpack.c.b16 %v1130, %v1128
      %v1605 = vpack.c.b16 %v1133, %v1131
      %v1606 = vpack.c.b16 %v1134, %v1132
      %v1607 = vpack.c.b16 %v1137, %v1135
      %v1608 = vpack.c.b16 %v1138, %v1136
      %v1609 = vpack.c.b16 %v1141, %v1139
      %v1610 = vpack.c.b16 %v1142, %v1140
      %v1611 = vpack.c.b16 %v1145, %v1143
      %v1612 = vpack.c.b16 %v1146, %v1144
      %v1613 = vpack.c.b16 %v1149, %v1147
      %v1614 = vpack.c.b16 %v1150, %v1148
      %v1615 = vpack.c.b16 %v1153, %v1151
      %v1616 = vpack.c.b16 %v1154, %v1152
      %v1617 = vpack.c.b16 %v1157, %v1155
      %v1618 = vpack.c.b16 %v1158, %v1156
      %v1619 = vpack.c.b16 %v1161, %v1159
      %v1620 = vpack.c.b16 %v1162, %v1160
      %v1621 = vpack.c.b16 %v1165, %v1163
      %v1622 = vpack.c.b16 %v1166, %v1164
      %v1623 = vpack.c.b16 %v1169, %v1167
      %v1624 = vpack.c.b16 %v1170, %v1168
      %v1625 = vpack.c.b16 %v1173, %v1171
      %v1626 = vpack.c.b16 %v1174, %v1172
      %v1627 = vpack.c.b16 %v1177, %v1175
      %v1628 = vpack.c.b16 %v1178, %v1176
      %v1629 = vpack.c.b16 %v1181, %v1179
      %v1630 = vpack.c.b16 %v1182, %v1180
      %v1631 = vpack.c.b16 %v1185, %v1183
      %v1632 = vpack.c.b16 %v1186, %v1184
      %v1633 = vpack.c.b16 %v1189, %v1187
      %v1634 = vpack.c.b16 %v1190, %v1188
      %v1635 = vpack.c.b16 %v1193, %v1191
      %v1636 = vpack.c.b16 %v1194, %v1192
      %v1637 = vpack.c.b16 %v1197, %v1195
      %v1638 = vpack.c.b16 %v1198, %v1196
      %v1639 = vpack.c.b16 %v1201, %v1199
      %v1640 = vpack.c.b16 %v1202, %v1200
      %v1641 = vpack.c.b16 %v1205, %v1203
      %v1642 = vpack.c.b16 %v1206, %v1204
      %v1643 = vpack.c.b16 %v1209, %v1207
      %v1644 = vpack.c.b16 %v1210, %v1208
      %v1645 = vpack.c.b16 %v1213, %v1211
      %v1646 = vpack.c.b16 %v1214, %v1212
      %v1647 = vpack.c.b16 %v1217, %v1215
      %v1648 = vpack.c.b16 %v1218, %v1216
      %v1649 = vpack.c.b16 %v1221, %v1219
      %v1650 = vpack.c.b16 %v1222, %v1220
      %v1651 = vpack.c.b16 %v1225, %v1223
      %v1652 = vpack.c.b16 %v1226, %v1224
      %v1653 = vpack.c.b16 %v1229, %v1227
      %v1654 = vpack.c.b16 %v1230, %v1228
      %v1655 = vpack.c.b16 %v1233, %v1231
      %v1656 = vpack.c.b16 %v1234, %v1232
      %v1657 = vpack.c.b16 %v1237, %v1235
      %v1658 = vpack.c.b16 %v1238, %v1236
      %v1659 = vpack.c.b16 %v1241, %v1239
      %v1660 = vpack.c.b16 %v1242, %v1240
      %v1661 = vpack.c.b16 %v1245, %v1243
      %v1662 = vpack.c.b16 %v1246, %v1244
      %v1663 = vpack.c.b16 %v1249, %v1247
      %v1664 = vpack.c.b16 %v1250, %v1248
      %v1665 = vpack.c.b16 %v1253, %v1251
      %v1666 = vpack.c.b16 %v1254, %v1252
      %v1667 = vpack.c.b16 %v1257, %v1255
      %v1668 = vpack.c.b16 %v1258, %v1256
      %v1669 = vpack.c.b16 %v1261, %v1259
      %v1670 = vpack.c.b16 %v1262, %v1260
      %v1671 = vpack.c.b16 %v1265, %v1263
      %v1672 = vpack.c.b16 %v1266, %v1264
      %v1673 = vpack.c.b16 %v1269, %v1267
      %v1674 = vpack.c.b16 %v1270, %v1268
      %v1675 = vpack.c.b16 %v1273, %v1271
      %v1676 = vpack.c.b16 %v1274, %v1272
      %v1677 = vpack.c.b16 %v1277, %v1275
      %v1678 = vpack.c.b16 %v1278, %v1276
      %v1679 = vpack.c.b16 %v1281, %v1279
      %v1680 = vpack.c.b16 %v1282, %v1280
      %v1681 = vpack.c.b16 %v1285, %v1283
      %v1682 = vpack.c.b16 %v1286, %v1284
      %v1683 = vpack.c.b16 %v1289, %v1287
      %v1684 = vpack.c.b16 %v1290, %v1288
      %v1685 = vpack.c.b16 %v1293, %v1291
      %v1686 = vpack.c.b16 %v1294, %v1292
      %v1687 = vpack.c.b16 %v1297, %v1295
      %v1688 = vpack.c.b16 %v1298, %v1296
      %v1689 = vpack.c.b16 %v1301, %v1299
      %v1690 = vpack.c.b16 %v1302, %v1300
      %v1691 = vpack.c.b16 %v1305, %v1303
      %v1692 = vpack.c.b16 %v1306, %v1304
      %v1693 = vpack.c.b16 %v1309, %v1307
      %v1694 = vpack.c.b16 %v1310, %v1308
      %v1695 = vpack.c.b16 %v1313, %v1311
      %v1696 = vpack.c.b16 %v1314, %v1312
      %v1697 = vpack.c.b16 %v1317, %v1315
      %v1698 = vpack.c.b16 %v1318, %v1316
      %v1699 = vpack.c.b16 %v1321, %v1319
      %v1700 = vpack.c.b16 %v1322, %v1320
      %v1701 = vpack.c.b16 %v1325, %v1323
      %v1702 = vpack.c.b16 %v1326, %v1324
      %v1703 = vpack.c.b16 %v1329, %v1327
      %v1704 = vpack.c.b16 %v1330, %v1328
      %v1705 = vpack.c.b16 %v1333, %v1331
      %v1706 = vpack.c.b16 %v1334, %v1332
      %v1707 = vpack.c.b16 %v1337, %v1335
      %v1708 = vpack.c.b16 %v1338, %v1336
      %v1709 = vpack.c.b16 %v1341, %v1339
      %v1710 = vpack.c.b16 %v1342, %v1340
      %v1711 = vpack.c.b16 %v1345, %v1343
      %v1712 = vpack.c.b16 %v1346, %v1344
      %v1713 = vpack.c.b16 %v1349, %v1347
      %v1714 = vpack.c.b16 %v1350, %v1348
      %v1715 = vpack.c.b16 %v1353, %v1351
      %v1716 = vpack.c.b16 %v1354, %v1352
      %v1717 = vpack.c.b16 %v1357, %v1355
      %v1718 = vpack.c.b16 %v1358, %v1356
      %v1719 = vpack.c.b16 %v1361, %v1359
      %v1720 = vpack.c.b16 %v1362, %v1360
      %v1721 = vpack.c.b16 %v1365, %v1363
      %v1722 = vpack.c.b16 %v1366, %v1364
      %v1723 = vpack.c.b16 %v1369, %v1367
      %v1724 = vpack.c.b16 %v1370, %v1368
      %v1725 = vpack.c.b16 %v1373, %v1371
      %v1726 = vpack.c.b16 %v1374, %v1372
      %v1727 = vpack.c.b16 %v1377, %v1375
      %v1728 = vpack.c.b16 %v1378, %v1376
      %v1729 = vpack.c.b16 %v1381, %v1379
      %v1730 = vpack.c.b16 %v1382, %v1380
      %v1731 = vpack.c.b16 %v1385, %v1383
      %v1732 = vpack.c.b16 %v1386, %v1384
      %v1733 = vpack.c.b16 %v1389, %v1387
      %v1734 = vpack.c.b16 %v1390, %v1388
      %v1735 = vpack.c.b16 %v1393, %v1391
      %v1736 = vpack.c.b16 %v1394, %v1392
      %v1737 = vpack.c.b16 %v1397, %v1395
      %v1738 = vpack.c.b16 %v1398, %v1396
      %v1739 = vpack.c.b16 %v1401, %v1399
      %v1740 = vpack.c.b16 %v1402, %v1400
      %v1741 = vpack.c.b16 %v1405, %v1403
      %v1742 = vpack.c.b16 %v1406, %v1404
      %v1743 = vpack.c.b16 %v1409, %v1407
      %v1744 = vpack.c.b16 %v1410, %v1408
      %v1745 = vpack.c.b16 %v1413, %v1411
      %v1746 = vpack.c.b16 %v1414, %v1412
      %v1747 = vpack.c.b16 %v1417, %v1415
      %v1748 = vpack.c.b16 %v1418, %v1416
      %v1749 = vpack.c.b16 %v1421, %v1419
      %v1750 = vpack.c.b16 %v1422, %v1420
      %v1751 = vpack.c.b16 %v1425, %v1423
      %v1752 = vpack.c.b16 %v1426, %v1424
      %v1753 = vpack.c.b16 %v1429, %v1427
      %v1754 = vpack.c.b16 %v1430, %v1428
      %v1755 = vpack.c.b16 %v1433, %v1431
      %v1756 = vpack.c.b16 %v1434, %v1432
      %v1757 = vpack.c.b16 %v1437, %v1435
      %v1758 = vpack.c.b16 %v1438, %v1436
      %v1759 = vpack.c.b16 %v1441, %v1439
      %v1760 = vpack.c.b16 %v1442, %v1440
      %v1761 = vpack.c.b16 %v1445, %v1443
      %v1762 = vpack.c.b16 %v1446, %v1444
      %v1763 = vpack.c.b16 %v1449, %v1447
      %v1764 = vpack.c.b16 %v1450, %v1448
      %v1765 = vpack.c.b16 %v1453, %v1451
      %v1766 = vpack.c.b16 %v1454, %v1452
      %v1767 = vpack.c.b16 %v1457, %v1455
      %v1768 = vpack.c.b16 %v1458, %v1456
      %v1769 = vpack.c.b16 %v1461, %v1459
      %v1770 = vpack.c.b16 %v1462, %v1460
      %v1771 = vpack.c.b16 %v1465, %v1463
      %v1772 = vpack.c.b16 %v1466, %v1464
      %v1773 = vpack.c.b16 %v1469, %v1467
      %v1774 = vpack.c.b16 %v1470, %v1468
      %v1775 = vpack.c.b16 %v1473, %v1471
      %v1776 = vpack.c.b16 %v1474, %v1472
      %v1777 = vpack.c.b16 %v1477, %v1475
      %v1778 = vpack.c.b16 %v1478, %v1476
      %v1779 = vpack.c.b16 %v1481, %v1479
      %v1780 = vpack.c.b16 %v1482, %v1480
      %v1781 = vpack.c.b16 %v1485, %v1483
      %v1782 = vpack.c.b16 %v1486, %v1484
      %v1783 = vpack.c.b16 %v1489, %v1487
      %v1784 = vpack.c.b16 %v1490, %v1488
      %v1785 = vpack.c.b16 %v1493, %v1491
      %v1786 = vpack.c.b16 %v1494, %v1492
      %v1787 = vpack.c.b16 %v1497, %v1495
      %v1788 = vpack.c.b16 %v1498, %v1496
      %v1789 = vpack.c.b16 %v1501, %v1499
      %v1790 = vpack.c.b16 %v1502, %v1500
      %2079 = vmatpush.bf16.msra.mxu0 %v1517
      %2080 = vmatpush.bf16.msra.mxu0 %v1515
      %2081 = vmatpush.bf16.msra.mxu0 %v1513
      %2082 = vmatpush.bf16.msra.mxu0 %v1511
      %2083 = vmatpush.bf16.msra.mxu0 %v1509
      %2084 = vmatpush.bf16.msra.mxu0 %v1507
      %2085 = vmatpush.bf16.msra.mxu0 %v1505
      %2086 = vmatpush.bf16.msra.mxu0 %v1503
      %2087 = vmatmul.bf16.gmra.mxu0 %v599
      %v2088 = vpop.f32.mrf.mxu0
      %v2089 = vadd.f32 0.0, %v2088
      %v2090 = vpop.f32.mrf.mxu0
      %2091 = vdwg.mxu0
      %2092 = vmatpush.bf16.msra.mxu0 %v1533
      %2093 = vmatpush.bf16.msra.mxu0 %v1531
      %2094 = vmatpush.bf16.msra.mxu0 %v1529
      %2095 = vmatpush.bf16.msra.mxu0 %v1527
      %2096 = vmatpush.bf16.msra.mxu0 %v1525
      %2097 = vmatpush.bf16.msra.mxu0 %v1523
      %2098 = vmatpush.bf16.msra.mxu0 %v1521
      %2099 = vmatpush.bf16.msra.mxu0 %v1519
      %2100 = vmatmul.bf16.gmra.mxu0 %v600
      %v2101 = vpop.f32.mrf.mxu0
      %v2102 = vadd.f32 %v2089, %v2101
      %v2103 = vpop.f32.mrf.mxu0
      %2104 = vdwg.mxu0
      %2105 = vmatpush.bf16.msra.mxu0 %v1549
      %2106 = vmatpush.bf16.msra.mxu0 %v1547
      %2107 = vmatpush.bf16.msra.mxu0 %v1545
      %2108 = vmatpush.bf16.msra.mxu0 %v1543
      %2109 = vmatpush.bf16.msra.mxu0 %v1541
      %2110 = vmatpush.bf16.msra.mxu0 %v1539
      %2111 = vmatpush.bf16.msra.mxu0 %v1537
      %2112 = vmatpush.bf16.msra.mxu0 %v1535
      %2113 = vmatmul.bf16.gmra.mxu0 %v601
      %v2114 = vpop.f32.mrf.mxu0
      %v2115 = vadd.f32 %v2102, %v2114
      %v2116 = vpop.f32.mrf.mxu0
      %2117 = vdwg.mxu0
      %2118 = vmatpush.bf16.msra.mxu0 %v1565
      %2119 = vmatpush.bf16.msra.mxu0 %v1563
      %2120 = vmatpush.bf16.msra.mxu0 %v1561
      %2121 = vmatpush.bf16.msra.mxu0 %v1559
      %2122 = vmatpush.bf16.msra.mxu0 %v1557
      %2123 = vmatpush.bf16.msra.mxu0 %v1555
      %2124 = vmatpush.bf16.msra.mxu0 %v1553
      %2125 = vmatpush.bf16.msra.mxu0 %v1551
      %2126 = vmatmul.bf16.gmra.mxu0 %v602
      %v2127 = vpop.f32.mrf.mxu0
      %v2128 = vadd.f32 %v2115, %v2127
      %v2129 = vpop.f32.mrf.mxu0
      %2130 = vdwg.mxu0
      %2131 = vmatpush.bf16.msra.mxu0 %v1581
      %2132 = vmatpush.bf16.msra.mxu0 %v1579
      %2133 = vmatpush.bf16.msra.mxu0 %v1577
      %2134 = vmatpush.bf16.msra.mxu0 %v1575
      %2135 = vmatpush.bf16.msra.mxu0 %v1573
      %2136 = vmatpush.bf16.msra.mxu0 %v1571
      %2137 = vmatpush.bf16.msra.mxu0 %v1569
      %2138 = vmatpush.bf16.msra.mxu0 %v1567
      %2139 = vmatmul.bf16.gmra.mxu0 %v603
      %v2140 = vpop.f32.mrf.mxu0
      %v2141 = vadd.f32 %v2128, %v2140
      %v2142 = vpop.f32.mrf.mxu0
      %2143 = vdwg.mxu0
      %2144 = vmatpush.bf16.msra.mxu0 %v1597
      %2145 = vmatpush.bf16.msra.mxu0 %v1595
      %2146 = vmatpush.bf16.msra.mxu0 %v1593
      %2147 = vmatpush.bf16.msra.mxu0 %v1591
      %2148 = vmatpush.bf16.msra.mxu0 %v1589
      %2149 = vmatpush.bf16.msra.mxu0 %v1587
      %2150 = vmatpush.bf16.msra.mxu0 %v1585
      %2151 = vmatpush.bf16.msra.mxu0 %v1583
      %2152 = vmatmul.bf16.gmra.mxu0 %v604
      %v2153 = vpop.f32.mrf.mxu0
      %v2154 = vadd.f32 %v2141, %v2153
      %v2155 = vpop.f32.mrf.mxu0
      %2156 = vdwg.mxu0
      %2157 = vmatpush.bf16.msra.mxu0 %v1613
      %2158 = vmatpush.bf16.msra.mxu0 %v1611
      %2159 = vmatpush.bf16.msra.mxu0 %v1609
      %2160 = vmatpush.bf16.msra.mxu0 %v1607
      %2161 = vmatpush.bf16.msra.mxu0 %v1605
      %2162 = vmatpush.bf16.msra.mxu0 %v1603
      %2163 = vmatpush.bf16.msra.mxu0 %v1601
      %2164 = vmatpush.bf16.msra.mxu0 %v1599
      %2165 = vmatmul.bf16.gmra.mxu0 %v605
      %v2166 = vpop.f32.mrf.mxu0
      %v2167 = vadd.f32 %v2154, %v2166
      %v2168 = vpop.f32.mrf.mxu0
      %2169 = vdwg.mxu0
      %2170 = vmatpush.bf16.msra.mxu0 %v1629
      %2171 = vmatpush.bf16.msra.mxu0 %v1627
      %2172 = vmatpush.bf16.msra.mxu0 %v1625
      %2173 = vmatpush.bf16.msra.mxu0 %v1623
      %2174 = vmatpush.bf16.msra.mxu0 %v1621
      %2175 = vmatpush.bf16.msra.mxu0 %v1619
      %2176 = vmatpush.bf16.msra.mxu0 %v1617
      %2177 = vmatpush.bf16.msra.mxu0 %v1615
      %2178 = vmatmul.bf16.gmra.mxu0 %v606
      %v2179 = vpop.f32.mrf.mxu0
      %v2180 = vadd.f32 %v2167, %v2179
      %v2181 = vpop.f32.mrf.mxu0
      %2182 = vdwg.mxu0
      %2183 = vmatpush.bf16.msra.mxu0 %v1645
      %2184 = vmatpush.bf16.msra.mxu0 %v1643
      %2185 = vmatpush.bf16.msra.mxu0 %v1641
      %2186 = vmatpush.bf16.msra.mxu0 %v1639
      %2187 = vmatpush.bf16.msra.mxu0 %v1637
      %2188 = vmatpush.bf16.msra.mxu0 %v1635
      %2189 = vmatpush.bf16.msra.mxu0 %v1633
      %2190 = vmatpush.bf16.msra.mxu0 %v1631
      %2191 = vmatmul.bf16.gmra.mxu0 %v609
      %v2192 = vpop.f32.mrf.mxu0
      %v2193 = vadd.f32 %v2180, %v2192
      %v2194 = vpop.f32.mrf.mxu0
      %2195 = vdwg.mxu0
      %2196 = vmatpush.bf16.msra.mxu0 %v1661
      %2197 = vmatpush.bf16.msra.mxu0 %v1659
      %2198 = vmatpush.bf16.msra.mxu0 %v1657
      %2199 = vmatpush.bf16.msra.mxu0 %v1655
      %2200 = vmatpush.bf16.msra.mxu0 %v1653
      %2201 = vmatpush.bf16.msra.mxu0 %v1651
      %2202 = vmatpush.bf16.msra.mxu0 %v1649
      %2203 = vmatpush.bf16.msra.mxu0 %v1647
      %2204 = vmatmul.bf16.gmra.mxu0 %v610
      %v2205 = vpop.f32.mrf.mxu0
      %v2206 = vadd.f32 %v2193, %v2205
      %v2207 = vpop.f32.mrf.mxu0
      %2208 = vdwg.mxu0
      %2209 = vmatpush.bf16.msra.mxu0 %v1677
      %2210 = vmatpush.bf16.msra.mxu0 %v1675
      %2211 = vmatpush.bf16.msra.mxu0 %v1673
      %2212 = vmatpush.bf16.msra.mxu0 %v1671
      %2213 = vmatpush.bf16.msra.mxu0 %v1669
      %2214 = vmatpush.bf16.msra.mxu0 %v1667
      %2215 = vmatpush.bf16.msra.mxu0 %v1665
      %2216 = vmatpush.bf16.msra.mxu0 %v1663
      %2217 = vmatmul.bf16.gmra.mxu0 %v611
      %v2218 = vpop.f32.mrf.mxu0
      %v2219 = vadd.f32 %v2206, %v2218
      %v2220 = vpop.f32.mrf.mxu0
      %2221 = vdwg.mxu0
      %2222 = vmatpush.bf16.msra.mxu0 %v1693
      %2223 = vmatpush.bf16.msra.mxu0 %v1691
      %2224 = vmatpush.bf16.msra.mxu0 %v1689
      %2225 = vmatpush.bf16.msra.mxu0 %v1687
      %2226 = vmatpush.bf16.msra.mxu0 %v1685
      %2227 = vmatpush.bf16.msra.mxu0 %v1683
      %2228 = vmatpush.bf16.msra.mxu0 %v1681
      %2229 = vmatpush.bf16.msra.mxu0 %v1679
      %2230 = vmatmul.bf16.gmra.mxu0 %v612
      %v2231 = vpop.f32.mrf.mxu0
      %v2232 = vadd.f32 %v2219, %v2231
      %v2233 = vpop.f32.mrf.mxu0
      %2234 = vdwg.mxu0
      %2235 = vmatpush.bf16.msra.mxu0 %v1709
      %2236 = vmatpush.bf16.msra.mxu0 %v1707
      %2237 = vmatpush.bf16.msra.mxu0 %v1705
      %2238 = vmatpush.bf16.msra.mxu0 %v1703
      %2239 = vmatpush.bf16.msra.mxu0 %v1701
      %2240 = vmatpush.bf16.msra.mxu0 %v1699
      %2241 = vmatpush.bf16.msra.mxu0 %v1697
      %2242 = vmatpush.bf16.msra.mxu0 %v1695
      %2243 = vmatmul.bf16.gmra.mxu0 %v613
      %v2244 = vpop.f32.mrf.mxu0
      %v2245 = vadd.f32 %v2232, %v2244
      %v2246 = vpop.f32.mrf.mxu0
      %2247 = vdwg.mxu0
      %2248 = vmatpush.bf16.msra.mxu0 %v1725
      %2249 = vmatpush.bf16.msra.mxu0 %v1723
      %2250 = vmatpush.bf16.msra.mxu0 %v1721
      %2251 = vmatpush.bf16.msra.mxu0 %v1719
      %2252 = vmatpush.bf16.msra.mxu0 %v1717
      %2253 = vmatpush.bf16.msra.mxu0 %v1715
      %2254 = vmatpush.bf16.msra.mxu0 %v1713
      %2255 = vmatpush.bf16.msra.mxu0 %v1711
      %2256 = vmatmul.bf16.gmra.mxu0 %v614
      %v2257 = vpop.f32.mrf.mxu0
      %v2258 = vadd.f32 %v2245, %v2257
      %v2259 = vpop.f32.mrf.mxu0
      %2260 = vdwg.mxu0
      %2261 = vmatpush.bf16.msra.mxu0 %v1741
      %2262 = vmatpush.bf16.msra.mxu0 %v1739
      %2263 = vmatpush.bf16.msra.mxu0 %v1737
      %2264 = vmatpush.bf16.msra.mxu0 %v1735
      %2265 = vmatpush.bf16.msra.mxu0 %v1733
      %2266 = vmatpush.bf16.msra.mxu0 %v1731
      %2267 = vmatpush.bf16.msra.mxu0 %v1729
      %2268 = vmatpush.bf16.msra.mxu0 %v1727
      %2269 = vmatmul.bf16.gmra.mxu0 %v615
      %v2270 = vpop.f32.mrf.mxu0
      %v2271 = vadd.f32 %v2258, %v2270
      %v2272 = vpop.f32.mrf.mxu0
      %2273 = vdwg.mxu0
      %2274 = vmatpush.bf16.msra.mxu0 %v1757
      %2275 = vmatpush.bf16.msra.mxu0 %v1755
      %2276 = vmatpush.bf16.msra.mxu0 %v1753
      %2277 = vmatpush.bf16.msra.mxu0 %v1751
      %2278 = vmatpush.bf16.msra.mxu0 %v1749
      %2279 = vmatpush.bf16.msra.mxu0 %v1747
      %2280 = vmatpush.bf16.msra.mxu0 %v1745
      %2281 = vmatpush.bf16.msra.mxu0 %v1743
      %2282 = vmatmul.bf16.gmra.mxu0 %v616
      %v2283 = vpop.f32.mrf.mxu0
      %v2284 = vadd.f32 %v2271, %v2283
      %v2285 = vpop.f32.mrf.mxu0
      %2286 = vdwg.mxu0
      %2287 = vmatpush.bf16.msra.mxu0 %v1773
      %2288 = vmatpush.bf16.msra.mxu0 %v1771
      %2289 = vmatpush.bf16.msra.mxu0 %v1769
      %2290 = vmatpush.bf16.msra.mxu0 %v1767
      %2291 = vmatpush.bf16.msra.mxu0 %v1765
      %2292 = vmatpush.bf16.msra.mxu0 %v1763
      %2293 = vmatpush.bf16.msra.mxu0 %v1761
      %2294 = vmatpush.bf16.msra.mxu0 %v1759
      %2295 = vmatmul.bf16.gmra.mxu0 %v619
      %v2296 = vpop.f32.mrf.mxu0
      %v2297 = vadd.f32 %v2284, %v2296
      %v2298 = vpop.f32.mrf.mxu0
      %2299 = vdwg.mxu0
      %2300 = vmatpush.bf16.msra.mxu0 %v1789
      %2301 = vmatpush.bf16.msra.mxu0 %v1787
      %2302 = vmatpush.bf16.msra.mxu0 %v1785
      %2303 = vmatpush.bf16.msra.mxu0 %v1783
      %2304 = vmatpush.bf16.msra.mxu0 %v1781
      %2305 = vmatpush.bf16.msra.mxu0 %v1779
      %2306 = vmatpush.bf16.msra.mxu0 %v1777
      %2307 = vmatpush.bf16.msra.mxu0 %v1775
      %2308 = vmatmul.bf16.gmra.mxu0 %v620
      %v2309 = vpop.f32.mrf.mxu0
      %v2310 = vadd.f32 %v2297, %v2309
      %v2311 = vpop.f32.mrf.mxu0
      %2312 = vdwg.mxu0
      %2313 = vmatpush.bf16.msra.mxu0 %v1518
      %2314 = vmatpush.bf16.msra.mxu0 %v1516
      %2315 = vmatpush.bf16.msra.mxu0 %v1514
      %2316 = vmatpush.bf16.msra.mxu0 %v1512
      %2317 = vmatpush.bf16.msra.mxu0 %v1510
      %2318 = vmatpush.bf16.msra.mxu0 %v1508
      %2319 = vmatpush.bf16.msra.mxu0 %v1506
      %2320 = vmatpush.bf16.msra.mxu0 %v1504
      %2321 = vmatmul.bf16.gmra.mxu0 %v599
      %v2322 = vpop.f32.mrf.mxu0
      %v2323 = vadd.f32 0.0, %v2322
      %v2324 = vpop.f32.mrf.mxu0
      %2325 = vdwg.mxu0
      %2326 = vmatpush.bf16.msra.mxu0 %v1534
      %2327 = vmatpush.bf16.msra.mxu0 %v1532
      %2328 = vmatpush.bf16.msra.mxu0 %v1530
      %2329 = vmatpush.bf16.msra.mxu0 %v1528
      %2330 = vmatpush.bf16.msra.mxu0 %v1526
      %2331 = vmatpush.bf16.msra.mxu0 %v1524
      %2332 = vmatpush.bf16.msra.mxu0 %v1522
      %2333 = vmatpush.bf16.msra.mxu0 %v1520
      %2334 = vmatmul.bf16.gmra.mxu0 %v600
      %v2335 = vpop.f32.mrf.mxu0
      %v2336 = vadd.f32 %v2323, %v2335
      %v2337 = vpop.f32.mrf.mxu0
      %2338 = vdwg.mxu0
      %2339 = vmatpush.bf16.msra.mxu0 %v1550
      %2340 = vmatpush.bf16.msra.mxu0 %v1548
      %2341 = vmatpush.bf16.msra.mxu0 %v1546
      %2342 = vmatpush.bf16.msra.mxu0 %v1544
      %2343 = vmatpush.bf16.msra.mxu0 %v1542
      %2344 = vmatpush.bf16.msra.mxu0 %v1540
      %2345 = vmatpush.bf16.msra.mxu0 %v1538
      %2346 = vmatpush.bf16.msra.mxu0 %v1536
      %2347 = vmatmul.bf16.gmra.mxu0 %v601
      %v2348 = vpop.f32.mrf.mxu0
      %v2349 = vadd.f32 %v2336, %v2348
      %v2350 = vpop.f32.mrf.mxu0
      %2351 = vdwg.mxu0
      %2352 = vmatpush.bf16.msra.mxu0 %v1566
      %2353 = vmatpush.bf16.msra.mxu0 %v1564
      %2354 = vmatpush.bf16.msra.mxu0 %v1562
      %2355 = vmatpush.bf16.msra.mxu0 %v1560
      %2356 = vmatpush.bf16.msra.mxu0 %v1558
      %2357 = vmatpush.bf16.msra.mxu0 %v1556
      %2358 = vmatpush.bf16.msra.mxu0 %v1554
      %2359 = vmatpush.bf16.msra.mxu0 %v1552
      %2360 = vmatmul.bf16.gmra.mxu0 %v602
      %v2361 = vpop.f32.mrf.mxu0
      %v2362 = vadd.f32 %v2349, %v2361
      %v2363 = vpop.f32.mrf.mxu0
      %2364 = vdwg.mxu0
      %2365 = vmatpush.bf16.msra.mxu0 %v1582
      %2366 = vmatpush.bf16.msra.mxu0 %v1580
      %2367 = vmatpush.bf16.msra.mxu0 %v1578
      %2368 = vmatpush.bf16.msra.mxu0 %v1576
      %2369 = vmatpush.bf16.msra.mxu0 %v1574
      %2370 = vmatpush.bf16.msra.mxu0 %v1572
      %2371 = vmatpush.bf16.msra.mxu0 %v1570
      %2372 = vmatpush.bf16.msra.mxu0 %v1568
      %2373 = vmatmul.bf16.gmra.mxu0 %v603
      %v2374 = vpop.f32.mrf.mxu0
      %v2375 = vadd.f32 %v2362, %v2374
      %v2376 = vpop.f32.mrf.mxu0
      %2377 = vdwg.mxu0
      %2378 = vmatpush.bf16.msra.mxu0 %v1598
      %2379 = vmatpush.bf16.msra.mxu0 %v1596
      %2380 = vmatpush.bf16.msra.mxu0 %v1594
      %2381 = vmatpush.bf16.msra.mxu0 %v1592
      %2382 = vmatpush.bf16.msra.mxu0 %v1590
      %2383 = vmatpush.bf16.msra.mxu0 %v1588
      %2384 = vmatpush.bf16.msra.mxu0 %v1586
      %2385 = vmatpush.bf16.msra.mxu0 %v1584
      %2386 = vmatmul.bf16.gmra.mxu0 %v604
      %v2387 = vpop.f32.mrf.mxu0
      %v2388 = vadd.f32 %v2375, %v2387
      %v2389 = vpop.f32.mrf.mxu0
      %2390 = vdwg.mxu0
      %2391 = vmatpush.bf16.msra.mxu0 %v1614
      %2392 = vmatpush.bf16.msra.mxu0 %v1612
      %2393 = vmatpush.bf16.msra.mxu0 %v1610
      %2394 = vmatpush.bf16.msra.mxu0 %v1608
      %2395 = vmatpush.bf16.msra.mxu0 %v1606
      %2396 = vmatpush.bf16.msra.mxu0 %v1604
      %2397 = vmatpush.bf16.msra.mxu0 %v1602
      %2398 = vmatpush.bf16.msra.mxu0 %v1600
      %2399 = vmatmul.bf16.gmra.mxu0 %v605
      %v2400 = vpop.f32.mrf.mxu0
      %v2401 = vadd.f32 %v2388, %v2400
      %v2402 = vpop.f32.mrf.mxu0
      %2403 = vdwg.mxu0
      %2404 = vmatpush.bf16.msra.mxu0 %v1630
      %2405 = vmatpush.bf16.msra.mxu0 %v1628
      %2406 = vmatpush.bf16.msra.mxu0 %v1626
      %2407 = vmatpush.bf16.msra.mxu0 %v1624
      %2408 = vmatpush.bf16.msra.mxu0 %v1622
      %2409 = vmatpush.bf16.msra.mxu0 %v1620
      %2410 = vmatpush.bf16.msra.mxu0 %v1618
      %2411 = vmatpush.bf16.msra.mxu0 %v1616
      %2412 = vmatmul.bf16.gmra.mxu0 %v606
      %v2413 = vpop.f32.mrf.mxu0
      %v2414 = vadd.f32 %v2401, %v2413
      %v2415 = vpop.f32.mrf.mxu0
      %2416 = vdwg.mxu0
      %2417 = vmatpush.bf16.msra.mxu0 %v1646
      %2418 = vmatpush.bf16.msra.mxu0 %v1644
      %2419 = vmatpush.bf16.msra.mxu0 %v1642
      %2420 = vmatpush.bf16.msra.mxu0 %v1640
      %2421 = vmatpush.bf16.msra.mxu0 %v1638
      %2422 = vmatpush.bf16.msra.mxu0 %v1636
      %2423 = vmatpush.bf16.msra.mxu0 %v1634
      %2424 = vmatpush.bf16.msra.mxu0 %v1632
      %2425 = vmatmul.bf16.gmra.mxu0 %v609
      %v2426 = vpop.f32.mrf.mxu0
      %v2427 = vadd.f32 %v2414, %v2426
      %v2428 = vpop.f32.mrf.mxu0
      %2429 = vdwg.mxu0
      %2430 = vmatpush.bf16.msra.mxu0 %v1662
      %2431 = vmatpush.bf16.msra.mxu0 %v1660
      %2432 = vmatpush.bf16.msra.mxu0 %v1658
      %2433 = vmatpush.bf16.msra.mxu0 %v1656
      %2434 = vmatpush.bf16.msra.mxu0 %v1654
      %2435 = vmatpush.bf16.msra.mxu0 %v1652
      %2436 = vmatpush.bf16.msra.mxu0 %v1650
      %2437 = vmatpush.bf16.msra.mxu0 %v1648
      %2438 = vmatmul.bf16.gmra.mxu0 %v610
      %v2439 = vpop.f32.mrf.mxu0
      %v2440 = vadd.f32 %v2427, %v2439
      %v2441 = vpop.f32.mrf.mxu0
      %2442 = vdwg.mxu0
      %2443 = vmatpush.bf16.msra.mxu0 %v1678
      %2444 = vmatpush.bf16.msra.mxu0 %v1676
      %2445 = vmatpush.bf16.msra.mxu0 %v1674
      %2446 = vmatpush.bf16.msra.mxu0 %v1672
      %2447 = vmatpush.bf16.msra.mxu0 %v1670
      %2448 = vmatpush.bf16.msra.mxu0 %v1668
      %2449 = vmatpush.bf16.msra.mxu0 %v1666
      %2450 = vmatpush.bf16.msra.mxu0 %v1664
      %2451 = vmatmul.bf16.gmra.mxu0 %v611
      %v2452 = vpop.f32.mrf.mxu0
      %v2453 = vadd.f32 %v2440, %v2452
      %v2454 = vpop.f32.mrf.mxu0
      %2455 = vdwg.mxu0
      %2456 = vmatpush.bf16.msra.mxu0 %v1694
      %2457 = vmatpush.bf16.msra.mxu0 %v1692
      %2458 = vmatpush.bf16.msra.mxu0 %v1690
      %2459 = vmatpush.bf16.msra.mxu0 %v1688
      %2460 = vmatpush.bf16.msra.mxu0 %v1686
      %2461 = vmatpush.bf16.msra.mxu0 %v1684
      %2462 = vmatpush.bf16.msra.mxu0 %v1682
      %2463 = vmatpush.bf16.msra.mxu0 %v1680
      %2464 = vmatmul.bf16.gmra.mxu0 %v612
      %v2465 = vpop.f32.mrf.mxu0
      %v2466 = vadd.f32 %v2453, %v2465
      %v2467 = vpop.f32.mrf.mxu0
      %2468 = vdwg.mxu0
      %2469 = vmatpush.bf16.msra.mxu0 %v1710
      %2470 = vmatpush.bf16.msra.mxu0 %v1708
      %2471 = vmatpush.bf16.msra.mxu0 %v1706
      %2472 = vmatpush.bf16.msra.mxu0 %v1704
      %2473 = vmatpush.bf16.msra.mxu0 %v1702
      %2474 = vmatpush.bf16.msra.mxu0 %v1700
      %2475 = vmatpush.bf16.msra.mxu0 %v1698
      %2476 = vmatpush.bf16.msra.mxu0 %v1696
      %2477 = vmatmul.bf16.gmra.mxu0 %v613
      %v2478 = vpop.f32.mrf.mxu0
      %v2479 = vadd.f32 %v2466, %v2478
      %v2480 = vpop.f32.mrf.mxu0
      %2481 = vdwg.mxu0
      %2482 = vmatpush.bf16.msra.mxu0 %v1726
      %2483 = vmatpush.bf16.msra.mxu0 %v1724
      %2484 = vmatpush.bf16.msra.mxu0 %v1722
      %2485 = vmatpush.bf16.msra.mxu0 %v1720
      %2486 = vmatpush.bf16.msra.mxu0 %v1718
      %2487 = vmatpush.bf16.msra.mxu0 %v1716
      %2488 = vmatpush.bf16.msra.mxu0 %v1714
      %2489 = vmatpush.bf16.msra.mxu0 %v1712
      %2490 = vmatmul.bf16.gmra.mxu0 %v614
      %v2491 = vpop.f32.mrf.mxu0
      %v2492 = vadd.f32 %v2479, %v2491
      %v2493 = vpop.f32.mrf.mxu0
      %2494 = vdwg.mxu0
      %2495 = vmatpush.bf16.msra.mxu0 %v1742
      %2496 = vmatpush.bf16.msra.mxu0 %v1740
      %2497 = vmatpush.bf16.msra.mxu0 %v1738
      %2498 = vmatpush.bf16.msra.mxu0 %v1736
      %2499 = vmatpush.bf16.msra.mxu0 %v1734
      %2500 = vmatpush.bf16.msra.mxu0 %v1732
      %2501 = vmatpush.bf16.msra.mxu0 %v1730
      %2502 = vmatpush.bf16.msra.mxu0 %v1728
      %2503 = vmatmul.bf16.gmra.mxu0 %v615
      %v2504 = vpop.f32.mrf.mxu0
      %v2505 = vadd.f32 %v2492, %v2504
      %v2506 = vpop.f32.mrf.mxu0
      %2507 = vdwg.mxu0
      %2508 = vmatpush.bf16.msra.mxu0 %v1758
      %2509 = vmatpush.bf16.msra.mxu0 %v1756
      %2510 = vmatpush.bf16.msra.mxu0 %v1754
      %2511 = vmatpush.bf16.msra.mxu0 %v1752
      %2512 = vmatpush.bf16.msra.mxu0 %v1750
      %2513 = vmatpush.bf16.msra.mxu0 %v1748
      %2514 = vmatpush.bf16.msra.mxu0 %v1746
      %2515 = vmatpush.bf16.msra.mxu0 %v1744
      %2516 = vmatmul.bf16.gmra.mxu0 %v616
      %v2517 = vpop.f32.mrf.mxu0
      %v2518 = vadd.f32 %v2505, %v2517
      %v2519 = vpop.f32.mrf.mxu0
      %2520 = vdwg.mxu0
      %2521 = vmatpush.bf16.msra.mxu0 %v1774
      %2522 = vmatpush.bf16.msra.mxu0 %v1772
      %2523 = vmatpush.bf16.msra.mxu0 %v1770
      %2524 = vmatpush.bf16.msra.mxu0 %v1768
      %2525 = vmatpush.bf16.msra.mxu0 %v1766
      %2526 = vmatpush.bf16.msra.mxu0 %v1764
      %2527 = vmatpush.bf16.msra.mxu0 %v1762
      %2528 = vmatpush.bf16.msra.mxu0 %v1760
      %2529 = vmatmul.bf16.gmra.mxu0 %v619
      %v2530 = vpop.f32.mrf.mxu0
      %v2531 = vadd.f32 %v2518, %v2530
      %v2532 = vpop.f32.mrf.mxu0
      %2533 = vdwg.mxu0
      %2534 = vmatpush.bf16.msra.mxu0 %v1790
      %2535 = vmatpush.bf16.msra.mxu0 %v1788
      %2536 = vmatpush.bf16.msra.mxu0 %v1786
      %2537 = vmatpush.bf16.msra.mxu0 %v1784
      %2538 = vmatpush.bf16.msra.mxu0 %v1782
      %2539 = vmatpush.bf16.msra.mxu0 %v1780
      %2540 = vmatpush.bf16.msra.mxu0 %v1778
      %2541 = vmatpush.bf16.msra.mxu0 %v1776
      %2542 = vmatmul.bf16.gmra.mxu0 %v620
      %v2543 = vpop.f32.mrf.mxu0
      %v2544 = vadd.f32 %v2531, %v2543
      %v2545 = vpop.f32.mrf.mxu0
      %2546 = vdwg.mxu0
      %v2549 = vrot.slane %v2544, 6
      %vm2550 = vcmask 1041408
      %v2551 = vsel %vm2550, %v2310, %v2549
      %v2553 = vadd.f32 %v305, %v2551
      %2554 = vst [vmem:[#allocation2] sm:$0xf] %v2553
      %p2555 = scmp.eq.s32.totalorder %s22, 2
      // Predicated region
      $region49: #{gesture3dnet_forward.14} parent=43 // pred_check
        %p2556 = pneg %p2555
      $region50: #{gesture3dnet_forward.14} parent=43 // pred_check_branch
        %2558 = sbr.rel (%p2556) target = $region52
      $region51: #{gesture3dnet_forward.14} parent=43 // pred_region
        %v2559 = vld [vmem:[%s295] sm:$0x1]
        %v2560 = vld [vmem:[%s4] sm:$0xff]
        %v2561 = vld [vmem:[%s4 + $0x8] sm:$0xff]
        %v2562 = vld [vmem:[%s4 + $0x10] sm:$0xff]
        %v2563 = vld [vmem:[%s4 + $0x18] sm:$0xff]
        %v2564 = vld [vmem:[%s4 + $0x20] sm:$0xff]
        %v2565 = vld [vmem:[%s4 + $0x28] sm:$0xff]
        %v2566 = vld [vmem:[%s4 + $0x30] sm:$0xff]
        %v2567 = vld [vmem:[%s4 + $0x38] sm:$0xff]
        %v2568 = vld [vmem:[%s4 + $0x40] sm:$0xff]
        %v2569 = vld [vmem:[%s4 + $0x48] sm:$0xff]
        %v2570 = vld [vmem:[%s4 + $0x50] sm:$0xff]
        %v2571 = vld [vmem:[%s4 + $0x58] sm:$0xff]
        %v2572 = vld [vmem:[%s4 + $0x60] sm:$0xff]
        %v2573 = vld [vmem:[%s4 + $0x68] sm:$0xff]
        %v2574 = vld [vmem:[%s4 + $0x70] sm:$0xff]
        %v2575 = vld [vmem:[%s4 + $0x78] sm:$0xff]
        %v2592 = vunpack.c.l.b16 %v2560
        %v2593 = vunpack.c.h.b16 %v2560
        %v2594 = vunpack.c.l.b16 %v2561
        %v2595 = vunpack.c.h.b16 %v2561
        %v2596 = vunpack.c.l.b16 %v2562
        %v2597 = vunpack.c.h.b16 %v2562
        %v2598 = vunpack.c.l.b16 %v2563
        %v2599 = vunpack.c.h.b16 %v2563
        %v2600 = vunpack.c.l.b16 %v2564
        %v2601 = vunpack.c.h.b16 %v2564
        %v2602 = vunpack.c.l.b16 %v2565
        %v2603 = vunpack.c.h.b16 %v2565
        %v2604 = vunpack.c.l.b16 %v2566
        %v2605 = vunpack.c.h.b16 %v2566
        %v2606 = vunpack.c.l.b16 %v2567
        %v2607 = vunpack.c.h.b16 %v2567
        %v2608 = vunpack.c.l.b16 %v2568
        %v2609 = vunpack.c.h.b16 %v2568
        %v2610 = vunpack.c.l.b16 %v2569
        %v2611 = vunpack.c.h.b16 %v2569
        %v2612 = vunpack.c.l.b16 %v2570
        %v2613 = vunpack.c.h.b16 %v2570
        %v2614 = vunpack.c.l.b16 %v2571
        %v2615 = vunpack.c.h.b16 %v2571
        %v2616 = vunpack.c.l.b16 %v2572
        %v2617 = vunpack.c.h.b16 %v2572
        %v2618 = vunpack.c.l.b16 %v2573
        %v2619 = vunpack.c.h.b16 %v2573
        %v2620 = vunpack.c.l.b16 %v2574
        %v2621 = vunpack.c.h.b16 %v2574
        %v2622 = vunpack.c.l.b16 %v2575
        %v2623 = vunpack.c.h.b16 %v2575
        %v2624 = vpack.c.b16 %v2594, %v2592
        %v2625 = vpack.c.b16 %v2595, %v2593
        %v2626 = vpack.c.b16 %v2598, %v2596
        %v2627 = vpack.c.b16 %v2599, %v2597
        %v2628 = vpack.c.b16 %v2602, %v2600
        %v2629 = vpack.c.b16 %v2603, %v2601
        %v2630 = vpack.c.b16 %v2606, %v2604
        %v2631 = vpack.c.b16 %v2607, %v2605
        %v2632 = vpack.c.b16 %v2610, %v2608
        %v2633 = vpack.c.b16 %v2611, %v2609
        %v2634 = vpack.c.b16 %v2614, %v2612
        %v2635 = vpack.c.b16 %v2615, %v2613
        %v2636 = vpack.c.b16 %v2618, %v2616
        %v2637 = vpack.c.b16 %v2619, %v2617
        %v2638 = vpack.c.b16 %v2622, %v2620
        %v2639 = vpack.c.b16 %v2623, %v2621
        %2656 = vmatpush.bf16.msra.mxu0 %v2638
        %2657 = vmatpush.bf16.msra.mxu0 %v2636
        %2658 = vmatpush.bf16.msra.mxu0 %v2634
        %2659 = vmatpush.bf16.msra.mxu0 %v2632
        %2660 = vmatpush.bf16.msra.mxu0 %v2630
        %2661 = vmatpush.bf16.msra.mxu0 %v2628
        %2662 = vmatpush.bf16.msra.mxu0 %v2626
        %2663 = vmatpush.bf16.msra.mxu0 %v2624
        %2664 = vmatmul.bf16.gmra.mxu0 %v2559
        %v2665 = vpop.f32.mrf.mxu0
        %v2666 = vadd.f32 0.0, %v2665
        %v2667 = vpop.f32.mrf.mxu0
        %2668 = vdwg.mxu0
        %2669 = vmatpush.bf16.msra.mxu0 %v2639
        %2670 = vmatpush.bf16.msra.mxu0 %v2637
        %2671 = vmatpush.bf16.msra.mxu0 %v2635
        %2672 = vmatpush.bf16.msra.mxu0 %v2633
        %2673 = vmatpush.bf16.msra.mxu0 %v2631
        %2674 = vmatpush.bf16.msra.mxu0 %v2629
        %2675 = vmatpush.bf16.msra.mxu0 %v2627
        %2676 = vmatpush.bf16.msra.mxu0 %v2625
        %2677 = vmatmul.bf16.gmra.mxu0 %v2559
        %v2678 = vpop.f32.mrf.mxu0
        %v2679 = vadd.f32 0.0, %v2678
        %v2680 = vpop.f32.mrf.mxu0
        %2681 = vdwg.mxu0
        %v2682 = vld [vmem:[#allocation2] sm:$0xf]
        %v2683 = vld [vmem:[%s2] sm:$0x3]
        %v2685 = vperm.slane %v2683, 0
        %v2686 = vperm.slane %v2683, 1
        %v2687 = vrot.slane %v2686, 6
        %v2688 = vsel %vm2550, %v2685, %v2687
        %v2690 = vadd.f32 %v2682, %v2688
        %v2693 = vrot.slane %v2679, 6
        %v2694 = vsel %vm2550, %v2666, %v2693
        %v2696 = vadd.f32 %v2690, %v2694
        %v2697 = vld [vmem:[%s5] sm:$0x3]
        %v2699 = vperm.slane %v2697, 0
        %v2700 = vperm.slane %v2697, 1
        %v2701 = vrot.slane %v2700, 6
        %v2702 = vsel %vm2550, %v2699, %v2701
        %v2704 = vadd.f32 %v2696, %v2702
        %v2705 = vmax.f32 %v2704, 0.0
        %2707 = vst [vmem:[#allocation1] ss:$4 sm:$0xff] %v2705
        %v2708 = vld.sshfl [vmem:[#allocation1] sm:$0xff pattern:$0x73625140]
        %v2709 = vld.sshfl [vmem:[#allocation1 + $0x8] sm:$0xff pattern:$0x73625140]
        %v2712 = vpack.c.bf16 %v2709, %v2708
        %v2714 = vrot.slane %v2712, 3
        %vm2715 = vcmask 1040384
        %v2718 = vsel %vm2715, %v2712, %v2714
        %2720 = vst [vmem:[%s299] sm:$0x3] %v2718
      $region52: #{gesture3dnet_forward.14} parent=43 // pred_fallthru
        _
      %p2721 = scmp.lt.s32.totalorder %s21, 3
      %s2722 = scalar_select %p2721, %s21, 3
      %s2723 = smul.addr %s2722, 2
      %s2724 = scalar_lea.vmem %s6, %s2723
      // Predicated region
      $region53: #{gesture3dnet_forward.14} parent=43 // pred_check
        %p2725 = pneg %p190
      $region54: #{gesture3dnet_forward.14} parent=43 // pred_check_branch
        %2727 = sbr.rel (%p2725) target = $region56
      $region55: #{gesture3dnet_forward.14} parent=43 // pred_region
        _
      $region56: #{gesture3dnet_forward.14} parent=43 // pred_fallthru
        _
    $region44: #{gesture3dnet_forward.14} parent=5 // pred_fallthru
      _
    %p2728 = scmp.le.s32.totalorder 2, %s12
    // Predicated region
    $region57: #{gesture3dnet_forward.14} parent=5 // pred_check
      %p2729 = pneg %p2728
    $region58: #{gesture3dnet_forward.14} parent=5 // pred_check_branch
      %2731 = sbr.rel (%p2729) target = $region60
    $region59: #{gesture3dnet_forward.14} parent=5 // pred_region
      %s2732 = ssub.s32 %s12, 2
      // Predicated region
      $region61: #{gesture3dnet_forward.14} parent=59 // pred_check
        %p2733 = pneg %p196
      $region62: #{gesture3dnet_forward.14} parent=59 // pred_check_branch
        %2735 = sbr.rel (%p2733) target = $region64
      $region63: #{gesture3dnet_forward.14} parent=59 // pred_region
        %p2736 = scmp.lt.s32.totalorder %s23, 3
        %s2737 = scalar_select %p2736, %s23, 3
        %s2738 = smul.addr %s2737, 2
        %s2739 = scalar_lea.vmem %s6, %s2738
      $region64: #{gesture3dnet_forward.14} parent=59 // pred_fallthru
        _
    $region60: #{gesture3dnet_forward.14} parent=5 // pred_fallthru
      _
  $region6: #{gesture3dnet_forward.14} parent=0 // loop_footer
    %s16 = sadd.s32 1, %s12
  $region7: #{gesture3dnet_forward.14} parent=0 // loop_footer_branch
    %11 = sbr.rel target = $region3
  $region8: #{gesture3dnet_forward.14} parent=0 // loop_exit
    _

</llo_original>
